<compile_context>
chip_gen: v5e
topology: v5e:2x2
jax: 0.10.0
libtpu: 0.0.40
codegen_flags: <defaults>
</compile_context>

<pallas_src>
import functools

import jax
import jax.numpy as jnp
from jax import lax
from jax.experimental import pallas as pl
from jax.experimental.pallas import tpu as pltpu


def _fused_bn_add_relu_conv1x1_kernel(x_ref, r_ref, gamma_ref, beta_ref, w_ref,
                                      out_ref, *, n_valid, eps):
    # x_ref, r_ref : (Cin, M)   channel-major activations, f32
    # gamma_ref    : (Cin, 1)   BN weight
    # beta_ref     : (Cin, 1)   BN bias
    # w_ref        : (Cout, Cin) bf16 1x1-conv weight (native layout, no .T)
    # out_ref      : (Cout, M)  f32
    x = x_ref[...]

    # Per-channel batch statistics: reduce over the lane axis (M = N*H*W).
    # block_shape == full array, so Mosaic masks the 196->256 lane padding
    # out of the reductions.
    inv_m = jnp.float32(1.0 / n_valid)
    mean = jnp.sum(x, axis=1, keepdims=True) * inv_m               # (Cin, 1)
    ex2 = jnp.sum(x * x, axis=1, keepdims=True) * inv_m            # (Cin, 1)
    var = ex2 - mean * mean                                        # biased var

    # Fold BN (mean/var/gamma/beta) into one per-channel scale + shift.
    scale = gamma_ref[...] * lax.rsqrt(var + jnp.float32(eps))     # (Cin, 1)
    shift = beta_ref[...] - mean * scale                           # (Cin, 1)

    # BN + residual add + ReLU in a single elementwise pass over x.
    y = jnp.maximum(x * scale + shift + r_ref[...], jnp.float32(0.0))

    # 1x1 conv == (Cout, Cin) @ (Cin, M) on the MXU, bf16 in / f32 accumulate.
    out_ref[...] = jnp.dot(
        w_ref[...], y.astype(jnp.bfloat16),
        preferred_element_type=jnp.float32).astype(out_ref.dtype)


def fused_bn_add_relu_conv1x1(x337, x330, gamma, beta, conv_w, *, eps=1e-5):
    """x337, x330: (N, Cin, H, W) f32; conv_w: (Cout, Cin, 1, 1). Returns NCHW."""
    N, Cin, H, W = x337.shape
    Cout = conv_w.shape[0]
    M = N * H * W

    # Channel-major (Cin, M) views.  For N == 1 these are free reshapes of the
    # contiguous NCHW buffer (no HBM round-trip).
    if N == 1:
        a = x337.reshape(Cin, M)
        b = x330.reshape(Cin, M)
    else:
        a = jnp.transpose(x337, (1, 0, 2, 3)).reshape(Cin, M)
        b = jnp.transpose(x330, (1, 0, 2, 3)).reshape(Cin, M)

    g = gamma.reshape(Cin, 1).astype(jnp.float32)
    be = beta.reshape(Cin, 1).astype(jnp.float32)
    w = conv_w.reshape(Cout, Cin).astype(jnp.bfloat16)   # native layout + bf16

    kernel = functools.partial(_fused_bn_add_relu_conv1x1_kernel,
                               n_valid=M, eps=eps)

    cost = pl.CostEstimate(
        flops=2 * M * Cin * Cout + 8 * M * Cin,        # matmul + elementwise
        transcendentals=Cin,                           # rsqrt per channel
        bytes_accessed=2 * M * Cin * 4 + Cin * Cout * 2 + M * Cout * 4,
    )

    out_cm = pl.pallas_call(
        kernel,
        out_shape=jax.ShapeDtypeStruct((Cout, M), jnp.float32),
        in_specs=[
            pl.BlockSpec((Cin, M), lambda: (0, 0)),      # x337 (channel-major)
            pl.BlockSpec((Cin, M), lambda: (0, 0)),      # x330 residual
            pl.BlockSpec((Cin, 1), lambda: (0, 0)),      # gamma
            pl.BlockSpec((Cin, 1), lambda: (0, 0)),      # beta
            pl.BlockSpec((Cout, Cin), lambda: (0, 0)),   # conv weight (bf16)
        ],
        out_specs=pl.BlockSpec((Cout, M), lambda: (0, 0)),
        compiler_params=pltpu.CompilerParams(vmem_limit_bytes=16 << 20),
        cost_estimate=cost,
    )(a, b, g, be, w)

    # (Cout, M) is already NCHW-ordered data for N == 1.
    if N == 1:
        return out_cm.reshape(1, Cout, H, W)
    return jnp.transpose(out_cm.reshape(Cout, N, H, W), (1, 0, 2, 3))


def _reference(x337, x330, gamma, beta, conv_w, eps=1e-5):
    # Pure-JAX reference (training-mode BN with batch statistics), all f32.
    mean = jnp.mean(x337, axis=(0, 2, 3), keepdims=True)
    var = jnp.var(x337, axis=(0, 2, 3), keepdims=True)
    g = gamma.reshape(1, -1, 1, 1)
    b = beta.reshape(1, -1, 1, 1)
    y = (x337 - mean) * lax.rsqrt(var + eps) * g + b
    y = jnp.maximum(y + x330, 0.0)
    w = conv_w.reshape(conv_w.shape[0], conv_w.shape[1])   # (Cout, Cin)
    return jnp.einsum('nchw,oc->nohw', y, w)


if __name__ == "__main__":
    key = jax.random.PRNGKey(0)
    k1, k2, k3 = jax.random.split(key, 3)

    N, Cin, H, W = 1, 1024, 14, 14
    Cout = 256

    x337 = jax.random.normal(k1, (N, Cin, H, W), dtype=jnp.float32)
    x330 = jax.random.normal(k2, (N, Cin, H, W), dtype=jnp.float32)

    # PyTorch BN defaults: weight=1, bias=0.
    gamma = jnp.ones((Cin,), dtype=jnp.float32)
    beta = jnp.zeros((Cin,), dtype=jnp.float32)
    conv_w = jax.random.normal(k3, (Cout, Cin, 1, 1), dtype=jnp.float32) * 0.02

    fused = jax.jit(fused_bn_add_relu_conv1x1)
    out = fused(x337, x330, gamma, beta, conv_w)
    out = jax.block_until_ready(out)

    ref = _reference(x337, x330, gamma, beta, conv_w)
    assert out.shape == (N, Cout, H, W), out.shape
    max_err = float(jnp.max(jnp.abs(out - ref)))
    # Tolerance accounts for the bf16 MXU matmul (f32 accumulation).
    assert bool(jnp.allclose(out, ref, atol=2e-2, rtol=2e-2)), max_err

    print("KERNEL_OK")
</pallas_src>

<mosaic_0001>
module attributes {stable_mosaic.version = 11 : i64} {
  func.func @_fused_bn_add_relu_conv1x1_kernel(%arg0: memref<1024x196xf32, #tpu.memory_space<vmem>>, %arg1: memref<1024x196xf32, #tpu.memory_space<vmem>>, %arg2: memref<1024x1xf32, #tpu.memory_space<vmem>>, %arg3: memref<1024x1xf32, #tpu.memory_space<vmem>>, %arg4: memref<256x1024xbf16, #tpu.memory_space<vmem>>, %arg5: memref<256x196xf32, #tpu.memory_space<vmem>>) attributes {dimension_semantics = [], scalar_prefetch = 0 : i64, scratch_operands = 0 : i64, tpu.core_type = #tpu.core_type<tc>} {
    %c0 = arith.constant 0 : index
    %c0_0 = arith.constant 0 : index
    %0 = vector.load %arg0[%c0, %c0_0] : memref<1024x196xf32, #tpu.memory_space<vmem>>, vector<1024x196xf32>
    %cst = arith.constant dense<0.000000e+00> : vector<1024xf32>
    %1 = vector.multi_reduction <add>, %0, %cst [1] : vector<1024x196xf32> to vector<1024xf32>
    %2 = vector.shape_cast %1 : vector<1024xf32> to vector<1024x1xf32>
    %cst_1 = arith.constant 0.00510204071 : f32
    %3 = vector.broadcast %cst_1 : f32 to vector<1024x1xf32>
    %4 = arith.mulf %2, %3 : vector<1024x1xf32>
    %5 = arith.mulf %0, %0 : vector<1024x196xf32>
    %cst_2 = arith.constant dense<0.000000e+00> : vector<1024xf32>
    %6 = vector.multi_reduction <add>, %5, %cst_2 [1] : vector<1024x196xf32> to vector<1024xf32>
    %7 = vector.shape_cast %6 : vector<1024xf32> to vector<1024x1xf32>
    %cst_3 = arith.constant 0.00510204071 : f32
    %8 = vector.broadcast %cst_3 : f32 to vector<1024x1xf32>
    %9 = arith.mulf %7, %8 : vector<1024x1xf32>
    %10 = arith.mulf %4, %4 : vector<1024x1xf32>
    %11 = arith.subf %9, %10 : vector<1024x1xf32>
    %c0_4 = arith.constant 0 : index
    %c0_5 = arith.constant 0 : index
    %12 = vector.load %arg2[%c0_4, %c0_5] : memref<1024x1xf32, #tpu.memory_space<vmem>>, vector<1024x1xf32>
    %cst_6 = arith.constant 9.99999974E-6 : f32
    %13 = vector.broadcast %cst_6 : f32 to vector<1024x1xf32>
    %14 = arith.addf %11, %13 : vector<1024x1xf32>
    %15 = math.rsqrt %14 : vector<1024x1xf32>
    %16 = arith.mulf %12, %15 : vector<1024x1xf32>
    %c0_7 = arith.constant 0 : index
    %c0_8 = arith.constant 0 : index
    %17 = vector.load %arg3[%c0_7, %c0_8] : memref<1024x1xf32, #tpu.memory_space<vmem>>, vector<1024x1xf32>
    %18 = arith.mulf %4, %16 : vector<1024x1xf32>
    %19 = arith.subf %17, %18 : vector<1024x1xf32>
    %20 = vector.broadcast %16 : vector<1024x1xf32> to vector<1024x196xf32>
    %21 = arith.mulf %0, %20 : vector<1024x196xf32>
    %22 = vector.broadcast %19 : vector<1024x1xf32> to vector<1024x196xf32>
    %23 = arith.addf %21, %22 : vector<1024x196xf32>
    %c0_9 = arith.constant 0 : index
    %c0_10 = arith.constant 0 : index
    %24 = vector.load %arg1[%c0_9, %c0_10] : memref<1024x196xf32, #tpu.memory_space<vmem>>, vector<1024x196xf32>
    %25 = arith.addf %23, %24 : vector<1024x196xf32>
    %cst_11 = arith.constant 0.000000e+00 : f32
    %26 = vector.broadcast %cst_11 : f32 to vector<1024x196xf32>
    %27 = arith.maximumf %25, %26 : vector<1024x196xf32>
    %c0_12 = arith.constant 0 : index
    %c0_13 = arith.constant 0 : index
    %28 = vector.load %arg4[%c0_12, %c0_13] : memref<256x1024xbf16, #tpu.memory_space<vmem>>, vector<256x1024xbf16>
    %29 = arith.truncf %27 : vector<1024x196xf32> to vector<1024x196xbf16>
    %cst_14 = arith.constant dense<0.000000e+00> : vector<256x196xf32>
    %30 = tpu.matmul %28, %29, %cst_14 {dimension_numbers = #tpu.dot_dimension_numbers<[1], [0], [0], [1], [0, 0, 1, 1], [], []>} : vector<256x1024xbf16>, vector<1024x196xbf16>, vector<256x196xf32> -> vector<256x196xf32>
    %c0_15 = arith.constant 0 : index
    %c0_16 = arith.constant 0 : index
    %31 = vector.load %arg5[%c0_15, %c0_16] : memref<256x196xf32, #tpu.memory_space<vmem>>, vector<256x196xf32>
    tpu.vector_store %arg5[%c0_15, %c0_16], %30 {strides = array<i32>} : memref<256x196xf32, #tpu.memory_space<vmem>>, vector<256x196xf32>,
    return
  }
}

</mosaic_0001>

<llo_original>
// kernel: fused_bn_add_relu_conv1x1.1
$region0: #{fused_bn_add_relu_conv1x1.1}
  #allocation0 [shape = 'u32[]', space=smem, size = 0x4, offset = 0x4, fixed_abs, tag = 'smem constant byte address 0x4 - core index']
  #allocation1 [shape = 'u32[72,128]{1,0:T(1,128)}', space=vmem, size = 0x9000, scoped, tag = 'internal scratch']
  %s0 = inlined_call_operand.vmem [shape: f32[1024,196], index: 0, kind: input, shape index: {}]
  %s1 = inlined_call_operand.vmem [shape: f32[1024,196], index: 1, kind: input, shape index: {}]
  %s2 = inlined_call_operand.vmem [shape: f32[1024,1], index: 2, kind: input, shape index: {}]
  %s3 = inlined_call_operand.vmem [shape: f32[1024,1], index: 3, kind: input, shape index: {}]
  %s4 = inlined_call_operand.vmem [shape: bf16[256,1024], index: 4, kind: input, shape index: {}]
  %s5 = inlined_call_operand.vmem [shape: f32[256,196], index: 5, kind: output, shape index: {}]
  %s6 = sld [smem:[#allocation0]]
  $region30: #{fused_bn_add_relu_conv1x1.1} parent=0
    _
  %s8 = ssub.s32 1, %s6
  %s9 = scalar_select 0, %s8, %s6
  // Predicated region
  $region2: #{fused_bn_add_relu_conv1x1.1} parent=0 // pred_check
    _
  $region3: #{fused_bn_add_relu_conv1x1.1} parent=0 // pred_check_branch
    %11 = sbr.rel (0) target = $region5
  $region4: #{fused_bn_add_relu_conv1x1.1} parent=0 // pred_region
    _
  $region5: #{fused_bn_add_relu_conv1x1.1} parent=0 // pred_fallthru
    _
  // Predicated region
  $region6: #{fused_bn_add_relu_conv1x1.1} parent=0 // pred_check
    _
  $region7: #{fused_bn_add_relu_conv1x1.1} parent=0 // pred_check_branch
    %13 = sbr.rel (0) target = $region9
  $region8: #{fused_bn_add_relu_conv1x1.1} parent=0 // pred_region
    _
  $region9: #{fused_bn_add_relu_conv1x1.1} parent=0 // pred_fallthru
    _
  // Predicated region
  $region10: #{fused_bn_add_relu_conv1x1.1} parent=0 // pred_check
    _
  $region11: #{fused_bn_add_relu_conv1x1.1} parent=0 // pred_check_branch
    %15 = sbr.rel (0) target = $region13
  $region12: #{fused_bn_add_relu_conv1x1.1} parent=0 // pred_region
    _
  $region13: #{fused_bn_add_relu_conv1x1.1} parent=0 // pred_fallthru
    _
  // Predicated region
  $region14: #{fused_bn_add_relu_conv1x1.1} parent=0 // pred_check
    _
  $region15: #{fused_bn_add_relu_conv1x1.1} parent=0 // pred_check_branch
    %17 = sbr.rel (0) target = $region17
  $region16: #{fused_bn_add_relu_conv1x1.1} parent=0 // pred_region
    _
  $region17: #{fused_bn_add_relu_conv1x1.1} parent=0 // pred_fallthru
    _
  // Predicated region
  $region18: #{fused_bn_add_relu_conv1x1.1} parent=0 // pred_check
    _
  $region19: #{fused_bn_add_relu_conv1x1.1} parent=0 // pred_check_branch
    %19 = sbr.rel (0) target = $region21
  $region20: #{fused_bn_add_relu_conv1x1.1} parent=0 // pred_region
    _
  $region21: #{fused_bn_add_relu_conv1x1.1} parent=0 // pred_fallthru
    _
  %v20 = vld [vmem:[%s0] sm:$0xff]
  %v21 = vld [vmem:[%s0 + $0x8] sm:$0xff]
  %v22 = vld [vmem:[%s0 + $0x10] sm:$0xff]
  %v23 = vld [vmem:[%s0 + $0x18] sm:$0xff]
  %v24 = vld [vmem:[%s0 + $0x20] sm:$0xff]
  %v25 = vld [vmem:[%s0 + $0x28] sm:$0xff]
  %v26 = vld [vmem:[%s0 + $0x30] sm:$0xff]
  %v27 = vld [vmem:[%s0 + $0x38] sm:$0xff]
  %v28 = vld [vmem:[%s0 + $0x40] sm:$0xff]
  %v29 = vld [vmem:[%s0 + $0x48] sm:$0xff]
  %v30 = vld [vmem:[%s0 + $0x50] sm:$0xff]
  %v31 = vld [vmem:[%s0 + $0x58] sm:$0xff]
  %v32 = vld [vmem:[%s0 + $0x60] sm:$0xff]
  %v33 = vld [vmem:[%s0 + $0x68] sm:$0xff]
  %v34 = vld [vmem:[%s0 + $0x70] sm:$0xff]
  %v35 = vld [vmem:[%s0 + $0x78] sm:$0xff]
  %v36 = vld [vmem:[%s0 + $0x80] sm:$0xff]
  %v37 = vld [vmem:[%s0 + $0x88] sm:$0xff]
  %v38 = vld [vmem:[%s0 + $0x90] sm:$0xff]
  %v39 = vld [vmem:[%s0 + $0x98] sm:$0xff]
  %v40 = vld [vmem:[%s0 + $0xa0] sm:$0xff]
  %v41 = vld [vmem:[%s0 + $0xa8] sm:$0xff]
  %v42 = vld [vmem:[%s0 + $0xb0] sm:$0xff]
  %v43 = vld [vmem:[%s0 + $0xb8] sm:$0xff]
  %v44 = vld [vmem:[%s0 + $0xc0] sm:$0xff]
  %v45 = vld [vmem:[%s0 + $0xc8] sm:$0xff]
  %v46 = vld [vmem:[%s0 + $0xd0] sm:$0xff]
  %v47 = vld [vmem:[%s0 + $0xd8] sm:$0xff]
  %v48 = vld [vmem:[%s0 + $0xe0] sm:$0xff]
  %v49 = vld [vmem:[%s0 + $0xe8] sm:$0xff]
  %v50 = vld [vmem:[%s0 + $0xf0] sm:$0xff]
  %v51 = vld [vmem:[%s0 + $0xf8] sm:$0xff]
  %v52 = vld [vmem:[%s0 + $0x100] sm:$0xff]
  %v53 = vld [vmem:[%s0 + $0x108] sm:$0xff]
  %v54 = vld [vmem:[%s0 + $0x110] sm:$0xff]
  %v55 = vld [vmem:[%s0 + $0x118] sm:$0xff]
  %v56 = vld [vmem:[%s0 + $0x120] sm:$0xff]
  %v57 = vld [vmem:[%s0 + $0x128] sm:$0xff]
  %v58 = vld [vmem:[%s0 + $0x130] sm:$0xff]
  %v59 = vld [vmem:[%s0 + $0x138] sm:$0xff]
  %v60 = vld [vmem:[%s0 + $0x140] sm:$0xff]
  %v61 = vld [vmem:[%s0 + $0x148] sm:$0xff]
  %v62 = vld [vmem:[%s0 + $0x150] sm:$0xff]
  %v63 = vld [vmem:[%s0 + $0x158] sm:$0xff]
  %v64 = vld [vmem:[%s0 + $0x160] sm:$0xff]
  %v65 = vld [vmem:[%s0 + $0x168] sm:$0xff]
  %v66 = vld [vmem:[%s0 + $0x170] sm:$0xff]
  %v67 = vld [vmem:[%s0 + $0x178] sm:$0xff]
  %v68 = vld [vmem:[%s0 + $0x180] sm:$0xff]
  %v69 = vld [vmem:[%s0 + $0x188] sm:$0xff]
  %v70 = vld [vmem:[%s0 + $0x190] sm:$0xff]
  %v71 = vld [vmem:[%s0 + $0x198] sm:$0xff]
  %v72 = vld [vmem:[%s0 + $0x1a0] sm:$0xff]
  %v73 = vld [vmem:[%s0 + $0x1a8] sm:$0xff]
  %v74 = vld [vmem:[%s0 + $0x1b0] sm:$0xff]
  %v75 = vld [vmem:[%s0 + $0x1b8] sm:$0xff]
  %v76 = vld [vmem:[%s0 + $0x1c0] sm:$0xff]
  %v77 = vld [vmem:[%s0 + $0x1c8] sm:$0xff]
  %v78 = vld [vmem:[%s0 + $0x1d0] sm:$0xff]
  %v79 = vld [vmem:[%s0 + $0x1d8] sm:$0xff]
  %v80 = vld [vmem:[%s0 + $0x1e0] sm:$0xff]
  %v81 = vld [vmem:[%s0 + $0x1e8] sm:$0xff]
  %v82 = vld [vmem:[%s0 + $0x1f0] sm:$0xff]
  %v83 = vld [vmem:[%s0 + $0x1f8] sm:$0xff]
  %v84 = vld [vmem:[%s0 + $0x200] sm:$0xff]
  %v85 = vld [vmem:[%s0 + $0x208] sm:$0xff]
  %v86 = vld [vmem:[%s0 + $0x210] sm:$0xff]
  %v87 = vld [vmem:[%s0 + $0x218] sm:$0xff]
  %v88 = vld [vmem:[%s0 + $0x220] sm:$0xff]
  %v89 = vld [vmem:[%s0 + $0x228] sm:$0xff]
  %v90 = vld [vmem:[%s0 + $0x230] sm:$0xff]
  %v91 = vld [vmem:[%s0 + $0x238] sm:$0xff]
  %v92 = vld [vmem:[%s0 + $0x240] sm:$0xff]
  %v93 = vld [vmem:[%s0 + $0x248] sm:$0xff]
  %v94 = vld [vmem:[%s0 + $0x250] sm:$0xff]
  %v95 = vld [vmem:[%s0 + $0x258] sm:$0xff]
  %v96 = vld [vmem:[%s0 + $0x260] sm:$0xff]
  %v97 = vld [vmem:[%s0 + $0x268] sm:$0xff]
  %v98 = vld [vmem:[%s0 + $0x270] sm:$0xff]
  %v99 = vld [vmem:[%s0 + $0x278] sm:$0xff]
  %v100 = vld [vmem:[%s0 + $0x280] sm:$0xff]
  %v101 = vld [vmem:[%s0 + $0x288] sm:$0xff]
  %v102 = vld [vmem:[%s0 + $0x290] sm:$0xff]
  %v103 = vld [vmem:[%s0 + $0x298] sm:$0xff]
  %v104 = vld [vmem:[%s0 + $0x2a0] sm:$0xff]
  %v105 = vld [vmem:[%s0 + $0x2a8] sm:$0xff]
  %v106 = vld [vmem:[%s0 + $0x2b0] sm:$0xff]
  %v107 = vld [vmem:[%s0 + $0x2b8] sm:$0xff]
  %v108 = vld [vmem:[%s0 + $0x2c0] sm:$0xff]
  %v109 = vld [vmem:[%s0 + $0x2c8] sm:$0xff]
  %v110 = vld [vmem:[%s0 + $0x2d0] sm:$0xff]
  %v111 = vld [vmem:[%s0 + $0x2d8] sm:$0xff]
  %v112 = vld [vmem:[%s0 + $0x2e0] sm:$0xff]
  %v113 = vld [vmem:[%s0 + $0x2e8] sm:$0xff]
  %v114 = vld [vmem:[%s0 + $0x2f0] sm:$0xff]
  %v115 = vld [vmem:[%s0 + $0x2f8] sm:$0xff]
  %v116 = vld [vmem:[%s0 + $0x300] sm:$0xff]
  %v117 = vld [vmem:[%s0 + $0x308] sm:$0xff]
  %v118 = vld [vmem:[%s0 + $0x310] sm:$0xff]
  %v119 = vld [vmem:[%s0 + $0x318] sm:$0xff]
  %v120 = vld [vmem:[%s0 + $0x320] sm:$0xff]
  %v121 = vld [vmem:[%s0 + $0x328] sm:$0xff]
  %v122 = vld [vmem:[%s0 + $0x330] sm:$0xff]
  %v123 = vld [vmem:[%s0 + $0x338] sm:$0xff]
  %v124 = vld [vmem:[%s0 + $0x340] sm:$0xff]
  %v125 = vld [vmem:[%s0 + $0x348] sm:$0xff]
  %v126 = vld [vmem:[%s0 + $0x350] sm:$0xff]
  %v127 = vld [vmem:[%s0 + $0x358] sm:$0xff]
  %v128 = vld [vmem:[%s0 + $0x360] sm:$0xff]
  %v129 = vld [vmem:[%s0 + $0x368] sm:$0xff]
  %v130 = vld [vmem:[%s0 + $0x370] sm:$0xff]
  %v131 = vld [vmem:[%s0 + $0x378] sm:$0xff]
  %v132 = vld [vmem:[%s0 + $0x380] sm:$0xff]
  %v133 = vld [vmem:[%s0 + $0x388] sm:$0xff]
  %v134 = vld [vmem:[%s0 + $0x390] sm:$0xff]
  %v135 = vld [vmem:[%s0 + $0x398] sm:$0xff]
  %v136 = vld [vmem:[%s0 + $0x3a0] sm:$0xff]
  %v137 = vld [vmem:[%s0 + $0x3a8] sm:$0xff]
  %v138 = vld [vmem:[%s0 + $0x3b0] sm:$0xff]
  %v139 = vld [vmem:[%s0 + $0x3b8] sm:$0xff]
  %v140 = vld [vmem:[%s0 + $0x3c0] sm:$0xff]
  %v141 = vld [vmem:[%s0 + $0x3c8] sm:$0xff]
  %v142 = vld [vmem:[%s0 + $0x3d0] sm:$0xff]
  %v143 = vld [vmem:[%s0 + $0x3d8] sm:$0xff]
  %v144 = vld [vmem:[%s0 + $0x3e0] sm:$0xff]
  %v145 = vld [vmem:[%s0 + $0x3e8] sm:$0xff]
  %v146 = vld [vmem:[%s0 + $0x3f0] sm:$0xff]
  %v147 = vld [vmem:[%s0 + $0x3f8] sm:$0xff]
  %v148 = vld [vmem:[%s0 + $0x400] sm:$0xff]
  %v149 = vld [vmem:[%s0 + $0x408] sm:$0xff]
  %v150 = vld [vmem:[%s0 + $0x410] sm:$0xff]
  %v151 = vld [vmem:[%s0 + $0x418] sm:$0xff]
  %v152 = vld [vmem:[%s0 + $0x420] sm:$0xff]
  %v153 = vld [vmem:[%s0 + $0x428] sm:$0xff]
  %v154 = vld [vmem:[%s0 + $0x430] sm:$0xff]
  %v155 = vld [vmem:[%s0 + $0x438] sm:$0xff]
  %v156 = vld [vmem:[%s0 + $0x440] sm:$0xff]
  %v157 = vld [vmem:[%s0 + $0x448] sm:$0xff]
  %v158 = vld [vmem:[%s0 + $0x450] sm:$0xff]
  %v159 = vld [vmem:[%s0 + $0x458] sm:$0xff]
  %v160 = vld [vmem:[%s0 + $0x460] sm:$0xff]
  %v161 = vld [vmem:[%s0 + $0x468] sm:$0xff]
  %v162 = vld [vmem:[%s0 + $0x470] sm:$0xff]
  %v163 = vld [vmem:[%s0 + $0x478] sm:$0xff]
  %v164 = vld [vmem:[%s0 + $0x480] sm:$0xff]
  %v165 = vld [vmem:[%s0 + $0x488] sm:$0xff]
  %v166 = vld [vmem:[%s0 + $0x490] sm:$0xff]
  %v167 = vld [vmem:[%s0 + $0x498] sm:$0xff]
  %v168 = vld [vmem:[%s0 + $0x4a0] sm:$0xff]
  %v169 = vld [vmem:[%s0 + $0x4a8] sm:$0xff]
  %v170 = vld [vmem:[%s0 + $0x4b0] sm:$0xff]
  %v171 = vld [vmem:[%s0 + $0x4b8] sm:$0xff]
  %v172 = vld [vmem:[%s0 + $0x4c0] sm:$0xff]
  %v173 = vld [vmem:[%s0 + $0x4c8] sm:$0xff]
  %v174 = vld [vmem:[%s0 + $0x4d0] sm:$0xff]
  %v175 = vld [vmem:[%s0 + $0x4d8] sm:$0xff]
  %v176 = vld [vmem:[%s0 + $0x4e0] sm:$0xff]
  %v177 = vld [vmem:[%s0 + $0x4e8] sm:$0xff]
  %v178 = vld [vmem:[%s0 + $0x4f0] sm:$0xff]
  %v179 = vld [vmem:[%s0 + $0x4f8] sm:$0xff]
  %v180 = vld [vmem:[%s0 + $0x500] sm:$0xff]
  %v181 = vld [vmem:[%s0 + $0x508] sm:$0xff]
  %v182 = vld [vmem:[%s0 + $0x510] sm:$0xff]
  %v183 = vld [vmem:[%s0 + $0x518] sm:$0xff]
  %v184 = vld [vmem:[%s0 + $0x520] sm:$0xff]
  %v185 = vld [vmem:[%s0 + $0x528] sm:$0xff]
  %v186 = vld [vmem:[%s0 + $0x530] sm:$0xff]
  %v187 = vld [vmem:[%s0 + $0x538] sm:$0xff]
  %v188 = vld [vmem:[%s0 + $0x540] sm:$0xff]
  %v189 = vld [vmem:[%s0 + $0x548] sm:$0xff]
  %v190 = vld [vmem:[%s0 + $0x550] sm:$0xff]
  %v191 = vld [vmem:[%s0 + $0x558] sm:$0xff]
  %v192 = vld [vmem:[%s0 + $0x560] sm:$0xff]
  %v193 = vld [vmem:[%s0 + $0x568] sm:$0xff]
  %v194 = vld [vmem:[%s0 + $0x570] sm:$0xff]
  %v195 = vld [vmem:[%s0 + $0x578] sm:$0xff]
  %v196 = vld [vmem:[%s0 + $0x580] sm:$0xff]
  %v197 = vld [vmem:[%s0 + $0x588] sm:$0xff]
  %v198 = vld [vmem:[%s0 + $0x590] sm:$0xff]
  %v199 = vld [vmem:[%s0 + $0x598] sm:$0xff]
  %v200 = vld [vmem:[%s0 + $0x5a0] sm:$0xff]
  %v201 = vld [vmem:[%s0 + $0x5a8] sm:$0xff]
  %v202 = vld [vmem:[%s0 + $0x5b0] sm:$0xff]
  %v203 = vld [vmem:[%s0 + $0x5b8] sm:$0xff]
  %v204 = vld [vmem:[%s0 + $0x5c0] sm:$0xff]
  %v205 = vld [vmem:[%s0 + $0x5c8] sm:$0xff]
  %v206 = vld [vmem:[%s0 + $0x5d0] sm:$0xff]
  %v207 = vld [vmem:[%s0 + $0x5d8] sm:$0xff]
  %v208 = vld [vmem:[%s0 + $0x5e0] sm:$0xff]
  %v209 = vld [vmem:[%s0 + $0x5e8] sm:$0xff]
  %v210 = vld [vmem:[%s0 + $0x5f0] sm:$0xff]
  %v211 = vld [vmem:[%s0 + $0x5f8] sm:$0xff]
  %v212 = vld [vmem:[%s0 + $0x600] sm:$0xff]
  %v213 = vld [vmem:[%s0 + $0x608] sm:$0xff]
  %v214 = vld [vmem:[%s0 + $0x610] sm:$0xff]
  %v215 = vld [vmem:[%s0 + $0x618] sm:$0xff]
  %v216 = vld [vmem:[%s0 + $0x620] sm:$0xff]
  %v217 = vld [vmem:[%s0 + $0x628] sm:$0xff]
  %v218 = vld [vmem:[%s0 + $0x630] sm:$0xff]
  %v219 = vld [vmem:[%s0 + $0x638] sm:$0xff]
  %v220 = vld [vmem:[%s0 + $0x640] sm:$0xff]
  %v221 = vld [vmem:[%s0 + $0x648] sm:$0xff]
  %v222 = vld [vmem:[%s0 + $0x650] sm:$0xff]
  %v223 = vld [vmem:[%s0 + $0x658] sm:$0xff]
  %v224 = vld [vmem:[%s0 + $0x660] sm:$0xff]
  %v225 = vld [vmem:[%s0 + $0x668] sm:$0xff]
  %v226 = vld [vmem:[%s0 + $0x670] sm:$0xff]
  %v227 = vld [vmem:[%s0 + $0x678] sm:$0xff]
  %v228 = vld [vmem:[%s0 + $0x680] sm:$0xff]
  %v229 = vld [vmem:[%s0 + $0x688] sm:$0xff]
  %v230 = vld [vmem:[%s0 + $0x690] sm:$0xff]
  %v231 = vld [vmem:[%s0 + $0x698] sm:$0xff]
  %v232 = vld [vmem:[%s0 + $0x6a0] sm:$0xff]
  %v233 = vld [vmem:[%s0 + $0x6a8] sm:$0xff]
  %v234 = vld [vmem:[%s0 + $0x6b0] sm:$0xff]
  %v235 = vld [vmem:[%s0 + $0x6b8] sm:$0xff]
  %v236 = vld [vmem:[%s0 + $0x6c0] sm:$0xff]
  %v237 = vld [vmem:[%s0 + $0x6c8] sm:$0xff]
  %v238 = vld [vmem:[%s0 + $0x6d0] sm:$0xff]
  %v239 = vld [vmem:[%s0 + $0x6d8] sm:$0xff]
  %v240 = vld [vmem:[%s0 + $0x6e0] sm:$0xff]
  %v241 = vld [vmem:[%s0 + $0x6e8] sm:$0xff]
  %v242 = vld [vmem:[%s0 + $0x6f0] sm:$0xff]
  %v243 = vld [vmem:[%s0 + $0x6f8] sm:$0xff]
  %v244 = vld [vmem:[%s0 + $0x700] sm:$0xff]
  %v245 = vld [vmem:[%s0 + $0x708] sm:$0xff]
  %v246 = vld [vmem:[%s0 + $0x710] sm:$0xff]
  %v247 = vld [vmem:[%s0 + $0x718] sm:$0xff]
  %v248 = vld [vmem:[%s0 + $0x720] sm:$0xff]
  %v249 = vld [vmem:[%s0 + $0x728] sm:$0xff]
  %v250 = vld [vmem:[%s0 + $0x730] sm:$0xff]
  %v251 = vld [vmem:[%s0 + $0x738] sm:$0xff]
  %v252 = vld [vmem:[%s0 + $0x740] sm:$0xff]
  %v253 = vld [vmem:[%s0 + $0x748] sm:$0xff]
  %v254 = vld [vmem:[%s0 + $0x750] sm:$0xff]
  %v255 = vld [vmem:[%s0 + $0x758] sm:$0xff]
  %v256 = vld [vmem:[%s0 + $0x760] sm:$0xff]
  %v257 = vld [vmem:[%s0 + $0x768] sm:$0xff]
  %v258 = vld [vmem:[%s0 + $0x770] sm:$0xff]
  %v259 = vld [vmem:[%s0 + $0x778] sm:$0xff]
  %v260 = vld [vmem:[%s0 + $0x780] sm:$0xff]
  %v261 = vld [vmem:[%s0 + $0x788] sm:$0xff]
  %v262 = vld [vmem:[%s0 + $0x790] sm:$0xff]
  %v263 = vld [vmem:[%s0 + $0x798] sm:$0xff]
  %v264 = vld [vmem:[%s0 + $0x7a0] sm:$0xff]
  %v265 = vld [vmem:[%s0 + $0x7a8] sm:$0xff]
  %v266 = vld [vmem:[%s0 + $0x7b0] sm:$0xff]
  %v267 = vld [vmem:[%s0 + $0x7b8] sm:$0xff]
  %v268 = vld [vmem:[%s0 + $0x7c0] sm:$0xff]
  %v269 = vld [vmem:[%s0 + $0x7c8] sm:$0xff]
  %v270 = vld [vmem:[%s0 + $0x7d0] sm:$0xff]
  %v271 = vld [vmem:[%s0 + $0x7d8] sm:$0xff]
  %v272 = vld [vmem:[%s0 + $0x7e0] sm:$0xff]
  %v273 = vld [vmem:[%s0 + $0x7e8] sm:$0xff]
  %v274 = vld [vmem:[%s0 + $0x7f0] sm:$0xff]
  %v275 = vld [vmem:[%s0 + $0x7f8] sm:$0xff]
  %vm276 = vcmask 556032
  %v277 = vsel %vm276, %v21, 0.0
  %v278 = vadd.f32 %v20, %v277
  %279 = vadd.xlane.f32.xlu0 %v278
  %v280 = vpop.xlane.xlu0 %279
  %v281 = vsel %vm276, %v23, 0.0
  %v282 = vadd.f32 %v22, %v281
  %283 = vadd.xlane.f32.xlu0 %v282
  %v284 = vpop.xlane.xlu0 %283
  %v285 = vsel %vm276, %v25, 0.0
  %v286 = vadd.f32 %v24, %v285
  %287 = vadd.xlane.f32.xlu0 %v286
  %v288 = vpop.xlane.xlu0 %287
  %v289 = vsel %vm276, %v27, 0.0
  %v290 = vadd.f32 %v26, %v289
  %291 = vadd.xlane.f32.xlu0 %v290
  %v292 = vpop.xlane.xlu0 %291
  %v293 = vsel %vm276, %v29, 0.0
  %v294 = vadd.f32 %v28, %v293
  %295 = vadd.xlane.f32.xlu0 %v294
  %v296 = vpop.xlane.xlu0 %295
  %v297 = vsel %vm276, %v31, 0.0
  %v298 = vadd.f32 %v30, %v297
  %299 = vadd.xlane.f32.xlu0 %v298
  %v300 = vpop.xlane.xlu0 %299
  %v301 = vsel %vm276, %v33, 0.0
  %v302 = vadd.f32 %v32, %v301
  %303 = vadd.xlane.f32.xlu0 %v302
  %v304 = vpop.xlane.xlu0 %303
  %v305 = vsel %vm276, %v35, 0.0
  %v306 = vadd.f32 %v34, %v305
  %307 = vadd.xlane.f32.xlu0 %v306
  %v308 = vpop.xlane.xlu0 %307
  %v309 = vsel %vm276, %v37, 0.0
  %v310 = vadd.f32 %v36, %v309
  %311 = vadd.xlane.f32.xlu0 %v310
  %v312 = vpop.xlane.xlu0 %311
  %v313 = vsel %vm276, %v39, 0.0
  %v314 = vadd.f32 %v38, %v313
  %315 = vadd.xlane.f32.xlu0 %v314
  %v316 = vpop.xlane.xlu0 %315
  %v317 = vsel %vm276, %v41, 0.0
  %v318 = vadd.f32 %v40, %v317
  %319 = vadd.xlane.f32.xlu0 %v318
  %v320 = vpop.xlane.xlu0 %319
  %v321 = vsel %vm276, %v43, 0.0
  %v322 = vadd.f32 %v42, %v321
  %323 = vadd.xlane.f32.xlu0 %v322
  %v324 = vpop.xlane.xlu0 %323
  %v325 = vsel %vm276, %v45, 0.0
  %v326 = vadd.f32 %v44, %v325
  %327 = vadd.xlane.f32.xlu0 %v326
  %v328 = vpop.xlane.xlu0 %327
  %v329 = vsel %vm276, %v47, 0.0
  %v330 = vadd.f32 %v46, %v329
  %331 = vadd.xlane.f32.xlu0 %v330
  %v332 = vpop.xlane.xlu0 %331
  %v333 = vsel %vm276, %v49, 0.0
  %v334 = vadd.f32 %v48, %v333
  %335 = vadd.xlane.f32.xlu0 %v334
  %v336 = vpop.xlane.xlu0 %335
  %v337 = vsel %vm276, %v51, 0.0
  %v338 = vadd.f32 %v50, %v337
  %339 = vadd.xlane.f32.xlu0 %v338
  %v340 = vpop.xlane.xlu0 %339
  %v341 = vsel %vm276, %v53, 0.0
  %v342 = vadd.f32 %v52, %v341
  %343 = vadd.xlane.f32.xlu0 %v342
  %v344 = vpop.xlane.xlu0 %343
  %v345 = vsel %vm276, %v55, 0.0
  %v346 = vadd.f32 %v54, %v345
  %347 = vadd.xlane.f32.xlu0 %v346
  %v348 = vpop.xlane.xlu0 %347
  %v349 = vsel %vm276, %v57, 0.0
  %v350 = vadd.f32 %v56, %v349
  %351 = vadd.xlane.f32.xlu0 %v350
  %v352 = vpop.xlane.xlu0 %351
  %v353 = vsel %vm276, %v59, 0.0
  %v354 = vadd.f32 %v58, %v353
  %355 = vadd.xlane.f32.xlu0 %v354
  %v356 = vpop.xlane.xlu0 %355
  %v357 = vsel %vm276, %v61, 0.0
  %v358 = vadd.f32 %v60, %v357
  %359 = vadd.xlane.f32.xlu0 %v358
  %v360 = vpop.xlane.xlu0 %359
  %v361 = vsel %vm276, %v63, 0.0
  %v362 = vadd.f32 %v62, %v361
  %363 = vadd.xlane.f32.xlu0 %v362
  %v364 = vpop.xlane.xlu0 %363
  %v365 = vsel %vm276, %v65, 0.0
  %v366 = vadd.f32 %v64, %v365
  %367 = vadd.xlane.f32.xlu0 %v366
  %v368 = vpop.xlane.xlu0 %367
  %v369 = vsel %vm276, %v67, 0.0
  %v370 = vadd.f32 %v66, %v369
  %371 = vadd.xlane.f32.xlu0 %v370
  %v372 = vpop.xlane.xlu0 %371
  %v373 = vsel %vm276, %v69, 0.0
  %v374 = vadd.f32 %v68, %v373
  %375 = vadd.xlane.f32.xlu0 %v374
  %v376 = vpop.xlane.xlu0 %375
  %v377 = vsel %vm276, %v71, 0.0
  %v378 = vadd.f32 %v70, %v377
  %379 = vadd.xlane.f32.xlu0 %v378
  %v380 = vpop.xlane.xlu0 %379
  %v381 = vsel %vm276, %v73, 0.0
  %v382 = vadd.f32 %v72, %v381
  %383 = vadd.xlane.f32.xlu0 %v382
  %v384 = vpop.xlane.xlu0 %383
  %v385 = vsel %vm276, %v75, 0.0
  %v386 = vadd.f32 %v74, %v385
  %387 = vadd.xlane.f32.xlu0 %v386
  %v388 = vpop.xlane.xlu0 %387
  %v389 = vsel %vm276, %v77, 0.0
  %v390 = vadd.f32 %v76, %v389
  %391 = vadd.xlane.f32.xlu0 %v390
  %v392 = vpop.xlane.xlu0 %391
  %v393 = vsel %vm276, %v79, 0.0
  %v394 = vadd.f32 %v78, %v393
  %395 = vadd.xlane.f32.xlu0 %v394
  %v396 = vpop.xlane.xlu0 %395
  %v397 = vsel %vm276, %v81, 0.0
  %v398 = vadd.f32 %v80, %v397
  %399 = vadd.xlane.f32.xlu0 %v398
  %v400 = vpop.xlane.xlu0 %399
  %v401 = vsel %vm276, %v83, 0.0
  %v402 = vadd.f32 %v82, %v401
  %403 = vadd.xlane.f32.xlu0 %v402
  %v404 = vpop.xlane.xlu0 %403
  %v405 = vsel %vm276, %v85, 0.0
  %v406 = vadd.f32 %v84, %v405
  %407 = vadd.xlane.f32.xlu0 %v406
  %v408 = vpop.xlane.xlu0 %407
  %v409 = vsel %vm276, %v87, 0.0
  %v410 = vadd.f32 %v86, %v409
  %411 = vadd.xlane.f32.xlu0 %v410
  %v412 = vpop.xlane.xlu0 %411
  %v413 = vsel %vm276, %v89, 0.0
  %v414 = vadd.f32 %v88, %v413
  %415 = vadd.xlane.f32.xlu0 %v414
  %v416 = vpop.xlane.xlu0 %415
  %v417 = vsel %vm276, %v91, 0.0
  %v418 = vadd.f32 %v90, %v417
  %419 = vadd.xlane.f32.xlu0 %v418
  %v420 = vpop.xlane.xlu0 %419
  %v421 = vsel %vm276, %v93, 0.0
  %v422 = vadd.f32 %v92, %v421
  %423 = vadd.xlane.f32.xlu0 %v422
  %v424 = vpop.xlane.xlu0 %423
  %v425 = vsel %vm276, %v95, 0.0
  %v426 = vadd.f32 %v94, %v425
  %427 = vadd.xlane.f32.xlu0 %v426
  %v428 = vpop.xlane.xlu0 %427
  %v429 = vsel %vm276, %v97, 0.0
  %v430 = vadd.f32 %v96, %v429
  %431 = vadd.xlane.f32.xlu0 %v430
  %v432 = vpop.xlane.xlu0 %431
  %v433 = vsel %vm276, %v99, 0.0
  %v434 = vadd.f32 %v98, %v433
  %435 = vadd.xlane.f32.xlu0 %v434
  %v436 = vpop.xlane.xlu0 %435
  %v437 = vsel %vm276, %v101, 0.0
  %v438 = vadd.f32 %v100, %v437
  %439 = vadd.xlane.f32.xlu0 %v438
  %v440 = vpop.xlane.xlu0 %439
  %v441 = vsel %vm276, %v103, 0.0
  %v442 = vadd.f32 %v102, %v441
  %443 = vadd.xlane.f32.xlu0 %v442
  %v444 = vpop.xlane.xlu0 %443
  %v445 = vsel %vm276, %v105, 0.0
  %v446 = vadd.f32 %v104, %v445
  %447 = vadd.xlane.f32.xlu0 %v446
  %v448 = vpop.xlane.xlu0 %447
  %v449 = vsel %vm276, %v107, 0.0
  %v450 = vadd.f32 %v106, %v449
  %451 = vadd.xlane.f32.xlu0 %v450
  %v452 = vpop.xlane.xlu0 %451
  %v453 = vsel %vm276, %v109, 0.0
  %v454 = vadd.f32 %v108, %v453
  %455 = vadd.xlane.f32.xlu0 %v454
  %v456 = vpop.xlane.xlu0 %455
  %v457 = vsel %vm276, %v111, 0.0
  %v458 = vadd.f32 %v110, %v457
  %459 = vadd.xlane.f32.xlu0 %v458
  %v460 = vpop.xlane.xlu0 %459
  %v461 = vsel %vm276, %v113, 0.0
  %v462 = vadd.f32 %v112, %v461
  %463 = vadd.xlane.f32.xlu0 %v462
  %v464 = vpop.xlane.xlu0 %463
  %v465 = vsel %vm276, %v115, 0.0
  %v466 = vadd.f32 %v114, %v465
  %467 = vadd.xlane.f32.xlu0 %v466
  %v468 = vpop.xlane.xlu0 %467
  %v469 = vsel %vm276, %v117, 0.0
  %v470 = vadd.f32 %v116, %v469
  %471 = vadd.xlane.f32.xlu0 %v470
  %v472 = vpop.xlane.xlu0 %471
  %v473 = vsel %vm276, %v119, 0.0
  %v474 = vadd.f32 %v118, %v473
  %475 = vadd.xlane.f32.xlu0 %v474
  %v476 = vpop.xlane.xlu0 %475
  %v477 = vsel %vm276, %v121, 0.0
  %v478 = vadd.f32 %v120, %v477
  %479 = vadd.xlane.f32.xlu0 %v478
  %v480 = vpop.xlane.xlu0 %479
  %v481 = vsel %vm276, %v123, 0.0
  %v482 = vadd.f32 %v122, %v481
  %483 = vadd.xlane.f32.xlu0 %v482
  %v484 = vpop.xlane.xlu0 %483
  %v485 = vsel %vm276, %v125, 0.0
  %v486 = vadd.f32 %v124, %v485
  %487 = vadd.xlane.f32.xlu0 %v486
  %v488 = vpop.xlane.xlu0 %487
  %v489 = vsel %vm276, %v127, 0.0
  %v490 = vadd.f32 %v126, %v489
  %491 = vadd.xlane.f32.xlu0 %v490
  %v492 = vpop.xlane.xlu0 %491
  %v493 = vsel %vm276, %v129, 0.0
  %v494 = vadd.f32 %v128, %v493
  %495 = vadd.xlane.f32.xlu0 %v494
  %v496 = vpop.xlane.xlu0 %495
  %v497 = vsel %vm276, %v131, 0.0
  %v498 = vadd.f32 %v130, %v497
  %499 = vadd.xlane.f32.xlu0 %v498
  %v500 = vpop.xlane.xlu0 %499
  %v501 = vsel %vm276, %v133, 0.0
  %v502 = vadd.f32 %v132, %v501
  %503 = vadd.xlane.f32.xlu0 %v502
  %v504 = vpop.xlane.xlu0 %503
  %v505 = vsel %vm276, %v135, 0.0
  %v506 = vadd.f32 %v134, %v505
  %507 = vadd.xlane.f32.xlu0 %v506
  %v508 = vpop.xlane.xlu0 %507
  %v509 = vsel %vm276, %v137, 0.0
  %v510 = vadd.f32 %v136, %v509
  %511 = vadd.xlane.f32.xlu0 %v510
  %v512 = vpop.xlane.xlu0 %511
  %v513 = vsel %vm276, %v139, 0.0
  %v514 = vadd.f32 %v138, %v513
  %515 = vadd.xlane.f32.xlu0 %v514
  %v516 = vpop.xlane.xlu0 %515
  %v517 = vsel %vm276, %v141, 0.0
  %v518 = vadd.f32 %v140, %v517
  %519 = vadd.xlane.f32.xlu0 %v518
  %v520 = vpop.xlane.xlu0 %519
  %v521 = vsel %vm276, %v143, 0.0
  %v522 = vadd.f32 %v142, %v521
  %523 = vadd.xlane.f32.xlu0 %v522
  %v524 = vpop.xlane.xlu0 %523
  %v525 = vsel %vm276, %v145, 0.0
  %v526 = vadd.f32 %v144, %v525
  %527 = vadd.xlane.f32.xlu0 %v526
  %v528 = vpop.xlane.xlu0 %527
  %v529 = vsel %vm276, %v147, 0.0
  %v530 = vadd.f32 %v146, %v529
  %531 = vadd.xlane.f32.xlu0 %v530
  %v532 = vpop.xlane.xlu0 %531
  %v533 = vsel %vm276, %v149, 0.0
  %v534 = vadd.f32 %v148, %v533
  %535 = vadd.xlane.f32.xlu0 %v534
  %v536 = vpop.xlane.xlu0 %535
  %v537 = vsel %vm276, %v151, 0.0
  %v538 = vadd.f32 %v150, %v537
  %539 = vadd.xlane.f32.xlu0 %v538
  %v540 = vpop.xlane.xlu0 %539
  %v541 = vsel %vm276, %v153, 0.0
  %v542 = vadd.f32 %v152, %v541
  %543 = vadd.xlane.f32.xlu0 %v542
  %v544 = vpop.xlane.xlu0 %543
  %v545 = vsel %vm276, %v155, 0.0
  %v546 = vadd.f32 %v154, %v545
  %547 = vadd.xlane.f32.xlu0 %v546
  %v548 = vpop.xlane.xlu0 %547
  %v549 = vsel %vm276, %v157, 0.0
  %v550 = vadd.f32 %v156, %v549
  %551 = vadd.xlane.f32.xlu0 %v550
  %v552 = vpop.xlane.xlu0 %551
  %v553 = vsel %vm276, %v159, 0.0
  %v554 = vadd.f32 %v158, %v553
  %555 = vadd.xlane.f32.xlu0 %v554
  %v556 = vpop.xlane.xlu0 %555
  %v557 = vsel %vm276, %v161, 0.0
  %v558 = vadd.f32 %v160, %v557
  %559 = vadd.xlane.f32.xlu0 %v558
  %v560 = vpop.xlane.xlu0 %559
  %v561 = vsel %vm276, %v163, 0.0
  %v562 = vadd.f32 %v162, %v561
  %563 = vadd.xlane.f32.xlu0 %v562
  %v564 = vpop.xlane.xlu0 %563
  %v565 = vsel %vm276, %v165, 0.0
  %v566 = vadd.f32 %v164, %v565
  %567 = vadd.xlane.f32.xlu0 %v566
  %v568 = vpop.xlane.xlu0 %567
  %v569 = vsel %vm276, %v167, 0.0
  %v570 = vadd.f32 %v166, %v569
  %571 = vadd.xlane.f32.xlu0 %v570
  %v572 = vpop.xlane.xlu0 %571
  %v573 = vsel %vm276, %v169, 0.0
  %v574 = vadd.f32 %v168, %v573
  %575 = vadd.xlane.f32.xlu0 %v574
  %v576 = vpop.xlane.xlu0 %575
  %v577 = vsel %vm276, %v171, 0.0
  %v578 = vadd.f32 %v170, %v577
  %579 = vadd.xlane.f32.xlu0 %v578
  %v580 = vpop.xlane.xlu0 %579
  %v581 = vsel %vm276, %v173, 0.0
  %v582 = vadd.f32 %v172, %v581
  %583 = vadd.xlane.f32.xlu0 %v582
  %v584 = vpop.xlane.xlu0 %583
  %v585 = vsel %vm276, %v175, 0.0
  %v586 = vadd.f32 %v174, %v585
  %587 = vadd.xlane.f32.xlu0 %v586
  %v588 = vpop.xlane.xlu0 %587
  %v589 = vsel %vm276, %v177, 0.0
  %v590 = vadd.f32 %v176, %v589
  %591 = vadd.xlane.f32.xlu0 %v590
  %v592 = vpop.xlane.xlu0 %591
  %v593 = vsel %vm276, %v179, 0.0
  %v594 = vadd.f32 %v178, %v593
  %595 = vadd.xlane.f32.xlu0 %v594
  %v596 = vpop.xlane.xlu0 %595
  %v597 = vsel %vm276, %v181, 0.0
  %v598 = vadd.f32 %v180, %v597
  %599 = vadd.xlane.f32.xlu0 %v598
  %v600 = vpop.xlane.xlu0 %599
  %v601 = vsel %vm276, %v183, 0.0
  %v602 = vadd.f32 %v182, %v601
  %603 = vadd.xlane.f32.xlu0 %v602
  %v604 = vpop.xlane.xlu0 %603
  %v605 = vsel %vm276, %v185, 0.0
  %v606 = vadd.f32 %v184, %v605
  %607 = vadd.xlane.f32.xlu0 %v606
  %v608 = vpop.xlane.xlu0 %607
  %v609 = vsel %vm276, %v187, 0.0
  %v610 = vadd.f32 %v186, %v609
  %611 = vadd.xlane.f32.xlu0 %v610
  %v612 = vpop.xlane.xlu0 %611
  %v613 = vsel %vm276, %v189, 0.0
  %v614 = vadd.f32 %v188, %v613
  %615 = vadd.xlane.f32.xlu0 %v614
  %v616 = vpop.xlane.xlu0 %615
  %v617 = vsel %vm276, %v191, 0.0
  %v618 = vadd.f32 %v190, %v617
  %619 = vadd.xlane.f32.xlu0 %v618
  %v620 = vpop.xlane.xlu0 %619
  %v621 = vsel %vm276, %v193, 0.0
  %v622 = vadd.f32 %v192, %v621
  %623 = vadd.xlane.f32.xlu0 %v622
  %v624 = vpop.xlane.xlu0 %623
  %v625 = vsel %vm276, %v195, 0.0
  %v626 = vadd.f32 %v194, %v625
  %627 = vadd.xlane.f32.xlu0 %v626
  %v628 = vpop.xlane.xlu0 %627
  %v629 = vsel %vm276, %v197, 0.0
  %v630 = vadd.f32 %v196, %v629
  %631 = vadd.xlane.f32.xlu0 %v630
  %v632 = vpop.xlane.xlu0 %631
  %v633 = vsel %vm276, %v199, 0.0
  %v634 = vadd.f32 %v198, %v633
  %635 = vadd.xlane.f32.xlu0 %v634
  %v636 = vpop.xlane.xlu0 %635
  %v637 = vsel %vm276, %v201, 0.0
  %v638 = vadd.f32 %v200, %v637
  %639 = vadd.xlane.f32.xlu0 %v638
  %v640 = vpop.xlane.xlu0 %639
  %v641 = vsel %vm276, %v203, 0.0
  %v642 = vadd.f32 %v202, %v641
  %643 = vadd.xlane.f32.xlu0 %v642
  %v644 = vpop.xlane.xlu0 %643
  %v645 = vsel %vm276, %v205, 0.0
  %v646 = vadd.f32 %v204, %v645
  %647 = vadd.xlane.f32.xlu0 %v646
  %v648 = vpop.xlane.xlu0 %647
  %v649 = vsel %vm276, %v207, 0.0
  %v650 = vadd.f32 %v206, %v649
  %651 = vadd.xlane.f32.xlu0 %v650
  %v652 = vpop.xlane.xlu0 %651
  %v653 = vsel %vm276, %v209, 0.0
  %v654 = vadd.f32 %v208, %v653
  %655 = vadd.xlane.f32.xlu0 %v654
  %v656 = vpop.xlane.xlu0 %655
  %v657 = vsel %vm276, %v211, 0.0
  %v658 = vadd.f32 %v210, %v657
  %659 = vadd.xlane.f32.xlu0 %v658
  %v660 = vpop.xlane.xlu0 %659
  %v661 = vsel %vm276, %v213, 0.0
  %v662 = vadd.f32 %v212, %v661
  %663 = vadd.xlane.f32.xlu0 %v662
  %v664 = vpop.xlane.xlu0 %663
  %v665 = vsel %vm276, %v215, 0.0
  %v666 = vadd.f32 %v214, %v665
  %667 = vadd.xlane.f32.xlu0 %v666
  %v668 = vpop.xlane.xlu0 %667
  %v669 = vsel %vm276, %v217, 0.0
  %v670 = vadd.f32 %v216, %v669
  %671 = vadd.xlane.f32.xlu0 %v670
  %v672 = vpop.xlane.xlu0 %671
  %v673 = vsel %vm276, %v219, 0.0
  %v674 = vadd.f32 %v218, %v673
  %675 = vadd.xlane.f32.xlu0 %v674
  %v676 = vpop.xlane.xlu0 %675
  %v677 = vsel %vm276, %v221, 0.0
  %v678 = vadd.f32 %v220, %v677
  %679 = vadd.xlane.f32.xlu0 %v678
  %v680 = vpop.xlane.xlu0 %679
  %v681 = vsel %vm276, %v223, 0.0
  %v682 = vadd.f32 %v222, %v681
  %683 = vadd.xlane.f32.xlu0 %v682
  %v684 = vpop.xlane.xlu0 %683
  %v685 = vsel %vm276, %v225, 0.0
  %v686 = vadd.f32 %v224, %v685
  %687 = vadd.xlane.f32.xlu0 %v686
  %v688 = vpop.xlane.xlu0 %687
  %v689 = vsel %vm276, %v227, 0.0
  %v690 = vadd.f32 %v226, %v689
  %691 = vadd.xlane.f32.xlu0 %v690
  %v692 = vpop.xlane.xlu0 %691
  %v693 = vsel %vm276, %v229, 0.0
  %v694 = vadd.f32 %v228, %v693
  %695 = vadd.xlane.f32.xlu0 %v694
  %v696 = vpop.xlane.xlu0 %695
  %v697 = vsel %vm276, %v231, 0.0
  %v698 = vadd.f32 %v230, %v697
  %699 = vadd.xlane.f32.xlu0 %v698
  %v700 = vpop.xlane.xlu0 %699
  %v701 = vsel %vm276, %v233, 0.0
  %v702 = vadd.f32 %v232, %v701
  %703 = vadd.xlane.f32.xlu0 %v702
  %v704 = vpop.xlane.xlu0 %703
  %v705 = vsel %vm276, %v235, 0.0
  %v706 = vadd.f32 %v234, %v705
  %707 = vadd.xlane.f32.xlu0 %v706
  %v708 = vpop.xlane.xlu0 %707
  %v709 = vsel %vm276, %v237, 0.0
  %v710 = vadd.f32 %v236, %v709
  %711 = vadd.xlane.f32.xlu0 %v710
  %v712 = vpop.xlane.xlu0 %711
  %v713 = vsel %vm276, %v239, 0.0
  %v714 = vadd.f32 %v238, %v713
  %715 = vadd.xlane.f32.xlu0 %v714
  %v716 = vpop.xlane.xlu0 %715
  %v717 = vsel %vm276, %v241, 0.0
  %v718 = vadd.f32 %v240, %v717
  %719 = vadd.xlane.f32.xlu0 %v718
  %v720 = vpop.xlane.xlu0 %719
  %v721 = vsel %vm276, %v243, 0.0
  %v722 = vadd.f32 %v242, %v721
  %723 = vadd.xlane.f32.xlu0 %v722
  %v724 = vpop.xlane.xlu0 %723
  %v725 = vsel %vm276, %v245, 0.0
  %v726 = vadd.f32 %v244, %v725
  %727 = vadd.xlane.f32.xlu0 %v726
  %v728 = vpop.xlane.xlu0 %727
  %v729 = vsel %vm276, %v247, 0.0
  %v730 = vadd.f32 %v246, %v729
  %731 = vadd.xlane.f32.xlu0 %v730
  %v732 = vpop.xlane.xlu0 %731
  %v733 = vsel %vm276, %v249, 0.0
  %v734 = vadd.f32 %v248, %v733
  %735 = vadd.xlane.f32.xlu0 %v734
  %v736 = vpop.xlane.xlu0 %735
  %v737 = vsel %vm276, %v251, 0.0
  %v738 = vadd.f32 %v250, %v737
  %739 = vadd.xlane.f32.xlu0 %v738
  %v740 = vpop.xlane.xlu0 %739
  %v741 = vsel %vm276, %v253, 0.0
  %v742 = vadd.f32 %v252, %v741
  %743 = vadd.xlane.f32.xlu0 %v742
  %v744 = vpop.xlane.xlu0 %743
  %v745 = vsel %vm276, %v255, 0.0
  %v746 = vadd.f32 %v254, %v745
  %747 = vadd.xlane.f32.xlu0 %v746
  %v748 = vpop.xlane.xlu0 %747
  %v749 = vsel %vm276, %v257, 0.0
  %v750 = vadd.f32 %v256, %v749
  %751 = vadd.xlane.f32.xlu0 %v750
  %v752 = vpop.xlane.xlu0 %751
  %v753 = vsel %vm276, %v259, 0.0
  %v754 = vadd.f32 %v258, %v753
  %755 = vadd.xlane.f32.xlu0 %v754
  %v756 = vpop.xlane.xlu0 %755
  %v757 = vsel %vm276, %v261, 0.0
  %v758 = vadd.f32 %v260, %v757
  %759 = vadd.xlane.f32.xlu0 %v758
  %v760 = vpop.xlane.xlu0 %759
  %v761 = vsel %vm276, %v263, 0.0
  %v762 = vadd.f32 %v262, %v761
  %763 = vadd.xlane.f32.xlu0 %v762
  %v764 = vpop.xlane.xlu0 %763
  %v765 = vsel %vm276, %v265, 0.0
  %v766 = vadd.f32 %v264, %v765
  %767 = vadd.xlane.f32.xlu0 %v766
  %v768 = vpop.xlane.xlu0 %767
  %v769 = vsel %vm276, %v267, 0.0
  %v770 = vadd.f32 %v266, %v769
  %771 = vadd.xlane.f32.xlu0 %v770
  %v772 = vpop.xlane.xlu0 %771
  %v773 = vsel %vm276, %v269, 0.0
  %v774 = vadd.f32 %v268, %v773
  %775 = vadd.xlane.f32.xlu0 %v774
  %v776 = vpop.xlane.xlu0 %775
  %v777 = vsel %vm276, %v271, 0.0
  %v778 = vadd.f32 %v270, %v777
  %779 = vadd.xlane.f32.xlu0 %v778
  %v780 = vpop.xlane.xlu0 %779
  %v781 = vsel %vm276, %v273, 0.0
  %v782 = vadd.f32 %v272, %v781
  %783 = vadd.xlane.f32.xlu0 %v782
  %v784 = vpop.xlane.xlu0 %783
  %v785 = vsel %vm276, %v275, 0.0
  %v786 = vadd.f32 %v274, %v785
  %787 = vadd.xlane.f32.xlu0 %v786
  %v788 = vpop.xlane.xlu0 %787
  %v789 = vmul.f32 %v280, 0.0051020407
  %v790 = vmul.f32 %v284, 0.0051020407
  %v791 = vmul.f32 %v288, 0.0051020407
  %v792 = vmul.f32 %v292, 0.0051020407
  %v793 = vmul.f32 %v296, 0.0051020407
  %v794 = vmul.f32 %v300, 0.0051020407
  %v795 = vmul.f32 %v304, 0.0051020407
  %v796 = vmul.f32 %v308, 0.0051020407
  %v797 = vmul.f32 %v312, 0.0051020407
  %v798 = vmul.f32 %v316, 0.0051020407
  %v799 = vmul.f32 %v320, 0.0051020407
  %v800 = vmul.f32 %v324, 0.0051020407
  %v801 = vmul.f32 %v328, 0.0051020407
  %v802 = vmul.f32 %v332, 0.0051020407
  %v803 = vmul.f32 %v336, 0.0051020407
  %v804 = vmul.f32 %v340, 0.0051020407
  %v805 = vmul.f32 %v344, 0.0051020407
  %v806 = vmul.f32 %v348, 0.0051020407
  %v807 = vmul.f32 %v352, 0.0051020407
  %v808 = vmul.f32 %v356, 0.0051020407
  %v809 = vmul.f32 %v360, 0.0051020407
  %v810 = vmul.f32 %v364, 0.0051020407
  %v811 = vmul.f32 %v368, 0.0051020407
  %v812 = vmul.f32 %v372, 0.0051020407
  %v813 = vmul.f32 %v376, 0.0051020407
  %v814 = vmul.f32 %v380, 0.0051020407
  %v815 = vmul.f32 %v384, 0.0051020407
  %v816 = vmul.f32 %v388, 0.0051020407
  %v817 = vmul.f32 %v392, 0.0051020407
  %v818 = vmul.f32 %v396, 0.0051020407
  %v819 = vmul.f32 %v400, 0.0051020407
  %v820 = vmul.f32 %v404, 0.0051020407
  %v821 = vmul.f32 %v408, 0.0051020407
  %v822 = vmul.f32 %v412, 0.0051020407
  %v823 = vmul.f32 %v416, 0.0051020407
  %v824 = vmul.f32 %v420, 0.0051020407
  %v825 = vmul.f32 %v424, 0.0051020407
  %v826 = vmul.f32 %v428, 0.0051020407
  %v827 = vmul.f32 %v432, 0.0051020407
  %v828 = vmul.f32 %v436, 0.0051020407
  %v829 = vmul.f32 %v440, 0.0051020407
  %v830 = vmul.f32 %v444, 0.0051020407
  %v831 = vmul.f32 %v448, 0.0051020407
  %v832 = vmul.f32 %v452, 0.0051020407
  %v833 = vmul.f32 %v456, 0.0051020407
  %v834 = vmul.f32 %v460, 0.0051020407
  %v835 = vmul.f32 %v464, 0.0051020407
  %v836 = vmul.f32 %v468, 0.0051020407
  %v837 = vmul.f32 %v472, 0.0051020407
  %v838 = vmul.f32 %v476, 0.0051020407
  %v839 = vmul.f32 %v480, 0.0051020407
  %v840 = vmul.f32 %v484, 0.0051020407
  %v841 = vmul.f32 %v488, 0.0051020407
  %v842 = vmul.f32 %v492, 0.0051020407
  %v843 = vmul.f32 %v496, 0.0051020407
  %v844 = vmul.f32 %v500, 0.0051020407
  %v845 = vmul.f32 %v504, 0.0051020407
  %v846 = vmul.f32 %v508, 0.0051020407
  %v847 = vmul.f32 %v512, 0.0051020407
  %v848 = vmul.f32 %v516, 0.0051020407
  %v849 = vmul.f32 %v520, 0.0051020407
  %v850 = vmul.f32 %v524, 0.0051020407
  %v851 = vmul.f32 %v528, 0.0051020407
  %v852 = vmul.f32 %v532, 0.0051020407
  %v853 = vmul.f32 %v536, 0.0051020407
  %v854 = vmul.f32 %v540, 0.0051020407
  %v855 = vmul.f32 %v544, 0.0051020407
  %v856 = vmul.f32 %v548, 0.0051020407
  %v857 = vmul.f32 %v552, 0.0051020407
  %v858 = vmul.f32 %v556, 0.0051020407
  %v859 = vmul.f32 %v560, 0.0051020407
  %v860 = vmul.f32 %v564, 0.0051020407
  %v861 = vmul.f32 %v568, 0.0051020407
  %v862 = vmul.f32 %v572, 0.0051020407
  %v863 = vmul.f32 %v576, 0.0051020407
  %v864 = vmul.f32 %v580, 0.0051020407
  %v865 = vmul.f32 %v584, 0.0051020407
  %v866 = vmul.f32 %v588, 0.0051020407
  %v867 = vmul.f32 %v592, 0.0051020407
  %v868 = vmul.f32 %v596, 0.0051020407
  %v869 = vmul.f32 %v600, 0.0051020407
  %v870 = vmul.f32 %v604, 0.0051020407
  %v871 = vmul.f32 %v608, 0.0051020407
  %v872 = vmul.f32 %v612, 0.0051020407
  %v873 = vmul.f32 %v616, 0.0051020407
  %v874 = vmul.f32 %v620, 0.0051020407
  %v875 = vmul.f32 %v624, 0.0051020407
  %v876 = vmul.f32 %v628, 0.0051020407
  %v877 = vmul.f32 %v632, 0.0051020407
  %v878 = vmul.f32 %v636, 0.0051020407
  %v879 = vmul.f32 %v640, 0.0051020407
  %v880 = vmul.f32 %v644, 0.0051020407
  %v881 = vmul.f32 %v648, 0.0051020407
  %v882 = vmul.f32 %v652, 0.0051020407
  %v883 = vmul.f32 %v656, 0.0051020407
  %v884 = vmul.f32 %v660, 0.0051020407
  %v885 = vmul.f32 %v664, 0.0051020407
  %v886 = vmul.f32 %v668, 0.0051020407
  %v887 = vmul.f32 %v672, 0.0051020407
  %v888 = vmul.f32 %v676, 0.0051020407
  %v889 = vmul.f32 %v680, 0.0051020407
  %v890 = vmul.f32 %v684, 0.0051020407
  %v891 = vmul.f32 %v688, 0.0051020407
  %v892 = vmul.f32 %v692, 0.0051020407
  %v893 = vmul.f32 %v696, 0.0051020407
  %v894 = vmul.f32 %v700, 0.0051020407
  %v895 = vmul.f32 %v704, 0.0051020407
  %v896 = vmul.f32 %v708, 0.0051020407
  %v897 = vmul.f32 %v712, 0.0051020407
  %v898 = vmul.f32 %v716, 0.0051020407
  %v899 = vmul.f32 %v720, 0.0051020407
  %v900 = vmul.f32 %v724, 0.0051020407
  %v901 = vmul.f32 %v728, 0.0051020407
  %v902 = vmul.f32 %v732, 0.0051020407
  %v903 = vmul.f32 %v736, 0.0051020407
  %v904 = vmul.f32 %v740, 0.0051020407
  %v905 = vmul.f32 %v744, 0.0051020407
  %v906 = vmul.f32 %v748, 0.0051020407
  %v907 = vmul.f32 %v752, 0.0051020407
  %v908 = vmul.f32 %v756, 0.0051020407
  %v909 = vmul.f32 %v760, 0.0051020407
  %v910 = vmul.f32 %v764, 0.0051020407
  %v911 = vmul.f32 %v768, 0.0051020407
  %v912 = vmul.f32 %v772, 0.0051020407
  %v913 = vmul.f32 %v776, 0.0051020407
  %v914 = vmul.f32 %v780, 0.0051020407
  %v915 = vmul.f32 %v784, 0.0051020407
  %v916 = vmul.f32 %v788, 0.0051020407
  %v917 = vmul.f32 %v20, %v20
  %v918 = vmul.f32 %v21, %v21
  %v919 = vmul.f32 %v22, %v22
  %v920 = vmul.f32 %v23, %v23
  %v921 = vmul.f32 %v24, %v24
  %v922 = vmul.f32 %v25, %v25
  %v923 = vmul.f32 %v26, %v26
  %v924 = vmul.f32 %v27, %v27
  %v925 = vmul.f32 %v28, %v28
  %v926 = vmul.f32 %v29, %v29
  %v927 = vmul.f32 %v30, %v30
  %v928 = vmul.f32 %v31, %v31
  %v929 = vmul.f32 %v32, %v32
  %v930 = vmul.f32 %v33, %v33
  %v931 = vmul.f32 %v34, %v34
  %v932 = vmul.f32 %v35, %v35
  %v933 = vmul.f32 %v36, %v36
  %v934 = vmul.f32 %v37, %v37
  %v935 = vmul.f32 %v38, %v38
  %v936 = vmul.f32 %v39, %v39
  %v937 = vmul.f32 %v40, %v40
  %v938 = vmul.f32 %v41, %v41
  %v939 = vmul.f32 %v42, %v42
  %v940 = vmul.f32 %v43, %v43
  %v941 = vmul.f32 %v44, %v44
  %v942 = vmul.f32 %v45, %v45
  %v943 = vmul.f32 %v46, %v46
  %v944 = vmul.f32 %v47, %v47
  %v945 = vmul.f32 %v48, %v48
  %v946 = vmul.f32 %v49, %v49
  %v947 = vmul.f32 %v50, %v50
  %v948 = vmul.f32 %v51, %v51
  %v949 = vmul.f32 %v52, %v52
  %v950 = vmul.f32 %v53, %v53
  %v951 = vmul.f32 %v54, %v54
  %v952 = vmul.f32 %v55, %v55
  %v953 = vmul.f32 %v56, %v56
  %v954 = vmul.f32 %v57, %v57
  %v955 = vmul.f32 %v58, %v58
  %v956 = vmul.f32 %v59, %v59
  %v957 = vmul.f32 %v60, %v60
  %v958 = vmul.f32 %v61, %v61
  %v959 = vmul.f32 %v62, %v62
  %v960 = vmul.f32 %v63, %v63
  %v961 = vmul.f32 %v64, %v64
  %v962 = vmul.f32 %v65, %v65
  %v963 = vmul.f32 %v66, %v66
  %v964 = vmul.f32 %v67, %v67
  %v965 = vmul.f32 %v68, %v68
  %v966 = vmul.f32 %v69, %v69
  %v967 = vmul.f32 %v70, %v70
  %v968 = vmul.f32 %v71, %v71
  %v969 = vmul.f32 %v72, %v72
  %v970 = vmul.f32 %v73, %v73
  %v971 = vmul.f32 %v74, %v74
  %v972 = vmul.f32 %v75, %v75
  %v973 = vmul.f32 %v76, %v76
  %v974 = vmul.f32 %v77, %v77
  %v975 = vmul.f32 %v78, %v78
  %v976 = vmul.f32 %v79, %v79
  %v977 = vmul.f32 %v80, %v80
  %v978 = vmul.f32 %v81, %v81
  %v979 = vmul.f32 %v82, %v82
  %v980 = vmul.f32 %v83, %v83
  %v981 = vmul.f32 %v84, %v84
  %v982 = vmul.f32 %v85, %v85
  %v983 = vmul.f32 %v86, %v86
  %v984 = vmul.f32 %v87, %v87
  %v985 = vmul.f32 %v88, %v88
  %v986 = vmul.f32 %v89, %v89
  %v987 = vmul.f32 %v90, %v90
  %v988 = vmul.f32 %v91, %v91
  %v989 = vmul.f32 %v92, %v92
  %v990 = vmul.f32 %v93, %v93
  %v991 = vmul.f32 %v94, %v94
  %v992 = vmul.f32 %v95, %v95
  %v993 = vmul.f32 %v96, %v96
  %v994 = vmul.f32 %v97, %v97
  %v995 = vmul.f32 %v98, %v98
  %v996 = vmul.f32 %v99, %v99
  %v997 = vmul.f32 %v100, %v100
  %v998 = vmul.f32 %v101, %v101
  %v999 = vmul.f32 %v102, %v102
  %v1000 = vmul.f32 %v103, %v103
  %v1001 = vmul.f32 %v104, %v104
  %v1002 = vmul.f32 %v105, %v105
  %v1003 = vmul.f32 %v106, %v106
  %v1004 = vmul.f32 %v107, %v107
  %v1005 = vmul.f32 %v108, %v108
  %v1006 = vmul.f32 %v109, %v109
  %v1007 = vmul.f32 %v110, %v110
  %v1008 = vmul.f32 %v111, %v111
  %v1009 = vmul.f32 %v112, %v112
  %v1010 = vmul.f32 %v113, %v113
  %v1011 = vmul.f32 %v114, %v114
  %v1012 = vmul.f32 %v115, %v115
  %v1013 = vmul.f32 %v116, %v116
  %v1014 = vmul.f32 %v117, %v117
  %v1015 = vmul.f32 %v118, %v118
  %v1016 = vmul.f32 %v119, %v119
  %v1017 = vmul.f32 %v120, %v120
  %v1018 = vmul.f32 %v121, %v121
  %v1019 = vmul.f32 %v122, %v122
  %v1020 = vmul.f32 %v123, %v123
  %v1021 = vmul.f32 %v124, %v124
  %v1022 = vmul.f32 %v125, %v125
  %v1023 = vmul.f32 %v126, %v126
  %v1024 = vmul.f32 %v127, %v127
  %v1025 = vmul.f32 %v128, %v128
  %v1026 = vmul.f32 %v129, %v129
  %v1027 = vmul.f32 %v130, %v130
  %v1028 = vmul.f32 %v131, %v131
  %v1029 = vmul.f32 %v132, %v132
  %v1030 = vmul.f32 %v133, %v133
  %v1031 = vmul.f32 %v134, %v134
  %v1032 = vmul.f32 %v135, %v135
  %v1033 = vmul.f32 %v136, %v136
  %v1034 = vmul.f32 %v137, %v137
  %v1035 = vmul.f32 %v138, %v138
  %v1036 = vmul.f32 %v139, %v139
  %v1037 = vmul.f32 %v140, %v140
  %v1038 = vmul.f32 %v141, %v141
  %v1039 = vmul.f32 %v142, %v142
  %v1040 = vmul.f32 %v143, %v143
  %v1041 = vmul.f32 %v144, %v144
  %v1042 = vmul.f32 %v145, %v145
  %v1043 = vmul.f32 %v146, %v146
  %v1044 = vmul.f32 %v147, %v147
  %v1045 = vmul.f32 %v148, %v148
  %v1046 = vmul.f32 %v149, %v149
  %v1047 = vmul.f32 %v150, %v150
  %v1048 = vmul.f32 %v151, %v151
  %v1049 = vmul.f32 %v152, %v152
  %v1050 = vmul.f32 %v153, %v153
  %v1051 = vmul.f32 %v154, %v154
  %v1052 = vmul.f32 %v155, %v155
  %v1053 = vmul.f32 %v156, %v156
  %v1054 = vmul.f32 %v157, %v157
  %v1055 = vmul.f32 %v158, %v158
  %v1056 = vmul.f32 %v159, %v159
  %v1057 = vmul.f32 %v160, %v160
  %v1058 = vmul.f32 %v161, %v161
  %v1059 = vmul.f32 %v162, %v162
  %v1060 = vmul.f32 %v163, %v163
  %v1061 = vmul.f32 %v164, %v164
  %v1062 = vmul.f32 %v165, %v165
  %v1063 = vmul.f32 %v166, %v166
  %v1064 = vmul.f32 %v167, %v167
  %v1065 = vmul.f32 %v168, %v168
  %v1066 = vmul.f32 %v169, %v169
  %v1067 = vmul.f32 %v170, %v170
  %v1068 = vmul.f32 %v171, %v171
  %v1069 = vmul.f32 %v172, %v172
  %v1070 = vmul.f32 %v173, %v173
  %v1071 = vmul.f32 %v174, %v174
  %v1072 = vmul.f32 %v175, %v175
  %v1073 = vmul.f32 %v176, %v176
  %v1074 = vmul.f32 %v177, %v177
  %v1075 = vmul.f32 %v178, %v178
  %v1076 = vmul.f32 %v179, %v179
  %v1077 = vmul.f32 %v180, %v180
  %v1078 = vmul.f32 %v181, %v181
  %v1079 = vmul.f32 %v182, %v182
  %v1080 = vmul.f32 %v183, %v183
  %v1081 = vmul.f32 %v184, %v184
  %v1082 = vmul.f32 %v185, %v185
  %v1083 = vmul.f32 %v186, %v186
  %v1084 = vmul.f32 %v187, %v187
  %v1085 = vmul.f32 %v188, %v188
  %v1086 = vmul.f32 %v189, %v189
  %v1087 = vmul.f32 %v190, %v190
  %v1088 = vmul.f32 %v191, %v191
  %v1089 = vmul.f32 %v192, %v192
  %v1090 = vmul.f32 %v193, %v193
  %v1091 = vmul.f32 %v194, %v194
  %v1092 = vmul.f32 %v195, %v195
  %v1093 = vmul.f32 %v196, %v196
  %v1094 = vmul.f32 %v197, %v197
  %v1095 = vmul.f32 %v198, %v198
  %v1096 = vmul.f32 %v199, %v199
  %v1097 = vmul.f32 %v200, %v200
  %v1098 = vmul.f32 %v201, %v201
  %v1099 = vmul.f32 %v202, %v202
  %v1100 = vmul.f32 %v203, %v203
  %v1101 = vmul.f32 %v204, %v204
  %v1102 = vmul.f32 %v205, %v205
  %v1103 = vmul.f32 %v206, %v206
  %v1104 = vmul.f32 %v207, %v207
  %v1105 = vmul.f32 %v208, %v208
  %v1106 = vmul.f32 %v209, %v209
  %v1107 = vmul.f32 %v210, %v210
  %v1108 = vmul.f32 %v211, %v211
  %v1109 = vmul.f32 %v212, %v212
  %v1110 = vmul.f32 %v213, %v213
  %v1111 = vmul.f32 %v214, %v214
  %v1112 = vmul.f32 %v215, %v215
  %v1113 = vmul.f32 %v216, %v216
  %v1114 = vmul.f32 %v217, %v217
  %v1115 = vmul.f32 %v218, %v218
  %v1116 = vmul.f32 %v219, %v219
  %v1117 = vmul.f32 %v220, %v220
  %v1118 = vmul.f32 %v221, %v221
  %v1119 = vmul.f32 %v222, %v222
  %v1120 = vmul.f32 %v223, %v223
  %v1121 = vmul.f32 %v224, %v224
  %v1122 = vmul.f32 %v225, %v225
  %v1123 = vmul.f32 %v226, %v226
  %v1124 = vmul.f32 %v227, %v227
  %v1125 = vmul.f32 %v228, %v228
  %v1126 = vmul.f32 %v229, %v229
  %v1127 = vmul.f32 %v230, %v230
  %v1128 = vmul.f32 %v231, %v231
  %v1129 = vmul.f32 %v232, %v232
  %v1130 = vmul.f32 %v233, %v233
  %v1131 = vmul.f32 %v234, %v234
  %v1132 = vmul.f32 %v235, %v235
  %v1133 = vmul.f32 %v236, %v236
  %v1134 = vmul.f32 %v237, %v237
  %v1135 = vmul.f32 %v238, %v238
  %v1136 = vmul.f32 %v239, %v239
  %v1137 = vmul.f32 %v240, %v240
  %v1138 = vmul.f32 %v241, %v241
  %v1139 = vmul.f32 %v242, %v242
  %v1140 = vmul.f32 %v243, %v243
  %v1141 = vmul.f32 %v244, %v244
  %v1142 = vmul.f32 %v245, %v245
  %v1143 = vmul.f32 %v246, %v246
  %v1144 = vmul.f32 %v247, %v247
  %v1145 = vmul.f32 %v248, %v248
  %v1146 = vmul.f32 %v249, %v249
  %v1147 = vmul.f32 %v250, %v250
  %v1148 = vmul.f32 %v251, %v251
  %v1149 = vmul.f32 %v252, %v252
  %v1150 = vmul.f32 %v253, %v253
  %v1151 = vmul.f32 %v254, %v254
  %v1152 = vmul.f32 %v255, %v255
  %v1153 = vmul.f32 %v256, %v256
  %v1154 = vmul.f32 %v257, %v257
  %v1155 = vmul.f32 %v258, %v258
  %v1156 = vmul.f32 %v259, %v259
  %v1157 = vmul.f32 %v260, %v260
  %v1158 = vmul.f32 %v261, %v261
  %v1159 = vmul.f32 %v262, %v262
  %v1160 = vmul.f32 %v263, %v263
  %v1161 = vmul.f32 %v264, %v264
  %v1162 = vmul.f32 %v265, %v265
  %v1163 = vmul.f32 %v266, %v266
  %v1164 = vmul.f32 %v267, %v267
  %v1165 = vmul.f32 %v268, %v268
  %v1166 = vmul.f32 %v269, %v269
  %v1167 = vmul.f32 %v270, %v270
  %v1168 = vmul.f32 %v271, %v271
  %v1169 = vmul.f32 %v272, %v272
  %v1170 = vmul.f32 %v273, %v273
  %v1171 = vmul.f32 %v274, %v274
  %v1172 = vmul.f32 %v275, %v275
  %v1173 = vsel %vm276, %v918, 0.0
  %v1174 = vadd.f32 %v917, %v1173
  %1175 = vadd.xlane.f32.xlu0 %v1174
  %v1176 = vpop.xlane.xlu0 %1175
  %v1177 = vsel %vm276, %v920, 0.0
  %v1178 = vadd.f32 %v919, %v1177
  %1179 = vadd.xlane.f32.xlu0 %v1178
  %v1180 = vpop.xlane.xlu0 %1179
  %v1181 = vsel %vm276, %v922, 0.0
  %v1182 = vadd.f32 %v921, %v1181
  %1183 = vadd.xlane.f32.xlu0 %v1182
  %v1184 = vpop.xlane.xlu0 %1183
  %v1185 = vsel %vm276, %v924, 0.0
  %v1186 = vadd.f32 %v923, %v1185
  %1187 = vadd.xlane.f32.xlu0 %v1186
  %v1188 = vpop.xlane.xlu0 %1187
  %v1189 = vsel %vm276, %v926, 0.0
  %v1190 = vadd.f32 %v925, %v1189
  %1191 = vadd.xlane.f32.xlu0 %v1190
  %v1192 = vpop.xlane.xlu0 %1191
  %v1193 = vsel %vm276, %v928, 0.0
  %v1194 = vadd.f32 %v927, %v1193
  %1195 = vadd.xlane.f32.xlu0 %v1194
  %v1196 = vpop.xlane.xlu0 %1195
  %v1197 = vsel %vm276, %v930, 0.0
  %v1198 = vadd.f32 %v929, %v1197
  %1199 = vadd.xlane.f32.xlu0 %v1198
  %v1200 = vpop.xlane.xlu0 %1199
  %v1201 = vsel %vm276, %v932, 0.0
  %v1202 = vadd.f32 %v931, %v1201
  %1203 = vadd.xlane.f32.xlu0 %v1202
  %v1204 = vpop.xlane.xlu0 %1203
  %v1205 = vsel %vm276, %v934, 0.0
  %v1206 = vadd.f32 %v933, %v1205
  %1207 = vadd.xlane.f32.xlu0 %v1206
  %v1208 = vpop.xlane.xlu0 %1207
  %v1209 = vsel %vm276, %v936, 0.0
  %v1210 = vadd.f32 %v935, %v1209
  %1211 = vadd.xlane.f32.xlu0 %v1210
  %v1212 = vpop.xlane.xlu0 %1211
  %v1213 = vsel %vm276, %v938, 0.0
  %v1214 = vadd.f32 %v937, %v1213
  %1215 = vadd.xlane.f32.xlu0 %v1214
  %v1216 = vpop.xlane.xlu0 %1215
  %v1217 = vsel %vm276, %v940, 0.0
  %v1218 = vadd.f32 %v939, %v1217
  %1219 = vadd.xlane.f32.xlu0 %v1218
  %v1220 = vpop.xlane.xlu0 %1219
  %v1221 = vsel %vm276, %v942, 0.0
  %v1222 = vadd.f32 %v941, %v1221
  %1223 = vadd.xlane.f32.xlu0 %v1222
  %v1224 = vpop.xlane.xlu0 %1223
  %v1225 = vsel %vm276, %v944, 0.0
  %v1226 = vadd.f32 %v943, %v1225
  %1227 = vadd.xlane.f32.xlu0 %v1226
  %v1228 = vpop.xlane.xlu0 %1227
  %v1229 = vsel %vm276, %v946, 0.0
  %v1230 = vadd.f32 %v945, %v1229
  %1231 = vadd.xlane.f32.xlu0 %v1230
  %v1232 = vpop.xlane.xlu0 %1231
  %v1233 = vsel %vm276, %v948, 0.0
  %v1234 = vadd.f32 %v947, %v1233
  %1235 = vadd.xlane.f32.xlu0 %v1234
  %v1236 = vpop.xlane.xlu0 %1235
  %v1237 = vsel %vm276, %v950, 0.0
  %v1238 = vadd.f32 %v949, %v1237
  %1239 = vadd.xlane.f32.xlu0 %v1238
  %v1240 = vpop.xlane.xlu0 %1239
  %v1241 = vsel %vm276, %v952, 0.0
  %v1242 = vadd.f32 %v951, %v1241
  %1243 = vadd.xlane.f32.xlu0 %v1242
  %v1244 = vpop.xlane.xlu0 %1243
  %v1245 = vsel %vm276, %v954, 0.0
  %v1246 = vadd.f32 %v953, %v1245
  %1247 = vadd.xlane.f32.xlu0 %v1246
  %v1248 = vpop.xlane.xlu0 %1247
  %v1249 = vsel %vm276, %v956, 0.0
  %v1250 = vadd.f32 %v955, %v1249
  %1251 = vadd.xlane.f32.xlu0 %v1250
  %v1252 = vpop.xlane.xlu0 %1251
  %v1253 = vsel %vm276, %v958, 0.0
  %v1254 = vadd.f32 %v957, %v1253
  %1255 = vadd.xlane.f32.xlu0 %v1254
  %v1256 = vpop.xlane.xlu0 %1255
  %v1257 = vsel %vm276, %v960, 0.0
  %v1258 = vadd.f32 %v959, %v1257
  %1259 = vadd.xlane.f32.xlu0 %v1258
  %v1260 = vpop.xlane.xlu0 %1259
  %v1261 = vsel %vm276, %v962, 0.0
  %v1262 = vadd.f32 %v961, %v1261
  %1263 = vadd.xlane.f32.xlu0 %v1262
  %v1264 = vpop.xlane.xlu0 %1263
  %v1265 = vsel %vm276, %v964, 0.0
  %v1266 = vadd.f32 %v963, %v1265
  %1267 = vadd.xlane.f32.xlu0 %v1266
  %v1268 = vpop.xlane.xlu0 %1267
  %v1269 = vsel %vm276, %v966, 0.0
  %v1270 = vadd.f32 %v965, %v1269
  %1271 = vadd.xlane.f32.xlu0 %v1270
  %v1272 = vpop.xlane.xlu0 %1271
  %v1273 = vsel %vm276, %v968, 0.0
  %v1274 = vadd.f32 %v967, %v1273
  %1275 = vadd.xlane.f32.xlu0 %v1274
  %v1276 = vpop.xlane.xlu0 %1275
  %v1277 = vsel %vm276, %v970, 0.0
  %v1278 = vadd.f32 %v969, %v1277
  %1279 = vadd.xlane.f32.xlu0 %v1278
  %v1280 = vpop.xlane.xlu0 %1279
  %v1281 = vsel %vm276, %v972, 0.0
  %v1282 = vadd.f32 %v971, %v1281
  %1283 = vadd.xlane.f32.xlu0 %v1282
  %v1284 = vpop.xlane.xlu0 %1283
  %v1285 = vsel %vm276, %v974, 0.0
  %v1286 = vadd.f32 %v973, %v1285
  %1287 = vadd.xlane.f32.xlu0 %v1286
  %v1288 = vpop.xlane.xlu0 %1287
  %v1289 = vsel %vm276, %v976, 0.0
  %v1290 = vadd.f32 %v975, %v1289
  %1291 = vadd.xlane.f32.xlu0 %v1290
  %v1292 = vpop.xlane.xlu0 %1291
  %v1293 = vsel %vm276, %v978, 0.0
  %v1294 = vadd.f32 %v977, %v1293
  %1295 = vadd.xlane.f32.xlu0 %v1294
  %v1296 = vpop.xlane.xlu0 %1295
  %v1297 = vsel %vm276, %v980, 0.0
  %v1298 = vadd.f32 %v979, %v1297
  %1299 = vadd.xlane.f32.xlu0 %v1298
  %v1300 = vpop.xlane.xlu0 %1299
  %v1301 = vsel %vm276, %v982, 0.0
  %v1302 = vadd.f32 %v981, %v1301
  %1303 = vadd.xlane.f32.xlu0 %v1302
  %v1304 = vpop.xlane.xlu0 %1303
  %v1305 = vsel %vm276, %v984, 0.0
  %v1306 = vadd.f32 %v983, %v1305
  %1307 = vadd.xlane.f32.xlu0 %v1306
  %v1308 = vpop.xlane.xlu0 %1307
  %v1309 = vsel %vm276, %v986, 0.0
  %v1310 = vadd.f32 %v985, %v1309
  %1311 = vadd.xlane.f32.xlu0 %v1310
  %v1312 = vpop.xlane.xlu0 %1311
  %v1313 = vsel %vm276, %v988, 0.0
  %v1314 = vadd.f32 %v987, %v1313
  %1315 = vadd.xlane.f32.xlu0 %v1314
  %v1316 = vpop.xlane.xlu0 %1315
  %v1317 = vsel %vm276, %v990, 0.0
  %v1318 = vadd.f32 %v989, %v1317
  %1319 = vadd.xlane.f32.xlu0 %v1318
  %v1320 = vpop.xlane.xlu0 %1319
  %v1321 = vsel %vm276, %v992, 0.0
  %v1322 = vadd.f32 %v991, %v1321
  %1323 = vadd.xlane.f32.xlu0 %v1322
  %v1324 = vpop.xlane.xlu0 %1323
  %v1325 = vsel %vm276, %v994, 0.0
  %v1326 = vadd.f32 %v993, %v1325
  %1327 = vadd.xlane.f32.xlu0 %v1326
  %v1328 = vpop.xlane.xlu0 %1327
  %v1329 = vsel %vm276, %v996, 0.0
  %v1330 = vadd.f32 %v995, %v1329
  %1331 = vadd.xlane.f32.xlu0 %v1330
  %v1332 = vpop.xlane.xlu0 %1331
  %v1333 = vsel %vm276, %v998, 0.0
  %v1334 = vadd.f32 %v997, %v1333
  %1335 = vadd.xlane.f32.xlu0 %v1334
  %v1336 = vpop.xlane.xlu0 %1335
  %v1337 = vsel %vm276, %v1000, 0.0
  %v1338 = vadd.f32 %v999, %v1337
  %1339 = vadd.xlane.f32.xlu0 %v1338
  %v1340 = vpop.xlane.xlu0 %1339
  %v1341 = vsel %vm276, %v1002, 0.0
  %v1342 = vadd.f32 %v1001, %v1341
  %1343 = vadd.xlane.f32.xlu0 %v1342
  %v1344 = vpop.xlane.xlu0 %1343
  %v1345 = vsel %vm276, %v1004, 0.0
  %v1346 = vadd.f32 %v1003, %v1345
  %1347 = vadd.xlane.f32.xlu0 %v1346
  %v1348 = vpop.xlane.xlu0 %1347
  %v1349 = vsel %vm276, %v1006, 0.0
  %v1350 = vadd.f32 %v1005, %v1349
  %1351 = vadd.xlane.f32.xlu0 %v1350
  %v1352 = vpop.xlane.xlu0 %1351
  %v1353 = vsel %vm276, %v1008, 0.0
  %v1354 = vadd.f32 %v1007, %v1353
  %1355 = vadd.xlane.f32.xlu0 %v1354
  %v1356 = vpop.xlane.xlu0 %1355
  %v1357 = vsel %vm276, %v1010, 0.0
  %v1358 = vadd.f32 %v1009, %v1357
  %1359 = vadd.xlane.f32.xlu0 %v1358
  %v1360 = vpop.xlane.xlu0 %1359
  %v1361 = vsel %vm276, %v1012, 0.0
  %v1362 = vadd.f32 %v1011, %v1361
  %1363 = vadd.xlane.f32.xlu0 %v1362
  %v1364 = vpop.xlane.xlu0 %1363
  %v1365 = vsel %vm276, %v1014, 0.0
  %v1366 = vadd.f32 %v1013, %v1365
  %1367 = vadd.xlane.f32.xlu0 %v1366
  %v1368 = vpop.xlane.xlu0 %1367
  %v1369 = vsel %vm276, %v1016, 0.0
  %v1370 = vadd.f32 %v1015, %v1369
  %1371 = vadd.xlane.f32.xlu0 %v1370
  %v1372 = vpop.xlane.xlu0 %1371
  %v1373 = vsel %vm276, %v1018, 0.0
  %v1374 = vadd.f32 %v1017, %v1373
  %1375 = vadd.xlane.f32.xlu0 %v1374
  %v1376 = vpop.xlane.xlu0 %1375
  %v1377 = vsel %vm276, %v1020, 0.0
  %v1378 = vadd.f32 %v1019, %v1377
  %1379 = vadd.xlane.f32.xlu0 %v1378
  %v1380 = vpop.xlane.xlu0 %1379
  %v1381 = vsel %vm276, %v1022, 0.0
  %v1382 = vadd.f32 %v1021, %v1381
  %1383 = vadd.xlane.f32.xlu0 %v1382
  %v1384 = vpop.xlane.xlu0 %1383
  %v1385 = vsel %vm276, %v1024, 0.0
  %v1386 = vadd.f32 %v1023, %v1385
  %1387 = vadd.xlane.f32.xlu0 %v1386
  %v1388 = vpop.xlane.xlu0 %1387
  %v1389 = vsel %vm276, %v1026, 0.0
  %v1390 = vadd.f32 %v1025, %v1389
  %1391 = vadd.xlane.f32.xlu0 %v1390
  %v1392 = vpop.xlane.xlu0 %1391
  %v1393 = vsel %vm276, %v1028, 0.0
  %v1394 = vadd.f32 %v1027, %v1393
  %1395 = vadd.xlane.f32.xlu0 %v1394
  %v1396 = vpop.xlane.xlu0 %1395
  %v1397 = vsel %vm276, %v1030, 0.0
  %v1398 = vadd.f32 %v1029, %v1397
  %1399 = vadd.xlane.f32.xlu0 %v1398
  %v1400 = vpop.xlane.xlu0 %1399
  %v1401 = vsel %vm276, %v1032, 0.0
  %v1402 = vadd.f32 %v1031, %v1401
  %1403 = vadd.xlane.f32.xlu0 %v1402
  %v1404 = vpop.xlane.xlu0 %1403
  %v1405 = vsel %vm276, %v1034, 0.0
  %v1406 = vadd.f32 %v1033, %v1405
  %1407 = vadd.xlane.f32.xlu0 %v1406
  %v1408 = vpop.xlane.xlu0 %1407
  %v1409 = vsel %vm276, %v1036, 0.0
  %v1410 = vadd.f32 %v1035, %v1409
  %1411 = vadd.xlane.f32.xlu0 %v1410
  %v1412 = vpop.xlane.xlu0 %1411
  %v1413 = vsel %vm276, %v1038, 0.0
  %v1414 = vadd.f32 %v1037, %v1413
  %1415 = vadd.xlane.f32.xlu0 %v1414
  %v1416 = vpop.xlane.xlu0 %1415
  %v1417 = vsel %vm276, %v1040, 0.0
  %v1418 = vadd.f32 %v1039, %v1417
  %1419 = vadd.xlane.f32.xlu0 %v1418
  %v1420 = vpop.xlane.xlu0 %1419
  %v1421 = vsel %vm276, %v1042, 0.0
  %v1422 = vadd.f32 %v1041, %v1421
  %1423 = vadd.xlane.f32.xlu0 %v1422
  %v1424 = vpop.xlane.xlu0 %1423
  %v1425 = vsel %vm276, %v1044, 0.0
  %v1426 = vadd.f32 %v1043, %v1425
  %1427 = vadd.xlane.f32.xlu0 %v1426
  %v1428 = vpop.xlane.xlu0 %1427
  %v1429 = vsel %vm276, %v1046, 0.0
  %v1430 = vadd.f32 %v1045, %v1429
  %1431 = vadd.xlane.f32.xlu0 %v1430
  %v1432 = vpop.xlane.xlu0 %1431
  %v1433 = vsel %vm276, %v1048, 0.0
  %v1434 = vadd.f32 %v1047, %v1433
  %1435 = vadd.xlane.f32.xlu0 %v1434
  %v1436 = vpop.xlane.xlu0 %1435
  %v1437 = vsel %vm276, %v1050, 0.0
  %v1438 = vadd.f32 %v1049, %v1437
  %1439 = vadd.xlane.f32.xlu0 %v1438
  %v1440 = vpop.xlane.xlu0 %1439
  %v1441 = vsel %vm276, %v1052, 0.0
  %v1442 = vadd.f32 %v1051, %v1441
  %1443 = vadd.xlane.f32.xlu0 %v1442
  %v1444 = vpop.xlane.xlu0 %1443
  %v1445 = vsel %vm276, %v1054, 0.0
  %v1446 = vadd.f32 %v1053, %v1445
  %1447 = vadd.xlane.f32.xlu0 %v1446
  %v1448 = vpop.xlane.xlu0 %1447
  %v1449 = vsel %vm276, %v1056, 0.0
  %v1450 = vadd.f32 %v1055, %v1449
  %1451 = vadd.xlane.f32.xlu0 %v1450
  %v1452 = vpop.xlane.xlu0 %1451
  %v1453 = vsel %vm276, %v1058, 0.0
  %v1454 = vadd.f32 %v1057, %v1453
  %1455 = vadd.xlane.f32.xlu0 %v1454
  %v1456 = vpop.xlane.xlu0 %1455
  %v1457 = vsel %vm276, %v1060, 0.0
  %v1458 = vadd.f32 %v1059, %v1457
  %1459 = vadd.xlane.f32.xlu0 %v1458
  %v1460 = vpop.xlane.xlu0 %1459
  %v1461 = vsel %vm276, %v1062, 0.0
  %v1462 = vadd.f32 %v1061, %v1461
  %1463 = vadd.xlane.f32.xlu0 %v1462
  %v1464 = vpop.xlane.xlu0 %1463
  %v1465 = vsel %vm276, %v1064, 0.0
  %v1466 = vadd.f32 %v1063, %v1465
  %1467 = vadd.xlane.f32.xlu0 %v1466
  %v1468 = vpop.xlane.xlu0 %1467
  %v1469 = vsel %vm276, %v1066, 0.0
  %v1470 = vadd.f32 %v1065, %v1469
  %1471 = vadd.xlane.f32.xlu0 %v1470
  %v1472 = vpop.xlane.xlu0 %1471
  %v1473 = vsel %vm276, %v1068, 0.0
  %v1474 = vadd.f32 %v1067, %v1473
  %1475 = vadd.xlane.f32.xlu0 %v1474
  %v1476 = vpop.xlane.xlu0 %1475
  %v1477 = vsel %vm276, %v1070, 0.0
  %v1478 = vadd.f32 %v1069, %v1477
  %1479 = vadd.xlane.f32.xlu0 %v1478
  %v1480 = vpop.xlane.xlu0 %1479
  %v1481 = vsel %vm276, %v1072, 0.0
  %v1482 = vadd.f32 %v1071, %v1481
  %1483 = vadd.xlane.f32.xlu0 %v1482
  %v1484 = vpop.xlane.xlu0 %1483
  %v1485 = vsel %vm276, %v1074, 0.0
  %v1486 = vadd.f32 %v1073, %v1485
  %1487 = vadd.xlane.f32.xlu0 %v1486
  %v1488 = vpop.xlane.xlu0 %1487
  %v1489 = vsel %vm276, %v1076, 0.0
  %v1490 = vadd.f32 %v1075, %v1489
  %1491 = vadd.xlane.f32.xlu0 %v1490
  %v1492 = vpop.xlane.xlu0 %1491
  %v1493 = vsel %vm276, %v1078, 0.0
  %v1494 = vadd.f32 %v1077, %v1493
  %1495 = vadd.xlane.f32.xlu0 %v1494
  %v1496 = vpop.xlane.xlu0 %1495
  %v1497 = vsel %vm276, %v1080, 0.0
  %v1498 = vadd.f32 %v1079, %v1497
  %1499 = vadd.xlane.f32.xlu0 %v1498
  %v1500 = vpop.xlane.xlu0 %1499
  %v1501 = vsel %vm276, %v1082, 0.0
  %v1502 = vadd.f32 %v1081, %v1501
  %1503 = vadd.xlane.f32.xlu0 %v1502
  %v1504 = vpop.xlane.xlu0 %1503
  %v1505 = vsel %vm276, %v1084, 0.0
  %v1506 = vadd.f32 %v1083, %v1505
  %1507 = vadd.xlane.f32.xlu0 %v1506
  %v1508 = vpop.xlane.xlu0 %1507
  %v1509 = vsel %vm276, %v1086, 0.0
  %v1510 = vadd.f32 %v1085, %v1509
  %1511 = vadd.xlane.f32.xlu0 %v1510
  %v1512 = vpop.xlane.xlu0 %1511
  %v1513 = vsel %vm276, %v1088, 0.0
  %v1514 = vadd.f32 %v1087, %v1513
  %1515 = vadd.xlane.f32.xlu0 %v1514
  %v1516 = vpop.xlane.xlu0 %1515
  %v1517 = vsel %vm276, %v1090, 0.0
  %v1518 = vadd.f32 %v1089, %v1517
  %1519 = vadd.xlane.f32.xlu0 %v1518
  %v1520 = vpop.xlane.xlu0 %1519
  %v1521 = vsel %vm276, %v1092, 0.0
  %v1522 = vadd.f32 %v1091, %v1521
  %1523 = vadd.xlane.f32.xlu0 %v1522
  %v1524 = vpop.xlane.xlu0 %1523
  %v1525 = vsel %vm276, %v1094, 0.0
  %v1526 = vadd.f32 %v1093, %v1525
  %1527 = vadd.xlane.f32.xlu0 %v1526
  %v1528 = vpop.xlane.xlu0 %1527
  %v1529 = vsel %vm276, %v1096, 0.0
  %v1530 = vadd.f32 %v1095, %v1529
  %1531 = vadd.xlane.f32.xlu0 %v1530
  %v1532 = vpop.xlane.xlu0 %1531
  %v1533 = vsel %vm276, %v1098, 0.0
  %v1534 = vadd.f32 %v1097, %v1533
  %1535 = vadd.xlane.f32.xlu0 %v1534
  %v1536 = vpop.xlane.xlu0 %1535
  %v1537 = vsel %vm276, %v1100, 0.0
  %v1538 = vadd.f32 %v1099, %v1537
  %1539 = vadd.xlane.f32.xlu0 %v1538
  %v1540 = vpop.xlane.xlu0 %1539
  %v1541 = vsel %vm276, %v1102, 0.0
  %v1542 = vadd.f32 %v1101, %v1541
  %1543 = vadd.xlane.f32.xlu0 %v1542
  %v1544 = vpop.xlane.xlu0 %1543
  %v1545 = vsel %vm276, %v1104, 0.0
  %v1546 = vadd.f32 %v1103, %v1545
  %1547 = vadd.xlane.f32.xlu0 %v1546
  %v1548 = vpop.xlane.xlu0 %1547
  %v1549 = vsel %vm276, %v1106, 0.0
  %v1550 = vadd.f32 %v1105, %v1549
  %1551 = vadd.xlane.f32.xlu0 %v1550
  %v1552 = vpop.xlane.xlu0 %1551
  %v1553 = vsel %vm276, %v1108, 0.0
  %v1554 = vadd.f32 %v1107, %v1553
  %1555 = vadd.xlane.f32.xlu0 %v1554
  %v1556 = vpop.xlane.xlu0 %1555
  %v1557 = vsel %vm276, %v1110, 0.0
  %v1558 = vadd.f32 %v1109, %v1557
  %1559 = vadd.xlane.f32.xlu0 %v1558
  %v1560 = vpop.xlane.xlu0 %1559
  %v1561 = vsel %vm276, %v1112, 0.0
  %v1562 = vadd.f32 %v1111, %v1561
  %1563 = vadd.xlane.f32.xlu0 %v1562
  %v1564 = vpop.xlane.xlu0 %1563
  %v1565 = vsel %vm276, %v1114, 0.0
  %v1566 = vadd.f32 %v1113, %v1565
  %1567 = vadd.xlane.f32.xlu0 %v1566
  %v1568 = vpop.xlane.xlu0 %1567
  %v1569 = vsel %vm276, %v1116, 0.0
  %v1570 = vadd.f32 %v1115, %v1569
  %1571 = vadd.xlane.f32.xlu0 %v1570
  %v1572 = vpop.xlane.xlu0 %1571
  %v1573 = vsel %vm276, %v1118, 0.0
  %v1574 = vadd.f32 %v1117, %v1573
  %1575 = vadd.xlane.f32.xlu0 %v1574
  %v1576 = vpop.xlane.xlu0 %1575
  %v1577 = vsel %vm276, %v1120, 0.0
  %v1578 = vadd.f32 %v1119, %v1577
  %1579 = vadd.xlane.f32.xlu0 %v1578
  %v1580 = vpop.xlane.xlu0 %1579
  %v1581 = vsel %vm276, %v1122, 0.0
  %v1582 = vadd.f32 %v1121, %v1581
  %1583 = vadd.xlane.f32.xlu0 %v1582
  %v1584 = vpop.xlane.xlu0 %1583
  %v1585 = vsel %vm276, %v1124, 0.0
  %v1586 = vadd.f32 %v1123, %v1585
  %1587 = vadd.xlane.f32.xlu0 %v1586
  %v1588 = vpop.xlane.xlu0 %1587
  %v1589 = vsel %vm276, %v1126, 0.0
  %v1590 = vadd.f32 %v1125, %v1589
  %1591 = vadd.xlane.f32.xlu0 %v1590
  %v1592 = vpop.xlane.xlu0 %1591
  %v1593 = vsel %vm276, %v1128, 0.0
  %v1594 = vadd.f32 %v1127, %v1593
  %1595 = vadd.xlane.f32.xlu0 %v1594
  %v1596 = vpop.xlane.xlu0 %1595
  %v1597 = vsel %vm276, %v1130, 0.0
  %v1598 = vadd.f32 %v1129, %v1597
  %1599 = vadd.xlane.f32.xlu0 %v1598
  %v1600 = vpop.xlane.xlu0 %1599
  %v1601 = vsel %vm276, %v1132, 0.0
  %v1602 = vadd.f32 %v1131, %v1601
  %1603 = vadd.xlane.f32.xlu0 %v1602
  %v1604 = vpop.xlane.xlu0 %1603
  %v1605 = vsel %vm276, %v1134, 0.0
  %v1606 = vadd.f32 %v1133, %v1605
  %1607 = vadd.xlane.f32.xlu0 %v1606
  %v1608 = vpop.xlane.xlu0 %1607
  %v1609 = vsel %vm276, %v1136, 0.0
  %v1610 = vadd.f32 %v1135, %v1609
  %1611 = vadd.xlane.f32.xlu0 %v1610
  %v1612 = vpop.xlane.xlu0 %1611
  %v1613 = vsel %vm276, %v1138, 0.0
  %v1614 = vadd.f32 %v1137, %v1613
  %1615 = vadd.xlane.f32.xlu0 %v1614
  %v1616 = vpop.xlane.xlu0 %1615
  %v1617 = vsel %vm276, %v1140, 0.0
  %v1618 = vadd.f32 %v1139, %v1617
  %1619 = vadd.xlane.f32.xlu0 %v1618
  %v1620 = vpop.xlane.xlu0 %1619
  %v1621 = vsel %vm276, %v1142, 0.0
  %v1622 = vadd.f32 %v1141, %v1621
  %1623 = vadd.xlane.f32.xlu0 %v1622
  %v1624 = vpop.xlane.xlu0 %1623
  %v1625 = vsel %vm276, %v1144, 0.0
  %v1626 = vadd.f32 %v1143, %v1625
  %1627 = vadd.xlane.f32.xlu0 %v1626
  %v1628 = vpop.xlane.xlu0 %1627
  %v1629 = vsel %vm276, %v1146, 0.0
  %v1630 = vadd.f32 %v1145, %v1629
  %1631 = vadd.xlane.f32.xlu0 %v1630
  %v1632 = vpop.xlane.xlu0 %1631
  %v1633 = vsel %vm276, %v1148, 0.0
  %v1634 = vadd.f32 %v1147, %v1633
  %1635 = vadd.xlane.f32.xlu0 %v1634
  %v1636 = vpop.xlane.xlu0 %1635
  %v1637 = vsel %vm276, %v1150, 0.0
  %v1638 = vadd.f32 %v1149, %v1637
  %1639 = vadd.xlane.f32.xlu0 %v1638
  %v1640 = vpop.xlane.xlu0 %1639
  %v1641 = vsel %vm276, %v1152, 0.0
  %v1642 = vadd.f32 %v1151, %v1641
  %1643 = vadd.xlane.f32.xlu0 %v1642
  %v1644 = vpop.xlane.xlu0 %1643
  %v1645 = vsel %vm276, %v1154, 0.0
  %v1646 = vadd.f32 %v1153, %v1645
  %1647 = vadd.xlane.f32.xlu0 %v1646
  %v1648 = vpop.xlane.xlu0 %1647
  %v1649 = vsel %vm276, %v1156, 0.0
  %v1650 = vadd.f32 %v1155, %v1649
  %1651 = vadd.xlane.f32.xlu0 %v1650
  %v1652 = vpop.xlane.xlu0 %1651
  %v1653 = vsel %vm276, %v1158, 0.0
  %v1654 = vadd.f32 %v1157, %v1653
  %1655 = vadd.xlane.f32.xlu0 %v1654
  %v1656 = vpop.xlane.xlu0 %1655
  %v1657 = vsel %vm276, %v1160, 0.0
  %v1658 = vadd.f32 %v1159, %v1657
  %1659 = vadd.xlane.f32.xlu0 %v1658
  %v1660 = vpop.xlane.xlu0 %1659
  %v1661 = vsel %vm276, %v1162, 0.0
  %v1662 = vadd.f32 %v1161, %v1661
  %1663 = vadd.xlane.f32.xlu0 %v1662
  %v1664 = vpop.xlane.xlu0 %1663
  %v1665 = vsel %vm276, %v1164, 0.0
  %v1666 = vadd.f32 %v1163, %v1665
  %1667 = vadd.xlane.f32.xlu0 %v1666
  %v1668 = vpop.xlane.xlu0 %1667
  %v1669 = vsel %vm276, %v1166, 0.0
  %v1670 = vadd.f32 %v1165, %v1669
  %1671 = vadd.xlane.f32.xlu0 %v1670
  %v1672 = vpop.xlane.xlu0 %1671
  %v1673 = vsel %vm276, %v1168, 0.0
  %v1674 = vadd.f32 %v1167, %v1673
  %1675 = vadd.xlane.f32.xlu0 %v1674
  %v1676 = vpop.xlane.xlu0 %1675
  %v1677 = vsel %vm276, %v1170, 0.0
  %v1678 = vadd.f32 %v1169, %v1677
  %1679 = vadd.xlane.f32.xlu0 %v1678
  %v1680 = vpop.xlane.xlu0 %1679
  %v1681 = vsel %vm276, %v1172, 0.0
  %v1682 = vadd.f32 %v1171, %v1681
  %1683 = vadd.xlane.f32.xlu0 %v1682
  %v1684 = vpop.xlane.xlu0 %1683
  %v1685 = vmul.f32 %v1176, 0.0051020407
  %v1686 = vmul.f32 %v1180, 0.0051020407
  %v1687 = vmul.f32 %v1184, 0.0051020407
  %v1688 = vmul.f32 %v1188, 0.0051020407
  %v1689 = vmul.f32 %v1192, 0.0051020407
  %v1690 = vmul.f32 %v1196, 0.0051020407
  %v1691 = vmul.f32 %v1200, 0.0051020407
  %v1692 = vmul.f32 %v1204, 0.0051020407
  %v1693 = vmul.f32 %v1208, 0.0051020407
  %v1694 = vmul.f32 %v1212, 0.0051020407
  %v1695 = vmul.f32 %v1216, 0.0051020407
  %v1696 = vmul.f32 %v1220, 0.0051020407
  %v1697 = vmul.f32 %v1224, 0.0051020407
  %v1698 = vmul.f32 %v1228, 0.0051020407
  %v1699 = vmul.f32 %v1232, 0.0051020407
  %v1700 = vmul.f32 %v1236, 0.0051020407
  %v1701 = vmul.f32 %v1240, 0.0051020407
  %v1702 = vmul.f32 %v1244, 0.0051020407
  %v1703 = vmul.f32 %v1248, 0.0051020407
  %v1704 = vmul.f32 %v1252, 0.0051020407
  %v1705 = vmul.f32 %v1256, 0.0051020407
  %v1706 = vmul.f32 %v1260, 0.0051020407
  %v1707 = vmul.f32 %v1264, 0.0051020407
  %v1708 = vmul.f32 %v1268, 0.0051020407
  %v1709 = vmul.f32 %v1272, 0.0051020407
  %v1710 = vmul.f32 %v1276, 0.0051020407
  %v1711 = vmul.f32 %v1280, 0.0051020407
  %v1712 = vmul.f32 %v1284, 0.0051020407
  %v1713 = vmul.f32 %v1288, 0.0051020407
  %v1714 = vmul.f32 %v1292, 0.0051020407
  %v1715 = vmul.f32 %v1296, 0.0051020407
  %v1716 = vmul.f32 %v1300, 0.0051020407
  %v1717 = vmul.f32 %v1304, 0.0051020407
  %v1718 = vmul.f32 %v1308, 0.0051020407
  %v1719 = vmul.f32 %v1312, 0.0051020407
  %v1720 = vmul.f32 %v1316, 0.0051020407
  %v1721 = vmul.f32 %v1320, 0.0051020407
  %v1722 = vmul.f32 %v1324, 0.0051020407
  %v1723 = vmul.f32 %v1328, 0.0051020407
  %v1724 = vmul.f32 %v1332, 0.0051020407
  %v1725 = vmul.f32 %v1336, 0.0051020407
  %v1726 = vmul.f32 %v1340, 0.0051020407
  %v1727 = vmul.f32 %v1344, 0.0051020407
  %v1728 = vmul.f32 %v1348, 0.0051020407
  %v1729 = vmul.f32 %v1352, 0.0051020407
  %v1730 = vmul.f32 %v1356, 0.0051020407
  %v1731 = vmul.f32 %v1360, 0.0051020407
  %v1732 = vmul.f32 %v1364, 0.0051020407
  %v1733 = vmul.f32 %v1368, 0.0051020407
  %v1734 = vmul.f32 %v1372, 0.0051020407
  %v1735 = vmul.f32 %v1376, 0.0051020407
  %v1736 = vmul.f32 %v1380, 0.0051020407
  %v1737 = vmul.f32 %v1384, 0.0051020407
  %v1738 = vmul.f32 %v1388, 0.0051020407
  %v1739 = vmul.f32 %v1392, 0.0051020407
  %v1740 = vmul.f32 %v1396, 0.0051020407
  %v1741 = vmul.f32 %v1400, 0.0051020407
  %v1742 = vmul.f32 %v1404, 0.0051020407
  %v1743 = vmul.f32 %v1408, 0.0051020407
  %v1744 = vmul.f32 %v1412, 0.0051020407
  %v1745 = vmul.f32 %v1416, 0.0051020407
  %v1746 = vmul.f32 %v1420, 0.0051020407
  %v1747 = vmul.f32 %v1424, 0.0051020407
  %v1748 = vmul.f32 %v1428, 0.0051020407
  %v1749 = vmul.f32 %v1432, 0.0051020407
  %v1750 = vmul.f32 %v1436, 0.0051020407
  %v1751 = vmul.f32 %v1440, 0.0051020407
  %v1752 = vmul.f32 %v1444, 0.0051020407
  %v1753 = vmul.f32 %v1448, 0.0051020407
  %v1754 = vmul.f32 %v1452, 0.0051020407
  %v1755 = vmul.f32 %v1456, 0.0051020407
  %v1756 = vmul.f32 %v1460, 0.0051020407
  %v1757 = vmul.f32 %v1464, 0.0051020407
  %v1758 = vmul.f32 %v1468, 0.0051020407
  %v1759 = vmul.f32 %v1472, 0.0051020407
  %v1760 = vmul.f32 %v1476, 0.0051020407
  %v1761 = vmul.f32 %v1480, 0.0051020407
  %v1762 = vmul.f32 %v1484, 0.0051020407
  %v1763 = vmul.f32 %v1488, 0.0051020407
  %v1764 = vmul.f32 %v1492, 0.0051020407
  %v1765 = vmul.f32 %v1496, 0.0051020407
  %v1766 = vmul.f32 %v1500, 0.0051020407
  %v1767 = vmul.f32 %v1504, 0.0051020407
  %v1768 = vmul.f32 %v1508, 0.0051020407
  %v1769 = vmul.f32 %v1512, 0.0051020407
  %v1770 = vmul.f32 %v1516, 0.0051020407
  %v1771 = vmul.f32 %v1520, 0.0051020407
  %v1772 = vmul.f32 %v1524, 0.0051020407
  %v1773 = vmul.f32 %v1528, 0.0051020407
  %v1774 = vmul.f32 %v1532, 0.0051020407
  %v1775 = vmul.f32 %v1536, 0.0051020407
  %v1776 = vmul.f32 %v1540, 0.0051020407
  %v1777 = vmul.f32 %v1544, 0.0051020407
  %v1778 = vmul.f32 %v1548, 0.0051020407
  %v1779 = vmul.f32 %v1552, 0.0051020407
  %v1780 = vmul.f32 %v1556, 0.0051020407
  %v1781 = vmul.f32 %v1560, 0.0051020407
  %v1782 = vmul.f32 %v1564, 0.0051020407
  %v1783 = vmul.f32 %v1568, 0.0051020407
  %v1784 = vmul.f32 %v1572, 0.0051020407
  %v1785 = vmul.f32 %v1576, 0.0051020407
  %v1786 = vmul.f32 %v1580, 0.0051020407
  %v1787 = vmul.f32 %v1584, 0.0051020407
  %v1788 = vmul.f32 %v1588, 0.0051020407
  %v1789 = vmul.f32 %v1592, 0.0051020407
  %v1790 = vmul.f32 %v1596, 0.0051020407
  %v1791 = vmul.f32 %v1600, 0.0051020407
  %v1792 = vmul.f32 %v1604, 0.0051020407
  %v1793 = vmul.f32 %v1608, 0.0051020407
  %v1794 = vmul.f32 %v1612, 0.0051020407
  %v1795 = vmul.f32 %v1616, 0.0051020407
  %v1796 = vmul.f32 %v1620, 0.0051020407
  %v1797 = vmul.f32 %v1624, 0.0051020407
  %v1798 = vmul.f32 %v1628, 0.0051020407
  %v1799 = vmul.f32 %v1632, 0.0051020407
  %v1800 = vmul.f32 %v1636, 0.0051020407
  %v1801 = vmul.f32 %v1640, 0.0051020407
  %v1802 = vmul.f32 %v1644, 0.0051020407
  %v1803 = vmul.f32 %v1648, 0.0051020407
  %v1804 = vmul.f32 %v1652, 0.0051020407
  %v1805 = vmul.f32 %v1656, 0.0051020407
  %v1806 = vmul.f32 %v1660, 0.0051020407
  %v1807 = vmul.f32 %v1664, 0.0051020407
  %v1808 = vmul.f32 %v1668, 0.0051020407
  %v1809 = vmul.f32 %v1672, 0.0051020407
  %v1810 = vmul.f32 %v1676, 0.0051020407
  %v1811 = vmul.f32 %v1680, 0.0051020407
  %v1812 = vmul.f32 %v1684, 0.0051020407
  %v1813 = vmul.f32 %v789, %v789
  %v1814 = vmul.f32 %v790, %v790
  %v1815 = vmul.f32 %v791, %v791
  %v1816 = vmul.f32 %v792, %v792
  %v1817 = vmul.f32 %v793, %v793
  %v1818 = vmul.f32 %v794, %v794
  %v1819 = vmul.f32 %v795, %v795
  %v1820 = vmul.f32 %v796, %v796
  %v1821 = vmul.f32 %v797, %v797
  %v1822 = vmul.f32 %v798, %v798
  %v1823 = vmul.f32 %v799, %v799
  %v1824 = vmul.f32 %v800, %v800
  %v1825 = vmul.f32 %v801, %v801
  %v1826 = vmul.f32 %v802, %v802
  %v1827 = vmul.f32 %v803, %v803
  %v1828 = vmul.f32 %v804, %v804
  %v1829 = vmul.f32 %v805, %v805
  %v1830 = vmul.f32 %v806, %v806
  %v1831 = vmul.f32 %v807, %v807
  %v1832 = vmul.f32 %v808, %v808
  %v1833 = vmul.f32 %v809, %v809
  %v1834 = vmul.f32 %v810, %v810
  %v1835 = vmul.f32 %v811, %v811
  %v1836 = vmul.f32 %v812, %v812
  %v1837 = vmul.f32 %v813, %v813
  %v1838 = vmul.f32 %v814, %v814
  %v1839 = vmul.f32 %v815, %v815
  %v1840 = vmul.f32 %v816, %v816
  %v1841 = vmul.f32 %v817, %v817
  %v1842 = vmul.f32 %v818, %v818
  %v1843 = vmul.f32 %v819, %v819
  %v1844 = vmul.f32 %v820, %v820
  %v1845 = vmul.f32 %v821, %v821
  %v1846 = vmul.f32 %v822, %v822
  %v1847 = vmul.f32 %v823, %v823
  %v1848 = vmul.f32 %v824, %v824
  %v1849 = vmul.f32 %v825, %v825
  %v1850 = vmul.f32 %v826, %v826
  %v1851 = vmul.f32 %v827, %v827
  %v1852 = vmul.f32 %v828, %v828
  %v1853 = vmul.f32 %v829, %v829
  %v1854 = vmul.f32 %v830, %v830
  %v1855 = vmul.f32 %v831, %v831
  %v1856 = vmul.f32 %v832, %v832
  %v1857 = vmul.f32 %v833, %v833
  %v1858 = vmul.f32 %v834, %v834
  %v1859 = vmul.f32 %v835, %v835
  %v1860 = vmul.f32 %v836, %v836
  %v1861 = vmul.f32 %v837, %v837
  %v1862 = vmul.f32 %v838, %v838
  %v1863 = vmul.f32 %v839, %v839
  %v1864 = vmul.f32 %v840, %v840
  %v1865 = vmul.f32 %v841, %v841
  %v1866 = vmul.f32 %v842, %v842
  %v1867 = vmul.f32 %v843, %v843
  %v1868 = vmul.f32 %v844, %v844
  %v1869 = vmul.f32 %v845, %v845
  %v1870 = vmul.f32 %v846, %v846
  %v1871 = vmul.f32 %v847, %v847
  %v1872 = vmul.f32 %v848, %v848
  %v1873 = vmul.f32 %v849, %v849
  %v1874 = vmul.f32 %v850, %v850
  %v1875 = vmul.f32 %v851, %v851
  %v1876 = vmul.f32 %v852, %v852
  %v1877 = vmul.f32 %v853, %v853
  %v1878 = vmul.f32 %v854, %v854
  %v1879 = vmul.f32 %v855, %v855
  %v1880 = vmul.f32 %v856, %v856
  %v1881 = vmul.f32 %v857, %v857
  %v1882 = vmul.f32 %v858, %v858
  %v1883 = vmul.f32 %v859, %v859
  %v1884 = vmul.f32 %v860, %v860
  %v1885 = vmul.f32 %v861, %v861
  %v1886 = vmul.f32 %v862, %v862
  %v1887 = vmul.f32 %v863, %v863
  %v1888 = vmul.f32 %v864, %v864
  %v1889 = vmul.f32 %v865, %v865
  %v1890 = vmul.f32 %v866, %v866
  %v1891 = vmul.f32 %v867, %v867
  %v1892 = vmul.f32 %v868, %v868
  %v1893 = vmul.f32 %v869, %v869
  %v1894 = vmul.f32 %v870, %v870
  %v1895 = vmul.f32 %v871, %v871
  %v1896 = vmul.f32 %v872, %v872
  %v1897 = vmul.f32 %v873, %v873
  %v1898 = vmul.f32 %v874, %v874
  %v1899 = vmul.f32 %v875, %v875
  %v1900 = vmul.f32 %v876, %v876
  %v1901 = vmul.f32 %v877, %v877
  %v1902 = vmul.f32 %v878, %v878
  %v1903 = vmul.f32 %v879, %v879
  %v1904 = vmul.f32 %v880, %v880
  %v1905 = vmul.f32 %v881, %v881
  %v1906 = vmul.f32 %v882, %v882
  %v1907 = vmul.f32 %v883, %v883
  %v1908 = vmul.f32 %v884, %v884
  %v1909 = vmul.f32 %v885, %v885
  %v1910 = vmul.f32 %v886, %v886
  %v1911 = vmul.f32 %v887, %v887
  %v1912 = vmul.f32 %v888, %v888
  %v1913 = vmul.f32 %v889, %v889
  %v1914 = vmul.f32 %v890, %v890
  %v1915 = vmul.f32 %v891, %v891
  %v1916 = vmul.f32 %v892, %v892
  %v1917 = vmul.f32 %v893, %v893
  %v1918 = vmul.f32 %v894, %v894
  %v1919 = vmul.f32 %v895, %v895
  %v1920 = vmul.f32 %v896, %v896
  %v1921 = vmul.f32 %v897, %v897
  %v1922 = vmul.f32 %v898, %v898
  %v1923 = vmul.f32 %v899, %v899
  %v1924 = vmul.f32 %v900, %v900
  %v1925 = vmul.f32 %v901, %v901
  %v1926 = vmul.f32 %v902, %v902
  %v1927 = vmul.f32 %v903, %v903
  %v1928 = vmul.f32 %v904, %v904
  %v1929 = vmul.f32 %v905, %v905
  %v1930 = vmul.f32 %v906, %v906
  %v1931 = vmul.f32 %v907, %v907
  %v1932 = vmul.f32 %v908, %v908
  %v1933 = vmul.f32 %v909, %v909
  %v1934 = vmul.f32 %v910, %v910
  %v1935 = vmul.f32 %v911, %v911
  %v1936 = vmul.f32 %v912, %v912
  %v1937 = vmul.f32 %v913, %v913
  %v1938 = vmul.f32 %v914, %v914
  %v1939 = vmul.f32 %v915, %v915
  %v1940 = vmul.f32 %v916, %v916
  %v1941 = vsub.f32 %v1685, %v1813
  %v1942 = vsub.f32 %v1686, %v1814
  %v1943 = vsub.f32 %v1687, %v1815
  %v1944 = vsub.f32 %v1688, %v1816
  %v1945 = vsub.f32 %v1689, %v1817
  %v1946 = vsub.f32 %v1690, %v1818
  %v1947 = vsub.f32 %v1691, %v1819
  %v1948 = vsub.f32 %v1692, %v1820
  %v1949 = vsub.f32 %v1693, %v1821
  %v1950 = vsub.f32 %v1694, %v1822
  %v1951 = vsub.f32 %v1695, %v1823
  %v1952 = vsub.f32 %v1696, %v1824
  %v1953 = vsub.f32 %v1697, %v1825
  %v1954 = vsub.f32 %v1698, %v1826
  %v1955 = vsub.f32 %v1699, %v1827
  %v1956 = vsub.f32 %v1700, %v1828
  %v1957 = vsub.f32 %v1701, %v1829
  %v1958 = vsub.f32 %v1702, %v1830
  %v1959 = vsub.f32 %v1703, %v1831
  %v1960 = vsub.f32 %v1704, %v1832
  %v1961 = vsub.f32 %v1705, %v1833
  %v1962 = vsub.f32 %v1706, %v1834
  %v1963 = vsub.f32 %v1707, %v1835
  %v1964 = vsub.f32 %v1708, %v1836
  %v1965 = vsub.f32 %v1709, %v1837
  %v1966 = vsub.f32 %v1710, %v1838
  %v1967 = vsub.f32 %v1711, %v1839
  %v1968 = vsub.f32 %v1712, %v1840
  %v1969 = vsub.f32 %v1713, %v1841
  %v1970 = vsub.f32 %v1714, %v1842
  %v1971 = vsub.f32 %v1715, %v1843
  %v1972 = vsub.f32 %v1716, %v1844
  %v1973 = vsub.f32 %v1717, %v1845
  %v1974 = vsub.f32 %v1718, %v1846
  %v1975 = vsub.f32 %v1719, %v1847
  %v1976 = vsub.f32 %v1720, %v1848
  %v1977 = vsub.f32 %v1721, %v1849
  %v1978 = vsub.f32 %v1722, %v1850
  %v1979 = vsub.f32 %v1723, %v1851
  %v1980 = vsub.f32 %v1724, %v1852
  %v1981 = vsub.f32 %v1725, %v1853
  %v1982 = vsub.f32 %v1726, %v1854
  %v1983 = vsub.f32 %v1727, %v1855
  %v1984 = vsub.f32 %v1728, %v1856
  %v1985 = vsub.f32 %v1729, %v1857
  %v1986 = vsub.f32 %v1730, %v1858
  %v1987 = vsub.f32 %v1731, %v1859
  %v1988 = vsub.f32 %v1732, %v1860
  %v1989 = vsub.f32 %v1733, %v1861
  %v1990 = vsub.f32 %v1734, %v1862
  %v1991 = vsub.f32 %v1735, %v1863
  %v1992 = vsub.f32 %v1736, %v1864
  %v1993 = vsub.f32 %v1737, %v1865
  %v1994 = vsub.f32 %v1738, %v1866
  %v1995 = vsub.f32 %v1739, %v1867
  %v1996 = vsub.f32 %v1740, %v1868
  %v1997 = vsub.f32 %v1741, %v1869
  %v1998 = vsub.f32 %v1742, %v1870
  %v1999 = vsub.f32 %v1743, %v1871
  %v2000 = vsub.f32 %v1744, %v1872
  %v2001 = vsub.f32 %v1745, %v1873
  %v2002 = vsub.f32 %v1746, %v1874
  %v2003 = vsub.f32 %v1747, %v1875
  %v2004 = vsub.f32 %v1748, %v1876
  %v2005 = vsub.f32 %v1749, %v1877
  %v2006 = vsub.f32 %v1750, %v1878
  %v2007 = vsub.f32 %v1751, %v1879
  %v2008 = vsub.f32 %v1752, %v1880
  %v2009 = vsub.f32 %v1753, %v1881
  %v2010 = vsub.f32 %v1754, %v1882
  %v2011 = vsub.f32 %v1755, %v1883
  %v2012 = vsub.f32 %v1756, %v1884
  %v2013 = vsub.f32 %v1757, %v1885
  %v2014 = vsub.f32 %v1758, %v1886
  %v2015 = vsub.f32 %v1759, %v1887
  %v2016 = vsub.f32 %v1760, %v1888
  %v2017 = vsub.f32 %v1761, %v1889
  %v2018 = vsub.f32 %v1762, %v1890
  %v2019 = vsub.f32 %v1763, %v1891
  %v2020 = vsub.f32 %v1764, %v1892
  %v2021 = vsub.f32 %v1765, %v1893
  %v2022 = vsub.f32 %v1766, %v1894
  %v2023 = vsub.f32 %v1767, %v1895
  %v2024 = vsub.f32 %v1768, %v1896
  %v2025 = vsub.f32 %v1769, %v1897
  %v2026 = vsub.f32 %v1770, %v1898
  %v2027 = vsub.f32 %v1771, %v1899
  %v2028 = vsub.f32 %v1772, %v1900
  %v2029 = vsub.f32 %v1773, %v1901
  %v2030 = vsub.f32 %v1774, %v1902
  %v2031 = vsub.f32 %v1775, %v1903
  %v2032 = vsub.f32 %v1776, %v1904
  %v2033 = vsub.f32 %v1777, %v1905
  %v2034 = vsub.f32 %v1778, %v1906
  %v2035 = vsub.f32 %v1779, %v1907
  %v2036 = vsub.f32 %v1780, %v1908
  %v2037 = vsub.f32 %v1781, %v1909
  %v2038 = vsub.f32 %v1782, %v1910
  %v2039 = vsub.f32 %v1783, %v1911
  %v2040 = vsub.f32 %v1784, %v1912
  %v2041 = vsub.f32 %v1785, %v1913
  %v2042 = vsub.f32 %v1786, %v1914
  %v2043 = vsub.f32 %v1787, %v1915
  %v2044 = vsub.f32 %v1788, %v1916
  %v2045 = vsub.f32 %v1789, %v1917
  %v2046 = vsub.f32 %v1790, %v1918
  %v2047 = vsub.f32 %v1791, %v1919
  %v2048 = vsub.f32 %v1792, %v1920
  %v2049 = vsub.f32 %v1793, %v1921
  %v2050 = vsub.f32 %v1794, %v1922
  %v2051 = vsub.f32 %v1795, %v1923
  %v2052 = vsub.f32 %v1796, %v1924
  %v2053 = vsub.f32 %v1797, %v1925
  %v2054 = vsub.f32 %v1798, %v1926
  %v2055 = vsub.f32 %v1799, %v1927
  %v2056 = vsub.f32 %v1800, %v1928
  %v2057 = vsub.f32 %v1801, %v1929
  %v2058 = vsub.f32 %v1802, %v1930
  %v2059 = vsub.f32 %v1803, %v1931
  %v2060 = vsub.f32 %v1804, %v1932
  %v2061 = vsub.f32 %v1805, %v1933
  %v2062 = vsub.f32 %v1806, %v1934
  %v2063 = vsub.f32 %v1807, %v1935
  %v2064 = vsub.f32 %v1808, %v1936
  %v2065 = vsub.f32 %v1809, %v1937
  %v2066 = vsub.f32 %v1810, %v1938
  %v2067 = vsub.f32 %v1811, %v1939
  %v2068 = vsub.f32 %v1812, %v1940
  %v2069 = vld [vmem:[%s2] sm:$0xff]
  %v2070 = vld [vmem:[%s2 + $0x8] sm:$0xff]
  %v2071 = vld [vmem:[%s2 + $0x10] sm:$0xff]
  %v2072 = vld [vmem:[%s2 + $0x18] sm:$0xff]
  %v2073 = vld [vmem:[%s2 + $0x20] sm:$0xff]
  %v2074 = vld [vmem:[%s2 + $0x28] sm:$0xff]
  %v2075 = vld [vmem:[%s2 + $0x30] sm:$0xff]
  %v2076 = vld [vmem:[%s2 + $0x38] sm:$0xff]
  %v2077 = vld [vmem:[%s2 + $0x40] sm:$0xff]
  %v2078 = vld [vmem:[%s2 + $0x48] sm:$0xff]
  %v2079 = vld [vmem:[%s2 + $0x50] sm:$0xff]
  %v2080 = vld [vmem:[%s2 + $0x58] sm:$0xff]
  %v2081 = vld [vmem:[%s2 + $0x60] sm:$0xff]
  %v2082 = vld [vmem:[%s2 + $0x68] sm:$0xff]
  %v2083 = vld [vmem:[%s2 + $0x70] sm:$0xff]
  %v2084 = vld [vmem:[%s2 + $0x78] sm:$0xff]
  %v2085 = vld [vmem:[%s2 + $0x80] sm:$0xff]
  %v2086 = vld [vmem:[%s2 + $0x88] sm:$0xff]
  %v2087 = vld [vmem:[%s2 + $0x90] sm:$0xff]
  %v2088 = vld [vmem:[%s2 + $0x98] sm:$0xff]
  %v2089 = vld [vmem:[%s2 + $0xa0] sm:$0xff]
  %v2090 = vld [vmem:[%s2 + $0xa8] sm:$0xff]
  %v2091 = vld [vmem:[%s2 + $0xb0] sm:$0xff]
  %v2092 = vld [vmem:[%s2 + $0xb8] sm:$0xff]
  %v2093 = vld [vmem:[%s2 + $0xc0] sm:$0xff]
  %v2094 = vld [vmem:[%s2 + $0xc8] sm:$0xff]
  %v2095 = vld [vmem:[%s2 + $0xd0] sm:$0xff]
  %v2096 = vld [vmem:[%s2 + $0xd8] sm:$0xff]
  %v2097 = vld [vmem:[%s2 + $0xe0] sm:$0xff]
  %v2098 = vld [vmem:[%s2 + $0xe8] sm:$0xff]
  %v2099 = vld [vmem:[%s2 + $0xf0] sm:$0xff]
  %v2100 = vld [vmem:[%s2 + $0xf8] sm:$0xff]
  %v2101 = vld [vmem:[%s2 + $0x100] sm:$0xff]
  %v2102 = vld [vmem:[%s2 + $0x108] sm:$0xff]
  %v2103 = vld [vmem:[%s2 + $0x110] sm:$0xff]
  %v2104 = vld [vmem:[%s2 + $0x118] sm:$0xff]
  %v2105 = vld [vmem:[%s2 + $0x120] sm:$0xff]
  %v2106 = vld [vmem:[%s2 + $0x128] sm:$0xff]
  %v2107 = vld [vmem:[%s2 + $0x130] sm:$0xff]
  %v2108 = vld [vmem:[%s2 + $0x138] sm:$0xff]
  %v2109 = vld [vmem:[%s2 + $0x140] sm:$0xff]
  %v2110 = vld [vmem:[%s2 + $0x148] sm:$0xff]
  %v2111 = vld [vmem:[%s2 + $0x150] sm:$0xff]
  %v2112 = vld [vmem:[%s2 + $0x158] sm:$0xff]
  %v2113 = vld [vmem:[%s2 + $0x160] sm:$0xff]
  %v2114 = vld [vmem:[%s2 + $0x168] sm:$0xff]
  %v2115 = vld [vmem:[%s2 + $0x170] sm:$0xff]
  %v2116 = vld [vmem:[%s2 + $0x178] sm:$0xff]
  %v2117 = vld [vmem:[%s2 + $0x180] sm:$0xff]
  %v2118 = vld [vmem:[%s2 + $0x188] sm:$0xff]
  %v2119 = vld [vmem:[%s2 + $0x190] sm:$0xff]
  %v2120 = vld [vmem:[%s2 + $0x198] sm:$0xff]
  %v2121 = vld [vmem:[%s2 + $0x1a0] sm:$0xff]
  %v2122 = vld [vmem:[%s2 + $0x1a8] sm:$0xff]
  %v2123 = vld [vmem:[%s2 + $0x1b0] sm:$0xff]
  %v2124 = vld [vmem:[%s2 + $0x1b8] sm:$0xff]
  %v2125 = vld [vmem:[%s2 + $0x1c0] sm:$0xff]
  %v2126 = vld [vmem:[%s2 + $0x1c8] sm:$0xff]
  %v2127 = vld [vmem:[%s2 + $0x1d0] sm:$0xff]
  %v2128 = vld [vmem:[%s2 + $0x1d8] sm:$0xff]
  %v2129 = vld [vmem:[%s2 + $0x1e0] sm:$0xff]
  %v2130 = vld [vmem:[%s2 + $0x1e8] sm:$0xff]
  %v2131 = vld [vmem:[%s2 + $0x1f0] sm:$0xff]
  %v2132 = vld [vmem:[%s2 + $0x1f8] sm:$0xff]
  %v2133 = vld [vmem:[%s2 + $0x200] sm:$0xff]
  %v2134 = vld [vmem:[%s2 + $0x208] sm:$0xff]
  %v2135 = vld [vmem:[%s2 + $0x210] sm:$0xff]
  %v2136 = vld [vmem:[%s2 + $0x218] sm:$0xff]
  %v2137 = vld [vmem:[%s2 + $0x220] sm:$0xff]
  %v2138 = vld [vmem:[%s2 + $0x228] sm:$0xff]
  %v2139 = vld [vmem:[%s2 + $0x230] sm:$0xff]
  %v2140 = vld [vmem:[%s2 + $0x238] sm:$0xff]
  %v2141 = vld [vmem:[%s2 + $0x240] sm:$0xff]
  %v2142 = vld [vmem:[%s2 + $0x248] sm:$0xff]
  %v2143 = vld [vmem:[%s2 + $0x250] sm:$0xff]
  %v2144 = vld [vmem:[%s2 + $0x258] sm:$0xff]
  %v2145 = vld [vmem:[%s2 + $0x260] sm:$0xff]
  %v2146 = vld [vmem:[%s2 + $0x268] sm:$0xff]
  %v2147 = vld [vmem:[%s2 + $0x270] sm:$0xff]
  %v2148 = vld [vmem:[%s2 + $0x278] sm:$0xff]
  %v2149 = vld [vmem:[%s2 + $0x280] sm:$0xff]
  %v2150 = vld [vmem:[%s2 + $0x288] sm:$0xff]
  %v2151 = vld [vmem:[%s2 + $0x290] sm:$0xff]
  %v2152 = vld [vmem:[%s2 + $0x298] sm:$0xff]
  %v2153 = vld [vmem:[%s2 + $0x2a0] sm:$0xff]
  %v2154 = vld [vmem:[%s2 + $0x2a8] sm:$0xff]
  %v2155 = vld [vmem:[%s2 + $0x2b0] sm:$0xff]
  %v2156 = vld [vmem:[%s2 + $0x2b8] sm:$0xff]
  %v2157 = vld [vmem:[%s2 + $0x2c0] sm:$0xff]
  %v2158 = vld [vmem:[%s2 + $0x2c8] sm:$0xff]
  %v2159 = vld [vmem:[%s2 + $0x2d0] sm:$0xff]
  %v2160 = vld [vmem:[%s2 + $0x2d8] sm:$0xff]
  %v2161 = vld [vmem:[%s2 + $0x2e0] sm:$0xff]
  %v2162 = vld [vmem:[%s2 + $0x2e8] sm:$0xff]
  %v2163 = vld [vmem:[%s2 + $0x2f0] sm:$0xff]
  %v2164 = vld [vmem:[%s2 + $0x2f8] sm:$0xff]
  %v2165 = vld [vmem:[%s2 + $0x300] sm:$0xff]
  %v2166 = vld [vmem:[%s2 + $0x308] sm:$0xff]
  %v2167 = vld [vmem:[%s2 + $0x310] sm:$0xff]
  %v2168 = vld [vmem:[%s2 + $0x318] sm:$0xff]
  %v2169 = vld [vmem:[%s2 + $0x320] sm:$0xff]
  %v2170 = vld [vmem:[%s2 + $0x328] sm:$0xff]
  %v2171 = vld [vmem:[%s2 + $0x330] sm:$0xff]
  %v2172 = vld [vmem:[%s2 + $0x338] sm:$0xff]
  %v2173 = vld [vmem:[%s2 + $0x340] sm:$0xff]
  %v2174 = vld [vmem:[%s2 + $0x348] sm:$0xff]
  %v2175 = vld [vmem:[%s2 + $0x350] sm:$0xff]
  %v2176 = vld [vmem:[%s2 + $0x358] sm:$0xff]
  %v2177 = vld [vmem:[%s2 + $0x360] sm:$0xff]
  %v2178 = vld [vmem:[%s2 + $0x368] sm:$0xff]
  %v2179 = vld [vmem:[%s2 + $0x370] sm:$0xff]
  %v2180 = vld [vmem:[%s2 + $0x378] sm:$0xff]
  %v2181 = vld [vmem:[%s2 + $0x380] sm:$0xff]
  %v2182 = vld [vmem:[%s2 + $0x388] sm:$0xff]
  %v2183 = vld [vmem:[%s2 + $0x390] sm:$0xff]
  %v2184 = vld [vmem:[%s2 + $0x398] sm:$0xff]
  %v2185 = vld [vmem:[%s2 + $0x3a0] sm:$0xff]
  %v2186 = vld [vmem:[%s2 + $0x3a8] sm:$0xff]
  %v2187 = vld [vmem:[%s2 + $0x3b0] sm:$0xff]
  %v2188 = vld [vmem:[%s2 + $0x3b8] sm:$0xff]
  %v2189 = vld [vmem:[%s2 + $0x3c0] sm:$0xff]
  %v2190 = vld [vmem:[%s2 + $0x3c8] sm:$0xff]
  %v2191 = vld [vmem:[%s2 + $0x3d0] sm:$0xff]
  %v2192 = vld [vmem:[%s2 + $0x3d8] sm:$0xff]
  %v2193 = vld [vmem:[%s2 + $0x3e0] sm:$0xff]
  %v2194 = vld [vmem:[%s2 + $0x3e8] sm:$0xff]
  %v2195 = vld [vmem:[%s2 + $0x3f0] sm:$0xff]
  %v2196 = vld [vmem:[%s2 + $0x3f8] sm:$0xff]
  %v2197 = vadd.f32 %v1941, 1e-05
  %v2198 = vadd.f32 %v1942, 1e-05
  %v2199 = vadd.f32 %v1943, 1e-05
  %v2200 = vadd.f32 %v1944, 1e-05
  %v2201 = vadd.f32 %v1945, 1e-05
  %v2202 = vadd.f32 %v1946, 1e-05
  %v2203 = vadd.f32 %v1947, 1e-05
  %v2204 = vadd.f32 %v1948, 1e-05
  %v2205 = vadd.f32 %v1949, 1e-05
  %v2206 = vadd.f32 %v1950, 1e-05
  %v2207 = vadd.f32 %v1951, 1e-05
  %v2208 = vadd.f32 %v1952, 1e-05
  %v2209 = vadd.f32 %v1953, 1e-05
  %v2210 = vadd.f32 %v1954, 1e-05
  %v2211 = vadd.f32 %v1955, 1e-05
  %v2212 = vadd.f32 %v1956, 1e-05
  %v2213 = vadd.f32 %v1957, 1e-05
  %v2214 = vadd.f32 %v1958, 1e-05
  %v2215 = vadd.f32 %v1959, 1e-05
  %v2216 = vadd.f32 %v1960, 1e-05
  %v2217 = vadd.f32 %v1961, 1e-05
  %v2218 = vadd.f32 %v1962, 1e-05
  %v2219 = vadd.f32 %v1963, 1e-05
  %v2220 = vadd.f32 %v1964, 1e-05
  %v2221 = vadd.f32 %v1965, 1e-05
  %v2222 = vadd.f32 %v1966, 1e-05
  %v2223 = vadd.f32 %v1967, 1e-05
  %v2224 = vadd.f32 %v1968, 1e-05
  %v2225 = vadd.f32 %v1969, 1e-05
  %v2226 = vadd.f32 %v1970, 1e-05
  %v2227 = vadd.f32 %v1971, 1e-05
  %v2228 = vadd.f32 %v1972, 1e-05
  %v2229 = vadd.f32 %v1973, 1e-05
  %v2230 = vadd.f32 %v1974, 1e-05
  %v2231 = vadd.f32 %v1975, 1e-05
  %v2232 = vadd.f32 %v1976, 1e-05
  %v2233 = vadd.f32 %v1977, 1e-05
  %v2234 = vadd.f32 %v1978, 1e-05
  %v2235 = vadd.f32 %v1979, 1e-05
  %v2236 = vadd.f32 %v1980, 1e-05
  %v2237 = vadd.f32 %v1981, 1e-05
  %v2238 = vadd.f32 %v1982, 1e-05
  %v2239 = vadd.f32 %v1983, 1e-05
  %v2240 = vadd.f32 %v1984, 1e-05
  %v2241 = vadd.f32 %v1985, 1e-05
  %v2242 = vadd.f32 %v1986, 1e-05
  %v2243 = vadd.f32 %v1987, 1e-05
  %v2244 = vadd.f32 %v1988, 1e-05
  %v2245 = vadd.f32 %v1989, 1e-05
  %v2246 = vadd.f32 %v1990, 1e-05
  %v2247 = vadd.f32 %v1991, 1e-05
  %v2248 = vadd.f32 %v1992, 1e-05
  %v2249 = vadd.f32 %v1993, 1e-05
  %v2250 = vadd.f32 %v1994, 1e-05
  %v2251 = vadd.f32 %v1995, 1e-05
  %v2252 = vadd.f32 %v1996, 1e-05
  %v2253 = vadd.f32 %v1997, 1e-05
  %v2254 = vadd.f32 %v1998, 1e-05
  %v2255 = vadd.f32 %v1999, 1e-05
  %v2256 = vadd.f32 %v2000, 1e-05
  %v2257 = vadd.f32 %v2001, 1e-05
  %v2258 = vadd.f32 %v2002, 1e-05
  %v2259 = vadd.f32 %v2003, 1e-05
  %v2260 = vadd.f32 %v2004, 1e-05
  %v2261 = vadd.f32 %v2005, 1e-05
  %v2262 = vadd.f32 %v2006, 1e-05
  %v2263 = vadd.f32 %v2007, 1e-05
  %v2264 = vadd.f32 %v2008, 1e-05
  %v2265 = vadd.f32 %v2009, 1e-05
  %v2266 = vadd.f32 %v2010, 1e-05
  %v2267 = vadd.f32 %v2011, 1e-05
  %v2268 = vadd.f32 %v2012, 1e-05
  %v2269 = vadd.f32 %v2013, 1e-05
  %v2270 = vadd.f32 %v2014, 1e-05
  %v2271 = vadd.f32 %v2015, 1e-05
  %v2272 = vadd.f32 %v2016, 1e-05
  %v2273 = vadd.f32 %v2017, 1e-05
  %v2274 = vadd.f32 %v2018, 1e-05
  %v2275 = vadd.f32 %v2019, 1e-05
  %v2276 = vadd.f32 %v2020, 1e-05
  %v2277 = vadd.f32 %v2021, 1e-05
  %v2278 = vadd.f32 %v2022, 1e-05
  %v2279 = vadd.f32 %v2023, 1e-05
  %v2280 = vadd.f32 %v2024, 1e-05
  %v2281 = vadd.f32 %v2025, 1e-05
  %v2282 = vadd.f32 %v2026, 1e-05
  %v2283 = vadd.f32 %v2027, 1e-05
  %v2284 = vadd.f32 %v2028, 1e-05
  %v2285 = vadd.f32 %v2029, 1e-05
  %v2286 = vadd.f32 %v2030, 1e-05
  %v2287 = vadd.f32 %v2031, 1e-05
  %v2288 = vadd.f32 %v2032, 1e-05
  %v2289 = vadd.f32 %v2033, 1e-05
  %v2290 = vadd.f32 %v2034, 1e-05
  %v2291 = vadd.f32 %v2035, 1e-05
  %v2292 = vadd.f32 %v2036, 1e-05
  %v2293 = vadd.f32 %v2037, 1e-05
  %v2294 = vadd.f32 %v2038, 1e-05
  %v2295 = vadd.f32 %v2039, 1e-05
  %v2296 = vadd.f32 %v2040, 1e-05
  %v2297 = vadd.f32 %v2041, 1e-05
  %v2298 = vadd.f32 %v2042, 1e-05
  %v2299 = vadd.f32 %v2043, 1e-05
  %v2300 = vadd.f32 %v2044, 1e-05
  %v2301 = vadd.f32 %v2045, 1e-05
  %v2302 = vadd.f32 %v2046, 1e-05
  %v2303 = vadd.f32 %v2047, 1e-05
  %v2304 = vadd.f32 %v2048, 1e-05
  %v2305 = vadd.f32 %v2049, 1e-05
  %v2306 = vadd.f32 %v2050, 1e-05
  %v2307 = vadd.f32 %v2051, 1e-05
  %v2308 = vadd.f32 %v2052, 1e-05
  %v2309 = vadd.f32 %v2053, 1e-05
  %v2310 = vadd.f32 %v2054, 1e-05
  %v2311 = vadd.f32 %v2055, 1e-05
  %v2312 = vadd.f32 %v2056, 1e-05
  %v2313 = vadd.f32 %v2057, 1e-05
  %v2314 = vadd.f32 %v2058, 1e-05
  %v2315 = vadd.f32 %v2059, 1e-05
  %v2316 = vadd.f32 %v2060, 1e-05
  %v2317 = vadd.f32 %v2061, 1e-05
  %v2318 = vadd.f32 %v2062, 1e-05
  %v2319 = vadd.f32 %v2063, 1e-05
  %v2320 = vadd.f32 %v2064, 1e-05
  %v2321 = vadd.f32 %v2065, 1e-05
  %v2322 = vadd.f32 %v2066, 1e-05
  %v2323 = vadd.f32 %v2067, 1e-05
  %v2324 = vadd.f32 %v2068, 1e-05
  %v2325 = vrsqrt.pop %v2197
  %v2326 = vmul.f32 %v2325, %v2197
  %v2327 = vmul.f32 %v2326, %v2325
  %v2328 = vmul.f32 0.5, %v2327
  %v2329 = vsub.f32 1.5, %v2328
  %v2330 = vmul.f32 %v2325, %v2329
  %vm2331 = vweird.f32 %v2197
  %vm2332 = vweird.f32 %v2325
  %vm2333 = vmor %vm2331, %vm2332
  %v2334 = vsel %vm2333, %v2325, %v2330
  %v2335 = vrsqrt.pop %v2198
  %v2336 = vmul.f32 %v2335, %v2198
  %v2337 = vmul.f32 %v2336, %v2335
  %v2338 = vmul.f32 0.5, %v2337
  %v2339 = vsub.f32 1.5, %v2338
  %v2340 = vmul.f32 %v2335, %v2339
  %vm2341 = vweird.f32 %v2198
  %vm2342 = vweird.f32 %v2335
  %vm2343 = vmor %vm2341, %vm2342
  %v2344 = vsel %vm2343, %v2335, %v2340
  %v2345 = vrsqrt.pop %v2199
  %v2346 = vmul.f32 %v2345, %v2199
  %v2347 = vmul.f32 %v2346, %v2345
  %v2348 = vmul.f32 0.5, %v2347
  %v2349 = vsub.f32 1.5, %v2348
  %v2350 = vmul.f32 %v2345, %v2349
  %vm2351 = vweird.f32 %v2199
  %vm2352 = vweird.f32 %v2345
  %vm2353 = vmor %vm2351, %vm2352
  %v2354 = vsel %vm2353, %v2345, %v2350
  %v2355 = vrsqrt.pop %v2200
  %v2356 = vmul.f32 %v2355, %v2200
  %v2357 = vmul.f32 %v2356, %v2355
  %v2358 = vmul.f32 0.5, %v2357
  %v2359 = vsub.f32 1.5, %v2358
  %v2360 = vmul.f32 %v2355, %v2359
  %vm2361 = vweird.f32 %v2200
  %vm2362 = vweird.f32 %v2355
  %vm2363 = vmor %vm2361, %vm2362
  %v2364 = vsel %vm2363, %v2355, %v2360
  %v2365 = vrsqrt.pop %v2201
  %v2366 = vmul.f32 %v2365, %v2201
  %v2367 = vmul.f32 %v2366, %v2365
  %v2368 = vmul.f32 0.5, %v2367
  %v2369 = vsub.f32 1.5, %v2368
  %v2370 = vmul.f32 %v2365, %v2369
  %vm2371 = vweird.f32 %v2201
  %vm2372 = vweird.f32 %v2365
  %vm2373 = vmor %vm2371, %vm2372
  %v2374 = vsel %vm2373, %v2365, %v2370
  %v2375 = vrsqrt.pop %v2202
  %v2376 = vmul.f32 %v2375, %v2202
  %v2377 = vmul.f32 %v2376, %v2375
  %v2378 = vmul.f32 0.5, %v2377
  %v2379 = vsub.f32 1.5, %v2378
  %v2380 = vmul.f32 %v2375, %v2379
  %vm2381 = vweird.f32 %v2202
  %vm2382 = vweird.f32 %v2375
  %vm2383 = vmor %vm2381, %vm2382
  %v2384 = vsel %vm2383, %v2375, %v2380
  %v2385 = vrsqrt.pop %v2203
  %v2386 = vmul.f32 %v2385, %v2203
  %v2387 = vmul.f32 %v2386, %v2385
  %v2388 = vmul.f32 0.5, %v2387
  %v2389 = vsub.f32 1.5, %v2388
  %v2390 = vmul.f32 %v2385, %v2389
  %vm2391 = vweird.f32 %v2203
  %vm2392 = vweird.f32 %v2385
  %vm2393 = vmor %vm2391, %vm2392
  %v2394 = vsel %vm2393, %v2385, %v2390
  %v2395 = vrsqrt.pop %v2204
  %v2396 = vmul.f32 %v2395, %v2204
  %v2397 = vmul.f32 %v2396, %v2395
  %v2398 = vmul.f32 0.5, %v2397
  %v2399 = vsub.f32 1.5, %v2398
  %v2400 = vmul.f32 %v2395, %v2399
  %vm2401 = vweird.f32 %v2204
  %vm2402 = vweird.f32 %v2395
  %vm2403 = vmor %vm2401, %vm2402
  %v2404 = vsel %vm2403, %v2395, %v2400
  %v2405 = vrsqrt.pop %v2205
  %v2406 = vmul.f32 %v2405, %v2205
  %v2407 = vmul.f32 %v2406, %v2405
  %v2408 = vmul.f32 0.5, %v2407
  %v2409 = vsub.f32 1.5, %v2408
  %v2410 = vmul.f32 %v2405, %v2409
  %vm2411 = vweird.f32 %v2205
  %vm2412 = vweird.f32 %v2405
  %vm2413 = vmor %vm2411, %vm2412
  %v2414 = vsel %vm2413, %v2405, %v2410
  %v2415 = vrsqrt.pop %v2206
  %v2416 = vmul.f32 %v2415, %v2206
  %v2417 = vmul.f32 %v2416, %v2415
  %v2418 = vmul.f32 0.5, %v2417
  %v2419 = vsub.f32 1.5, %v2418
  %v2420 = vmul.f32 %v2415, %v2419
  %vm2421 = vweird.f32 %v2206
  %vm2422 = vweird.f32 %v2415
  %vm2423 = vmor %vm2421, %vm2422
  %v2424 = vsel %vm2423, %v2415, %v2420
  %v2425 = vrsqrt.pop %v2207
  %v2426 = vmul.f32 %v2425, %v2207
  %v2427 = vmul.f32 %v2426, %v2425
  %v2428 = vmul.f32 0.5, %v2427
  %v2429 = vsub.f32 1.5, %v2428
  %v2430 = vmul.f32 %v2425, %v2429
  %vm2431 = vweird.f32 %v2207
  %vm2432 = vweird.f32 %v2425
  %vm2433 = vmor %vm2431, %vm2432
  %v2434 = vsel %vm2433, %v2425, %v2430
  %v2435 = vrsqrt.pop %v2208
  %v2436 = vmul.f32 %v2435, %v2208
  %v2437 = vmul.f32 %v2436, %v2435
  %v2438 = vmul.f32 0.5, %v2437
  %v2439 = vsub.f32 1.5, %v2438
  %v2440 = vmul.f32 %v2435, %v2439
  %vm2441 = vweird.f32 %v2208
  %vm2442 = vweird.f32 %v2435
  %vm2443 = vmor %vm2441, %vm2442
  %v2444 = vsel %vm2443, %v2435, %v2440
  %v2445 = vrsqrt.pop %v2209
  %v2446 = vmul.f32 %v2445, %v2209
  %v2447 = vmul.f32 %v2446, %v2445
  %v2448 = vmul.f32 0.5, %v2447
  %v2449 = vsub.f32 1.5, %v2448
  %v2450 = vmul.f32 %v2445, %v2449
  %vm2451 = vweird.f32 %v2209
  %vm2452 = vweird.f32 %v2445
  %vm2453 = vmor %vm2451, %vm2452
  %v2454 = vsel %vm2453, %v2445, %v2450
  %v2455 = vrsqrt.pop %v2210
  %v2456 = vmul.f32 %v2455, %v2210
  %v2457 = vmul.f32 %v2456, %v2455
  %v2458 = vmul.f32 0.5, %v2457
  %v2459 = vsub.f32 1.5, %v2458
  %v2460 = vmul.f32 %v2455, %v2459
  %vm2461 = vweird.f32 %v2210
  %vm2462 = vweird.f32 %v2455
  %vm2463 = vmor %vm2461, %vm2462
  %v2464 = vsel %vm2463, %v2455, %v2460
  %v2465 = vrsqrt.pop %v2211
  %v2466 = vmul.f32 %v2465, %v2211
  %v2467 = vmul.f32 %v2466, %v2465
  %v2468 = vmul.f32 0.5, %v2467
  %v2469 = vsub.f32 1.5, %v2468
  %v2470 = vmul.f32 %v2465, %v2469
  %vm2471 = vweird.f32 %v2211
  %vm2472 = vweird.f32 %v2465
  %vm2473 = vmor %vm2471, %vm2472
  %v2474 = vsel %vm2473, %v2465, %v2470
  %v2475 = vrsqrt.pop %v2212
  %v2476 = vmul.f32 %v2475, %v2212
  %v2477 = vmul.f32 %v2476, %v2475
  %v2478 = vmul.f32 0.5, %v2477
  %v2479 = vsub.f32 1.5, %v2478
  %v2480 = vmul.f32 %v2475, %v2479
  %vm2481 = vweird.f32 %v2212
  %vm2482 = vweird.f32 %v2475
  %vm2483 = vmor %vm2481, %vm2482
  %v2484 = vsel %vm2483, %v2475, %v2480
  %v2485 = vrsqrt.pop %v2213
  %v2486 = vmul.f32 %v2485, %v2213
  %v2487 = vmul.f32 %v2486, %v2485
  %v2488 = vmul.f32 0.5, %v2487
  %v2489 = vsub.f32 1.5, %v2488
  %v2490 = vmul.f32 %v2485, %v2489
  %vm2491 = vweird.f32 %v2213
  %vm2492 = vweird.f32 %v2485
  %vm2493 = vmor %vm2491, %vm2492
  %v2494 = vsel %vm2493, %v2485, %v2490
  %v2495 = vrsqrt.pop %v2214
  %v2496 = vmul.f32 %v2495, %v2214
  %v2497 = vmul.f32 %v2496, %v2495
  %v2498 = vmul.f32 0.5, %v2497
  %v2499 = vsub.f32 1.5, %v2498
  %v2500 = vmul.f32 %v2495, %v2499
  %vm2501 = vweird.f32 %v2214
  %vm2502 = vweird.f32 %v2495
  %vm2503 = vmor %vm2501, %vm2502
  %v2504 = vsel %vm2503, %v2495, %v2500
  %v2505 = vrsqrt.pop %v2215
  %v2506 = vmul.f32 %v2505, %v2215
  %v2507 = vmul.f32 %v2506, %v2505
  %v2508 = vmul.f32 0.5, %v2507
  %v2509 = vsub.f32 1.5, %v2508
  %v2510 = vmul.f32 %v2505, %v2509
  %vm2511 = vweird.f32 %v2215
  %vm2512 = vweird.f32 %v2505
  %vm2513 = vmor %vm2511, %vm2512
  %v2514 = vsel %vm2513, %v2505, %v2510
  %v2515 = vrsqrt.pop %v2216
  %v2516 = vmul.f32 %v2515, %v2216
  %v2517 = vmul.f32 %v2516, %v2515
  %v2518 = vmul.f32 0.5, %v2517
  %v2519 = vsub.f32 1.5, %v2518
  %v2520 = vmul.f32 %v2515, %v2519
  %vm2521 = vweird.f32 %v2216
  %vm2522 = vweird.f32 %v2515
  %vm2523 = vmor %vm2521, %vm2522
  %v2524 = vsel %vm2523, %v2515, %v2520
  %v2525 = vrsqrt.pop %v2217
  %v2526 = vmul.f32 %v2525, %v2217
  %v2527 = vmul.f32 %v2526, %v2525
  %v2528 = vmul.f32 0.5, %v2527
  %v2529 = vsub.f32 1.5, %v2528
  %v2530 = vmul.f32 %v2525, %v2529
  %vm2531 = vweird.f32 %v2217
  %vm2532 = vweird.f32 %v2525
  %vm2533 = vmor %vm2531, %vm2532
  %v2534 = vsel %vm2533, %v2525, %v2530
  %v2535 = vrsqrt.pop %v2218
  %v2536 = vmul.f32 %v2535, %v2218
  %v2537 = vmul.f32 %v2536, %v2535
  %v2538 = vmul.f32 0.5, %v2537
  %v2539 = vsub.f32 1.5, %v2538
  %v2540 = vmul.f32 %v2535, %v2539
  %vm2541 = vweird.f32 %v2218
  %vm2542 = vweird.f32 %v2535
  %vm2543 = vmor %vm2541, %vm2542
  %v2544 = vsel %vm2543, %v2535, %v2540
  %v2545 = vrsqrt.pop %v2219
  %v2546 = vmul.f32 %v2545, %v2219
  %v2547 = vmul.f32 %v2546, %v2545
  %v2548 = vmul.f32 0.5, %v2547
  %v2549 = vsub.f32 1.5, %v2548
  %v2550 = vmul.f32 %v2545, %v2549
  %vm2551 = vweird.f32 %v2219
  %vm2552 = vweird.f32 %v2545
  %vm2553 = vmor %vm2551, %vm2552
  %v2554 = vsel %vm2553, %v2545, %v2550
  %v2555 = vrsqrt.pop %v2220
  %v2556 = vmul.f32 %v2555, %v2220
  %v2557 = vmul.f32 %v2556, %v2555
  %v2558 = vmul.f32 0.5, %v2557
  %v2559 = vsub.f32 1.5, %v2558
  %v2560 = vmul.f32 %v2555, %v2559
  %vm2561 = vweird.f32 %v2220
  %vm2562 = vweird.f32 %v2555
  %vm2563 = vmor %vm2561, %vm2562
  %v2564 = vsel %vm2563, %v2555, %v2560
  %v2565 = vrsqrt.pop %v2221
  %v2566 = vmul.f32 %v2565, %v2221
  %v2567 = vmul.f32 %v2566, %v2565
  %v2568 = vmul.f32 0.5, %v2567
  %v2569 = vsub.f32 1.5, %v2568
  %v2570 = vmul.f32 %v2565, %v2569
  %vm2571 = vweird.f32 %v2221
  %vm2572 = vweird.f32 %v2565
  %vm2573 = vmor %vm2571, %vm2572
  %v2574 = vsel %vm2573, %v2565, %v2570
  %v2575 = vrsqrt.pop %v2222
  %v2576 = vmul.f32 %v2575, %v2222
  %v2577 = vmul.f32 %v2576, %v2575
  %v2578 = vmul.f32 0.5, %v2577
  %v2579 = vsub.f32 1.5, %v2578
  %v2580 = vmul.f32 %v2575, %v2579
  %vm2581 = vweird.f32 %v2222
  %vm2582 = vweird.f32 %v2575
  %vm2583 = vmor %vm2581, %vm2582
  %v2584 = vsel %vm2583, %v2575, %v2580
  %v2585 = vrsqrt.pop %v2223
  %v2586 = vmul.f32 %v2585, %v2223
  %v2587 = vmul.f32 %v2586, %v2585
  %v2588 = vmul.f32 0.5, %v2587
  %v2589 = vsub.f32 1.5, %v2588
  %v2590 = vmul.f32 %v2585, %v2589
  %vm2591 = vweird.f32 %v2223
  %vm2592 = vweird.f32 %v2585
  %vm2593 = vmor %vm2591, %vm2592
  %v2594 = vsel %vm2593, %v2585, %v2590
  %v2595 = vrsqrt.pop %v2224
  %v2596 = vmul.f32 %v2595, %v2224
  %v2597 = vmul.f32 %v2596, %v2595
  %v2598 = vmul.f32 0.5, %v2597
  %v2599 = vsub.f32 1.5, %v2598
  %v2600 = vmul.f32 %v2595, %v2599
  %vm2601 = vweird.f32 %v2224
  %vm2602 = vweird.f32 %v2595
  %vm2603 = vmor %vm2601, %vm2602
  %v2604 = vsel %vm2603, %v2595, %v2600
  %v2605 = vrsqrt.pop %v2225
  %v2606 = vmul.f32 %v2605, %v2225
  %v2607 = vmul.f32 %v2606, %v2605
  %v2608 = vmul.f32 0.5, %v2607
  %v2609 = vsub.f32 1.5, %v2608
  %v2610 = vmul.f32 %v2605, %v2609
  %vm2611 = vweird.f32 %v2225
  %vm2612 = vweird.f32 %v2605
  %vm2613 = vmor %vm2611, %vm2612
  %v2614 = vsel %vm2613, %v2605, %v2610
  %v2615 = vrsqrt.pop %v2226
  %v2616 = vmul.f32 %v2615, %v2226
  %v2617 = vmul.f32 %v2616, %v2615
  %v2618 = vmul.f32 0.5, %v2617
  %v2619 = vsub.f32 1.5, %v2618
  %v2620 = vmul.f32 %v2615, %v2619
  %vm2621 = vweird.f32 %v2226
  %vm2622 = vweird.f32 %v2615
  %vm2623 = vmor %vm2621, %vm2622
  %v2624 = vsel %vm2623, %v2615, %v2620
  %v2625 = vrsqrt.pop %v2227
  %v2626 = vmul.f32 %v2625, %v2227
  %v2627 = vmul.f32 %v2626, %v2625
  %v2628 = vmul.f32 0.5, %v2627
  %v2629 = vsub.f32 1.5, %v2628
  %v2630 = vmul.f32 %v2625, %v2629
  %vm2631 = vweird.f32 %v2227
  %vm2632 = vweird.f32 %v2625
  %vm2633 = vmor %vm2631, %vm2632
  %v2634 = vsel %vm2633, %v2625, %v2630
  %v2635 = vrsqrt.pop %v2228
  %v2636 = vmul.f32 %v2635, %v2228
  %v2637 = vmul.f32 %v2636, %v2635
  %v2638 = vmul.f32 0.5, %v2637
  %v2639 = vsub.f32 1.5, %v2638
  %v2640 = vmul.f32 %v2635, %v2639
  %vm2641 = vweird.f32 %v2228
  %vm2642 = vweird.f32 %v2635
  %vm2643 = vmor %vm2641, %vm2642
  %v2644 = vsel %vm2643, %v2635, %v2640
  %v2645 = vrsqrt.pop %v2229
  %v2646 = vmul.f32 %v2645, %v2229
  %v2647 = vmul.f32 %v2646, %v2645
  %v2648 = vmul.f32 0.5, %v2647
  %v2649 = vsub.f32 1.5, %v2648
  %v2650 = vmul.f32 %v2645, %v2649
  %vm2651 = vweird.f32 %v2229
  %vm2652 = vweird.f32 %v2645
  %vm2653 = vmor %vm2651, %vm2652
  %v2654 = vsel %vm2653, %v2645, %v2650
  %v2655 = vrsqrt.pop %v2230
  %v2656 = vmul.f32 %v2655, %v2230
  %v2657 = vmul.f32 %v2656, %v2655
  %v2658 = vmul.f32 0.5, %v2657
  %v2659 = vsub.f32 1.5, %v2658
  %v2660 = vmul.f32 %v2655, %v2659
  %vm2661 = vweird.f32 %v2230
  %vm2662 = vweird.f32 %v2655
  %vm2663 = vmor %vm2661, %vm2662
  %v2664 = vsel %vm2663, %v2655, %v2660
  %v2665 = vrsqrt.pop %v2231
  %v2666 = vmul.f32 %v2665, %v2231
  %v2667 = vmul.f32 %v2666, %v2665
  %v2668 = vmul.f32 0.5, %v2667
  %v2669 = vsub.f32 1.5, %v2668
  %v2670 = vmul.f32 %v2665, %v2669
  %vm2671 = vweird.f32 %v2231
  %vm2672 = vweird.f32 %v2665
  %vm2673 = vmor %vm2671, %vm2672
  %v2674 = vsel %vm2673, %v2665, %v2670
  %v2675 = vrsqrt.pop %v2232
  %v2676 = vmul.f32 %v2675, %v2232
  %v2677 = vmul.f32 %v2676, %v2675
  %v2678 = vmul.f32 0.5, %v2677
  %v2679 = vsub.f32 1.5, %v2678
  %v2680 = vmul.f32 %v2675, %v2679
  %vm2681 = vweird.f32 %v2232
  %vm2682 = vweird.f32 %v2675
  %vm2683 = vmor %vm2681, %vm2682
  %v2684 = vsel %vm2683, %v2675, %v2680
  %v2685 = vrsqrt.pop %v2233
  %v2686 = vmul.f32 %v2685, %v2233
  %v2687 = vmul.f32 %v2686, %v2685
  %v2688 = vmul.f32 0.5, %v2687
  %v2689 = vsub.f32 1.5, %v2688
  %v2690 = vmul.f32 %v2685, %v2689
  %vm2691 = vweird.f32 %v2233
  %vm2692 = vweird.f32 %v2685
  %vm2693 = vmor %vm2691, %vm2692
  %v2694 = vsel %vm2693, %v2685, %v2690
  %v2695 = vrsqrt.pop %v2234
  %v2696 = vmul.f32 %v2695, %v2234
  %v2697 = vmul.f32 %v2696, %v2695
  %v2698 = vmul.f32 0.5, %v2697
  %v2699 = vsub.f32 1.5, %v2698
  %v2700 = vmul.f32 %v2695, %v2699
  %vm2701 = vweird.f32 %v2234
  %vm2702 = vweird.f32 %v2695
  %vm2703 = vmor %vm2701, %vm2702
  %v2704 = vsel %vm2703, %v2695, %v2700
  %v2705 = vrsqrt.pop %v2235
  %v2706 = vmul.f32 %v2705, %v2235
  %v2707 = vmul.f32 %v2706, %v2705
  %v2708 = vmul.f32 0.5, %v2707
  %v2709 = vsub.f32 1.5, %v2708
  %v2710 = vmul.f32 %v2705, %v2709
  %vm2711 = vweird.f32 %v2235
  %vm2712 = vweird.f32 %v2705
  %vm2713 = vmor %vm2711, %vm2712
  %v2714 = vsel %vm2713, %v2705, %v2710
  %v2715 = vrsqrt.pop %v2236
  %v2716 = vmul.f32 %v2715, %v2236
  %v2717 = vmul.f32 %v2716, %v2715
  %v2718 = vmul.f32 0.5, %v2717
  %v2719 = vsub.f32 1.5, %v2718
  %v2720 = vmul.f32 %v2715, %v2719
  %vm2721 = vweird.f32 %v2236
  %vm2722 = vweird.f32 %v2715
  %vm2723 = vmor %vm2721, %vm2722
  %v2724 = vsel %vm2723, %v2715, %v2720
  %v2725 = vrsqrt.pop %v2237
  %v2726 = vmul.f32 %v2725, %v2237
  %v2727 = vmul.f32 %v2726, %v2725
  %v2728 = vmul.f32 0.5, %v2727
  %v2729 = vsub.f32 1.5, %v2728
  %v2730 = vmul.f32 %v2725, %v2729
  %vm2731 = vweird.f32 %v2237
  %vm2732 = vweird.f32 %v2725
  %vm2733 = vmor %vm2731, %vm2732
  %v2734 = vsel %vm2733, %v2725, %v2730
  %v2735 = vrsqrt.pop %v2238
  %v2736 = vmul.f32 %v2735, %v2238
  %v2737 = vmul.f32 %v2736, %v2735
  %v2738 = vmul.f32 0.5, %v2737
  %v2739 = vsub.f32 1.5, %v2738
  %v2740 = vmul.f32 %v2735, %v2739
  %vm2741 = vweird.f32 %v2238
  %vm2742 = vweird.f32 %v2735
  %vm2743 = vmor %vm2741, %vm2742
  %v2744 = vsel %vm2743, %v2735, %v2740
  %v2745 = vrsqrt.pop %v2239
  %v2746 = vmul.f32 %v2745, %v2239
  %v2747 = vmul.f32 %v2746, %v2745
  %v2748 = vmul.f32 0.5, %v2747
  %v2749 = vsub.f32 1.5, %v2748
  %v2750 = vmul.f32 %v2745, %v2749
  %vm2751 = vweird.f32 %v2239
  %vm2752 = vweird.f32 %v2745
  %vm2753 = vmor %vm2751, %vm2752
  %v2754 = vsel %vm2753, %v2745, %v2750
  %v2755 = vrsqrt.pop %v2240
  %v2756 = vmul.f32 %v2755, %v2240
  %v2757 = vmul.f32 %v2756, %v2755
  %v2758 = vmul.f32 0.5, %v2757
  %v2759 = vsub.f32 1.5, %v2758
  %v2760 = vmul.f32 %v2755, %v2759
  %vm2761 = vweird.f32 %v2240
  %vm2762 = vweird.f32 %v2755
  %vm2763 = vmor %vm2761, %vm2762
  %v2764 = vsel %vm2763, %v2755, %v2760
  %v2765 = vrsqrt.pop %v2241
  %v2766 = vmul.f32 %v2765, %v2241
  %v2767 = vmul.f32 %v2766, %v2765
  %v2768 = vmul.f32 0.5, %v2767
  %v2769 = vsub.f32 1.5, %v2768
  %v2770 = vmul.f32 %v2765, %v2769
  %vm2771 = vweird.f32 %v2241
  %vm2772 = vweird.f32 %v2765
  %vm2773 = vmor %vm2771, %vm2772
  %v2774 = vsel %vm2773, %v2765, %v2770
  %v2775 = vrsqrt.pop %v2242
  %v2776 = vmul.f32 %v2775, %v2242
  %v2777 = vmul.f32 %v2776, %v2775
  %v2778 = vmul.f32 0.5, %v2777
  %v2779 = vsub.f32 1.5, %v2778
  %v2780 = vmul.f32 %v2775, %v2779
  %vm2781 = vweird.f32 %v2242
  %vm2782 = vweird.f32 %v2775
  %vm2783 = vmor %vm2781, %vm2782
  %v2784 = vsel %vm2783, %v2775, %v2780
  %v2785 = vrsqrt.pop %v2243
  %v2786 = vmul.f32 %v2785, %v2243
  %v2787 = vmul.f32 %v2786, %v2785
  %v2788 = vmul.f32 0.5, %v2787
  %v2789 = vsub.f32 1.5, %v2788
  %v2790 = vmul.f32 %v2785, %v2789
  %vm2791 = vweird.f32 %v2243
  %vm2792 = vweird.f32 %v2785
  %vm2793 = vmor %vm2791, %vm2792
  %v2794 = vsel %vm2793, %v2785, %v2790
  %v2795 = vrsqrt.pop %v2244
  %v2796 = vmul.f32 %v2795, %v2244
  %v2797 = vmul.f32 %v2796, %v2795
  %v2798 = vmul.f32 0.5, %v2797
  %v2799 = vsub.f32 1.5, %v2798
  %v2800 = vmul.f32 %v2795, %v2799
  %vm2801 = vweird.f32 %v2244
  %vm2802 = vweird.f32 %v2795
  %vm2803 = vmor %vm2801, %vm2802
  %v2804 = vsel %vm2803, %v2795, %v2800
  %v2805 = vrsqrt.pop %v2245
  %v2806 = vmul.f32 %v2805, %v2245
  %v2807 = vmul.f32 %v2806, %v2805
  %v2808 = vmul.f32 0.5, %v2807
  %v2809 = vsub.f32 1.5, %v2808
  %v2810 = vmul.f32 %v2805, %v2809
  %vm2811 = vweird.f32 %v2245
  %vm2812 = vweird.f32 %v2805
  %vm2813 = vmor %vm2811, %vm2812
  %v2814 = vsel %vm2813, %v2805, %v2810
  %v2815 = vrsqrt.pop %v2246
  %v2816 = vmul.f32 %v2815, %v2246
  %v2817 = vmul.f32 %v2816, %v2815
  %v2818 = vmul.f32 0.5, %v2817
  %v2819 = vsub.f32 1.5, %v2818
  %v2820 = vmul.f32 %v2815, %v2819
  %vm2821 = vweird.f32 %v2246
  %vm2822 = vweird.f32 %v2815
  %vm2823 = vmor %vm2821, %vm2822
  %v2824 = vsel %vm2823, %v2815, %v2820
  %v2825 = vrsqrt.pop %v2247
  %v2826 = vmul.f32 %v2825, %v2247
  %v2827 = vmul.f32 %v2826, %v2825
  %v2828 = vmul.f32 0.5, %v2827
  %v2829 = vsub.f32 1.5, %v2828
  %v2830 = vmul.f32 %v2825, %v2829
  %vm2831 = vweird.f32 %v2247
  %vm2832 = vweird.f32 %v2825
  %vm2833 = vmor %vm2831, %vm2832
  %v2834 = vsel %vm2833, %v2825, %v2830
  %v2835 = vrsqrt.pop %v2248
  %v2836 = vmul.f32 %v2835, %v2248
  %v2837 = vmul.f32 %v2836, %v2835
  %v2838 = vmul.f32 0.5, %v2837
  %v2839 = vsub.f32 1.5, %v2838
  %v2840 = vmul.f32 %v2835, %v2839
  %vm2841 = vweird.f32 %v2248
  %vm2842 = vweird.f32 %v2835
  %vm2843 = vmor %vm2841, %vm2842
  %v2844 = vsel %vm2843, %v2835, %v2840
  %v2845 = vrsqrt.pop %v2249
  %v2846 = vmul.f32 %v2845, %v2249
  %v2847 = vmul.f32 %v2846, %v2845
  %v2848 = vmul.f32 0.5, %v2847
  %v2849 = vsub.f32 1.5, %v2848
  %v2850 = vmul.f32 %v2845, %v2849
  %vm2851 = vweird.f32 %v2249
  %vm2852 = vweird.f32 %v2845
  %vm2853 = vmor %vm2851, %vm2852
  %v2854 = vsel %vm2853, %v2845, %v2850
  %v2855 = vrsqrt.pop %v2250
  %v2856 = vmul.f32 %v2855, %v2250
  %v2857 = vmul.f32 %v2856, %v2855
  %v2858 = vmul.f32 0.5, %v2857
  %v2859 = vsub.f32 1.5, %v2858
  %v2860 = vmul.f32 %v2855, %v2859
  %vm2861 = vweird.f32 %v2250
  %vm2862 = vweird.f32 %v2855
  %vm2863 = vmor %vm2861, %vm2862
  %v2864 = vsel %vm2863, %v2855, %v2860
  %v2865 = vrsqrt.pop %v2251
  %v2866 = vmul.f32 %v2865, %v2251
  %v2867 = vmul.f32 %v2866, %v2865
  %v2868 = vmul.f32 0.5, %v2867
  %v2869 = vsub.f32 1.5, %v2868
  %v2870 = vmul.f32 %v2865, %v2869
  %vm2871 = vweird.f32 %v2251
  %vm2872 = vweird.f32 %v2865
  %vm2873 = vmor %vm2871, %vm2872
  %v2874 = vsel %vm2873, %v2865, %v2870
  %v2875 = vrsqrt.pop %v2252
  %v2876 = vmul.f32 %v2875, %v2252
  %v2877 = vmul.f32 %v2876, %v2875
  %v2878 = vmul.f32 0.5, %v2877
  %v2879 = vsub.f32 1.5, %v2878
  %v2880 = vmul.f32 %v2875, %v2879
  %vm2881 = vweird.f32 %v2252
  %vm2882 = vweird.f32 %v2875
  %vm2883 = vmor %vm2881, %vm2882
  %v2884 = vsel %vm2883, %v2875, %v2880
  %v2885 = vrsqrt.pop %v2253
  %v2886 = vmul.f32 %v2885, %v2253
  %v2887 = vmul.f32 %v2886, %v2885
  %v2888 = vmul.f32 0.5, %v2887
  %v2889 = vsub.f32 1.5, %v2888
  %v2890 = vmul.f32 %v2885, %v2889
  %vm2891 = vweird.f32 %v2253
  %vm2892 = vweird.f32 %v2885
  %vm2893 = vmor %vm2891, %vm2892
  %v2894 = vsel %vm2893, %v2885, %v2890
  %v2895 = vrsqrt.pop %v2254
  %v2896 = vmul.f32 %v2895, %v2254
  %v2897 = vmul.f32 %v2896, %v2895
  %v2898 = vmul.f32 0.5, %v2897
  %v2899 = vsub.f32 1.5, %v2898
  %v2900 = vmul.f32 %v2895, %v2899
  %vm2901 = vweird.f32 %v2254
  %vm2902 = vweird.f32 %v2895
  %vm2903 = vmor %vm2901, %vm2902
  %v2904 = vsel %vm2903, %v2895, %v2900
  %v2905 = vrsqrt.pop %v2255
  %v2906 = vmul.f32 %v2905, %v2255
  %v2907 = vmul.f32 %v2906, %v2905
  %v2908 = vmul.f32 0.5, %v2907
  %v2909 = vsub.f32 1.5, %v2908
  %v2910 = vmul.f32 %v2905, %v2909
  %vm2911 = vweird.f32 %v2255
  %vm2912 = vweird.f32 %v2905
  %vm2913 = vmor %vm2911, %vm2912
  %v2914 = vsel %vm2913, %v2905, %v2910
  %v2915 = vrsqrt.pop %v2256
  %v2916 = vmul.f32 %v2915, %v2256
  %v2917 = vmul.f32 %v2916, %v2915
  %v2918 = vmul.f32 0.5, %v2917
  %v2919 = vsub.f32 1.5, %v2918
  %v2920 = vmul.f32 %v2915, %v2919
  %vm2921 = vweird.f32 %v2256
  %vm2922 = vweird.f32 %v2915
  %vm2923 = vmor %vm2921, %vm2922
  %v2924 = vsel %vm2923, %v2915, %v2920
  %v2925 = vrsqrt.pop %v2257
  %v2926 = vmul.f32 %v2925, %v2257
  %v2927 = vmul.f32 %v2926, %v2925
  %v2928 = vmul.f32 0.5, %v2927
  %v2929 = vsub.f32 1.5, %v2928
  %v2930 = vmul.f32 %v2925, %v2929
  %vm2931 = vweird.f32 %v2257
  %vm2932 = vweird.f32 %v2925
  %vm2933 = vmor %vm2931, %vm2932
  %v2934 = vsel %vm2933, %v2925, %v2930
  %v2935 = vrsqrt.pop %v2258
  %v2936 = vmul.f32 %v2935, %v2258
  %v2937 = vmul.f32 %v2936, %v2935
  %v2938 = vmul.f32 0.5, %v2937
  %v2939 = vsub.f32 1.5, %v2938
  %v2940 = vmul.f32 %v2935, %v2939
  %vm2941 = vweird.f32 %v2258
  %vm2942 = vweird.f32 %v2935
  %vm2943 = vmor %vm2941, %vm2942
  %v2944 = vsel %vm2943, %v2935, %v2940
  %v2945 = vrsqrt.pop %v2259
  %v2946 = vmul.f32 %v2945, %v2259
  %v2947 = vmul.f32 %v2946, %v2945
  %v2948 = vmul.f32 0.5, %v2947
  %v2949 = vsub.f32 1.5, %v2948
  %v2950 = vmul.f32 %v2945, %v2949
  %vm2951 = vweird.f32 %v2259
  %vm2952 = vweird.f32 %v2945
  %vm2953 = vmor %vm2951, %vm2952
  %v2954 = vsel %vm2953, %v2945, %v2950
  %v2955 = vrsqrt.pop %v2260
  %v2956 = vmul.f32 %v2955, %v2260
  %v2957 = vmul.f32 %v2956, %v2955
  %v2958 = vmul.f32 0.5, %v2957
  %v2959 = vsub.f32 1.5, %v2958
  %v2960 = vmul.f32 %v2955, %v2959
  %vm2961 = vweird.f32 %v2260
  %vm2962 = vweird.f32 %v2955
  %vm2963 = vmor %vm2961, %vm2962
  %v2964 = vsel %vm2963, %v2955, %v2960
  %v2965 = vrsqrt.pop %v2261
  %v2966 = vmul.f32 %v2965, %v2261
  %v2967 = vmul.f32 %v2966, %v2965
  %v2968 = vmul.f32 0.5, %v2967
  %v2969 = vsub.f32 1.5, %v2968
  %v2970 = vmul.f32 %v2965, %v2969
  %vm2971 = vweird.f32 %v2261
  %vm2972 = vweird.f32 %v2965
  %vm2973 = vmor %vm2971, %vm2972
  %v2974 = vsel %vm2973, %v2965, %v2970
  %v2975 = vrsqrt.pop %v2262
  %v2976 = vmul.f32 %v2975, %v2262
  %v2977 = vmul.f32 %v2976, %v2975
  %v2978 = vmul.f32 0.5, %v2977
  %v2979 = vsub.f32 1.5, %v2978
  %v2980 = vmul.f32 %v2975, %v2979
  %vm2981 = vweird.f32 %v2262
  %vm2982 = vweird.f32 %v2975
  %vm2983 = vmor %vm2981, %vm2982
  %v2984 = vsel %vm2983, %v2975, %v2980
  %v2985 = vrsqrt.pop %v2263
  %v2986 = vmul.f32 %v2985, %v2263
  %v2987 = vmul.f32 %v2986, %v2985
  %v2988 = vmul.f32 0.5, %v2987
  %v2989 = vsub.f32 1.5, %v2988
  %v2990 = vmul.f32 %v2985, %v2989
  %vm2991 = vweird.f32 %v2263
  %vm2992 = vweird.f32 %v2985
  %vm2993 = vmor %vm2991, %vm2992
  %v2994 = vsel %vm2993, %v2985, %v2990
  %v2995 = vrsqrt.pop %v2264
  %v2996 = vmul.f32 %v2995, %v2264
  %v2997 = vmul.f32 %v2996, %v2995
  %v2998 = vmul.f32 0.5, %v2997
  %v2999 = vsub.f32 1.5, %v2998
  %v3000 = vmul.f32 %v2995, %v2999
  %vm3001 = vweird.f32 %v2264
  %vm3002 = vweird.f32 %v2995
  %vm3003 = vmor %vm3001, %vm3002
  %v3004 = vsel %vm3003, %v2995, %v3000
  %v3005 = vrsqrt.pop %v2265
  %v3006 = vmul.f32 %v3005, %v2265
  %v3007 = vmul.f32 %v3006, %v3005
  %v3008 = vmul.f32 0.5, %v3007
  %v3009 = vsub.f32 1.5, %v3008
  %v3010 = vmul.f32 %v3005, %v3009
  %vm3011 = vweird.f32 %v2265
  %vm3012 = vweird.f32 %v3005
  %vm3013 = vmor %vm3011, %vm3012
  %v3014 = vsel %vm3013, %v3005, %v3010
  %v3015 = vrsqrt.pop %v2266
  %v3016 = vmul.f32 %v3015, %v2266
  %v3017 = vmul.f32 %v3016, %v3015
  %v3018 = vmul.f32 0.5, %v3017
  %v3019 = vsub.f32 1.5, %v3018
  %v3020 = vmul.f32 %v3015, %v3019
  %vm3021 = vweird.f32 %v2266
  %vm3022 = vweird.f32 %v3015
  %vm3023 = vmor %vm3021, %vm3022
  %v3024 = vsel %vm3023, %v3015, %v3020
  %v3025 = vrsqrt.pop %v2267
  %v3026 = vmul.f32 %v3025, %v2267
  %v3027 = vmul.f32 %v3026, %v3025
  %v3028 = vmul.f32 0.5, %v3027
  %v3029 = vsub.f32 1.5, %v3028
  %v3030 = vmul.f32 %v3025, %v3029
  %vm3031 = vweird.f32 %v2267
  %vm3032 = vweird.f32 %v3025
  %vm3033 = vmor %vm3031, %vm3032
  %v3034 = vsel %vm3033, %v3025, %v3030
  %v3035 = vrsqrt.pop %v2268
  %v3036 = vmul.f32 %v3035, %v2268
  %v3037 = vmul.f32 %v3036, %v3035
  %v3038 = vmul.f32 0.5, %v3037
  %v3039 = vsub.f32 1.5, %v3038
  %v3040 = vmul.f32 %v3035, %v3039
  %vm3041 = vweird.f32 %v2268
  %vm3042 = vweird.f32 %v3035
  %vm3043 = vmor %vm3041, %vm3042
  %v3044 = vsel %vm3043, %v3035, %v3040
  %v3045 = vrsqrt.pop %v2269
  %v3046 = vmul.f32 %v3045, %v2269
  %v3047 = vmul.f32 %v3046, %v3045
  %v3048 = vmul.f32 0.5, %v3047
  %v3049 = vsub.f32 1.5, %v3048
  %v3050 = vmul.f32 %v3045, %v3049
  %vm3051 = vweird.f32 %v2269
  %vm3052 = vweird.f32 %v3045
  %vm3053 = vmor %vm3051, %vm3052
  %v3054 = vsel %vm3053, %v3045, %v3050
  %v3055 = vrsqrt.pop %v2270
  %v3056 = vmul.f32 %v3055, %v2270
  %v3057 = vmul.f32 %v3056, %v3055
  %v3058 = vmul.f32 0.5, %v3057
  %v3059 = vsub.f32 1.5, %v3058
  %v3060 = vmul.f32 %v3055, %v3059
  %vm3061 = vweird.f32 %v2270
  %vm3062 = vweird.f32 %v3055
  %vm3063 = vmor %vm3061, %vm3062
  %v3064 = vsel %vm3063, %v3055, %v3060
  %v3065 = vrsqrt.pop %v2271
  %v3066 = vmul.f32 %v3065, %v2271
  %v3067 = vmul.f32 %v3066, %v3065
  %v3068 = vmul.f32 0.5, %v3067
  %v3069 = vsub.f32 1.5, %v3068
  %v3070 = vmul.f32 %v3065, %v3069
  %vm3071 = vweird.f32 %v2271
  %vm3072 = vweird.f32 %v3065
  %vm3073 = vmor %vm3071, %vm3072
  %v3074 = vsel %vm3073, %v3065, %v3070
  %v3075 = vrsqrt.pop %v2272
  %v3076 = vmul.f32 %v3075, %v2272
  %v3077 = vmul.f32 %v3076, %v3075
  %v3078 = vmul.f32 0.5, %v3077
  %v3079 = vsub.f32 1.5, %v3078
  %v3080 = vmul.f32 %v3075, %v3079
  %vm3081 = vweird.f32 %v2272
  %vm3082 = vweird.f32 %v3075
  %vm3083 = vmor %vm3081, %vm3082
  %v3084 = vsel %vm3083, %v3075, %v3080
  %v3085 = vrsqrt.pop %v2273
  %v3086 = vmul.f32 %v3085, %v2273
  %v3087 = vmul.f32 %v3086, %v3085
  %v3088 = vmul.f32 0.5, %v3087
  %v3089 = vsub.f32 1.5, %v3088
  %v3090 = vmul.f32 %v3085, %v3089
  %vm3091 = vweird.f32 %v2273
  %vm3092 = vweird.f32 %v3085
  %vm3093 = vmor %vm3091, %vm3092
  %v3094 = vsel %vm3093, %v3085, %v3090
  %v3095 = vrsqrt.pop %v2274
  %v3096 = vmul.f32 %v3095, %v2274
  %v3097 = vmul.f32 %v3096, %v3095
  %v3098 = vmul.f32 0.5, %v3097
  %v3099 = vsub.f32 1.5, %v3098
  %v3100 = vmul.f32 %v3095, %v3099
  %vm3101 = vweird.f32 %v2274
  %vm3102 = vweird.f32 %v3095
  %vm3103 = vmor %vm3101, %vm3102
  %v3104 = vsel %vm3103, %v3095, %v3100
  %v3105 = vrsqrt.pop %v2275
  %v3106 = vmul.f32 %v3105, %v2275
  %v3107 = vmul.f32 %v3106, %v3105
  %v3108 = vmul.f32 0.5, %v3107
  %v3109 = vsub.f32 1.5, %v3108
  %v3110 = vmul.f32 %v3105, %v3109
  %vm3111 = vweird.f32 %v2275
  %vm3112 = vweird.f32 %v3105
  %vm3113 = vmor %vm3111, %vm3112
  %v3114 = vsel %vm3113, %v3105, %v3110
  %v3115 = vrsqrt.pop %v2276
  %v3116 = vmul.f32 %v3115, %v2276
  %v3117 = vmul.f32 %v3116, %v3115
  %v3118 = vmul.f32 0.5, %v3117
  %v3119 = vsub.f32 1.5, %v3118
  %v3120 = vmul.f32 %v3115, %v3119
  %vm3121 = vweird.f32 %v2276
  %vm3122 = vweird.f32 %v3115
  %vm3123 = vmor %vm3121, %vm3122
  %v3124 = vsel %vm3123, %v3115, %v3120
  %v3125 = vrsqrt.pop %v2277
  %v3126 = vmul.f32 %v3125, %v2277
  %v3127 = vmul.f32 %v3126, %v3125
  %v3128 = vmul.f32 0.5, %v3127
  %v3129 = vsub.f32 1.5, %v3128
  %v3130 = vmul.f32 %v3125, %v3129
  %vm3131 = vweird.f32 %v2277
  %vm3132 = vweird.f32 %v3125
  %vm3133 = vmor %vm3131, %vm3132
  %v3134 = vsel %vm3133, %v3125, %v3130
  %v3135 = vrsqrt.pop %v2278
  %v3136 = vmul.f32 %v3135, %v2278
  %v3137 = vmul.f32 %v3136, %v3135
  %v3138 = vmul.f32 0.5, %v3137
  %v3139 = vsub.f32 1.5, %v3138
  %v3140 = vmul.f32 %v3135, %v3139
  %vm3141 = vweird.f32 %v2278
  %vm3142 = vweird.f32 %v3135
  %vm3143 = vmor %vm3141, %vm3142
  %v3144 = vsel %vm3143, %v3135, %v3140
  %v3145 = vrsqrt.pop %v2279
  %v3146 = vmul.f32 %v3145, %v2279
  %v3147 = vmul.f32 %v3146, %v3145
  %v3148 = vmul.f32 0.5, %v3147
  %v3149 = vsub.f32 1.5, %v3148
  %v3150 = vmul.f32 %v3145, %v3149
  %vm3151 = vweird.f32 %v2279
  %vm3152 = vweird.f32 %v3145
  %vm3153 = vmor %vm3151, %vm3152
  %v3154 = vsel %vm3153, %v3145, %v3150
  %v3155 = vrsqrt.pop %v2280
  %v3156 = vmul.f32 %v3155, %v2280
  %v3157 = vmul.f32 %v3156, %v3155
  %v3158 = vmul.f32 0.5, %v3157
  %v3159 = vsub.f32 1.5, %v3158
  %v3160 = vmul.f32 %v3155, %v3159
  %vm3161 = vweird.f32 %v2280
  %vm3162 = vweird.f32 %v3155
  %vm3163 = vmor %vm3161, %vm3162
  %v3164 = vsel %vm3163, %v3155, %v3160
  %v3165 = vrsqrt.pop %v2281
  %v3166 = vmul.f32 %v3165, %v2281
  %v3167 = vmul.f32 %v3166, %v3165
  %v3168 = vmul.f32 0.5, %v3167
  %v3169 = vsub.f32 1.5, %v3168
  %v3170 = vmul.f32 %v3165, %v3169
  %vm3171 = vweird.f32 %v2281
  %vm3172 = vweird.f32 %v3165
  %vm3173 = vmor %vm3171, %vm3172
  %v3174 = vsel %vm3173, %v3165, %v3170
  %v3175 = vrsqrt.pop %v2282
  %v3176 = vmul.f32 %v3175, %v2282
  %v3177 = vmul.f32 %v3176, %v3175
  %v3178 = vmul.f32 0.5, %v3177
  %v3179 = vsub.f32 1.5, %v3178
  %v3180 = vmul.f32 %v3175, %v3179
  %vm3181 = vweird.f32 %v2282
  %vm3182 = vweird.f32 %v3175
  %vm3183 = vmor %vm3181, %vm3182
  %v3184 = vsel %vm3183, %v3175, %v3180
  %v3185 = vrsqrt.pop %v2283
  %v3186 = vmul.f32 %v3185, %v2283
  %v3187 = vmul.f32 %v3186, %v3185
  %v3188 = vmul.f32 0.5, %v3187
  %v3189 = vsub.f32 1.5, %v3188
  %v3190 = vmul.f32 %v3185, %v3189
  %vm3191 = vweird.f32 %v2283
  %vm3192 = vweird.f32 %v3185
  %vm3193 = vmor %vm3191, %vm3192
  %v3194 = vsel %vm3193, %v3185, %v3190
  %v3195 = vrsqrt.pop %v2284
  %v3196 = vmul.f32 %v3195, %v2284
  %v3197 = vmul.f32 %v3196, %v3195
  %v3198 = vmul.f32 0.5, %v3197
  %v3199 = vsub.f32 1.5, %v3198
  %v3200 = vmul.f32 %v3195, %v3199
  %vm3201 = vweird.f32 %v2284
  %vm3202 = vweird.f32 %v3195
  %vm3203 = vmor %vm3201, %vm3202
  %v3204 = vsel %vm3203, %v3195, %v3200
  %v3205 = vrsqrt.pop %v2285
  %v3206 = vmul.f32 %v3205, %v2285
  %v3207 = vmul.f32 %v3206, %v3205
  %v3208 = vmul.f32 0.5, %v3207
  %v3209 = vsub.f32 1.5, %v3208
  %v3210 = vmul.f32 %v3205, %v3209
  %vm3211 = vweird.f32 %v2285
  %vm3212 = vweird.f32 %v3205
  %vm3213 = vmor %vm3211, %vm3212
  %v3214 = vsel %vm3213, %v3205, %v3210
  %v3215 = vrsqrt.pop %v2286
  %v3216 = vmul.f32 %v3215, %v2286
  %v3217 = vmul.f32 %v3216, %v3215
  %v3218 = vmul.f32 0.5, %v3217
  %v3219 = vsub.f32 1.5, %v3218
  %v3220 = vmul.f32 %v3215, %v3219
  %vm3221 = vweird.f32 %v2286
  %vm3222 = vweird.f32 %v3215
  %vm3223 = vmor %vm3221, %vm3222
  %v3224 = vsel %vm3223, %v3215, %v3220
  %v3225 = vrsqrt.pop %v2287
  %v3226 = vmul.f32 %v3225, %v2287
  %v3227 = vmul.f32 %v3226, %v3225
  %v3228 = vmul.f32 0.5, %v3227
  %v3229 = vsub.f32 1.5, %v3228
  %v3230 = vmul.f32 %v3225, %v3229
  %vm3231 = vweird.f32 %v2287
  %vm3232 = vweird.f32 %v3225
  %vm3233 = vmor %vm3231, %vm3232
  %v3234 = vsel %vm3233, %v3225, %v3230
  %v3235 = vrsqrt.pop %v2288
  %v3236 = vmul.f32 %v3235, %v2288
  %v3237 = vmul.f32 %v3236, %v3235
  %v3238 = vmul.f32 0.5, %v3237
  %v3239 = vsub.f32 1.5, %v3238
  %v3240 = vmul.f32 %v3235, %v3239
  %vm3241 = vweird.f32 %v2288
  %vm3242 = vweird.f32 %v3235
  %vm3243 = vmor %vm3241, %vm3242
  %v3244 = vsel %vm3243, %v3235, %v3240
  %v3245 = vrsqrt.pop %v2289
  %v3246 = vmul.f32 %v3245, %v2289
  %v3247 = vmul.f32 %v3246, %v3245
  %v3248 = vmul.f32 0.5, %v3247
  %v3249 = vsub.f32 1.5, %v3248
  %v3250 = vmul.f32 %v3245, %v3249
  %vm3251 = vweird.f32 %v2289
  %vm3252 = vweird.f32 %v3245
  %vm3253 = vmor %vm3251, %vm3252
  %v3254 = vsel %vm3253, %v3245, %v3250
  %v3255 = vrsqrt.pop %v2290
  %v3256 = vmul.f32 %v3255, %v2290
  %v3257 = vmul.f32 %v3256, %v3255
  %v3258 = vmul.f32 0.5, %v3257
  %v3259 = vsub.f32 1.5, %v3258
  %v3260 = vmul.f32 %v3255, %v3259
  %vm3261 = vweird.f32 %v2290
  %vm3262 = vweird.f32 %v3255
  %vm3263 = vmor %vm3261, %vm3262
  %v3264 = vsel %vm3263, %v3255, %v3260
  %v3265 = vrsqrt.pop %v2291
  %v3266 = vmul.f32 %v3265, %v2291
  %v3267 = vmul.f32 %v3266, %v3265
  %v3268 = vmul.f32 0.5, %v3267
  %v3269 = vsub.f32 1.5, %v3268
  %v3270 = vmul.f32 %v3265, %v3269
  %vm3271 = vweird.f32 %v2291
  %vm3272 = vweird.f32 %v3265
  %vm3273 = vmor %vm3271, %vm3272
  %v3274 = vsel %vm3273, %v3265, %v3270
  %v3275 = vrsqrt.pop %v2292
  %v3276 = vmul.f32 %v3275, %v2292
  %v3277 = vmul.f32 %v3276, %v3275
  %v3278 = vmul.f32 0.5, %v3277
  %v3279 = vsub.f32 1.5, %v3278
  %v3280 = vmul.f32 %v3275, %v3279
  %vm3281 = vweird.f32 %v2292
  %vm3282 = vweird.f32 %v3275
  %vm3283 = vmor %vm3281, %vm3282
  %v3284 = vsel %vm3283, %v3275, %v3280
  %v3285 = vrsqrt.pop %v2293
  %v3286 = vmul.f32 %v3285, %v2293
  %v3287 = vmul.f32 %v3286, %v3285
  %v3288 = vmul.f32 0.5, %v3287
  %v3289 = vsub.f32 1.5, %v3288
  %v3290 = vmul.f32 %v3285, %v3289
  %vm3291 = vweird.f32 %v2293
  %vm3292 = vweird.f32 %v3285
  %vm3293 = vmor %vm3291, %vm3292
  %v3294 = vsel %vm3293, %v3285, %v3290
  %v3295 = vrsqrt.pop %v2294
  %v3296 = vmul.f32 %v3295, %v2294
  %v3297 = vmul.f32 %v3296, %v3295
  %v3298 = vmul.f32 0.5, %v3297
  %v3299 = vsub.f32 1.5, %v3298
  %v3300 = vmul.f32 %v3295, %v3299
  %vm3301 = vweird.f32 %v2294
  %vm3302 = vweird.f32 %v3295
  %vm3303 = vmor %vm3301, %vm3302
  %v3304 = vsel %vm3303, %v3295, %v3300
  %v3305 = vrsqrt.pop %v2295
  %v3306 = vmul.f32 %v3305, %v2295
  %v3307 = vmul.f32 %v3306, %v3305
  %v3308 = vmul.f32 0.5, %v3307
  %v3309 = vsub.f32 1.5, %v3308
  %v3310 = vmul.f32 %v3305, %v3309
  %vm3311 = vweird.f32 %v2295
  %vm3312 = vweird.f32 %v3305
  %vm3313 = vmor %vm3311, %vm3312
  %v3314 = vsel %vm3313, %v3305, %v3310
  %v3315 = vrsqrt.pop %v2296
  %v3316 = vmul.f32 %v3315, %v2296
  %v3317 = vmul.f32 %v3316, %v3315
  %v3318 = vmul.f32 0.5, %v3317
  %v3319 = vsub.f32 1.5, %v3318
  %v3320 = vmul.f32 %v3315, %v3319
  %vm3321 = vweird.f32 %v2296
  %vm3322 = vweird.f32 %v3315
  %vm3323 = vmor %vm3321, %vm3322
  %v3324 = vsel %vm3323, %v3315, %v3320
  %v3325 = vrsqrt.pop %v2297
  %v3326 = vmul.f32 %v3325, %v2297
  %v3327 = vmul.f32 %v3326, %v3325
  %v3328 = vmul.f32 0.5, %v3327
  %v3329 = vsub.f32 1.5, %v3328
  %v3330 = vmul.f32 %v3325, %v3329
  %vm3331 = vweird.f32 %v2297
  %vm3332 = vweird.f32 %v3325
  %vm3333 = vmor %vm3331, %vm3332
  %v3334 = vsel %vm3333, %v3325, %v3330
  %v3335 = vrsqrt.pop %v2298
  %v3336 = vmul.f32 %v3335, %v2298
  %v3337 = vmul.f32 %v3336, %v3335
  %v3338 = vmul.f32 0.5, %v3337
  %v3339 = vsub.f32 1.5, %v3338
  %v3340 = vmul.f32 %v3335, %v3339
  %vm3341 = vweird.f32 %v2298
  %vm3342 = vweird.f32 %v3335
  %vm3343 = vmor %vm3341, %vm3342
  %v3344 = vsel %vm3343, %v3335, %v3340
  %v3345 = vrsqrt.pop %v2299
  %v3346 = vmul.f32 %v3345, %v2299
  %v3347 = vmul.f32 %v3346, %v3345
  %v3348 = vmul.f32 0.5, %v3347
  %v3349 = vsub.f32 1.5, %v3348
  %v3350 = vmul.f32 %v3345, %v3349
  %vm3351 = vweird.f32 %v2299
  %vm3352 = vweird.f32 %v3345
  %vm3353 = vmor %vm3351, %vm3352
  %v3354 = vsel %vm3353, %v3345, %v3350
  %v3355 = vrsqrt.pop %v2300
  %v3356 = vmul.f32 %v3355, %v2300
  %v3357 = vmul.f32 %v3356, %v3355
  %v3358 = vmul.f32 0.5, %v3357
  %v3359 = vsub.f32 1.5, %v3358
  %v3360 = vmul.f32 %v3355, %v3359
  %vm3361 = vweird.f32 %v2300
  %vm3362 = vweird.f32 %v3355
  %vm3363 = vmor %vm3361, %vm3362
  %v3364 = vsel %vm3363, %v3355, %v3360
  %v3365 = vrsqrt.pop %v2301
  %v3366 = vmul.f32 %v3365, %v2301
  %v3367 = vmul.f32 %v3366, %v3365
  %v3368 = vmul.f32 0.5, %v3367
  %v3369 = vsub.f32 1.5, %v3368
  %v3370 = vmul.f32 %v3365, %v3369
  %vm3371 = vweird.f32 %v2301
  %vm3372 = vweird.f32 %v3365
  %vm3373 = vmor %vm3371, %vm3372
  %v3374 = vsel %vm3373, %v3365, %v3370
  %v3375 = vrsqrt.pop %v2302
  %v3376 = vmul.f32 %v3375, %v2302
  %v3377 = vmul.f32 %v3376, %v3375
  %v3378 = vmul.f32 0.5, %v3377
  %v3379 = vsub.f32 1.5, %v3378
  %v3380 = vmul.f32 %v3375, %v3379
  %vm3381 = vweird.f32 %v2302
  %vm3382 = vweird.f32 %v3375
  %vm3383 = vmor %vm3381, %vm3382
  %v3384 = vsel %vm3383, %v3375, %v3380
  %v3385 = vrsqrt.pop %v2303
  %v3386 = vmul.f32 %v3385, %v2303
  %v3387 = vmul.f32 %v3386, %v3385
  %v3388 = vmul.f32 0.5, %v3387
  %v3389 = vsub.f32 1.5, %v3388
  %v3390 = vmul.f32 %v3385, %v3389
  %vm3391 = vweird.f32 %v2303
  %vm3392 = vweird.f32 %v3385
  %vm3393 = vmor %vm3391, %vm3392
  %v3394 = vsel %vm3393, %v3385, %v3390
  %v3395 = vrsqrt.pop %v2304
  %v3396 = vmul.f32 %v3395, %v2304
  %v3397 = vmul.f32 %v3396, %v3395
  %v3398 = vmul.f32 0.5, %v3397
  %v3399 = vsub.f32 1.5, %v3398
  %v3400 = vmul.f32 %v3395, %v3399
  %vm3401 = vweird.f32 %v2304
  %vm3402 = vweird.f32 %v3395
  %vm3403 = vmor %vm3401, %vm3402
  %v3404 = vsel %vm3403, %v3395, %v3400
  %v3405 = vrsqrt.pop %v2305
  %v3406 = vmul.f32 %v3405, %v2305
  %v3407 = vmul.f32 %v3406, %v3405
  %v3408 = vmul.f32 0.5, %v3407
  %v3409 = vsub.f32 1.5, %v3408
  %v3410 = vmul.f32 %v3405, %v3409
  %vm3411 = vweird.f32 %v2305
  %vm3412 = vweird.f32 %v3405
  %vm3413 = vmor %vm3411, %vm3412
  %v3414 = vsel %vm3413, %v3405, %v3410
  %v3415 = vrsqrt.pop %v2306
  %v3416 = vmul.f32 %v3415, %v2306
  %v3417 = vmul.f32 %v3416, %v3415
  %v3418 = vmul.f32 0.5, %v3417
  %v3419 = vsub.f32 1.5, %v3418
  %v3420 = vmul.f32 %v3415, %v3419
  %vm3421 = vweird.f32 %v2306
  %vm3422 = vweird.f32 %v3415
  %vm3423 = vmor %vm3421, %vm3422
  %v3424 = vsel %vm3423, %v3415, %v3420
  %v3425 = vrsqrt.pop %v2307
  %v3426 = vmul.f32 %v3425, %v2307
  %v3427 = vmul.f32 %v3426, %v3425
  %v3428 = vmul.f32 0.5, %v3427
  %v3429 = vsub.f32 1.5, %v3428
  %v3430 = vmul.f32 %v3425, %v3429
  %vm3431 = vweird.f32 %v2307
  %vm3432 = vweird.f32 %v3425
  %vm3433 = vmor %vm3431, %vm3432
  %v3434 = vsel %vm3433, %v3425, %v3430
  %v3435 = vrsqrt.pop %v2308
  %v3436 = vmul.f32 %v3435, %v2308
  %v3437 = vmul.f32 %v3436, %v3435
  %v3438 = vmul.f32 0.5, %v3437
  %v3439 = vsub.f32 1.5, %v3438
  %v3440 = vmul.f32 %v3435, %v3439
  %vm3441 = vweird.f32 %v2308
  %vm3442 = vweird.f32 %v3435
  %vm3443 = vmor %vm3441, %vm3442
  %v3444 = vsel %vm3443, %v3435, %v3440
  %v3445 = vrsqrt.pop %v2309
  %v3446 = vmul.f32 %v3445, %v2309
  %v3447 = vmul.f32 %v3446, %v3445
  %v3448 = vmul.f32 0.5, %v3447
  %v3449 = vsub.f32 1.5, %v3448
  %v3450 = vmul.f32 %v3445, %v3449
  %vm3451 = vweird.f32 %v2309
  %vm3452 = vweird.f32 %v3445
  %vm3453 = vmor %vm3451, %vm3452
  %v3454 = vsel %vm3453, %v3445, %v3450
  %v3455 = vrsqrt.pop %v2310
  %v3456 = vmul.f32 %v3455, %v2310
  %v3457 = vmul.f32 %v3456, %v3455
  %v3458 = vmul.f32 0.5, %v3457
  %v3459 = vsub.f32 1.5, %v3458
  %v3460 = vmul.f32 %v3455, %v3459
  %vm3461 = vweird.f32 %v2310
  %vm3462 = vweird.f32 %v3455
  %vm3463 = vmor %vm3461, %vm3462
  %v3464 = vsel %vm3463, %v3455, %v3460
  %v3465 = vrsqrt.pop %v2311
  %v3466 = vmul.f32 %v3465, %v2311
  %v3467 = vmul.f32 %v3466, %v3465
  %v3468 = vmul.f32 0.5, %v3467
  %v3469 = vsub.f32 1.5, %v3468
  %v3470 = vmul.f32 %v3465, %v3469
  %vm3471 = vweird.f32 %v2311
  %vm3472 = vweird.f32 %v3465
  %vm3473 = vmor %vm3471, %vm3472
  %v3474 = vsel %vm3473, %v3465, %v3470
  %v3475 = vrsqrt.pop %v2312
  %v3476 = vmul.f32 %v3475, %v2312
  %v3477 = vmul.f32 %v3476, %v3475
  %v3478 = vmul.f32 0.5, %v3477
  %v3479 = vsub.f32 1.5, %v3478
  %v3480 = vmul.f32 %v3475, %v3479
  %vm3481 = vweird.f32 %v2312
  %vm3482 = vweird.f32 %v3475
  %vm3483 = vmor %vm3481, %vm3482
  %v3484 = vsel %vm3483, %v3475, %v3480
  %v3485 = vrsqrt.pop %v2313
  %v3486 = vmul.f32 %v3485, %v2313
  %v3487 = vmul.f32 %v3486, %v3485
  %v3488 = vmul.f32 0.5, %v3487
  %v3489 = vsub.f32 1.5, %v3488
  %v3490 = vmul.f32 %v3485, %v3489
  %vm3491 = vweird.f32 %v2313
  %vm3492 = vweird.f32 %v3485
  %vm3493 = vmor %vm3491, %vm3492
  %v3494 = vsel %vm3493, %v3485, %v3490
  %v3495 = vrsqrt.pop %v2314
  %v3496 = vmul.f32 %v3495, %v2314
  %v3497 = vmul.f32 %v3496, %v3495
  %v3498 = vmul.f32 0.5, %v3497
  %v3499 = vsub.f32 1.5, %v3498
  %v3500 = vmul.f32 %v3495, %v3499
  %vm3501 = vweird.f32 %v2314
  %vm3502 = vweird.f32 %v3495
  %vm3503 = vmor %vm3501, %vm3502
  %v3504 = vsel %vm3503, %v3495, %v3500
  %v3505 = vrsqrt.pop %v2315
  %v3506 = vmul.f32 %v3505, %v2315
  %v3507 = vmul.f32 %v3506, %v3505
  %v3508 = vmul.f32 0.5, %v3507
  %v3509 = vsub.f32 1.5, %v3508
  %v3510 = vmul.f32 %v3505, %v3509
  %vm3511 = vweird.f32 %v2315
  %vm3512 = vweird.f32 %v3505
  %vm3513 = vmor %vm3511, %vm3512
  %v3514 = vsel %vm3513, %v3505, %v3510
  %v3515 = vrsqrt.pop %v2316
  %v3516 = vmul.f32 %v3515, %v2316
  %v3517 = vmul.f32 %v3516, %v3515
  %v3518 = vmul.f32 0.5, %v3517
  %v3519 = vsub.f32 1.5, %v3518
  %v3520 = vmul.f32 %v3515, %v3519
  %vm3521 = vweird.f32 %v2316
  %vm3522 = vweird.f32 %v3515
  %vm3523 = vmor %vm3521, %vm3522
  %v3524 = vsel %vm3523, %v3515, %v3520
  %v3525 = vrsqrt.pop %v2317
  %v3526 = vmul.f32 %v3525, %v2317
  %v3527 = vmul.f32 %v3526, %v3525
  %v3528 = vmul.f32 0.5, %v3527
  %v3529 = vsub.f32 1.5, %v3528
  %v3530 = vmul.f32 %v3525, %v3529
  %vm3531 = vweird.f32 %v2317
  %vm3532 = vweird.f32 %v3525
  %vm3533 = vmor %vm3531, %vm3532
  %v3534 = vsel %vm3533, %v3525, %v3530
  %v3535 = vrsqrt.pop %v2318
  %v3536 = vmul.f32 %v3535, %v2318
  %v3537 = vmul.f32 %v3536, %v3535
  %v3538 = vmul.f32 0.5, %v3537
  %v3539 = vsub.f32 1.5, %v3538
  %v3540 = vmul.f32 %v3535, %v3539
  %vm3541 = vweird.f32 %v2318
  %vm3542 = vweird.f32 %v3535
  %vm3543 = vmor %vm3541, %vm3542
  %v3544 = vsel %vm3543, %v3535, %v3540
  %v3545 = vrsqrt.pop %v2319
  %v3546 = vmul.f32 %v3545, %v2319
  %v3547 = vmul.f32 %v3546, %v3545
  %v3548 = vmul.f32 0.5, %v3547
  %v3549 = vsub.f32 1.5, %v3548
  %v3550 = vmul.f32 %v3545, %v3549
  %vm3551 = vweird.f32 %v2319
  %vm3552 = vweird.f32 %v3545
  %vm3553 = vmor %vm3551, %vm3552
  %v3554 = vsel %vm3553, %v3545, %v3550
  %v3555 = vrsqrt.pop %v2320
  %v3556 = vmul.f32 %v3555, %v2320
  %v3557 = vmul.f32 %v3556, %v3555
  %v3558 = vmul.f32 0.5, %v3557
  %v3559 = vsub.f32 1.5, %v3558
  %v3560 = vmul.f32 %v3555, %v3559
  %vm3561 = vweird.f32 %v2320
  %vm3562 = vweird.f32 %v3555
  %vm3563 = vmor %vm3561, %vm3562
  %v3564 = vsel %vm3563, %v3555, %v3560
  %v3565 = vrsqrt.pop %v2321
  %v3566 = vmul.f32 %v3565, %v2321
  %v3567 = vmul.f32 %v3566, %v3565
  %v3568 = vmul.f32 0.5, %v3567
  %v3569 = vsub.f32 1.5, %v3568
  %v3570 = vmul.f32 %v3565, %v3569
  %vm3571 = vweird.f32 %v2321
  %vm3572 = vweird.f32 %v3565
  %vm3573 = vmor %vm3571, %vm3572
  %v3574 = vsel %vm3573, %v3565, %v3570
  %v3575 = vrsqrt.pop %v2322
  %v3576 = vmul.f32 %v3575, %v2322
  %v3577 = vmul.f32 %v3576, %v3575
  %v3578 = vmul.f32 0.5, %v3577
  %v3579 = vsub.f32 1.5, %v3578
  %v3580 = vmul.f32 %v3575, %v3579
  %vm3581 = vweird.f32 %v2322
  %vm3582 = vweird.f32 %v3575
  %vm3583 = vmor %vm3581, %vm3582
  %v3584 = vsel %vm3583, %v3575, %v3580
  %v3585 = vrsqrt.pop %v2323
  %v3586 = vmul.f32 %v3585, %v2323
  %v3587 = vmul.f32 %v3586, %v3585
  %v3588 = vmul.f32 0.5, %v3587
  %v3589 = vsub.f32 1.5, %v3588
  %v3590 = vmul.f32 %v3585, %v3589
  %vm3591 = vweird.f32 %v2323
  %vm3592 = vweird.f32 %v3585
  %vm3593 = vmor %vm3591, %vm3592
  %v3594 = vsel %vm3593, %v3585, %v3590
  %v3595 = vrsqrt.pop %v2324
  %v3596 = vmul.f32 %v3595, %v2324
  %v3597 = vmul.f32 %v3596, %v3595
  %v3598 = vmul.f32 0.5, %v3597
  %v3599 = vsub.f32 1.5, %v3598
  %v3600 = vmul.f32 %v3595, %v3599
  %vm3601 = vweird.f32 %v2324
  %vm3602 = vweird.f32 %v3595
  %vm3603 = vmor %vm3601, %vm3602
  %v3604 = vsel %vm3603, %v3595, %v3600
  %v3605 = vmul.f32 %v2069, %v2334
  %v3606 = vmul.f32 %v2070, %v2344
  %v3607 = vmul.f32 %v2071, %v2354
  %v3608 = vmul.f32 %v2072, %v2364
  %v3609 = vmul.f32 %v2073, %v2374
  %v3610 = vmul.f32 %v2074, %v2384
  %v3611 = vmul.f32 %v2075, %v2394
  %v3612 = vmul.f32 %v2076, %v2404
  %v3613 = vmul.f32 %v2077, %v2414
  %v3614 = vmul.f32 %v2078, %v2424
  %v3615 = vmul.f32 %v2079, %v2434
  %v3616 = vmul.f32 %v2080, %v2444
  %v3617 = vmul.f32 %v2081, %v2454
  %v3618 = vmul.f32 %v2082, %v2464
  %v3619 = vmul.f32 %v2083, %v2474
  %v3620 = vmul.f32 %v2084, %v2484
  %v3621 = vmul.f32 %v2085, %v2494
  %v3622 = vmul.f32 %v2086, %v2504
  %v3623 = vmul.f32 %v2087, %v2514
  %v3624 = vmul.f32 %v2088, %v2524
  %v3625 = vmul.f32 %v2089, %v2534
  %v3626 = vmul.f32 %v2090, %v2544
  %v3627 = vmul.f32 %v2091, %v2554
  %v3628 = vmul.f32 %v2092, %v2564
  %v3629 = vmul.f32 %v2093, %v2574
  %v3630 = vmul.f32 %v2094, %v2584
  %v3631 = vmul.f32 %v2095, %v2594
  %v3632 = vmul.f32 %v2096, %v2604
  %v3633 = vmul.f32 %v2097, %v2614
  %v3634 = vmul.f32 %v2098, %v2624
  %v3635 = vmul.f32 %v2099, %v2634
  %v3636 = vmul.f32 %v2100, %v2644
  %v3637 = vmul.f32 %v2101, %v2654
  %v3638 = vmul.f32 %v2102, %v2664
  %v3639 = vmul.f32 %v2103, %v2674
  %v3640 = vmul.f32 %v2104, %v2684
  %v3641 = vmul.f32 %v2105, %v2694
  %v3642 = vmul.f32 %v2106, %v2704
  %v3643 = vmul.f32 %v2107, %v2714
  %v3644 = vmul.f32 %v2108, %v2724
  %v3645 = vmul.f32 %v2109, %v2734
  %v3646 = vmul.f32 %v2110, %v2744
  %v3647 = vmul.f32 %v2111, %v2754
  %v3648 = vmul.f32 %v2112, %v2764
  %v3649 = vmul.f32 %v2113, %v2774
  %v3650 = vmul.f32 %v2114, %v2784
  %v3651 = vmul.f32 %v2115, %v2794
  %v3652 = vmul.f32 %v2116, %v2804
  %v3653 = vmul.f32 %v2117, %v2814
  %v3654 = vmul.f32 %v2118, %v2824
  %v3655 = vmul.f32 %v2119, %v2834
  %v3656 = vmul.f32 %v2120, %v2844
  %v3657 = vmul.f32 %v2121, %v2854
  %v3658 = vmul.f32 %v2122, %v2864
  %v3659 = vmul.f32 %v2123, %v2874
  %v3660 = vmul.f32 %v2124, %v2884
  %v3661 = vmul.f32 %v2125, %v2894
  %v3662 = vmul.f32 %v2126, %v2904
  %v3663 = vmul.f32 %v2127, %v2914
  %v3664 = vmul.f32 %v2128, %v2924
  %v3665 = vmul.f32 %v2129, %v2934
  %v3666 = vmul.f32 %v2130, %v2944
  %v3667 = vmul.f32 %v2131, %v2954
  %v3668 = vmul.f32 %v2132, %v2964
  %v3669 = vmul.f32 %v2133, %v2974
  %v3670 = vmul.f32 %v2134, %v2984
  %v3671 = vmul.f32 %v2135, %v2994
  %v3672 = vmul.f32 %v2136, %v3004
  %v3673 = vmul.f32 %v2137, %v3014
  %v3674 = vmul.f32 %v2138, %v3024
  %v3675 = vmul.f32 %v2139, %v3034
  %v3676 = vmul.f32 %v2140, %v3044
  %v3677 = vmul.f32 %v2141, %v3054
  %v3678 = vmul.f32 %v2142, %v3064
  %v3679 = vmul.f32 %v2143, %v3074
  %v3680 = vmul.f32 %v2144, %v3084
  %v3681 = vmul.f32 %v2145, %v3094
  %v3682 = vmul.f32 %v2146, %v3104
  %v3683 = vmul.f32 %v2147, %v3114
  %v3684 = vmul.f32 %v2148, %v3124
  %v3685 = vmul.f32 %v2149, %v3134
  %v3686 = vmul.f32 %v2150, %v3144
  %v3687 = vmul.f32 %v2151, %v3154
  %v3688 = vmul.f32 %v2152, %v3164
  %v3689 = vmul.f32 %v2153, %v3174
  %v3690 = vmul.f32 %v2154, %v3184
  %v3691 = vmul.f32 %v2155, %v3194
  %v3692 = vmul.f32 %v2156, %v3204
  %v3693 = vmul.f32 %v2157, %v3214
  %v3694 = vmul.f32 %v2158, %v3224
  %v3695 = vmul.f32 %v2159, %v3234
  %v3696 = vmul.f32 %v2160, %v3244
  %v3697 = vmul.f32 %v2161, %v3254
  %v3698 = vmul.f32 %v2162, %v3264
  %v3699 = vmul.f32 %v2163, %v3274
  %v3700 = vmul.f32 %v2164, %v3284
  %v3701 = vmul.f32 %v2165, %v3294
  %v3702 = vmul.f32 %v2166, %v3304
  %v3703 = vmul.f32 %v2167, %v3314
  %v3704 = vmul.f32 %v2168, %v3324
  %v3705 = vmul.f32 %v2169, %v3334
  %v3706 = vmul.f32 %v2170, %v3344
  %v3707 = vmul.f32 %v2171, %v3354
  %v3708 = vmul.f32 %v2172, %v3364
  %v3709 = vmul.f32 %v2173, %v3374
  %v3710 = vmul.f32 %v2174, %v3384
  %v3711 = vmul.f32 %v2175, %v3394
  %v3712 = vmul.f32 %v2176, %v3404
  %v3713 = vmul.f32 %v2177, %v3414
  %v3714 = vmul.f32 %v2178, %v3424
  %v3715 = vmul.f32 %v2179, %v3434
  %v3716 = vmul.f32 %v2180, %v3444
  %v3717 = vmul.f32 %v2181, %v3454
  %v3718 = vmul.f32 %v2182, %v3464
  %v3719 = vmul.f32 %v2183, %v3474
  %v3720 = vmul.f32 %v2184, %v3484
  %v3721 = vmul.f32 %v2185, %v3494
  %v3722 = vmul.f32 %v2186, %v3504
  %v3723 = vmul.f32 %v2187, %v3514
  %v3724 = vmul.f32 %v2188, %v3524
  %v3725 = vmul.f32 %v2189, %v3534
  %v3726 = vmul.f32 %v2190, %v3544
  %v3727 = vmul.f32 %v2191, %v3554
  %v3728 = vmul.f32 %v2192, %v3564
  %v3729 = vmul.f32 %v2193, %v3574
  %v3730 = vmul.f32 %v2194, %v3584
  %v3731 = vmul.f32 %v2195, %v3594
  %v3732 = vmul.f32 %v2196, %v3604
  %v3733 = vld [vmem:[%s3] sm:$0xff]
  %v3734 = vld [vmem:[%s3 + $0x8] sm:$0xff]
  %v3735 = vld [vmem:[%s3 + $0x10] sm:$0xff]
  %v3736 = vld [vmem:[%s3 + $0x18] sm:$0xff]
  %v3737 = vld [vmem:[%s3 + $0x20] sm:$0xff]
  %v3738 = vld [vmem:[%s3 + $0x28] sm:$0xff]
  %v3739 = vld [vmem:[%s3 + $0x30] sm:$0xff]
  %v3740 = vld [vmem:[%s3 + $0x38] sm:$0xff]
  %v3741 = vld [vmem:[%s3 + $0x40] sm:$0xff]
  %v3742 = vld [vmem:[%s3 + $0x48] sm:$0xff]
  %v3743 = vld [vmem:[%s3 + $0x50] sm:$0xff]
  %v3744 = vld [vmem:[%s3 + $0x58] sm:$0xff]
  %v3745 = vld [vmem:[%s3 + $0x60] sm:$0xff]
  %v3746 = vld [vmem:[%s3 + $0x68] sm:$0xff]
  %v3747 = vld [vmem:[%s3 + $0x70] sm:$0xff]
  %v3748 = vld [vmem:[%s3 + $0x78] sm:$0xff]
  %v3749 = vld [vmem:[%s3 + $0x80] sm:$0xff]
  %v3750 = vld [vmem:[%s3 + $0x88] sm:$0xff]
  %v3751 = vld [vmem:[%s3 + $0x90] sm:$0xff]
  %v3752 = vld [vmem:[%s3 + $0x98] sm:$0xff]
  %v3753 = vld [vmem:[%s3 + $0xa0] sm:$0xff]
  %v3754 = vld [vmem:[%s3 + $0xa8] sm:$0xff]
  %v3755 = vld [vmem:[%s3 + $0xb0] sm:$0xff]
  %v3756 = vld [vmem:[%s3 + $0xb8] sm:$0xff]
  %v3757 = vld [vmem:[%s3 + $0xc0] sm:$0xff]
  %v3758 = vld [vmem:[%s3 + $0xc8] sm:$0xff]
  %v3759 = vld [vmem:[%s3 + $0xd0] sm:$0xff]
  %v3760 = vld [vmem:[%s3 + $0xd8] sm:$0xff]
  %v3761 = vld [vmem:[%s3 + $0xe0] sm:$0xff]
  %v3762 = vld [vmem:[%s3 + $0xe8] sm:$0xff]
  %v3763 = vld [vmem:[%s3 + $0xf0] sm:$0xff]
  %v3764 = vld [vmem:[%s3 + $0xf8] sm:$0xff]
  %v3765 = vld [vmem:[%s3 + $0x100] sm:$0xff]
  %v3766 = vld [vmem:[%s3 + $0x108] sm:$0xff]
  %v3767 = vld [vmem:[%s3 + $0x110] sm:$0xff]
  %v3768 = vld [vmem:[%s3 + $0x118] sm:$0xff]
  %v3769 = vld [vmem:[%s3 + $0x120] sm:$0xff]
  %v3770 = vld [vmem:[%s3 + $0x128] sm:$0xff]
  %v3771 = vld [vmem:[%s3 + $0x130] sm:$0xff]
  %v3772 = vld [vmem:[%s3 + $0x138] sm:$0xff]
  %v3773 = vld [vmem:[%s3 + $0x140] sm:$0xff]
  %v3774 = vld [vmem:[%s3 + $0x148] sm:$0xff]
  %v3775 = vld [vmem:[%s3 + $0x150] sm:$0xff]
  %v3776 = vld [vmem:[%s3 + $0x158] sm:$0xff]
  %v3777 = vld [vmem:[%s3 + $0x160] sm:$0xff]
  %v3778 = vld [vmem:[%s3 + $0x168] sm:$0xff]
  %v3779 = vld [vmem:[%s3 + $0x170] sm:$0xff]
  %v3780 = vld [vmem:[%s3 + $0x178] sm:$0xff]
  %v3781 = vld [vmem:[%s3 + $0x180] sm:$0xff]
  %v3782 = vld [vmem:[%s3 + $0x188] sm:$0xff]
  %v3783 = vld [vmem:[%s3 + $0x190] sm:$0xff]
  %v3784 = vld [vmem:[%s3 + $0x198] sm:$0xff]
  %v3785 = vld [vmem:[%s3 + $0x1a0] sm:$0xff]
  %v3786 = vld [vmem:[%s3 + $0x1a8] sm:$0xff]
  %v3787 = vld [vmem:[%s3 + $0x1b0] sm:$0xff]
  %v3788 = vld [vmem:[%s3 + $0x1b8] sm:$0xff]
  %v3789 = vld [vmem:[%s3 + $0x1c0] sm:$0xff]
  %v3790 = vld [vmem:[%s3 + $0x1c8] sm:$0xff]
  %v3791 = vld [vmem:[%s3 + $0x1d0] sm:$0xff]
  %v3792 = vld [vmem:[%s3 + $0x1d8] sm:$0xff]
  %v3793 = vld [vmem:[%s3 + $0x1e0] sm:$0xff]
  %v3794 = vld [vmem:[%s3 + $0x1e8] sm:$0xff]
  %v3795 = vld [vmem:[%s3 + $0x1f0] sm:$0xff]
  %v3796 = vld [vmem:[%s3 + $0x1f8] sm:$0xff]
  %v3797 = vld [vmem:[%s3 + $0x200] sm:$0xff]
  %v3798 = vld [vmem:[%s3 + $0x208] sm:$0xff]
  %v3799 = vld [vmem:[%s3 + $0x210] sm:$0xff]
  %v3800 = vld [vmem:[%s3 + $0x218] sm:$0xff]
  %v3801 = vld [vmem:[%s3 + $0x220] sm:$0xff]
  %v3802 = vld [vmem:[%s3 + $0x228] sm:$0xff]
  %v3803 = vld [vmem:[%s3 + $0x230] sm:$0xff]
  %v3804 = vld [vmem:[%s3 + $0x238] sm:$0xff]
  %v3805 = vld [vmem:[%s3 + $0x240] sm:$0xff]
  %v3806 = vld [vmem:[%s3 + $0x248] sm:$0xff]
  %v3807 = vld [vmem:[%s3 + $0x250] sm:$0xff]
  %v3808 = vld [vmem:[%s3 + $0x258] sm:$0xff]
  %v3809 = vld [vmem:[%s3 + $0x260] sm:$0xff]
  %v3810 = vld [vmem:[%s3 + $0x268] sm:$0xff]
  %v3811 = vld [vmem:[%s3 + $0x270] sm:$0xff]
  %v3812 = vld [vmem:[%s3 + $0x278] sm:$0xff]
  %v3813 = vld [vmem:[%s3 + $0x280] sm:$0xff]
  %v3814 = vld [vmem:[%s3 + $0x288] sm:$0xff]
  %v3815 = vld [vmem:[%s3 + $0x290] sm:$0xff]
  %v3816 = vld [vmem:[%s3 + $0x298] sm:$0xff]
  %v3817 = vld [vmem:[%s3 + $0x2a0] sm:$0xff]
  %v3818 = vld [vmem:[%s3 + $0x2a8] sm:$0xff]
  %v3819 = vld [vmem:[%s3 + $0x2b0] sm:$0xff]
  %v3820 = vld [vmem:[%s3 + $0x2b8] sm:$0xff]
  %v3821 = vld [vmem:[%s3 + $0x2c0] sm:$0xff]
  %v3822 = vld [vmem:[%s3 + $0x2c8] sm:$0xff]
  %v3823 = vld [vmem:[%s3 + $0x2d0] sm:$0xff]
  %v3824 = vld [vmem:[%s3 + $0x2d8] sm:$0xff]
  %v3825 = vld [vmem:[%s3 + $0x2e0] sm:$0xff]
  %v3826 = vld [vmem:[%s3 + $0x2e8] sm:$0xff]
  %v3827 = vld [vmem:[%s3 + $0x2f0] sm:$0xff]
  %v3828 = vld [vmem:[%s3 + $0x2f8] sm:$0xff]
  %v3829 = vld [vmem:[%s3 + $0x300] sm:$0xff]
  %v3830 = vld [vmem:[%s3 + $0x308] sm:$0xff]
  %v3831 = vld [vmem:[%s3 + $0x310] sm:$0xff]
  %v3832 = vld [vmem:[%s3 + $0x318] sm:$0xff]
  %v3833 = vld [vmem:[%s3 + $0x320] sm:$0xff]
  %v3834 = vld [vmem:[%s3 + $0x328] sm:$0xff]
  %v3835 = vld [vmem:[%s3 + $0x330] sm:$0xff]
  %v3836 = vld [vmem:[%s3 + $0x338] sm:$0xff]
  %v3837 = vld [vmem:[%s3 + $0x340] sm:$0xff]
  %v3838 = vld [vmem:[%s3 + $0x348] sm:$0xff]
  %v3839 = vld [vmem:[%s3 + $0x350] sm:$0xff]
  %v3840 = vld [vmem:[%s3 + $0x358] sm:$0xff]
  %v3841 = vld [vmem:[%s3 + $0x360] sm:$0xff]
  %v3842 = vld [vmem:[%s3 + $0x368] sm:$0xff]
  %v3843 = vld [vmem:[%s3 + $0x370] sm:$0xff]
  %v3844 = vld [vmem:[%s3 + $0x378] sm:$0xff]
  %v3845 = vld [vmem:[%s3 + $0x380] sm:$0xff]
  %v3846 = vld [vmem:[%s3 + $0x388] sm:$0xff]
  %v3847 = vld [vmem:[%s3 + $0x390] sm:$0xff]
  %v3848 = vld [vmem:[%s3 + $0x398] sm:$0xff]
  %v3849 = vld [vmem:[%s3 + $0x3a0] sm:$0xff]
  %v3850 = vld [vmem:[%s3 + $0x3a8] sm:$0xff]
  %v3851 = vld [vmem:[%s3 + $0x3b0] sm:$0xff]
  %v3852 = vld [vmem:[%s3 + $0x3b8] sm:$0xff]
  %v3853 = vld [vmem:[%s3 + $0x3c0] sm:$0xff]
  %v3854 = vld [vmem:[%s3 + $0x3c8] sm:$0xff]
  %v3855 = vld [vmem:[%s3 + $0x3d0] sm:$0xff]
  %v3856 = vld [vmem:[%s3 + $0x3d8] sm:$0xff]
  %v3857 = vld [vmem:[%s3 + $0x3e0] sm:$0xff]
  %v3858 = vld [vmem:[%s3 + $0x3e8] sm:$0xff]
  %v3859 = vld [vmem:[%s3 + $0x3f0] sm:$0xff]
  %v3860 = vld [vmem:[%s3 + $0x3f8] sm:$0xff]
  %v3861 = vmul.f32 %v789, %v3605
  %v3862 = vmul.f32 %v790, %v3606
  %v3863 = vmul.f32 %v791, %v3607
  %v3864 = vmul.f32 %v792, %v3608
  %v3865 = vmul.f32 %v793, %v3609
  %v3866 = vmul.f32 %v794, %v3610
  %v3867 = vmul.f32 %v795, %v3611
  %v3868 = vmul.f32 %v796, %v3612
  %v3869 = vmul.f32 %v797, %v3613
  %v3870 = vmul.f32 %v798, %v3614
  %v3871 = vmul.f32 %v799, %v3615
  %v3872 = vmul.f32 %v800, %v3616
  %v3873 = vmul.f32 %v801, %v3617
  %v3874 = vmul.f32 %v802, %v3618
  %v3875 = vmul.f32 %v803, %v3619
  %v3876 = vmul.f32 %v804, %v3620
  %v3877 = vmul.f32 %v805, %v3621
  %v3878 = vmul.f32 %v806, %v3622
  %v3879 = vmul.f32 %v807, %v3623
  %v3880 = vmul.f32 %v808, %v3624
  %v3881 = vmul.f32 %v809, %v3625
  %v3882 = vmul.f32 %v810, %v3626
  %v3883 = vmul.f32 %v811, %v3627
  %v3884 = vmul.f32 %v812, %v3628
  %v3885 = vmul.f32 %v813, %v3629
  %v3886 = vmul.f32 %v814, %v3630
  %v3887 = vmul.f32 %v815, %v3631
  %v3888 = vmul.f32 %v816, %v3632
  %v3889 = vmul.f32 %v817, %v3633
  %v3890 = vmul.f32 %v818, %v3634
  %v3891 = vmul.f32 %v819, %v3635
  %v3892 = vmul.f32 %v820, %v3636
  %v3893 = vmul.f32 %v821, %v3637
  %v3894 = vmul.f32 %v822, %v3638
  %v3895 = vmul.f32 %v823, %v3639
  %v3896 = vmul.f32 %v824, %v3640
  %v3897 = vmul.f32 %v825, %v3641
  %v3898 = vmul.f32 %v826, %v3642
  %v3899 = vmul.f32 %v827, %v3643
  %v3900 = vmul.f32 %v828, %v3644
  %v3901 = vmul.f32 %v829, %v3645
  %v3902 = vmul.f32 %v830, %v3646
  %v3903 = vmul.f32 %v831, %v3647
  %v3904 = vmul.f32 %v832, %v3648
  %v3905 = vmul.f32 %v833, %v3649
  %v3906 = vmul.f32 %v834, %v3650
  %v3907 = vmul.f32 %v835, %v3651
  %v3908 = vmul.f32 %v836, %v3652
  %v3909 = vmul.f32 %v837, %v3653
  %v3910 = vmul.f32 %v838, %v3654
  %v3911 = vmul.f32 %v839, %v3655
  %v3912 = vmul.f32 %v840, %v3656
  %v3913 = vmul.f32 %v841, %v3657
  %v3914 = vmul.f32 %v842, %v3658
  %v3915 = vmul.f32 %v843, %v3659
  %v3916 = vmul.f32 %v844, %v3660
  %v3917 = vmul.f32 %v845, %v3661
  %v3918 = vmul.f32 %v846, %v3662
  %v3919 = vmul.f32 %v847, %v3663
  %v3920 = vmul.f32 %v848, %v3664
  %v3921 = vmul.f32 %v849, %v3665
  %v3922 = vmul.f32 %v850, %v3666
  %v3923 = vmul.f32 %v851, %v3667
  %v3924 = vmul.f32 %v852, %v3668
  %v3925 = vmul.f32 %v853, %v3669
  %v3926 = vmul.f32 %v854, %v3670
  %v3927 = vmul.f32 %v855, %v3671
  %v3928 = vmul.f32 %v856, %v3672
  %v3929 = vmul.f32 %v857, %v3673
  %v3930 = vmul.f32 %v858, %v3674
  %v3931 = vmul.f32 %v859, %v3675
  %v3932 = vmul.f32 %v860, %v3676
  %v3933 = vmul.f32 %v861, %v3677
  %v3934 = vmul.f32 %v862, %v3678
  %v3935 = vmul.f32 %v863, %v3679
  %v3936 = vmul.f32 %v864, %v3680
  %v3937 = vmul.f32 %v865, %v3681
  %v3938 = vmul.f32 %v866, %v3682
  %v3939 = vmul.f32 %v867, %v3683
  %v3940 = vmul.f32 %v868, %v3684
  %v3941 = vmul.f32 %v869, %v3685
  %v3942 = vmul.f32 %v870, %v3686
  %v3943 = vmul.f32 %v871, %v3687
  %v3944 = vmul.f32 %v872, %v3688
  %v3945 = vmul.f32 %v873, %v3689
  %v3946 = vmul.f32 %v874, %v3690
  %v3947 = vmul.f32 %v875, %v3691
  %v3948 = vmul.f32 %v876, %v3692
  %v3949 = vmul.f32 %v877, %v3693
  %v3950 = vmul.f32 %v878, %v3694
  %v3951 = vmul.f32 %v879, %v3695
  %v3952 = vmul.f32 %v880, %v3696
  %v3953 = vmul.f32 %v881, %v3697
  %v3954 = vmul.f32 %v882, %v3698
  %v3955 = vmul.f32 %v883, %v3699
  %v3956 = vmul.f32 %v884, %v3700
  %v3957 = vmul.f32 %v885, %v3701
  %v3958 = vmul.f32 %v886, %v3702
  %v3959 = vmul.f32 %v887, %v3703
  %v3960 = vmul.f32 %v888, %v3704
  %v3961 = vmul.f32 %v889, %v3705
  %v3962 = vmul.f32 %v890, %v3706
  %v3963 = vmul.f32 %v891, %v3707
  %v3964 = vmul.f32 %v892, %v3708
  %v3965 = vmul.f32 %v893, %v3709
  %v3966 = vmul.f32 %v894, %v3710
  %v3967 = vmul.f32 %v895, %v3711
  %v3968 = vmul.f32 %v896, %v3712
  %v3969 = vmul.f32 %v897, %v3713
  %v3970 = vmul.f32 %v898, %v3714
  %v3971 = vmul.f32 %v899, %v3715
  %v3972 = vmul.f32 %v900, %v3716
  %v3973 = vmul.f32 %v901, %v3717
  %v3974 = vmul.f32 %v902, %v3718
  %v3975 = vmul.f32 %v903, %v3719
  %v3976 = vmul.f32 %v904, %v3720
  %v3977 = vmul.f32 %v905, %v3721
  %v3978 = vmul.f32 %v906, %v3722
  %v3979 = vmul.f32 %v907, %v3723
  %v3980 = vmul.f32 %v908, %v3724
  %v3981 = vmul.f32 %v909, %v3725
  %v3982 = vmul.f32 %v910, %v3726
  %v3983 = vmul.f32 %v911, %v3727
  %v3984 = vmul.f32 %v912, %v3728
  %v3985 = vmul.f32 %v913, %v3729
  %v3986 = vmul.f32 %v914, %v3730
  %v3987 = vmul.f32 %v915, %v3731
  %v3988 = vmul.f32 %v916, %v3732
  %v3989 = vsub.f32 %v3733, %v3861
  %v3990 = vsub.f32 %v3734, %v3862
  %v3991 = vsub.f32 %v3735, %v3863
  %v3992 = vsub.f32 %v3736, %v3864
  %v3993 = vsub.f32 %v3737, %v3865
  %v3994 = vsub.f32 %v3738, %v3866
  %v3995 = vsub.f32 %v3739, %v3867
  %v3996 = vsub.f32 %v3740, %v3868
  %v3997 = vsub.f32 %v3741, %v3869
  %v3998 = vsub.f32 %v3742, %v3870
  %v3999 = vsub.f32 %v3743, %v3871
  %v4000 = vsub.f32 %v3744, %v3872
  %v4001 = vsub.f32 %v3745, %v3873
  %v4002 = vsub.f32 %v3746, %v3874
  %v4003 = vsub.f32 %v3747, %v3875
  %v4004 = vsub.f32 %v3748, %v3876
  %v4005 = vsub.f32 %v3749, %v3877
  %v4006 = vsub.f32 %v3750, %v3878
  %v4007 = vsub.f32 %v3751, %v3879
  %v4008 = vsub.f32 %v3752, %v3880
  %v4009 = vsub.f32 %v3753, %v3881
  %v4010 = vsub.f32 %v3754, %v3882
  %v4011 = vsub.f32 %v3755, %v3883
  %v4012 = vsub.f32 %v3756, %v3884
  %v4013 = vsub.f32 %v3757, %v3885
  %v4014 = vsub.f32 %v3758, %v3886
  %v4015 = vsub.f32 %v3759, %v3887
  %v4016 = vsub.f32 %v3760, %v3888
  %v4017 = vsub.f32 %v3761, %v3889
  %v4018 = vsub.f32 %v3762, %v3890
  %v4019 = vsub.f32 %v3763, %v3891
  %v4020 = vsub.f32 %v3764, %v3892
  %v4021 = vsub.f32 %v3765, %v3893
  %v4022 = vsub.f32 %v3766, %v3894
  %v4023 = vsub.f32 %v3767, %v3895
  %v4024 = vsub.f32 %v3768, %v3896
  %v4025 = vsub.f32 %v3769, %v3897
  %v4026 = vsub.f32 %v3770, %v3898
  %v4027 = vsub.f32 %v3771, %v3899
  %v4028 = vsub.f32 %v3772, %v3900
  %v4029 = vsub.f32 %v3773, %v3901
  %v4030 = vsub.f32 %v3774, %v3902
  %v4031 = vsub.f32 %v3775, %v3903
  %v4032 = vsub.f32 %v3776, %v3904
  %v4033 = vsub.f32 %v3777, %v3905
  %v4034 = vsub.f32 %v3778, %v3906
  %v4035 = vsub.f32 %v3779, %v3907
  %v4036 = vsub.f32 %v3780, %v3908
  %v4037 = vsub.f32 %v3781, %v3909
  %v4038 = vsub.f32 %v3782, %v3910
  %v4039 = vsub.f32 %v3783, %v3911
  %v4040 = vsub.f32 %v3784, %v3912
  %v4041 = vsub.f32 %v3785, %v3913
  %v4042 = vsub.f32 %v3786, %v3914
  %v4043 = vsub.f32 %v3787, %v3915
  %v4044 = vsub.f32 %v3788, %v3916
  %v4045 = vsub.f32 %v3789, %v3917
  %v4046 = vsub.f32 %v3790, %v3918
  %v4047 = vsub.f32 %v3791, %v3919
  %v4048 = vsub.f32 %v3792, %v3920
  %v4049 = vsub.f32 %v3793, %v3921
  %v4050 = vsub.f32 %v3794, %v3922
  %v4051 = vsub.f32 %v3795, %v3923
  %v4052 = vsub.f32 %v3796, %v3924
  %v4053 = vsub.f32 %v3797, %v3925
  %v4054 = vsub.f32 %v3798, %v3926
  %v4055 = vsub.f32 %v3799, %v3927
  %v4056 = vsub.f32 %v3800, %v3928
  %v4057 = vsub.f32 %v3801, %v3929
  %v4058 = vsub.f32 %v3802, %v3930
  %v4059 = vsub.f32 %v3803, %v3931
  %v4060 = vsub.f32 %v3804, %v3932
  %v4061 = vsub.f32 %v3805, %v3933
  %v4062 = vsub.f32 %v3806, %v3934
  %v4063 = vsub.f32 %v3807, %v3935
  %v4064 = vsub.f32 %v3808, %v3936
  %v4065 = vsub.f32 %v3809, %v3937
  %v4066 = vsub.f32 %v3810, %v3938
  %v4067 = vsub.f32 %v3811, %v3939
  %v4068 = vsub.f32 %v3812, %v3940
  %v4069 = vsub.f32 %v3813, %v3941
  %v4070 = vsub.f32 %v3814, %v3942
  %v4071 = vsub.f32 %v3815, %v3943
  %v4072 = vsub.f32 %v3816, %v3944
  %v4073 = vsub.f32 %v3817, %v3945
  %v4074 = vsub.f32 %v3818, %v3946
  %v4075 = vsub.f32 %v3819, %v3947
  %v4076 = vsub.f32 %v3820, %v3948
  %v4077 = vsub.f32 %v3821, %v3949
  %v4078 = vsub.f32 %v3822, %v3950
  %v4079 = vsub.f32 %v3823, %v3951
  %v4080 = vsub.f32 %v3824, %v3952
  %v4081 = vsub.f32 %v3825, %v3953
  %v4082 = vsub.f32 %v3826, %v3954
  %v4083 = vsub.f32 %v3827, %v3955
  %v4084 = vsub.f32 %v3828, %v3956
  %v4085 = vsub.f32 %v3829, %v3957
  %v4086 = vsub.f32 %v3830, %v3958
  %v4087 = vsub.f32 %v3831, %v3959
  %v4088 = vsub.f32 %v3832, %v3960
  %v4089 = vsub.f32 %v3833, %v3961
  %v4090 = vsub.f32 %v3834, %v3962
  %v4091 = vsub.f32 %v3835, %v3963
  %v4092 = vsub.f32 %v3836, %v3964
  %v4093 = vsub.f32 %v3837, %v3965
  %v4094 = vsub.f32 %v3838, %v3966
  %v4095 = vsub.f32 %v3839, %v3967
  %v4096 = vsub.f32 %v3840, %v3968
  %v4097 = vsub.f32 %v3841, %v3969
  %v4098 = vsub.f32 %v3842, %v3970
  %v4099 = vsub.f32 %v3843, %v3971
  %v4100 = vsub.f32 %v3844, %v3972
  %v4101 = vsub.f32 %v3845, %v3973
  %v4102 = vsub.f32 %v3846, %v3974
  %v4103 = vsub.f32 %v3847, %v3975
  %v4104 = vsub.f32 %v3848, %v3976
  %v4105 = vsub.f32 %v3849, %v3977
  %v4106 = vsub.f32 %v3850, %v3978
  %v4107 = vsub.f32 %v3851, %v3979
  %v4108 = vsub.f32 %v3852, %v3980
  %v4109 = vsub.f32 %v3853, %v3981
  %v4110 = vsub.f32 %v3854, %v3982
  %v4111 = vsub.f32 %v3855, %v3983
  %v4112 = vsub.f32 %v3856, %v3984
  %v4113 = vsub.f32 %v3857, %v3985
  %v4114 = vsub.f32 %v3858, %v3986
  %v4115 = vsub.f32 %v3859, %v3987
  %v4116 = vsub.f32 %v3860, %v3988
  %4118 = vset.pattern.permute.xlu0 0
  %4119 = vperm.xlu0 %4118, %v3605
  %v4120 = vpop.permute.xlu0 %4119
  %4123 = vset.pattern.permute.xlu0 0
  %4124 = vperm.xlu0 %4123, %v3606
  %v4125 = vpop.permute.xlu0 %4124
  %4128 = vset.pattern.permute.xlu0 0
  %4129 = vperm.xlu0 %4128, %v3607
  %v4130 = vpop.permute.xlu0 %4129
  %4133 = vset.pattern.permute.xlu0 0
  %4134 = vperm.xlu0 %4133, %v3608
  %v4135 = vpop.permute.xlu0 %4134
  %4138 = vset.pattern.permute.xlu0 0
  %4139 = vperm.xlu0 %4138, %v3609
  %v4140 = vpop.permute.xlu0 %4139
  %4143 = vset.pattern.permute.xlu0 0
  %4144 = vperm.xlu0 %4143, %v3610
  %v4145 = vpop.permute.xlu0 %4144
  %4148 = vset.pattern.permute.xlu0 0
  %4149 = vperm.xlu0 %4148, %v3611
  %v4150 = vpop.permute.xlu0 %4149
  %4153 = vset.pattern.permute.xlu0 0
  %4154 = vperm.xlu0 %4153, %v3612
  %v4155 = vpop.permute.xlu0 %4154
  %4158 = vset.pattern.permute.xlu0 0
  %4159 = vperm.xlu0 %4158, %v3613
  %v4160 = vpop.permute.xlu0 %4159
  %4163 = vset.pattern.permute.xlu0 0
  %4164 = vperm.xlu0 %4163, %v3614
  %v4165 = vpop.permute.xlu0 %4164
  %4168 = vset.pattern.permute.xlu0 0
  %4169 = vperm.xlu0 %4168, %v3615
  %v4170 = vpop.permute.xlu0 %4169
  %4173 = vset.pattern.permute.xlu0 0
  %4174 = vperm.xlu0 %4173, %v3616
  %v4175 = vpop.permute.xlu0 %4174
  %4178 = vset.pattern.permute.xlu0 0
  %4179 = vperm.xlu0 %4178, %v3617
  %v4180 = vpop.permute.xlu0 %4179
  %4183 = vset.pattern.permute.xlu0 0
  %4184 = vperm.xlu0 %4183, %v3618
  %v4185 = vpop.permute.xlu0 %4184
  %4188 = vset.pattern.permute.xlu0 0
  %4189 = vperm.xlu0 %4188, %v3619
  %v4190 = vpop.permute.xlu0 %4189
  %4193 = vset.pattern.permute.xlu0 0
  %4194 = vperm.xlu0 %4193, %v3620
  %v4195 = vpop.permute.xlu0 %4194
  %4198 = vset.pattern.permute.xlu0 0
  %4199 = vperm.xlu0 %4198, %v3621
  %v4200 = vpop.permute.xlu0 %4199
  %4203 = vset.pattern.permute.xlu0 0
  %4204 = vperm.xlu0 %4203, %v3622
  %v4205 = vpop.permute.xlu0 %4204
  %4208 = vset.pattern.permute.xlu0 0
  %4209 = vperm.xlu0 %4208, %v3623
  %v4210 = vpop.permute.xlu0 %4209
  %4213 = vset.pattern.permute.xlu0 0
  %4214 = vperm.xlu0 %4213, %v3624
  %v4215 = vpop.permute.xlu0 %4214
  %4218 = vset.pattern.permute.xlu0 0
  %4219 = vperm.xlu0 %4218, %v3625
  %v4220 = vpop.permute.xlu0 %4219
  %4223 = vset.pattern.permute.xlu0 0
  %4224 = vperm.xlu0 %4223, %v3626
  %v4225 = vpop.permute.xlu0 %4224
  %4228 = vset.pattern.permute.xlu0 0
  %4229 = vperm.xlu0 %4228, %v3627
  %v4230 = vpop.permute.xlu0 %4229
  %4233 = vset.pattern.permute.xlu0 0
  %4234 = vperm.xlu0 %4233, %v3628
  %v4235 = vpop.permute.xlu0 %4234
  %4238 = vset.pattern.permute.xlu0 0
  %4239 = vperm.xlu0 %4238, %v3629
  %v4240 = vpop.permute.xlu0 %4239
  %4243 = vset.pattern.permute.xlu0 0
  %4244 = vperm.xlu0 %4243, %v3630
  %v4245 = vpop.permute.xlu0 %4244
  %4248 = vset.pattern.permute.xlu0 0
  %4249 = vperm.xlu0 %4248, %v3631
  %v4250 = vpop.permute.xlu0 %4249
  %4253 = vset.pattern.permute.xlu0 0
  %4254 = vperm.xlu0 %4253, %v3632
  %v4255 = vpop.permute.xlu0 %4254
  %4258 = vset.pattern.permute.xlu0 0
  %4259 = vperm.xlu0 %4258, %v3633
  %v4260 = vpop.permute.xlu0 %4259
  %4263 = vset.pattern.permute.xlu0 0
  %4264 = vperm.xlu0 %4263, %v3634
  %v4265 = vpop.permute.xlu0 %4264
  %4268 = vset.pattern.permute.xlu0 0
  %4269 = vperm.xlu0 %4268, %v3635
  %v4270 = vpop.permute.xlu0 %4269
  %4273 = vset.pattern.permute.xlu0 0
  %4274 = vperm.xlu0 %4273, %v3636
  %v4275 = vpop.permute.xlu0 %4274
  %4278 = vset.pattern.permute.xlu0 0
  %4279 = vperm.xlu0 %4278, %v3637
  %v4280 = vpop.permute.xlu0 %4279
  %4283 = vset.pattern.permute.xlu0 0
  %4284 = vperm.xlu0 %4283, %v3638
  %v4285 = vpop.permute.xlu0 %4284
  %4288 = vset.pattern.permute.xlu0 0
  %4289 = vperm.xlu0 %4288, %v3639
  %v4290 = vpop.permute.xlu0 %4289
  %4293 = vset.pattern.permute.xlu0 0
  %4294 = vperm.xlu0 %4293, %v3640
  %v4295 = vpop.permute.xlu0 %4294
  %4298 = vset.pattern.permute.xlu0 0
  %4299 = vperm.xlu0 %4298, %v3641
  %v4300 = vpop.permute.xlu0 %4299
  %4303 = vset.pattern.permute.xlu0 0
  %4304 = vperm.xlu0 %4303, %v3642
  %v4305 = vpop.permute.xlu0 %4304
  %4308 = vset.pattern.permute.xlu0 0
  %4309 = vperm.xlu0 %4308, %v3643
  %v4310 = vpop.permute.xlu0 %4309
  %4313 = vset.pattern.permute.xlu0 0
  %4314 = vperm.xlu0 %4313, %v3644
  %v4315 = vpop.permute.xlu0 %4314
  %4318 = vset.pattern.permute.xlu0 0
  %4319 = vperm.xlu0 %4318, %v3645
  %v4320 = vpop.permute.xlu0 %4319
  %4323 = vset.pattern.permute.xlu0 0
  %4324 = vperm.xlu0 %4323, %v3646
  %v4325 = vpop.permute.xlu0 %4324
  %4328 = vset.pattern.permute.xlu0 0
  %4329 = vperm.xlu0 %4328, %v3647
  %v4330 = vpop.permute.xlu0 %4329
  %4333 = vset.pattern.permute.xlu0 0
  %4334 = vperm.xlu0 %4333, %v3648
  %v4335 = vpop.permute.xlu0 %4334
  %4338 = vset.pattern.permute.xlu0 0
  %4339 = vperm.xlu0 %4338, %v3649
  %v4340 = vpop.permute.xlu0 %4339
  %4343 = vset.pattern.permute.xlu0 0
  %4344 = vperm.xlu0 %4343, %v3650
  %v4345 = vpop.permute.xlu0 %4344
  %4348 = vset.pattern.permute.xlu0 0
  %4349 = vperm.xlu0 %4348, %v3651
  %v4350 = vpop.permute.xlu0 %4349
  %4353 = vset.pattern.permute.xlu0 0
  %4354 = vperm.xlu0 %4353, %v3652
  %v4355 = vpop.permute.xlu0 %4354
  %4358 = vset.pattern.permute.xlu0 0
  %4359 = vperm.xlu0 %4358, %v3653
  %v4360 = vpop.permute.xlu0 %4359
  %4363 = vset.pattern.permute.xlu0 0
  %4364 = vperm.xlu0 %4363, %v3654
  %v4365 = vpop.permute.xlu0 %4364
  %4368 = vset.pattern.permute.xlu0 0
  %4369 = vperm.xlu0 %4368, %v3655
  %v4370 = vpop.permute.xlu0 %4369
  %4373 = vset.pattern.permute.xlu0 0
  %4374 = vperm.xlu0 %4373, %v3656
  %v4375 = vpop.permute.xlu0 %4374
  %4378 = vset.pattern.permute.xlu0 0
  %4379 = vperm.xlu0 %4378, %v3657
  %v4380 = vpop.permute.xlu0 %4379
  %4383 = vset.pattern.permute.xlu0 0
  %4384 = vperm.xlu0 %4383, %v3658
  %v4385 = vpop.permute.xlu0 %4384
  %4388 = vset.pattern.permute.xlu0 0
  %4389 = vperm.xlu0 %4388, %v3659
  %v4390 = vpop.permute.xlu0 %4389
  %4393 = vset.pattern.permute.xlu0 0
  %4394 = vperm.xlu0 %4393, %v3660
  %v4395 = vpop.permute.xlu0 %4394
  %4398 = vset.pattern.permute.xlu0 0
  %4399 = vperm.xlu0 %4398, %v3661
  %v4400 = vpop.permute.xlu0 %4399
  %4403 = vset.pattern.permute.xlu0 0
  %4404 = vperm.xlu0 %4403, %v3662
  %v4405 = vpop.permute.xlu0 %4404
  %4408 = vset.pattern.permute.xlu0 0
  %4409 = vperm.xlu0 %4408, %v3663
  %v4410 = vpop.permute.xlu0 %4409
  %4413 = vset.pattern.permute.xlu0 0
  %4414 = vperm.xlu0 %4413, %v3664
  %v4415 = vpop.permute.xlu0 %4414
  %4418 = vset.pattern.permute.xlu0 0
  %4419 = vperm.xlu0 %4418, %v3665
  %v4420 = vpop.permute.xlu0 %4419
  %4423 = vset.pattern.permute.xlu0 0
  %4424 = vperm.xlu0 %4423, %v3666
  %v4425 = vpop.permute.xlu0 %4424
  %4428 = vset.pattern.permute.xlu0 0
  %4429 = vperm.xlu0 %4428, %v3667
  %v4430 = vpop.permute.xlu0 %4429
  %4433 = vset.pattern.permute.xlu0 0
  %4434 = vperm.xlu0 %4433, %v3668
  %v4435 = vpop.permute.xlu0 %4434
  %4438 = vset.pattern.permute.xlu0 0
  %4439 = vperm.xlu0 %4438, %v3669
  %v4440 = vpop.permute.xlu0 %4439
  %4443 = vset.pattern.permute.xlu0 0
  %4444 = vperm.xlu0 %4443, %v3670
  %v4445 = vpop.permute.xlu0 %4444
  %4448 = vset.pattern.permute.xlu0 0
  %4449 = vperm.xlu0 %4448, %v3671
  %v4450 = vpop.permute.xlu0 %4449
  %4453 = vset.pattern.permute.xlu0 0
  %4454 = vperm.xlu0 %4453, %v3672
  %v4455 = vpop.permute.xlu0 %4454
  %4458 = vset.pattern.permute.xlu0 0
  %4459 = vperm.xlu0 %4458, %v3673
  %v4460 = vpop.permute.xlu0 %4459
  %4463 = vset.pattern.permute.xlu0 0
  %4464 = vperm.xlu0 %4463, %v3674
  %v4465 = vpop.permute.xlu0 %4464
  %4468 = vset.pattern.permute.xlu0 0
  %4469 = vperm.xlu0 %4468, %v3675
  %v4470 = vpop.permute.xlu0 %4469
  %4473 = vset.pattern.permute.xlu0 0
  %4474 = vperm.xlu0 %4473, %v3676
  %v4475 = vpop.permute.xlu0 %4474
  %4478 = vset.pattern.permute.xlu0 0
  %4479 = vperm.xlu0 %4478, %v3677
  %v4480 = vpop.permute.xlu0 %4479
  %4483 = vset.pattern.permute.xlu0 0
  %4484 = vperm.xlu0 %4483, %v3678
  %v4485 = vpop.permute.xlu0 %4484
  %4488 = vset.pattern.permute.xlu0 0
  %4489 = vperm.xlu0 %4488, %v3679
  %v4490 = vpop.permute.xlu0 %4489
  %4493 = vset.pattern.permute.xlu0 0
  %4494 = vperm.xlu0 %4493, %v3680
  %v4495 = vpop.permute.xlu0 %4494
  %4498 = vset.pattern.permute.xlu0 0
  %4499 = vperm.xlu0 %4498, %v3681
  %v4500 = vpop.permute.xlu0 %4499
  %4503 = vset.pattern.permute.xlu0 0
  %4504 = vperm.xlu0 %4503, %v3682
  %v4505 = vpop.permute.xlu0 %4504
  %4508 = vset.pattern.permute.xlu0 0
  %4509 = vperm.xlu0 %4508, %v3683
  %v4510 = vpop.permute.xlu0 %4509
  %4513 = vset.pattern.permute.xlu0 0
  %4514 = vperm.xlu0 %4513, %v3684
  %v4515 = vpop.permute.xlu0 %4514
  %4518 = vset.pattern.permute.xlu0 0
  %4519 = vperm.xlu0 %4518, %v3685
  %v4520 = vpop.permute.xlu0 %4519
  %4523 = vset.pattern.permute.xlu0 0
  %4524 = vperm.xlu0 %4523, %v3686
  %v4525 = vpop.permute.xlu0 %4524
  %4528 = vset.pattern.permute.xlu0 0
  %4529 = vperm.xlu0 %4528, %v3687
  %v4530 = vpop.permute.xlu0 %4529
  %4533 = vset.pattern.permute.xlu0 0
  %4534 = vperm.xlu0 %4533, %v3688
  %v4535 = vpop.permute.xlu0 %4534
  %4538 = vset.pattern.permute.xlu0 0
  %4539 = vperm.xlu0 %4538, %v3689
  %v4540 = vpop.permute.xlu0 %4539
  %4543 = vset.pattern.permute.xlu0 0
  %4544 = vperm.xlu0 %4543, %v3690
  %v4545 = vpop.permute.xlu0 %4544
  %4548 = vset.pattern.permute.xlu0 0
  %4549 = vperm.xlu0 %4548, %v3691
  %v4550 = vpop.permute.xlu0 %4549
  %4553 = vset.pattern.permute.xlu0 0
  %4554 = vperm.xlu0 %4553, %v3692
  %v4555 = vpop.permute.xlu0 %4554
  %4558 = vset.pattern.permute.xlu0 0
  %4559 = vperm.xlu0 %4558, %v3693
  %v4560 = vpop.permute.xlu0 %4559
  %4563 = vset.pattern.permute.xlu0 0
  %4564 = vperm.xlu0 %4563, %v3694
  %v4565 = vpop.permute.xlu0 %4564
  %4568 = vset.pattern.permute.xlu0 0
  %4569 = vperm.xlu0 %4568, %v3695
  %v4570 = vpop.permute.xlu0 %4569
  %4573 = vset.pattern.permute.xlu0 0
  %4574 = vperm.xlu0 %4573, %v3696
  %v4575 = vpop.permute.xlu0 %4574
  %4578 = vset.pattern.permute.xlu0 0
  %4579 = vperm.xlu0 %4578, %v3697
  %v4580 = vpop.permute.xlu0 %4579
  %4583 = vset.pattern.permute.xlu0 0
  %4584 = vperm.xlu0 %4583, %v3698
  %v4585 = vpop.permute.xlu0 %4584
  %4588 = vset.pattern.permute.xlu0 0
  %4589 = vperm.xlu0 %4588, %v3699
  %v4590 = vpop.permute.xlu0 %4589
  %4593 = vset.pattern.permute.xlu0 0
  %4594 = vperm.xlu0 %4593, %v3700
  %v4595 = vpop.permute.xlu0 %4594
  %4598 = vset.pattern.permute.xlu0 0
  %4599 = vperm.xlu0 %4598, %v3701
  %v4600 = vpop.permute.xlu0 %4599
  %4603 = vset.pattern.permute.xlu0 0
  %4604 = vperm.xlu0 %4603, %v3702
  %v4605 = vpop.permute.xlu0 %4604
  %4608 = vset.pattern.permute.xlu0 0
  %4609 = vperm.xlu0 %4608, %v3703
  %v4610 = vpop.permute.xlu0 %4609
  %4613 = vset.pattern.permute.xlu0 0
  %4614 = vperm.xlu0 %4613, %v3704
  %v4615 = vpop.permute.xlu0 %4614
  %4618 = vset.pattern.permute.xlu0 0
  %4619 = vperm.xlu0 %4618, %v3705
  %v4620 = vpop.permute.xlu0 %4619
  %4623 = vset.pattern.permute.xlu0 0
  %4624 = vperm.xlu0 %4623, %v3706
  %v4625 = vpop.permute.xlu0 %4624
  %4628 = vset.pattern.permute.xlu0 0
  %4629 = vperm.xlu0 %4628, %v3707
  %v4630 = vpop.permute.xlu0 %4629
  %4633 = vset.pattern.permute.xlu0 0
  %4634 = vperm.xlu0 %4633, %v3708
  %v4635 = vpop.permute.xlu0 %4634
  %4638 = vset.pattern.permute.xlu0 0
  %4639 = vperm.xlu0 %4638, %v3709
  %v4640 = vpop.permute.xlu0 %4639
  %4643 = vset.pattern.permute.xlu0 0
  %4644 = vperm.xlu0 %4643, %v3710
  %v4645 = vpop.permute.xlu0 %4644
  %4648 = vset.pattern.permute.xlu0 0
  %4649 = vperm.xlu0 %4648, %v3711
  %v4650 = vpop.permute.xlu0 %4649
  %4653 = vset.pattern.permute.xlu0 0
  %4654 = vperm.xlu0 %4653, %v3712
  %v4655 = vpop.permute.xlu0 %4654
  %4658 = vset.pattern.permute.xlu0 0
  %4659 = vperm.xlu0 %4658, %v3713
  %v4660 = vpop.permute.xlu0 %4659
  %4663 = vset.pattern.permute.xlu0 0
  %4664 = vperm.xlu0 %4663, %v3714
  %v4665 = vpop.permute.xlu0 %4664
  %4668 = vset.pattern.permute.xlu0 0
  %4669 = vperm.xlu0 %4668, %v3715
  %v4670 = vpop.permute.xlu0 %4669
  %4673 = vset.pattern.permute.xlu0 0
  %4674 = vperm.xlu0 %4673, %v3716
  %v4675 = vpop.permute.xlu0 %4674
  %4678 = vset.pattern.permute.xlu0 0
  %4679 = vperm.xlu0 %4678, %v3717
  %v4680 = vpop.permute.xlu0 %4679
  %4683 = vset.pattern.permute.xlu0 0
  %4684 = vperm.xlu0 %4683, %v3718
  %v4685 = vpop.permute.xlu0 %4684
  %4688 = vset.pattern.permute.xlu0 0
  %4689 = vperm.xlu0 %4688, %v3719
  %v4690 = vpop.permute.xlu0 %4689
  %4693 = vset.pattern.permute.xlu0 0
  %4694 = vperm.xlu0 %4693, %v3720
  %v4695 = vpop.permute.xlu0 %4694
  %4698 = vset.pattern.permute.xlu0 0
  %4699 = vperm.xlu0 %4698, %v3721
  %v4700 = vpop.permute.xlu0 %4699
  %4703 = vset.pattern.permute.xlu0 0
  %4704 = vperm.xlu0 %4703, %v3722
  %v4705 = vpop.permute.xlu0 %4704
  %4708 = vset.pattern.permute.xlu0 0
  %4709 = vperm.xlu0 %4708, %v3723
  %v4710 = vpop.permute.xlu0 %4709
  %4713 = vset.pattern.permute.xlu0 0
  %4714 = vperm.xlu0 %4713, %v3724
  %v4715 = vpop.permute.xlu0 %4714
  %4718 = vset.pattern.permute.xlu0 0
  %4719 = vperm.xlu0 %4718, %v3725
  %v4720 = vpop.permute.xlu0 %4719
  %4723 = vset.pattern.permute.xlu0 0
  %4724 = vperm.xlu0 %4723, %v3726
  %v4725 = vpop.permute.xlu0 %4724
  %4728 = vset.pattern.permute.xlu0 0
  %4729 = vperm.xlu0 %4728, %v3727
  %v4730 = vpop.permute.xlu0 %4729
  %4733 = vset.pattern.permute.xlu0 0
  %4734 = vperm.xlu0 %4733, %v3728
  %v4735 = vpop.permute.xlu0 %4734
  %4738 = vset.pattern.permute.xlu0 0
  %4739 = vperm.xlu0 %4738, %v3729
  %v4740 = vpop.permute.xlu0 %4739
  %4743 = vset.pattern.permute.xlu0 0
  %4744 = vperm.xlu0 %4743, %v3730
  %v4745 = vpop.permute.xlu0 %4744
  %4748 = vset.pattern.permute.xlu0 0
  %4749 = vperm.xlu0 %4748, %v3731
  %v4750 = vpop.permute.xlu0 %4749
  %4753 = vset.pattern.permute.xlu0 0
  %4754 = vperm.xlu0 %4753, %v3732
  %v4755 = vpop.permute.xlu0 %4754
  %v4757 = vmul.f32 %v20, %v4120
  %v4758 = vmul.f32 %v21, %v4120
  %v4759 = vmul.f32 %v22, %v4125
  %v4760 = vmul.f32 %v23, %v4125
  %v4761 = vmul.f32 %v24, %v4130
  %v4762 = vmul.f32 %v25, %v4130
  %v4763 = vmul.f32 %v26, %v4135
  %v4764 = vmul.f32 %v27, %v4135
  %v4765 = vmul.f32 %v28, %v4140
  %v4766 = vmul.f32 %v29, %v4140
  %v4767 = vmul.f32 %v30, %v4145
  %v4768 = vmul.f32 %v31, %v4145
  %v4769 = vmul.f32 %v32, %v4150
  %v4770 = vmul.f32 %v33, %v4150
  %v4771 = vmul.f32 %v34, %v4155
  %v4772 = vmul.f32 %v35, %v4155
  %v4773 = vmul.f32 %v36, %v4160
  %v4774 = vmul.f32 %v37, %v4160
  %v4775 = vmul.f32 %v38, %v4165
  %v4776 = vmul.f32 %v39, %v4165
  %v4777 = vmul.f32 %v40, %v4170
  %v4778 = vmul.f32 %v41, %v4170
  %v4779 = vmul.f32 %v42, %v4175
  %v4780 = vmul.f32 %v43, %v4175
  %v4781 = vmul.f32 %v44, %v4180
  %v4782 = vmul.f32 %v45, %v4180
  %v4783 = vmul.f32 %v46, %v4185
  %v4784 = vmul.f32 %v47, %v4185
  %v4785 = vmul.f32 %v48, %v4190
  %v4786 = vmul.f32 %v49, %v4190
  %v4787 = vmul.f32 %v50, %v4195
  %v4788 = vmul.f32 %v51, %v4195
  %v4789 = vmul.f32 %v52, %v4200
  %v4790 = vmul.f32 %v53, %v4200
  %v4791 = vmul.f32 %v54, %v4205
  %v4792 = vmul.f32 %v55, %v4205
  %v4793 = vmul.f32 %v56, %v4210
  %v4794 = vmul.f32 %v57, %v4210
  %v4795 = vmul.f32 %v58, %v4215
  %v4796 = vmul.f32 %v59, %v4215
  %v4797 = vmul.f32 %v60, %v4220
  %v4798 = vmul.f32 %v61, %v4220
  %v4799 = vmul.f32 %v62, %v4225
  %v4800 = vmul.f32 %v63, %v4225
  %v4801 = vmul.f32 %v64, %v4230
  %v4802 = vmul.f32 %v65, %v4230
  %v4803 = vmul.f32 %v66, %v4235
  %v4804 = vmul.f32 %v67, %v4235
  %v4805 = vmul.f32 %v68, %v4240
  %v4806 = vmul.f32 %v69, %v4240
  %v4807 = vmul.f32 %v70, %v4245
  %v4808 = vmul.f32 %v71, %v4245
  %v4809 = vmul.f32 %v72, %v4250
  %v4810 = vmul.f32 %v73, %v4250
  %v4811 = vmul.f32 %v74, %v4255
  %v4812 = vmul.f32 %v75, %v4255
  %v4813 = vmul.f32 %v76, %v4260
  %v4814 = vmul.f32 %v77, %v4260
  %v4815 = vmul.f32 %v78, %v4265
  %v4816 = vmul.f32 %v79, %v4265
  %v4817 = vmul.f32 %v80, %v4270
  %v4818 = vmul.f32 %v81, %v4270
  %v4819 = vmul.f32 %v82, %v4275
  %v4820 = vmul.f32 %v83, %v4275
  %v4821 = vmul.f32 %v84, %v4280
  %v4822 = vmul.f32 %v85, %v4280
  %v4823 = vmul.f32 %v86, %v4285
  %v4824 = vmul.f32 %v87, %v4285
  %v4825 = vmul.f32 %v88, %v4290
  %v4826 = vmul.f32 %v89, %v4290
  %v4827 = vmul.f32 %v90, %v4295
  %v4828 = vmul.f32 %v91, %v4295
  %v4829 = vmul.f32 %v92, %v4300
  %v4830 = vmul.f32 %v93, %v4300
  %v4831 = vmul.f32 %v94, %v4305
  %v4832 = vmul.f32 %v95, %v4305
  %v4833 = vmul.f32 %v96, %v4310
  %v4834 = vmul.f32 %v97, %v4310
  %v4835 = vmul.f32 %v98, %v4315
  %v4836 = vmul.f32 %v99, %v4315
  %v4837 = vmul.f32 %v100, %v4320
  %v4838 = vmul.f32 %v101, %v4320
  %v4839 = vmul.f32 %v102, %v4325
  %v4840 = vmul.f32 %v103, %v4325
  %v4841 = vmul.f32 %v104, %v4330
  %v4842 = vmul.f32 %v105, %v4330
  %v4843 = vmul.f32 %v106, %v4335
  %v4844 = vmul.f32 %v107, %v4335
  %v4845 = vmul.f32 %v108, %v4340
  %v4846 = vmul.f32 %v109, %v4340
  %v4847 = vmul.f32 %v110, %v4345
  %v4848 = vmul.f32 %v111, %v4345
  %v4849 = vmul.f32 %v112, %v4350
  %v4850 = vmul.f32 %v113, %v4350
  %v4851 = vmul.f32 %v114, %v4355
  %v4852 = vmul.f32 %v115, %v4355
  %v4853 = vmul.f32 %v116, %v4360
  %v4854 = vmul.f32 %v117, %v4360
  %v4855 = vmul.f32 %v118, %v4365
  %v4856 = vmul.f32 %v119, %v4365
  %v4857 = vmul.f32 %v120, %v4370
  %v4858 = vmul.f32 %v121, %v4370
  %v4859 = vmul.f32 %v122, %v4375
  %v4860 = vmul.f32 %v123, %v4375
  %v4861 = vmul.f32 %v124, %v4380
  %v4862 = vmul.f32 %v125, %v4380
  %v4863 = vmul.f32 %v126, %v4385
  %v4864 = vmul.f32 %v127, %v4385
  %v4865 = vmul.f32 %v128, %v4390
  %v4866 = vmul.f32 %v129, %v4390
  %v4867 = vmul.f32 %v130, %v4395
  %v4868 = vmul.f32 %v131, %v4395
  %v4869 = vmul.f32 %v132, %v4400
  %v4870 = vmul.f32 %v133, %v4400
  %v4871 = vmul.f32 %v134, %v4405
  %v4872 = vmul.f32 %v135, %v4405
  %v4873 = vmul.f32 %v136, %v4410
  %v4874 = vmul.f32 %v137, %v4410
  %v4875 = vmul.f32 %v138, %v4415
  %v4876 = vmul.f32 %v139, %v4415
  %v4877 = vmul.f32 %v140, %v4420
  %v4878 = vmul.f32 %v141, %v4420
  %v4879 = vmul.f32 %v142, %v4425
  %v4880 = vmul.f32 %v143, %v4425
  %v4881 = vmul.f32 %v144, %v4430
  %v4882 = vmul.f32 %v145, %v4430
  %v4883 = vmul.f32 %v146, %v4435
  %v4884 = vmul.f32 %v147, %v4435
  %v4885 = vmul.f32 %v148, %v4440
  %v4886 = vmul.f32 %v149, %v4440
  %v4887 = vmul.f32 %v150, %v4445
  %v4888 = vmul.f32 %v151, %v4445
  %v4889 = vmul.f32 %v152, %v4450
  %v4890 = vmul.f32 %v153, %v4450
  %v4891 = vmul.f32 %v154, %v4455
  %v4892 = vmul.f32 %v155, %v4455
  %v4893 = vmul.f32 %v156, %v4460
  %v4894 = vmul.f32 %v157, %v4460
  %v4895 = vmul.f32 %v158, %v4465
  %v4896 = vmul.f32 %v159, %v4465
  %v4897 = vmul.f32 %v160, %v4470
  %v4898 = vmul.f32 %v161, %v4470
  %v4899 = vmul.f32 %v162, %v4475
  %v4900 = vmul.f32 %v163, %v4475
  %v4901 = vmul.f32 %v164, %v4480
  %v4902 = vmul.f32 %v165, %v4480
  %v4903 = vmul.f32 %v166, %v4485
  %v4904 = vmul.f32 %v167, %v4485
  %v4905 = vmul.f32 %v168, %v4490
  %v4906 = vmul.f32 %v169, %v4490
  %v4907 = vmul.f32 %v170, %v4495
  %v4908 = vmul.f32 %v171, %v4495
  %v4909 = vmul.f32 %v172, %v4500
  %v4910 = vmul.f32 %v173, %v4500
  %v4911 = vmul.f32 %v174, %v4505
  %v4912 = vmul.f32 %v175, %v4505
  %v4913 = vmul.f32 %v176, %v4510
  %v4914 = vmul.f32 %v177, %v4510
  %v4915 = vmul.f32 %v178, %v4515
  %v4916 = vmul.f32 %v179, %v4515
  %v4917 = vmul.f32 %v180, %v4520
  %v4918 = vmul.f32 %v181, %v4520
  %v4919 = vmul.f32 %v182, %v4525
  %v4920 = vmul.f32 %v183, %v4525
  %v4921 = vmul.f32 %v184, %v4530
  %v4922 = vmul.f32 %v185, %v4530
  %v4923 = vmul.f32 %v186, %v4535
  %v4924 = vmul.f32 %v187, %v4535
  %v4925 = vmul.f32 %v188, %v4540
  %v4926 = vmul.f32 %v189, %v4540
  %v4927 = vmul.f32 %v190, %v4545
  %v4928 = vmul.f32 %v191, %v4545
  %v4929 = vmul.f32 %v192, %v4550
  %v4930 = vmul.f32 %v193, %v4550
  %v4931 = vmul.f32 %v194, %v4555
  %v4932 = vmul.f32 %v195, %v4555
  %v4933 = vmul.f32 %v196, %v4560
  %v4934 = vmul.f32 %v197, %v4560
  %v4935 = vmul.f32 %v198, %v4565
  %v4936 = vmul.f32 %v199, %v4565
  %v4937 = vmul.f32 %v200, %v4570
  %v4938 = vmul.f32 %v201, %v4570
  %v4939 = vmul.f32 %v202, %v4575
  %v4940 = vmul.f32 %v203, %v4575
  %v4941 = vmul.f32 %v204, %v4580
  %v4942 = vmul.f32 %v205, %v4580
  %v4943 = vmul.f32 %v206, %v4585
  %v4944 = vmul.f32 %v207, %v4585
  %v4945 = vmul.f32 %v208, %v4590
  %v4946 = vmul.f32 %v209, %v4590
  %v4947 = vmul.f32 %v210, %v4595
  %v4948 = vmul.f32 %v211, %v4595
  %v4949 = vmul.f32 %v212, %v4600
  %v4950 = vmul.f32 %v213, %v4600
  %v4951 = vmul.f32 %v214, %v4605
  %v4952 = vmul.f32 %v215, %v4605
  %v4953 = vmul.f32 %v216, %v4610
  %v4954 = vmul.f32 %v217, %v4610
  %v4955 = vmul.f32 %v218, %v4615
  %v4956 = vmul.f32 %v219, %v4615
  %v4957 = vmul.f32 %v220, %v4620
  %v4958 = vmul.f32 %v221, %v4620
  %v4959 = vmul.f32 %v222, %v4625
  %v4960 = vmul.f32 %v223, %v4625
  %v4961 = vmul.f32 %v224, %v4630
  %v4962 = vmul.f32 %v225, %v4630
  %v4963 = vmul.f32 %v226, %v4635
  %v4964 = vmul.f32 %v227, %v4635
  %v4965 = vmul.f32 %v228, %v4640
  %v4966 = vmul.f32 %v229, %v4640
  %v4967 = vmul.f32 %v230, %v4645
  %v4968 = vmul.f32 %v231, %v4645
  %v4969 = vmul.f32 %v232, %v4650
  %v4970 = vmul.f32 %v233, %v4650
  %v4971 = vmul.f32 %v234, %v4655
  %v4972 = vmul.f32 %v235, %v4655
  %v4973 = vmul.f32 %v236, %v4660
  %v4974 = vmul.f32 %v237, %v4660
  %v4975 = vmul.f32 %v238, %v4665
  %v4976 = vmul.f32 %v239, %v4665
  %v4977 = vmul.f32 %v240, %v4670
  %v4978 = vmul.f32 %v241, %v4670
  %v4979 = vmul.f32 %v242, %v4675
  %v4980 = vmul.f32 %v243, %v4675
  %v4981 = vmul.f32 %v244, %v4680
  %v4982 = vmul.f32 %v245, %v4680
  %v4983 = vmul.f32 %v246, %v4685
  %v4984 = vmul.f32 %v247, %v4685
  %v4985 = vmul.f32 %v248, %v4690
  %v4986 = vmul.f32 %v249, %v4690
  %v4987 = vmul.f32 %v250, %v4695
  %v4988 = vmul.f32 %v251, %v4695
  %v4989 = vmul.f32 %v252, %v4700
  %v4990 = vmul.f32 %v253, %v4700
  %v4991 = vmul.f32 %v254, %v4705
  %v4992 = vmul.f32 %v255, %v4705
  %v4993 = vmul.f32 %v256, %v4710
  %v4994 = vmul.f32 %v257, %v4710
  %v4995 = vmul.f32 %v258, %v4715
  %v4996 = vmul.f32 %v259, %v4715
  %v4997 = vmul.f32 %v260, %v4720
  %v4998 = vmul.f32 %v261, %v4720
  %v4999 = vmul.f32 %v262, %v4725
  %v5000 = vmul.f32 %v263, %v4725
  %v5001 = vmul.f32 %v264, %v4730
  %v5002 = vmul.f32 %v265, %v4730
  %v5003 = vmul.f32 %v266, %v4735
  %v5004 = vmul.f32 %v267, %v4735
  %v5005 = vmul.f32 %v268, %v4740
  %v5006 = vmul.f32 %v269, %v4740
  %v5007 = vmul.f32 %v270, %v4745
  %v5008 = vmul.f32 %v271, %v4745
  %v5009 = vmul.f32 %v272, %v4750
  %v5010 = vmul.f32 %v273, %v4750
  %v5011 = vmul.f32 %v274, %v4755
  %v5012 = vmul.f32 %v275, %v4755
  %5014 = vset.pattern.permute.xlu0 0
  %5015 = vperm.xlu0 %5014, %v3989
  %v5016 = vpop.permute.xlu0 %5015
  %5019 = vset.pattern.permute.xlu0 0
  %5020 = vperm.xlu0 %5019, %v3990
  %v5021 = vpop.permute.xlu0 %5020
  %5024 = vset.pattern.permute.xlu0 0
  %5025 = vperm.xlu0 %5024, %v3991
  %v5026 = vpop.permute.xlu0 %5025
  %5029 = vset.pattern.permute.xlu0 0
  %5030 = vperm.xlu0 %5029, %v3992
  %v5031 = vpop.permute.xlu0 %5030
  %5034 = vset.pattern.permute.xlu0 0
  %5035 = vperm.xlu0 %5034, %v3993
  %v5036 = vpop.permute.xlu0 %5035
  %5039 = vset.pattern.permute.xlu0 0
  %5040 = vperm.xlu0 %5039, %v3994
  %v5041 = vpop.permute.xlu0 %5040
  %5044 = vset.pattern.permute.xlu0 0
  %5045 = vperm.xlu0 %5044, %v3995
  %v5046 = vpop.permute.xlu0 %5045
  %5049 = vset.pattern.permute.xlu0 0
  %5050 = vperm.xlu0 %5049, %v3996
  %v5051 = vpop.permute.xlu0 %5050
  %5054 = vset.pattern.permute.xlu0 0
  %5055 = vperm.xlu0 %5054, %v3997
  %v5056 = vpop.permute.xlu0 %5055
  %5059 = vset.pattern.permute.xlu0 0
  %5060 = vperm.xlu0 %5059, %v3998
  %v5061 = vpop.permute.xlu0 %5060
  %5064 = vset.pattern.permute.xlu0 0
  %5065 = vperm.xlu0 %5064, %v3999
  %v5066 = vpop.permute.xlu0 %5065
  %5069 = vset.pattern.permute.xlu0 0
  %5070 = vperm.xlu0 %5069, %v4000
  %v5071 = vpop.permute.xlu0 %5070
  %5074 = vset.pattern.permute.xlu0 0
  %5075 = vperm.xlu0 %5074, %v4001
  %v5076 = vpop.permute.xlu0 %5075
  %5079 = vset.pattern.permute.xlu0 0
  %5080 = vperm.xlu0 %5079, %v4002
  %v5081 = vpop.permute.xlu0 %5080
  %5084 = vset.pattern.permute.xlu0 0
  %5085 = vperm.xlu0 %5084, %v4003
  %v5086 = vpop.permute.xlu0 %5085
  %5089 = vset.pattern.permute.xlu0 0
  %5090 = vperm.xlu0 %5089, %v4004
  %v5091 = vpop.permute.xlu0 %5090
  %5094 = vset.pattern.permute.xlu0 0
  %5095 = vperm.xlu0 %5094, %v4005
  %v5096 = vpop.permute.xlu0 %5095
  %5099 = vset.pattern.permute.xlu0 0
  %5100 = vperm.xlu0 %5099, %v4006
  %v5101 = vpop.permute.xlu0 %5100
  %5104 = vset.pattern.permute.xlu0 0
  %5105 = vperm.xlu0 %5104, %v4007
  %v5106 = vpop.permute.xlu0 %5105
  %5109 = vset.pattern.permute.xlu0 0
  %5110 = vperm.xlu0 %5109, %v4008
  %v5111 = vpop.permute.xlu0 %5110
  %5114 = vset.pattern.permute.xlu0 0
  %5115 = vperm.xlu0 %5114, %v4009
  %v5116 = vpop.permute.xlu0 %5115
  %5119 = vset.pattern.permute.xlu0 0
  %5120 = vperm.xlu0 %5119, %v4010
  %v5121 = vpop.permute.xlu0 %5120
  %5124 = vset.pattern.permute.xlu0 0
  %5125 = vperm.xlu0 %5124, %v4011
  %v5126 = vpop.permute.xlu0 %5125
  %5129 = vset.pattern.permute.xlu0 0
  %5130 = vperm.xlu0 %5129, %v4012
  %v5131 = vpop.permute.xlu0 %5130
  %5134 = vset.pattern.permute.xlu0 0
  %5135 = vperm.xlu0 %5134, %v4013
  %v5136 = vpop.permute.xlu0 %5135
  %5139 = vset.pattern.permute.xlu0 0
  %5140 = vperm.xlu0 %5139, %v4014
  %v5141 = vpop.permute.xlu0 %5140
  %5144 = vset.pattern.permute.xlu0 0
  %5145 = vperm.xlu0 %5144, %v4015
  %v5146 = vpop.permute.xlu0 %5145
  %5149 = vset.pattern.permute.xlu0 0
  %5150 = vperm.xlu0 %5149, %v4016
  %v5151 = vpop.permute.xlu0 %5150
  %5154 = vset.pattern.permute.xlu0 0
  %5155 = vperm.xlu0 %5154, %v4017
  %v5156 = vpop.permute.xlu0 %5155
  %5159 = vset.pattern.permute.xlu0 0
  %5160 = vperm.xlu0 %5159, %v4018
  %v5161 = vpop.permute.xlu0 %5160
  %5164 = vset.pattern.permute.xlu0 0
  %5165 = vperm.xlu0 %5164, %v4019
  %v5166 = vpop.permute.xlu0 %5165
  %5169 = vset.pattern.permute.xlu0 0
  %5170 = vperm.xlu0 %5169, %v4020
  %v5171 = vpop.permute.xlu0 %5170
  %5174 = vset.pattern.permute.xlu0 0
  %5175 = vperm.xlu0 %5174, %v4021
  %v5176 = vpop.permute.xlu0 %5175
  %5179 = vset.pattern.permute.xlu0 0
  %5180 = vperm.xlu0 %5179, %v4022
  %v5181 = vpop.permute.xlu0 %5180
  %5184 = vset.pattern.permute.xlu0 0
  %5185 = vperm.xlu0 %5184, %v4023
  %v5186 = vpop.permute.xlu0 %5185
  %5189 = vset.pattern.permute.xlu0 0
  %5190 = vperm.xlu0 %5189, %v4024
  %v5191 = vpop.permute.xlu0 %5190
  %5194 = vset.pattern.permute.xlu0 0
  %5195 = vperm.xlu0 %5194, %v4025
  %v5196 = vpop.permute.xlu0 %5195
  %5199 = vset.pattern.permute.xlu0 0
  %5200 = vperm.xlu0 %5199, %v4026
  %v5201 = vpop.permute.xlu0 %5200
  %5204 = vset.pattern.permute.xlu0 0
  %5205 = vperm.xlu0 %5204, %v4027
  %v5206 = vpop.permute.xlu0 %5205
  %5209 = vset.pattern.permute.xlu0 0
  %5210 = vperm.xlu0 %5209, %v4028
  %v5211 = vpop.permute.xlu0 %5210
  %5214 = vset.pattern.permute.xlu0 0
  %5215 = vperm.xlu0 %5214, %v4029
  %v5216 = vpop.permute.xlu0 %5215
  %5219 = vset.pattern.permute.xlu0 0
  %5220 = vperm.xlu0 %5219, %v4030
  %v5221 = vpop.permute.xlu0 %5220
  %5224 = vset.pattern.permute.xlu0 0
  %5225 = vperm.xlu0 %5224, %v4031
  %v5226 = vpop.permute.xlu0 %5225
  %5229 = vset.pattern.permute.xlu0 0
  %5230 = vperm.xlu0 %5229, %v4032
  %v5231 = vpop.permute.xlu0 %5230
  %5234 = vset.pattern.permute.xlu0 0
  %5235 = vperm.xlu0 %5234, %v4033
  %v5236 = vpop.permute.xlu0 %5235
  %5239 = vset.pattern.permute.xlu0 0
  %5240 = vperm.xlu0 %5239, %v4034
  %v5241 = vpop.permute.xlu0 %5240
  %5244 = vset.pattern.permute.xlu0 0
  %5245 = vperm.xlu0 %5244, %v4035
  %v5246 = vpop.permute.xlu0 %5245
  %5249 = vset.pattern.permute.xlu0 0
  %5250 = vperm.xlu0 %5249, %v4036
  %v5251 = vpop.permute.xlu0 %5250
  %5254 = vset.pattern.permute.xlu0 0
  %5255 = vperm.xlu0 %5254, %v4037
  %v5256 = vpop.permute.xlu0 %5255
  %5259 = vset.pattern.permute.xlu0 0
  %5260 = vperm.xlu0 %5259, %v4038
  %v5261 = vpop.permute.xlu0 %5260
  %5264 = vset.pattern.permute.xlu0 0
  %5265 = vperm.xlu0 %5264, %v4039
  %v5266 = vpop.permute.xlu0 %5265
  %5269 = vset.pattern.permute.xlu0 0
  %5270 = vperm.xlu0 %5269, %v4040
  %v5271 = vpop.permute.xlu0 %5270
  %5274 = vset.pattern.permute.xlu0 0
  %5275 = vperm.xlu0 %5274, %v4041
  %v5276 = vpop.permute.xlu0 %5275
  %5279 = vset.pattern.permute.xlu0 0
  %5280 = vperm.xlu0 %5279, %v4042
  %v5281 = vpop.permute.xlu0 %5280
  %5284 = vset.pattern.permute.xlu0 0
  %5285 = vperm.xlu0 %5284, %v4043
  %v5286 = vpop.permute.xlu0 %5285
  %5289 = vset.pattern.permute.xlu0 0
  %5290 = vperm.xlu0 %5289, %v4044
  %v5291 = vpop.permute.xlu0 %5290
  %5294 = vset.pattern.permute.xlu0 0
  %5295 = vperm.xlu0 %5294, %v4045
  %v5296 = vpop.permute.xlu0 %5295
  %5299 = vset.pattern.permute.xlu0 0
  %5300 = vperm.xlu0 %5299, %v4046
  %v5301 = vpop.permute.xlu0 %5300
  %5304 = vset.pattern.permute.xlu0 0
  %5305 = vperm.xlu0 %5304, %v4047
  %v5306 = vpop.permute.xlu0 %5305
  %5309 = vset.pattern.permute.xlu0 0
  %5310 = vperm.xlu0 %5309, %v4048
  %v5311 = vpop.permute.xlu0 %5310
  %5314 = vset.pattern.permute.xlu0 0
  %5315 = vperm.xlu0 %5314, %v4049
  %v5316 = vpop.permute.xlu0 %5315
  %5319 = vset.pattern.permute.xlu0 0
  %5320 = vperm.xlu0 %5319, %v4050
  %v5321 = vpop.permute.xlu0 %5320
  %5324 = vset.pattern.permute.xlu0 0
  %5325 = vperm.xlu0 %5324, %v4051
  %v5326 = vpop.permute.xlu0 %5325
  %5329 = vset.pattern.permute.xlu0 0
  %5330 = vperm.xlu0 %5329, %v4052
  %v5331 = vpop.permute.xlu0 %5330
  %5334 = vset.pattern.permute.xlu0 0
  %5335 = vperm.xlu0 %5334, %v4053
  %v5336 = vpop.permute.xlu0 %5335
  %5339 = vset.pattern.permute.xlu0 0
  %5340 = vperm.xlu0 %5339, %v4054
  %v5341 = vpop.permute.xlu0 %5340
  %5344 = vset.pattern.permute.xlu0 0
  %5345 = vperm.xlu0 %5344, %v4055
  %v5346 = vpop.permute.xlu0 %5345
  %5349 = vset.pattern.permute.xlu0 0
  %5350 = vperm.xlu0 %5349, %v4056
  %v5351 = vpop.permute.xlu0 %5350
  %5354 = vset.pattern.permute.xlu0 0
  %5355 = vperm.xlu0 %5354, %v4057
  %v5356 = vpop.permute.xlu0 %5355
  %5359 = vset.pattern.permute.xlu0 0
  %5360 = vperm.xlu0 %5359, %v4058
  %v5361 = vpop.permute.xlu0 %5360
  %5364 = vset.pattern.permute.xlu0 0
  %5365 = vperm.xlu0 %5364, %v4059
  %v5366 = vpop.permute.xlu0 %5365
  %5369 = vset.pattern.permute.xlu0 0
  %5370 = vperm.xlu0 %5369, %v4060
  %v5371 = vpop.permute.xlu0 %5370
  %5374 = vset.pattern.permute.xlu0 0
  %5375 = vperm.xlu0 %5374, %v4061
  %v5376 = vpop.permute.xlu0 %5375
  %5379 = vset.pattern.permute.xlu0 0
  %5380 = vperm.xlu0 %5379, %v4062
  %v5381 = vpop.permute.xlu0 %5380
  %5384 = vset.pattern.permute.xlu0 0
  %5385 = vperm.xlu0 %5384, %v4063
  %v5386 = vpop.permute.xlu0 %5385
  %5389 = vset.pattern.permute.xlu0 0
  %5390 = vperm.xlu0 %5389, %v4064
  %v5391 = vpop.permute.xlu0 %5390
  %5394 = vset.pattern.permute.xlu0 0
  %5395 = vperm.xlu0 %5394, %v4065
  %v5396 = vpop.permute.xlu0 %5395
  %5399 = vset.pattern.permute.xlu0 0
  %5400 = vperm.xlu0 %5399, %v4066
  %v5401 = vpop.permute.xlu0 %5400
  %5404 = vset.pattern.permute.xlu0 0
  %5405 = vperm.xlu0 %5404, %v4067
  %v5406 = vpop.permute.xlu0 %5405
  %5409 = vset.pattern.permute.xlu0 0
  %5410 = vperm.xlu0 %5409, %v4068
  %v5411 = vpop.permute.xlu0 %5410
  %5414 = vset.pattern.permute.xlu0 0
  %5415 = vperm.xlu0 %5414, %v4069
  %v5416 = vpop.permute.xlu0 %5415
  %5419 = vset.pattern.permute.xlu0 0
  %5420 = vperm.xlu0 %5419, %v4070
  %v5421 = vpop.permute.xlu0 %5420
  %5424 = vset.pattern.permute.xlu0 0
  %5425 = vperm.xlu0 %5424, %v4071
  %v5426 = vpop.permute.xlu0 %5425
  %5429 = vset.pattern.permute.xlu0 0
  %5430 = vperm.xlu0 %5429, %v4072
  %v5431 = vpop.permute.xlu0 %5430
  %5434 = vset.pattern.permute.xlu0 0
  %5435 = vperm.xlu0 %5434, %v4073
  %v5436 = vpop.permute.xlu0 %5435
  %5439 = vset.pattern.permute.xlu0 0
  %5440 = vperm.xlu0 %5439, %v4074
  %v5441 = vpop.permute.xlu0 %5440
  %5444 = vset.pattern.permute.xlu0 0
  %5445 = vperm.xlu0 %5444, %v4075
  %v5446 = vpop.permute.xlu0 %5445
  %5449 = vset.pattern.permute.xlu0 0
  %5450 = vperm.xlu0 %5449, %v4076
  %v5451 = vpop.permute.xlu0 %5450
  %5454 = vset.pattern.permute.xlu0 0
  %5455 = vperm.xlu0 %5454, %v4077
  %v5456 = vpop.permute.xlu0 %5455
  %5459 = vset.pattern.permute.xlu0 0
  %5460 = vperm.xlu0 %5459, %v4078
  %v5461 = vpop.permute.xlu0 %5460
  %5464 = vset.pattern.permute.xlu0 0
  %5465 = vperm.xlu0 %5464, %v4079
  %v5466 = vpop.permute.xlu0 %5465
  %5469 = vset.pattern.permute.xlu0 0
  %5470 = vperm.xlu0 %5469, %v4080
  %v5471 = vpop.permute.xlu0 %5470
  %5474 = vset.pattern.permute.xlu0 0
  %5475 = vperm.xlu0 %5474, %v4081
  %v5476 = vpop.permute.xlu0 %5475
  %5479 = vset.pattern.permute.xlu0 0
  %5480 = vperm.xlu0 %5479, %v4082
  %v5481 = vpop.permute.xlu0 %5480
  %5484 = vset.pattern.permute.xlu0 0
  %5485 = vperm.xlu0 %5484, %v4083
  %v5486 = vpop.permute.xlu0 %5485
  %5489 = vset.pattern.permute.xlu0 0
  %5490 = vperm.xlu0 %5489, %v4084
  %v5491 = vpop.permute.xlu0 %5490
  %5494 = vset.pattern.permute.xlu0 0
  %5495 = vperm.xlu0 %5494, %v4085
  %v5496 = vpop.permute.xlu0 %5495
  %5499 = vset.pattern.permute.xlu0 0
  %5500 = vperm.xlu0 %5499, %v4086
  %v5501 = vpop.permute.xlu0 %5500
  %5504 = vset.pattern.permute.xlu0 0
  %5505 = vperm.xlu0 %5504, %v4087
  %v5506 = vpop.permute.xlu0 %5505
  %5509 = vset.pattern.permute.xlu0 0
  %5510 = vperm.xlu0 %5509, %v4088
  %v5511 = vpop.permute.xlu0 %5510
  %5514 = vset.pattern.permute.xlu0 0
  %5515 = vperm.xlu0 %5514, %v4089
  %v5516 = vpop.permute.xlu0 %5515
  %5519 = vset.pattern.permute.xlu0 0
  %5520 = vperm.xlu0 %5519, %v4090
  %v5521 = vpop.permute.xlu0 %5520
  %5524 = vset.pattern.permute.xlu0 0
  %5525 = vperm.xlu0 %5524, %v4091
  %v5526 = vpop.permute.xlu0 %5525
  %5529 = vset.pattern.permute.xlu0 0
  %5530 = vperm.xlu0 %5529, %v4092
  %v5531 = vpop.permute.xlu0 %5530
  %5534 = vset.pattern.permute.xlu0 0
  %5535 = vperm.xlu0 %5534, %v4093
  %v5536 = vpop.permute.xlu0 %5535
  %5539 = vset.pattern.permute.xlu0 0
  %5540 = vperm.xlu0 %5539, %v4094
  %v5541 = vpop.permute.xlu0 %5540
  %5544 = vset.pattern.permute.xlu0 0
  %5545 = vperm.xlu0 %5544, %v4095
  %v5546 = vpop.permute.xlu0 %5545
  %5549 = vset.pattern.permute.xlu0 0
  %5550 = vperm.xlu0 %5549, %v4096
  %v5551 = vpop.permute.xlu0 %5550
  %5554 = vset.pattern.permute.xlu0 0
  %5555 = vperm.xlu0 %5554, %v4097
  %v5556 = vpop.permute.xlu0 %5555
  %5559 = vset.pattern.permute.xlu0 0
  %5560 = vperm.xlu0 %5559, %v4098
  %v5561 = vpop.permute.xlu0 %5560
  %5564 = vset.pattern.permute.xlu0 0
  %5565 = vperm.xlu0 %5564, %v4099
  %v5566 = vpop.permute.xlu0 %5565
  %5569 = vset.pattern.permute.xlu0 0
  %5570 = vperm.xlu0 %5569, %v4100
  %v5571 = vpop.permute.xlu0 %5570
  %5574 = vset.pattern.permute.xlu0 0
  %5575 = vperm.xlu0 %5574, %v4101
  %v5576 = vpop.permute.xlu0 %5575
  %5579 = vset.pattern.permute.xlu0 0
  %5580 = vperm.xlu0 %5579, %v4102
  %v5581 = vpop.permute.xlu0 %5580
  %5584 = vset.pattern.permute.xlu0 0
  %5585 = vperm.xlu0 %5584, %v4103
  %v5586 = vpop.permute.xlu0 %5585
  %5589 = vset.pattern.permute.xlu0 0
  %5590 = vperm.xlu0 %5589, %v4104
  %v5591 = vpop.permute.xlu0 %5590
  %5594 = vset.pattern.permute.xlu0 0
  %5595 = vperm.xlu0 %5594, %v4105
  %v5596 = vpop.permute.xlu0 %5595
  %5599 = vset.pattern.permute.xlu0 0
  %5600 = vperm.xlu0 %5599, %v4106
  %v5601 = vpop.permute.xlu0 %5600
  %5604 = vset.pattern.permute.xlu0 0
  %5605 = vperm.xlu0 %5604, %v4107
  %v5606 = vpop.permute.xlu0 %5605
  %5609 = vset.pattern.permute.xlu0 0
  %5610 = vperm.xlu0 %5609, %v4108
  %v5611 = vpop.permute.xlu0 %5610
  %5614 = vset.pattern.permute.xlu0 0
  %5615 = vperm.xlu0 %5614, %v4109
  %v5616 = vpop.permute.xlu0 %5615
  %5619 = vset.pattern.permute.xlu0 0
  %5620 = vperm.xlu0 %5619, %v4110
  %v5621 = vpop.permute.xlu0 %5620
  %5624 = vset.pattern.permute.xlu0 0
  %5625 = vperm.xlu0 %5624, %v4111
  %v5626 = vpop.permute.xlu0 %5625
  %5629 = vset.pattern.permute.xlu0 0
  %5630 = vperm.xlu0 %5629, %v4112
  %v5631 = vpop.permute.xlu0 %5630
  %5634 = vset.pattern.permute.xlu0 0
  %5635 = vperm.xlu0 %5634, %v4113
  %v5636 = vpop.permute.xlu0 %5635
  %5639 = vset.pattern.permute.xlu0 0
  %5640 = vperm.xlu0 %5639, %v4114
  %v5641 = vpop.permute.xlu0 %5640
  %5644 = vset.pattern.permute.xlu0 0
  %5645 = vperm.xlu0 %5644, %v4115
  %v5646 = vpop.permute.xlu0 %5645
  %5649 = vset.pattern.permute.xlu0 0
  %5650 = vperm.xlu0 %5649, %v4116
  %v5651 = vpop.permute.xlu0 %5650
  %v5653 = vadd.f32 %v4757, %v5016
  %v5654 = vadd.f32 %v4758, %v5016
  %v5655 = vadd.f32 %v4759, %v5021
  %v5656 = vadd.f32 %v4760, %v5021
  %v5657 = vadd.f32 %v4761, %v5026
  %v5658 = vadd.f32 %v4762, %v5026
  %v5659 = vadd.f32 %v4763, %v5031
  %v5660 = vadd.f32 %v4764, %v5031
  %v5661 = vadd.f32 %v4765, %v5036
  %v5662 = vadd.f32 %v4766, %v5036
  %v5663 = vadd.f32 %v4767, %v5041
  %v5664 = vadd.f32 %v4768, %v5041
  %v5665 = vadd.f32 %v4769, %v5046
  %v5666 = vadd.f32 %v4770, %v5046
  %v5667 = vadd.f32 %v4771, %v5051
  %v5668 = vadd.f32 %v4772, %v5051
  %v5669 = vadd.f32 %v4773, %v5056
  %v5670 = vadd.f32 %v4774, %v5056
  %v5671 = vadd.f32 %v4775, %v5061
  %v5672 = vadd.f32 %v4776, %v5061
  %v5673 = vadd.f32 %v4777, %v5066
  %v5674 = vadd.f32 %v4778, %v5066
  %v5675 = vadd.f32 %v4779, %v5071
  %v5676 = vadd.f32 %v4780, %v5071
  %v5677 = vadd.f32 %v4781, %v5076
  %v5678 = vadd.f32 %v4782, %v5076
  %v5679 = vadd.f32 %v4783, %v5081
  %v5680 = vadd.f32 %v4784, %v5081
  %v5681 = vadd.f32 %v4785, %v5086
  %v5682 = vadd.f32 %v4786, %v5086
  %v5683 = vadd.f32 %v4787, %v5091
  %v5684 = vadd.f32 %v4788, %v5091
  %v5685 = vadd.f32 %v4789, %v5096
  %v5686 = vadd.f32 %v4790, %v5096
  %v5687 = vadd.f32 %v4791, %v5101
  %v5688 = vadd.f32 %v4792, %v5101
  %v5689 = vadd.f32 %v4793, %v5106
  %v5690 = vadd.f32 %v4794, %v5106
  %v5691 = vadd.f32 %v4795, %v5111
  %v5692 = vadd.f32 %v4796, %v5111
  %v5693 = vadd.f32 %v4797, %v5116
  %v5694 = vadd.f32 %v4798, %v5116
  %v5695 = vadd.f32 %v4799, %v5121
  %v5696 = vadd.f32 %v4800, %v5121
  %v5697 = vadd.f32 %v4801, %v5126
  %v5698 = vadd.f32 %v4802, %v5126
  %v5699 = vadd.f32 %v4803, %v5131
  %v5700 = vadd.f32 %v4804, %v5131
  %v5701 = vadd.f32 %v4805, %v5136
  %v5702 = vadd.f32 %v4806, %v5136
  %v5703 = vadd.f32 %v4807, %v5141
  %v5704 = vadd.f32 %v4808, %v5141
  %v5705 = vadd.f32 %v4809, %v5146
  %v5706 = vadd.f32 %v4810, %v5146
  %v5707 = vadd.f32 %v4811, %v5151
  %v5708 = vadd.f32 %v4812, %v5151
  %v5709 = vadd.f32 %v4813, %v5156
  %v5710 = vadd.f32 %v4814, %v5156
  %v5711 = vadd.f32 %v4815, %v5161
  %v5712 = vadd.f32 %v4816, %v5161
  %v5713 = vadd.f32 %v4817, %v5166
  %v5714 = vadd.f32 %v4818, %v5166
  %v5715 = vadd.f32 %v4819, %v5171
  %v5716 = vadd.f32 %v4820, %v5171
  %v5717 = vadd.f32 %v4821, %v5176
  %v5718 = vadd.f32 %v4822, %v5176
  %v5719 = vadd.f32 %v4823, %v5181
  %v5720 = vadd.f32 %v4824, %v5181
  %v5721 = vadd.f32 %v4825, %v5186
  %v5722 = vadd.f32 %v4826, %v5186
  %v5723 = vadd.f32 %v4827, %v5191
  %v5724 = vadd.f32 %v4828, %v5191
  %v5725 = vadd.f32 %v4829, %v5196
  %v5726 = vadd.f32 %v4830, %v5196
  %v5727 = vadd.f32 %v4831, %v5201
  %v5728 = vadd.f32 %v4832, %v5201
  %v5729 = vadd.f32 %v4833, %v5206
  %v5730 = vadd.f32 %v4834, %v5206
  %v5731 = vadd.f32 %v4835, %v5211
  %v5732 = vadd.f32 %v4836, %v5211
  %v5733 = vadd.f32 %v4837, %v5216
  %v5734 = vadd.f32 %v4838, %v5216
  %v5735 = vadd.f32 %v4839, %v5221
  %v5736 = vadd.f32 %v4840, %v5221
  %v5737 = vadd.f32 %v4841, %v5226
  %v5738 = vadd.f32 %v4842, %v5226
  %v5739 = vadd.f32 %v4843, %v5231
  %v5740 = vadd.f32 %v4844, %v5231
  %v5741 = vadd.f32 %v4845, %v5236
  %v5742 = vadd.f32 %v4846, %v5236
  %v5743 = vadd.f32 %v4847, %v5241
  %v5744 = vadd.f32 %v4848, %v5241
  %v5745 = vadd.f32 %v4849, %v5246
  %v5746 = vadd.f32 %v4850, %v5246
  %v5747 = vadd.f32 %v4851, %v5251
  %v5748 = vadd.f32 %v4852, %v5251
  %v5749 = vadd.f32 %v4853, %v5256
  %v5750 = vadd.f32 %v4854, %v5256
  %v5751 = vadd.f32 %v4855, %v5261
  %v5752 = vadd.f32 %v4856, %v5261
  %v5753 = vadd.f32 %v4857, %v5266
  %v5754 = vadd.f32 %v4858, %v5266
  %v5755 = vadd.f32 %v4859, %v5271
  %v5756 = vadd.f32 %v4860, %v5271
  %v5757 = vadd.f32 %v4861, %v5276
  %v5758 = vadd.f32 %v4862, %v5276
  %v5759 = vadd.f32 %v4863, %v5281
  %v5760 = vadd.f32 %v4864, %v5281
  %v5761 = vadd.f32 %v4865, %v5286
  %v5762 = vadd.f32 %v4866, %v5286
  %v5763 = vadd.f32 %v4867, %v5291
  %v5764 = vadd.f32 %v4868, %v5291
  %v5765 = vadd.f32 %v4869, %v5296
  %v5766 = vadd.f32 %v4870, %v5296
  %v5767 = vadd.f32 %v4871, %v5301
  %v5768 = vadd.f32 %v4872, %v5301
  %v5769 = vadd.f32 %v4873, %v5306
  %v5770 = vadd.f32 %v4874, %v5306
  %v5771 = vadd.f32 %v4875, %v5311
  %v5772 = vadd.f32 %v4876, %v5311
  %v5773 = vadd.f32 %v4877, %v5316
  %v5774 = vadd.f32 %v4878, %v5316
  %v5775 = vadd.f32 %v4879, %v5321
  %v5776 = vadd.f32 %v4880, %v5321
  %v5777 = vadd.f32 %v4881, %v5326
  %v5778 = vadd.f32 %v4882, %v5326
  %v5779 = vadd.f32 %v4883, %v5331
  %v5780 = vadd.f32 %v4884, %v5331
  %v5781 = vadd.f32 %v4885, %v5336
  %v5782 = vadd.f32 %v4886, %v5336
  %v5783 = vadd.f32 %v4887, %v5341
  %v5784 = vadd.f32 %v4888, %v5341
  %v5785 = vadd.f32 %v4889, %v5346
  %v5786 = vadd.f32 %v4890, %v5346
  %v5787 = vadd.f32 %v4891, %v5351
  %v5788 = vadd.f32 %v4892, %v5351
  %v5789 = vadd.f32 %v4893, %v5356
  %v5790 = vadd.f32 %v4894, %v5356
  %v5791 = vadd.f32 %v4895, %v5361
  %v5792 = vadd.f32 %v4896, %v5361
  %v5793 = vadd.f32 %v4897, %v5366
  %v5794 = vadd.f32 %v4898, %v5366
  %v5795 = vadd.f32 %v4899, %v5371
  %v5796 = vadd.f32 %v4900, %v5371
  %v5797 = vadd.f32 %v4901, %v5376
  %v5798 = vadd.f32 %v4902, %v5376
  %v5799 = vadd.f32 %v4903, %v5381
  %v5800 = vadd.f32 %v4904, %v5381
  %v5801 = vadd.f32 %v4905, %v5386
  %v5802 = vadd.f32 %v4906, %v5386
  %v5803 = vadd.f32 %v4907, %v5391
  %v5804 = vadd.f32 %v4908, %v5391
  %v5805 = vadd.f32 %v4909, %v5396
  %v5806 = vadd.f32 %v4910, %v5396
  %v5807 = vadd.f32 %v4911, %v5401
  %v5808 = vadd.f32 %v4912, %v5401
  %v5809 = vadd.f32 %v4913, %v5406
  %v5810 = vadd.f32 %v4914, %v5406
  %v5811 = vadd.f32 %v4915, %v5411
  %v5812 = vadd.f32 %v4916, %v5411
  %v5813 = vadd.f32 %v4917, %v5416
  %v5814 = vadd.f32 %v4918, %v5416
  %v5815 = vadd.f32 %v4919, %v5421
  %v5816 = vadd.f32 %v4920, %v5421
  %v5817 = vadd.f32 %v4921, %v5426
  %v5818 = vadd.f32 %v4922, %v5426
  %v5819 = vadd.f32 %v4923, %v5431
  %v5820 = vadd.f32 %v4924, %v5431
  %v5821 = vadd.f32 %v4925, %v5436
  %v5822 = vadd.f32 %v4926, %v5436
  %v5823 = vadd.f32 %v4927, %v5441
  %v5824 = vadd.f32 %v4928, %v5441
  %v5825 = vadd.f32 %v4929, %v5446
  %v5826 = vadd.f32 %v4930, %v5446
  %v5827 = vadd.f32 %v4931, %v5451
  %v5828 = vadd.f32 %v4932, %v5451
  %v5829 = vadd.f32 %v4933, %v5456
  %v5830 = vadd.f32 %v4934, %v5456
  %v5831 = vadd.f32 %v4935, %v5461
  %v5832 = vadd.f32 %v4936, %v5461
  %v5833 = vadd.f32 %v4937, %v5466
  %v5834 = vadd.f32 %v4938, %v5466
  %v5835 = vadd.f32 %v4939, %v5471
  %v5836 = vadd.f32 %v4940, %v5471
  %v5837 = vadd.f32 %v4941, %v5476
  %v5838 = vadd.f32 %v4942, %v5476
  %v5839 = vadd.f32 %v4943, %v5481
  %v5840 = vadd.f32 %v4944, %v5481
  %v5841 = vadd.f32 %v4945, %v5486
  %v5842 = vadd.f32 %v4946, %v5486
  %v5843 = vadd.f32 %v4947, %v5491
  %v5844 = vadd.f32 %v4948, %v5491
  %v5845 = vadd.f32 %v4949, %v5496
  %v5846 = vadd.f32 %v4950, %v5496
  %v5847 = vadd.f32 %v4951, %v5501
  %v5848 = vadd.f32 %v4952, %v5501
  %v5849 = vadd.f32 %v4953, %v5506
  %v5850 = vadd.f32 %v4954, %v5506
  %v5851 = vadd.f32 %v4955, %v5511
  %v5852 = vadd.f32 %v4956, %v5511
  %v5853 = vadd.f32 %v4957, %v5516
  %v5854 = vadd.f32 %v4958, %v5516
  %v5855 = vadd.f32 %v4959, %v5521
  %v5856 = vadd.f32 %v4960, %v5521
  %v5857 = vadd.f32 %v4961, %v5526
  %v5858 = vadd.f32 %v4962, %v5526
  %v5859 = vadd.f32 %v4963, %v5531
  %v5860 = vadd.f32 %v4964, %v5531
  %v5861 = vadd.f32 %v4965, %v5536
  %v5862 = vadd.f32 %v4966, %v5536
  %v5863 = vadd.f32 %v4967, %v5541
  %v5864 = vadd.f32 %v4968, %v5541
  %v5865 = vadd.f32 %v4969, %v5546
  %v5866 = vadd.f32 %v4970, %v5546
  %v5867 = vadd.f32 %v4971, %v5551
  %v5868 = vadd.f32 %v4972, %v5551
  %v5869 = vadd.f32 %v4973, %v5556
  %v5870 = vadd.f32 %v4974, %v5556
  %v5871 = vadd.f32 %v4975, %v5561
  %v5872 = vadd.f32 %v4976, %v5561
  %v5873 = vadd.f32 %v4977, %v5566
  %v5874 = vadd.f32 %v4978, %v5566
  %v5875 = vadd.f32 %v4979, %v5571
  %v5876 = vadd.f32 %v4980, %v5571
  %v5877 = vadd.f32 %v4981, %v5576
  %v5878 = vadd.f32 %v4982, %v5576
  %v5879 = vadd.f32 %v4983, %v5581
  %v5880 = vadd.f32 %v4984, %v5581
  %v5881 = vadd.f32 %v4985, %v5586
  %v5882 = vadd.f32 %v4986, %v5586
  %v5883 = vadd.f32 %v4987, %v5591
  %v5884 = vadd.f32 %v4988, %v5591
  %v5885 = vadd.f32 %v4989, %v5596
  %v5886 = vadd.f32 %v4990, %v5596
  %v5887 = vadd.f32 %v4991, %v5601
  %v5888 = vadd.f32 %v4992, %v5601
  %v5889 = vadd.f32 %v4993, %v5606
  %v5890 = vadd.f32 %v4994, %v5606
  %v5891 = vadd.f32 %v4995, %v5611
  %v5892 = vadd.f32 %v4996, %v5611
  %v5893 = vadd.f32 %v4997, %v5616
  %v5894 = vadd.f32 %v4998, %v5616
  %v5895 = vadd.f32 %v4999, %v5621
  %v5896 = vadd.f32 %v5000, %v5621
  %v5897 = vadd.f32 %v5001, %v5626
  %v5898 = vadd.f32 %v5002, %v5626
  %v5899 = vadd.f32 %v5003, %v5631
  %v5900 = vadd.f32 %v5004, %v5631
  %v5901 = vadd.f32 %v5005, %v5636
  %v5902 = vadd.f32 %v5006, %v5636
  %v5903 = vadd.f32 %v5007, %v5641
  %v5904 = vadd.f32 %v5008, %v5641
  %v5905 = vadd.f32 %v5009, %v5646
  %v5906 = vadd.f32 %v5010, %v5646
  %v5907 = vadd.f32 %v5011, %v5651
  %v5908 = vadd.f32 %v5012, %v5651
  %v5909 = vld [vmem:[%s1] sm:$0xff]
  %v5910 = vld [vmem:[%s1 + $0x8] sm:$0xff]
  %v5911 = vld [vmem:[%s1 + $0x10] sm:$0xff]
  %v5912 = vld [vmem:[%s1 + $0x18] sm:$0xff]
  %v5913 = vld [vmem:[%s1 + $0x20] sm:$0xff]
  %v5914 = vld [vmem:[%s1 + $0x28] sm:$0xff]
  %v5915 = vld [vmem:[%s1 + $0x30] sm:$0xff]
  %v5916 = vld [vmem:[%s1 + $0x38] sm:$0xff]
  %v5917 = vld [vmem:[%s1 + $0x40] sm:$0xff]
  %v5918 = vld [vmem:[%s1 + $0x48] sm:$0xff]
  %v5919 = vld [vmem:[%s1 + $0x50] sm:$0xff]
  %v5920 = vld [vmem:[%s1 + $0x58] sm:$0xff]
  %v5921 = vld [vmem:[%s1 + $0x60] sm:$0xff]
  %v5922 = vld [vmem:[%s1 + $0x68] sm:$0xff]
  %v5923 = vld [vmem:[%s1 + $0x70] sm:$0xff]
  %v5924 = vld [vmem:[%s1 + $0x78] sm:$0xff]
  %v5925 = vld [vmem:[%s1 + $0x80] sm:$0xff]
  %v5926 = vld [vmem:[%s1 + $0x88] sm:$0xff]
  %v5927 = vld [vmem:[%s1 + $0x90] sm:$0xff]
  %v5928 = vld [vmem:[%s1 + $0x98] sm:$0xff]
  %v5929 = vld [vmem:[%s1 + $0xa0] sm:$0xff]
  %v5930 = vld [vmem:[%s1 + $0xa8] sm:$0xff]
  %v5931 = vld [vmem:[%s1 + $0xb0] sm:$0xff]
  %v5932 = vld [vmem:[%s1 + $0xb8] sm:$0xff]
  %v5933 = vld [vmem:[%s1 + $0xc0] sm:$0xff]
  %v5934 = vld [vmem:[%s1 + $0xc8] sm:$0xff]
  %v5935 = vld [vmem:[%s1 + $0xd0] sm:$0xff]
  %v5936 = vld [vmem:[%s1 + $0xd8] sm:$0xff]
  %v5937 = vld [vmem:[%s1 + $0xe0] sm:$0xff]
  %v5938 = vld [vmem:[%s1 + $0xe8] sm:$0xff]
  %v5939 = vld [vmem:[%s1 + $0xf0] sm:$0xff]
  %v5940 = vld [vmem:[%s1 + $0xf8] sm:$0xff]
  %v5941 = vld [vmem:[%s1 + $0x100] sm:$0xff]
  %v5942 = vld [vmem:[%s1 + $0x108] sm:$0xff]
  %v5943 = vld [vmem:[%s1 + $0x110] sm:$0xff]
  %v5944 = vld [vmem:[%s1 + $0x118] sm:$0xff]
  %v5945 = vld [vmem:[%s1 + $0x120] sm:$0xff]
  %v5946 = vld [vmem:[%s1 + $0x128] sm:$0xff]
  %v5947 = vld [vmem:[%s1 + $0x130] sm:$0xff]
  %v5948 = vld [vmem:[%s1 + $0x138] sm:$0xff]
  %v5949 = vld [vmem:[%s1 + $0x140] sm:$0xff]
  %v5950 = vld [vmem:[%s1 + $0x148] sm:$0xff]
  %v5951 = vld [vmem:[%s1 + $0x150] sm:$0xff]
  %v5952 = vld [vmem:[%s1 + $0x158] sm:$0xff]
  %v5953 = vld [vmem:[%s1 + $0x160] sm:$0xff]
  %v5954 = vld [vmem:[%s1 + $0x168] sm:$0xff]
  %v5955 = vld [vmem:[%s1 + $0x170] sm:$0xff]
  %v5956 = vld [vmem:[%s1 + $0x178] sm:$0xff]
  %v5957 = vld [vmem:[%s1 + $0x180] sm:$0xff]
  %v5958 = vld [vmem:[%s1 + $0x188] sm:$0xff]
  %v5959 = vld [vmem:[%s1 + $0x190] sm:$0xff]
  %v5960 = vld [vmem:[%s1 + $0x198] sm:$0xff]
  %v5961 = vld [vmem:[%s1 + $0x1a0] sm:$0xff]
  %v5962 = vld [vmem:[%s1 + $0x1a8] sm:$0xff]
  %v5963 = vld [vmem:[%s1 + $0x1b0] sm:$0xff]
  %v5964 = vld [vmem:[%s1 + $0x1b8] sm:$0xff]
  %v5965 = vld [vmem:[%s1 + $0x1c0] sm:$0xff]
  %v5966 = vld [vmem:[%s1 + $0x1c8] sm:$0xff]
  %v5967 = vld [vmem:[%s1 + $0x1d0] sm:$0xff]
  %v5968 = vld [vmem:[%s1 + $0x1d8] sm:$0xff]
  %v5969 = vld [vmem:[%s1 + $0x1e0] sm:$0xff]
  %v5970 = vld [vmem:[%s1 + $0x1e8] sm:$0xff]
  %v5971 = vld [vmem:[%s1 + $0x1f0] sm:$0xff]
  %v5972 = vld [vmem:[%s1 + $0x1f8] sm:$0xff]
  %v5973 = vld [vmem:[%s1 + $0x200] sm:$0xff]
  %v5974 = vld [vmem:[%s1 + $0x208] sm:$0xff]
  %v5975 = vld [vmem:[%s1 + $0x210] sm:$0xff]
  %v5976 = vld [vmem:[%s1 + $0x218] sm:$0xff]
  %v5977 = vld [vmem:[%s1 + $0x220] sm:$0xff]
  %v5978 = vld [vmem:[%s1 + $0x228] sm:$0xff]
  %v5979 = vld [vmem:[%s1 + $0x230] sm:$0xff]
  %v5980 = vld [vmem:[%s1 + $0x238] sm:$0xff]
  %v5981 = vld [vmem:[%s1 + $0x240] sm:$0xff]
  %v5982 = vld [vmem:[%s1 + $0x248] sm:$0xff]
  %v5983 = vld [vmem:[%s1 + $0x250] sm:$0xff]
  %v5984 = vld [vmem:[%s1 + $0x258] sm:$0xff]
  %v5985 = vld [vmem:[%s1 + $0x260] sm:$0xff]
  %v5986 = vld [vmem:[%s1 + $0x268] sm:$0xff]
  %v5987 = vld [vmem:[%s1 + $0x270] sm:$0xff]
  %v5988 = vld [vmem:[%s1 + $0x278] sm:$0xff]
  %v5989 = vld [vmem:[%s1 + $0x280] sm:$0xff]
  %v5990 = vld [vmem:[%s1 + $0x288] sm:$0xff]
  %v5991 = vld [vmem:[%s1 + $0x290] sm:$0xff]
  %v5992 = vld [vmem:[%s1 + $0x298] sm:$0xff]
  %v5993 = vld [vmem:[%s1 + $0x2a0] sm:$0xff]
  %v5994 = vld [vmem:[%s1 + $0x2a8] sm:$0xff]
  %v5995 = vld [vmem:[%s1 + $0x2b0] sm:$0xff]
  %v5996 = vld [vmem:[%s1 + $0x2b8] sm:$0xff]
  %v5997 = vld [vmem:[%s1 + $0x2c0] sm:$0xff]
  %v5998 = vld [vmem:[%s1 + $0x2c8] sm:$0xff]
  %v5999 = vld [vmem:[%s1 + $0x2d0] sm:$0xff]
  %v6000 = vld [vmem:[%s1 + $0x2d8] sm:$0xff]
  %v6001 = vld [vmem:[%s1 + $0x2e0] sm:$0xff]
  %v6002 = vld [vmem:[%s1 + $0x2e8] sm:$0xff]
  %v6003 = vld [vmem:[%s1 + $0x2f0] sm:$0xff]
  %v6004 = vld [vmem:[%s1 + $0x2f8] sm:$0xff]
  %v6005 = vld [vmem:[%s1 + $0x300] sm:$0xff]
  %v6006 = vld [vmem:[%s1 + $0x308] sm:$0xff]
  %v6007 = vld [vmem:[%s1 + $0x310] sm:$0xff]
  %v6008 = vld [vmem:[%s1 + $0x318] sm:$0xff]
  %v6009 = vld [vmem:[%s1 + $0x320] sm:$0xff]
  %v6010 = vld [vmem:[%s1 + $0x328] sm:$0xff]
  %v6011 = vld [vmem:[%s1 + $0x330] sm:$0xff]
  %v6012 = vld [vmem:[%s1 + $0x338] sm:$0xff]
  %v6013 = vld [vmem:[%s1 + $0x340] sm:$0xff]
  %v6014 = vld [vmem:[%s1 + $0x348] sm:$0xff]
  %v6015 = vld [vmem:[%s1 + $0x350] sm:$0xff]
  %v6016 = vld [vmem:[%s1 + $0x358] sm:$0xff]
  %v6017 = vld [vmem:[%s1 + $0x360] sm:$0xff]
  %v6018 = vld [vmem:[%s1 + $0x368] sm:$0xff]
  %v6019 = vld [vmem:[%s1 + $0x370] sm:$0xff]
  %v6020 = vld [vmem:[%s1 + $0x378] sm:$0xff]
  %v6021 = vld [vmem:[%s1 + $0x380] sm:$0xff]
  %v6022 = vld [vmem:[%s1 + $0x388] sm:$0xff]
  %v6023 = vld [vmem:[%s1 + $0x390] sm:$0xff]
  %v6024 = vld [vmem:[%s1 + $0x398] sm:$0xff]
  %v6025 = vld [vmem:[%s1 + $0x3a0] sm:$0xff]
  %v6026 = vld [vmem:[%s1 + $0x3a8] sm:$0xff]
  %v6027 = vld [vmem:[%s1 + $0x3b0] sm:$0xff]
  %v6028 = vld [vmem:[%s1 + $0x3b8] sm:$0xff]
  %v6029 = vld [vmem:[%s1 + $0x3c0] sm:$0xff]
  %v6030 = vld [vmem:[%s1 + $0x3c8] sm:$0xff]
  %v6031 = vld [vmem:[%s1 + $0x3d0] sm:$0xff]
  %v6032 = vld [vmem:[%s1 + $0x3d8] sm:$0xff]
  %v6033 = vld [vmem:[%s1 + $0x3e0] sm:$0xff]
  %v6034 = vld [vmem:[%s1 + $0x3e8] sm:$0xff]
  %v6035 = vld [vmem:[%s1 + $0x3f0] sm:$0xff]
  %v6036 = vld [vmem:[%s1 + $0x3f8] sm:$0xff]
  %v6037 = vld [vmem:[%s1 + $0x400] sm:$0xff]
  %v6038 = vld [vmem:[%s1 + $0x408] sm:$0xff]
  %v6039 = vld [vmem:[%s1 + $0x410] sm:$0xff]
  %v6040 = vld [vmem:[%s1 + $0x418] sm:$0xff]
  %v6041 = vld [vmem:[%s1 + $0x420] sm:$0xff]
  %v6042 = vld [vmem:[%s1 + $0x428] sm:$0xff]
  %v6043 = vld [vmem:[%s1 + $0x430] sm:$0xff]
  %v6044 = vld [vmem:[%s1 + $0x438] sm:$0xff]
  %v6045 = vld [vmem:[%s1 + $0x440] sm:$0xff]
  %v6046 = vld [vmem:[%s1 + $0x448] sm:$0xff]
  %v6047 = vld [vmem:[%s1 + $0x450] sm:$0xff]
  %v6048 = vld [vmem:[%s1 + $0x458] sm:$0xff]
  %v6049 = vld [vmem:[%s1 + $0x460] sm:$0xff]
  %v6050 = vld [vmem:[%s1 + $0x468] sm:$0xff]
  %v6051 = vld [vmem:[%s1 + $0x470] sm:$0xff]
  %v6052 = vld [vmem:[%s1 + $0x478] sm:$0xff]
  %v6053 = vld [vmem:[%s1 + $0x480] sm:$0xff]
  %v6054 = vld [vmem:[%s1 + $0x488] sm:$0xff]
  %v6055 = vld [vmem:[%s1 + $0x490] sm:$0xff]
  %v6056 = vld [vmem:[%s1 + $0x498] sm:$0xff]
  %v6057 = vld [vmem:[%s1 + $0x4a0] sm:$0xff]
  %v6058 = vld [vmem:[%s1 + $0x4a8] sm:$0xff]
  %v6059 = vld [vmem:[%s1 + $0x4b0] sm:$0xff]
  %v6060 = vld [vmem:[%s1 + $0x4b8] sm:$0xff]
  %v6061 = vld [vmem:[%s1 + $0x4c0] sm:$0xff]
  %v6062 = vld [vmem:[%s1 + $0x4c8] sm:$0xff]
  %v6063 = vld [vmem:[%s1 + $0x4d0] sm:$0xff]
  %v6064 = vld [vmem:[%s1 + $0x4d8] sm:$0xff]
  %v6065 = vld [vmem:[%s1 + $0x4e0] sm:$0xff]
  %v6066 = vld [vmem:[%s1 + $0x4e8] sm:$0xff]
  %v6067 = vld [vmem:[%s1 + $0x4f0] sm:$0xff]
  %v6068 = vld [vmem:[%s1 + $0x4f8] sm:$0xff]
  %v6069 = vld [vmem:[%s1 + $0x500] sm:$0xff]
  %v6070 = vld [vmem:[%s1 + $0x508] sm:$0xff]
  %v6071 = vld [vmem:[%s1 + $0x510] sm:$0xff]
  %v6072 = vld [vmem:[%s1 + $0x518] sm:$0xff]
  %v6073 = vld [vmem:[%s1 + $0x520] sm:$0xff]
  %v6074 = vld [vmem:[%s1 + $0x528] sm:$0xff]
  %v6075 = vld [vmem:[%s1 + $0x530] sm:$0xff]
  %v6076 = vld [vmem:[%s1 + $0x538] sm:$0xff]
  %v6077 = vld [vmem:[%s1 + $0x540] sm:$0xff]
  %v6078 = vld [vmem:[%s1 + $0x548] sm:$0xff]
  %v6079 = vld [vmem:[%s1 + $0x550] sm:$0xff]
  %v6080 = vld [vmem:[%s1 + $0x558] sm:$0xff]
  %v6081 = vld [vmem:[%s1 + $0x560] sm:$0xff]
  %v6082 = vld [vmem:[%s1 + $0x568] sm:$0xff]
  %v6083 = vld [vmem:[%s1 + $0x570] sm:$0xff]
  %v6084 = vld [vmem:[%s1 + $0x578] sm:$0xff]
  %v6085 = vld [vmem:[%s1 + $0x580] sm:$0xff]
  %v6086 = vld [vmem:[%s1 + $0x588] sm:$0xff]
  %v6087 = vld [vmem:[%s1 + $0x590] sm:$0xff]
  %v6088 = vld [vmem:[%s1 + $0x598] sm:$0xff]
  %v6089 = vld [vmem:[%s1 + $0x5a0] sm:$0xff]
  %v6090 = vld [vmem:[%s1 + $0x5a8] sm:$0xff]
  %v6091 = vld [vmem:[%s1 + $0x5b0] sm:$0xff]
  %v6092 = vld [vmem:[%s1 + $0x5b8] sm:$0xff]
  %v6093 = vld [vmem:[%s1 + $0x5c0] sm:$0xff]
  %v6094 = vld [vmem:[%s1 + $0x5c8] sm:$0xff]
  %v6095 = vld [vmem:[%s1 + $0x5d0] sm:$0xff]
  %v6096 = vld [vmem:[%s1 + $0x5d8] sm:$0xff]
  %v6097 = vld [vmem:[%s1 + $0x5e0] sm:$0xff]
  %v6098 = vld [vmem:[%s1 + $0x5e8] sm:$0xff]
  %v6099 = vld [vmem:[%s1 + $0x5f0] sm:$0xff]
  %v6100 = vld [vmem:[%s1 + $0x5f8] sm:$0xff]
  %v6101 = vld [vmem:[%s1 + $0x600] sm:$0xff]
  %v6102 = vld [vmem:[%s1 + $0x608] sm:$0xff]
  %v6103 = vld [vmem:[%s1 + $0x610] sm:$0xff]
  %v6104 = vld [vmem:[%s1 + $0x618] sm:$0xff]
  %v6105 = vld [vmem:[%s1 + $0x620] sm:$0xff]
  %v6106 = vld [vmem:[%s1 + $0x628] sm:$0xff]
  %v6107 = vld [vmem:[%s1 + $0x630] sm:$0xff]
  %v6108 = vld [vmem:[%s1 + $0x638] sm:$0xff]
  %v6109 = vld [vmem:[%s1 + $0x640] sm:$0xff]
  %v6110 = vld [vmem:[%s1 + $0x648] sm:$0xff]
  %v6111 = vld [vmem:[%s1 + $0x650] sm:$0xff]
  %v6112 = vld [vmem:[%s1 + $0x658] sm:$0xff]
  %v6113 = vld [vmem:[%s1 + $0x660] sm:$0xff]
  %v6114 = vld [vmem:[%s1 + $0x668] sm:$0xff]
  %v6115 = vld [vmem:[%s1 + $0x670] sm:$0xff]
  %v6116 = vld [vmem:[%s1 + $0x678] sm:$0xff]
  %v6117 = vld [vmem:[%s1 + $0x680] sm:$0xff]
  %v6118 = vld [vmem:[%s1 + $0x688] sm:$0xff]
  %v6119 = vld [vmem:[%s1 + $0x690] sm:$0xff]
  %v6120 = vld [vmem:[%s1 + $0x698] sm:$0xff]
  %v6121 = vld [vmem:[%s1 + $0x6a0] sm:$0xff]
  %v6122 = vld [vmem:[%s1 + $0x6a8] sm:$0xff]
  %v6123 = vld [vmem:[%s1 + $0x6b0] sm:$0xff]
  %v6124 = vld [vmem:[%s1 + $0x6b8] sm:$0xff]
  %v6125 = vld [vmem:[%s1 + $0x6c0] sm:$0xff]
  %v6126 = vld [vmem:[%s1 + $0x6c8] sm:$0xff]
  %v6127 = vld [vmem:[%s1 + $0x6d0] sm:$0xff]
  %v6128 = vld [vmem:[%s1 + $0x6d8] sm:$0xff]
  %v6129 = vld [vmem:[%s1 + $0x6e0] sm:$0xff]
  %v6130 = vld [vmem:[%s1 + $0x6e8] sm:$0xff]
  %v6131 = vld [vmem:[%s1 + $0x6f0] sm:$0xff]
  %v6132 = vld [vmem:[%s1 + $0x6f8] sm:$0xff]
  %v6133 = vld [vmem:[%s1 + $0x700] sm:$0xff]
  %v6134 = vld [vmem:[%s1 + $0x708] sm:$0xff]
  %v6135 = vld [vmem:[%s1 + $0x710] sm:$0xff]
  %v6136 = vld [vmem:[%s1 + $0x718] sm:$0xff]
  %v6137 = vld [vmem:[%s1 + $0x720] sm:$0xff]
  %v6138 = vld [vmem:[%s1 + $0x728] sm:$0xff]
  %v6139 = vld [vmem:[%s1 + $0x730] sm:$0xff]
  %v6140 = vld [vmem:[%s1 + $0x738] sm:$0xff]
  %v6141 = vld [vmem:[%s1 + $0x740] sm:$0xff]
  %v6142 = vld [vmem:[%s1 + $0x748] sm:$0xff]
  %v6143 = vld [vmem:[%s1 + $0x750] sm:$0xff]
  %v6144 = vld [vmem:[%s1 + $0x758] sm:$0xff]
  %v6145 = vld [vmem:[%s1 + $0x760] sm:$0xff]
  %v6146 = vld [vmem:[%s1 + $0x768] sm:$0xff]
  %v6147 = vld [vmem:[%s1 + $0x770] sm:$0xff]
  %v6148 = vld [vmem:[%s1 + $0x778] sm:$0xff]
  %v6149 = vld [vmem:[%s1 + $0x780] sm:$0xff]
  %v6150 = vld [vmem:[%s1 + $0x788] sm:$0xff]
  %v6151 = vld [vmem:[%s1 + $0x790] sm:$0xff]
  %v6152 = vld [vmem:[%s1 + $0x798] sm:$0xff]
  %v6153 = vld [vmem:[%s1 + $0x7a0] sm:$0xff]
  %v6154 = vld [vmem:[%s1 + $0x7a8] sm:$0xff]
  %v6155 = vld [vmem:[%s1 + $0x7b0] sm:$0xff]
  %v6156 = vld [vmem:[%s1 + $0x7b8] sm:$0xff]
  %v6157 = vld [vmem:[%s1 + $0x7c0] sm:$0xff]
  %v6158 = vld [vmem:[%s1 + $0x7c8] sm:$0xff]
  %v6159 = vld [vmem:[%s1 + $0x7d0] sm:$0xff]
  %v6160 = vld [vmem:[%s1 + $0x7d8] sm:$0xff]
  %v6161 = vld [vmem:[%s1 + $0x7e0] sm:$0xff]
  %v6162 = vld [vmem:[%s1 + $0x7e8] sm:$0xff]
  %v6163 = vld [vmem:[%s1 + $0x7f0] sm:$0xff]
  %v6164 = vld [vmem:[%s1 + $0x7f8] sm:$0xff]
  %v6165 = vadd.f32 %v5653, %v5909
  %v6166 = vadd.f32 %v5654, %v5910
  %v6167 = vadd.f32 %v5655, %v5911
  %v6168 = vadd.f32 %v5656, %v5912
  %v6169 = vadd.f32 %v5657, %v5913
  %v6170 = vadd.f32 %v5658, %v5914
  %v6171 = vadd.f32 %v5659, %v5915
  %v6172 = vadd.f32 %v5660, %v5916
  %v6173 = vadd.f32 %v5661, %v5917
  %v6174 = vadd.f32 %v5662, %v5918
  %v6175 = vadd.f32 %v5663, %v5919
  %v6176 = vadd.f32 %v5664, %v5920
  %v6177 = vadd.f32 %v5665, %v5921
  %v6178 = vadd.f32 %v5666, %v5922
  %v6179 = vadd.f32 %v5667, %v5923
  %v6180 = vadd.f32 %v5668, %v5924
  %v6181 = vadd.f32 %v5669, %v5925
  %v6182 = vadd.f32 %v5670, %v5926
  %v6183 = vadd.f32 %v5671, %v5927
  %v6184 = vadd.f32 %v5672, %v5928
  %v6185 = vadd.f32 %v5673, %v5929
  %v6186 = vadd.f32 %v5674, %v5930
  %v6187 = vadd.f32 %v5675, %v5931
  %v6188 = vadd.f32 %v5676, %v5932
  %v6189 = vadd.f32 %v5677, %v5933
  %v6190 = vadd.f32 %v5678, %v5934
  %v6191 = vadd.f32 %v5679, %v5935
  %v6192 = vadd.f32 %v5680, %v5936
  %v6193 = vadd.f32 %v5681, %v5937
  %v6194 = vadd.f32 %v5682, %v5938
  %v6195 = vadd.f32 %v5683, %v5939
  %v6196 = vadd.f32 %v5684, %v5940
  %v6197 = vadd.f32 %v5685, %v5941
  %v6198 = vadd.f32 %v5686, %v5942
  %v6199 = vadd.f32 %v5687, %v5943
  %v6200 = vadd.f32 %v5688, %v5944
  %v6201 = vadd.f32 %v5689, %v5945
  %v6202 = vadd.f32 %v5690, %v5946
  %v6203 = vadd.f32 %v5691, %v5947
  %v6204 = vadd.f32 %v5692, %v5948
  %v6205 = vadd.f32 %v5693, %v5949
  %v6206 = vadd.f32 %v5694, %v5950
  %v6207 = vadd.f32 %v5695, %v5951
  %v6208 = vadd.f32 %v5696, %v5952
  %v6209 = vadd.f32 %v5697, %v5953
  %v6210 = vadd.f32 %v5698, %v5954
  %v6211 = vadd.f32 %v5699, %v5955
  %v6212 = vadd.f32 %v5700, %v5956
  %v6213 = vadd.f32 %v5701, %v5957
  %v6214 = vadd.f32 %v5702, %v5958
  %v6215 = vadd.f32 %v5703, %v5959
  %v6216 = vadd.f32 %v5704, %v5960
  %v6217 = vadd.f32 %v5705, %v5961
  %v6218 = vadd.f32 %v5706, %v5962
  %v6219 = vadd.f32 %v5707, %v5963
  %v6220 = vadd.f32 %v5708, %v5964
  %v6221 = vadd.f32 %v5709, %v5965
  %v6222 = vadd.f32 %v5710, %v5966
  %v6223 = vadd.f32 %v5711, %v5967
  %v6224 = vadd.f32 %v5712, %v5968
  %v6225 = vadd.f32 %v5713, %v5969
  %v6226 = vadd.f32 %v5714, %v5970
  %v6227 = vadd.f32 %v5715, %v5971
  %v6228 = vadd.f32 %v5716, %v5972
  %v6229 = vadd.f32 %v5717, %v5973
  %v6230 = vadd.f32 %v5718, %v5974
  %v6231 = vadd.f32 %v5719, %v5975
  %v6232 = vadd.f32 %v5720, %v5976
  %v6233 = vadd.f32 %v5721, %v5977
  %v6234 = vadd.f32 %v5722, %v5978
  %v6235 = vadd.f32 %v5723, %v5979
  %v6236 = vadd.f32 %v5724, %v5980
  %v6237 = vadd.f32 %v5725, %v5981
  %v6238 = vadd.f32 %v5726, %v5982
  %v6239 = vadd.f32 %v5727, %v5983
  %v6240 = vadd.f32 %v5728, %v5984
  %v6241 = vadd.f32 %v5729, %v5985
  %v6242 = vadd.f32 %v5730, %v5986
  %v6243 = vadd.f32 %v5731, %v5987
  %v6244 = vadd.f32 %v5732, %v5988
  %v6245 = vadd.f32 %v5733, %v5989
  %v6246 = vadd.f32 %v5734, %v5990
  %v6247 = vadd.f32 %v5735, %v5991
  %v6248 = vadd.f32 %v5736, %v5992
  %v6249 = vadd.f32 %v5737, %v5993
  %v6250 = vadd.f32 %v5738, %v5994
  %v6251 = vadd.f32 %v5739, %v5995
  %v6252 = vadd.f32 %v5740, %v5996
  %v6253 = vadd.f32 %v5741, %v5997
  %v6254 = vadd.f32 %v5742, %v5998
  %v6255 = vadd.f32 %v5743, %v5999
  %v6256 = vadd.f32 %v5744, %v6000
  %v6257 = vadd.f32 %v5745, %v6001
  %v6258 = vadd.f32 %v5746, %v6002
  %v6259 = vadd.f32 %v5747, %v6003
  %v6260 = vadd.f32 %v5748, %v6004
  %v6261 = vadd.f32 %v5749, %v6005
  %v6262 = vadd.f32 %v5750, %v6006
  %v6263 = vadd.f32 %v5751, %v6007
  %v6264 = vadd.f32 %v5752, %v6008
  %v6265 = vadd.f32 %v5753, %v6009
  %v6266 = vadd.f32 %v5754, %v6010
  %v6267 = vadd.f32 %v5755, %v6011
  %v6268 = vadd.f32 %v5756, %v6012
  %v6269 = vadd.f32 %v5757, %v6013
  %v6270 = vadd.f32 %v5758, %v6014
  %v6271 = vadd.f32 %v5759, %v6015
  %v6272 = vadd.f32 %v5760, %v6016
  %v6273 = vadd.f32 %v5761, %v6017
  %v6274 = vadd.f32 %v5762, %v6018
  %v6275 = vadd.f32 %v5763, %v6019
  %v6276 = vadd.f32 %v5764, %v6020
  %v6277 = vadd.f32 %v5765, %v6021
  %v6278 = vadd.f32 %v5766, %v6022
  %v6279 = vadd.f32 %v5767, %v6023
  %v6280 = vadd.f32 %v5768, %v6024
  %v6281 = vadd.f32 %v5769, %v6025
  %v6282 = vadd.f32 %v5770, %v6026
  %v6283 = vadd.f32 %v5771, %v6027
  %v6284 = vadd.f32 %v5772, %v6028
  %v6285 = vadd.f32 %v5773, %v6029
  %v6286 = vadd.f32 %v5774, %v6030
  %v6287 = vadd.f32 %v5775, %v6031
  %v6288 = vadd.f32 %v5776, %v6032
  %v6289 = vadd.f32 %v5777, %v6033
  %v6290 = vadd.f32 %v5778, %v6034
  %v6291 = vadd.f32 %v5779, %v6035
  %v6292 = vadd.f32 %v5780, %v6036
  %v6293 = vadd.f32 %v5781, %v6037
  %v6294 = vadd.f32 %v5782, %v6038
  %v6295 = vadd.f32 %v5783, %v6039
  %v6296 = vadd.f32 %v5784, %v6040
  %v6297 = vadd.f32 %v5785, %v6041
  %v6298 = vadd.f32 %v5786, %v6042
  %v6299 = vadd.f32 %v5787, %v6043
  %v6300 = vadd.f32 %v5788, %v6044
  %v6301 = vadd.f32 %v5789, %v6045
  %v6302 = vadd.f32 %v5790, %v6046
  %v6303 = vadd.f32 %v5791, %v6047
  %v6304 = vadd.f32 %v5792, %v6048
  %v6305 = vadd.f32 %v5793, %v6049
  %v6306 = vadd.f32 %v5794, %v6050
  %v6307 = vadd.f32 %v5795, %v6051
  %v6308 = vadd.f32 %v5796, %v6052
  %v6309 = vadd.f32 %v5797, %v6053
  %v6310 = vadd.f32 %v5798, %v6054
  %v6311 = vadd.f32 %v5799, %v6055
  %v6312 = vadd.f32 %v5800, %v6056
  %v6313 = vadd.f32 %v5801, %v6057
  %v6314 = vadd.f32 %v5802, %v6058
  %v6315 = vadd.f32 %v5803, %v6059
  %v6316 = vadd.f32 %v5804, %v6060
  %v6317 = vadd.f32 %v5805, %v6061
  %v6318 = vadd.f32 %v5806, %v6062
  %v6319 = vadd.f32 %v5807, %v6063
  %v6320 = vadd.f32 %v5808, %v6064
  %v6321 = vadd.f32 %v5809, %v6065
  %v6322 = vadd.f32 %v5810, %v6066
  %v6323 = vadd.f32 %v5811, %v6067
  %v6324 = vadd.f32 %v5812, %v6068
  %v6325 = vadd.f32 %v5813, %v6069
  %v6326 = vadd.f32 %v5814, %v6070
  %v6327 = vadd.f32 %v5815, %v6071
  %v6328 = vadd.f32 %v5816, %v6072
  %v6329 = vadd.f32 %v5817, %v6073
  %v6330 = vadd.f32 %v5818, %v6074
  %v6331 = vadd.f32 %v5819, %v6075
  %v6332 = vadd.f32 %v5820, %v6076
  %v6333 = vadd.f32 %v5821, %v6077
  %v6334 = vadd.f32 %v5822, %v6078
  %v6335 = vadd.f32 %v5823, %v6079
  %v6336 = vadd.f32 %v5824, %v6080
  %v6337 = vadd.f32 %v5825, %v6081
  %v6338 = vadd.f32 %v5826, %v6082
  %v6339 = vadd.f32 %v5827, %v6083
  %v6340 = vadd.f32 %v5828, %v6084
  %v6341 = vadd.f32 %v5829, %v6085
  %v6342 = vadd.f32 %v5830, %v6086
  %v6343 = vadd.f32 %v5831, %v6087
  %v6344 = vadd.f32 %v5832, %v6088
  %v6345 = vadd.f32 %v5833, %v6089
  %v6346 = vadd.f32 %v5834, %v6090
  %v6347 = vadd.f32 %v5835, %v6091
  %v6348 = vadd.f32 %v5836, %v6092
  %v6349 = vadd.f32 %v5837, %v6093
  %v6350 = vadd.f32 %v5838, %v6094
  %v6351 = vadd.f32 %v5839, %v6095
  %v6352 = vadd.f32 %v5840, %v6096
  %v6353 = vadd.f32 %v5841, %v6097
  %v6354 = vadd.f32 %v5842, %v6098
  %v6355 = vadd.f32 %v5843, %v6099
  %v6356 = vadd.f32 %v5844, %v6100
  %v6357 = vadd.f32 %v5845, %v6101
  %v6358 = vadd.f32 %v5846, %v6102
  %v6359 = vadd.f32 %v5847, %v6103
  %v6360 = vadd.f32 %v5848, %v6104
  %v6361 = vadd.f32 %v5849, %v6105
  %v6362 = vadd.f32 %v5850, %v6106
  %v6363 = vadd.f32 %v5851, %v6107
  %v6364 = vadd.f32 %v5852, %v6108
  %v6365 = vadd.f32 %v5853, %v6109
  %v6366 = vadd.f32 %v5854, %v6110
  %v6367 = vadd.f32 %v5855, %v6111
  %v6368 = vadd.f32 %v5856, %v6112
  %v6369 = vadd.f32 %v5857, %v6113
  %v6370 = vadd.f32 %v5858, %v6114
  %v6371 = vadd.f32 %v5859, %v6115
  %v6372 = vadd.f32 %v5860, %v6116
  %v6373 = vadd.f32 %v5861, %v6117
  %v6374 = vadd.f32 %v5862, %v6118
  %v6375 = vadd.f32 %v5863, %v6119
  %v6376 = vadd.f32 %v5864, %v6120
  %v6377 = vadd.f32 %v5865, %v6121
  %v6378 = vadd.f32 %v5866, %v6122
  %v6379 = vadd.f32 %v5867, %v6123
  %v6380 = vadd.f32 %v5868, %v6124
  %v6381 = vadd.f32 %v5869, %v6125
  %v6382 = vadd.f32 %v5870, %v6126
  %v6383 = vadd.f32 %v5871, %v6127
  %v6384 = vadd.f32 %v5872, %v6128
  %v6385 = vadd.f32 %v5873, %v6129
  %v6386 = vadd.f32 %v5874, %v6130
  %v6387 = vadd.f32 %v5875, %v6131
  %v6388 = vadd.f32 %v5876, %v6132
  %v6389 = vadd.f32 %v5877, %v6133
  %v6390 = vadd.f32 %v5878, %v6134
  %v6391 = vadd.f32 %v5879, %v6135
  %v6392 = vadd.f32 %v5880, %v6136
  %v6393 = vadd.f32 %v5881, %v6137
  %v6394 = vadd.f32 %v5882, %v6138
  %v6395 = vadd.f32 %v5883, %v6139
  %v6396 = vadd.f32 %v5884, %v6140
  %v6397 = vadd.f32 %v5885, %v6141
  %v6398 = vadd.f32 %v5886, %v6142
  %v6399 = vadd.f32 %v5887, %v6143
  %v6400 = vadd.f32 %v5888, %v6144
  %v6401 = vadd.f32 %v5889, %v6145
  %v6402 = vadd.f32 %v5890, %v6146
  %v6403 = vadd.f32 %v5891, %v6147
  %v6404 = vadd.f32 %v5892, %v6148
  %v6405 = vadd.f32 %v5893, %v6149
  %v6406 = vadd.f32 %v5894, %v6150
  %v6407 = vadd.f32 %v5895, %v6151
  %v6408 = vadd.f32 %v5896, %v6152
  %v6409 = vadd.f32 %v5897, %v6153
  %v6410 = vadd.f32 %v5898, %v6154
  %v6411 = vadd.f32 %v5899, %v6155
  %v6412 = vadd.f32 %v5900, %v6156
  %v6413 = vadd.f32 %v5901, %v6157
  %v6414 = vadd.f32 %v5902, %v6158
  %v6415 = vadd.f32 %v5903, %v6159
  %v6416 = vadd.f32 %v5904, %v6160
  %v6417 = vadd.f32 %v5905, %v6161
  %v6418 = vadd.f32 %v5906, %v6162
  %v6419 = vadd.f32 %v5907, %v6163
  %v6420 = vadd.f32 %v5908, %v6164
  %v6421 = vmax.f32 %v6165, 0.0
  %v6422 = vmax.f32 %v6166, 0.0
  %v6423 = vmax.f32 %v6167, 0.0
  %v6424 = vmax.f32 %v6168, 0.0
  %v6425 = vmax.f32 %v6169, 0.0
  %v6426 = vmax.f32 %v6170, 0.0
  %v6427 = vmax.f32 %v6171, 0.0
  %v6428 = vmax.f32 %v6172, 0.0
  %v6429 = vmax.f32 %v6173, 0.0
  %v6430 = vmax.f32 %v6174, 0.0
  %v6431 = vmax.f32 %v6175, 0.0
  %v6432 = vmax.f32 %v6176, 0.0
  %v6433 = vmax.f32 %v6177, 0.0
  %v6434 = vmax.f32 %v6178, 0.0
  %v6435 = vmax.f32 %v6179, 0.0
  %v6436 = vmax.f32 %v6180, 0.0
  %v6437 = vmax.f32 %v6181, 0.0
  %v6438 = vmax.f32 %v6182, 0.0
  %v6439 = vmax.f32 %v6183, 0.0
  %v6440 = vmax.f32 %v6184, 0.0
  %v6441 = vmax.f32 %v6185, 0.0
  %v6442 = vmax.f32 %v6186, 0.0
  %v6443 = vmax.f32 %v6187, 0.0
  %v6444 = vmax.f32 %v6188, 0.0
  %v6445 = vmax.f32 %v6189, 0.0
  %v6446 = vmax.f32 %v6190, 0.0
  %v6447 = vmax.f32 %v6191, 0.0
  %v6448 = vmax.f32 %v6192, 0.0
  %v6449 = vmax.f32 %v6193, 0.0
  %v6450 = vmax.f32 %v6194, 0.0
  %v6451 = vmax.f32 %v6195, 0.0
  %v6452 = vmax.f32 %v6196, 0.0
  %v6453 = vmax.f32 %v6197, 0.0
  %v6454 = vmax.f32 %v6198, 0.0
  %v6455 = vmax.f32 %v6199, 0.0
  %v6456 = vmax.f32 %v6200, 0.0
  %v6457 = vmax.f32 %v6201, 0.0
  %v6458 = vmax.f32 %v6202, 0.0
  %v6459 = vmax.f32 %v6203, 0.0
  %v6460 = vmax.f32 %v6204, 0.0
  %v6461 = vmax.f32 %v6205, 0.0
  %v6462 = vmax.f32 %v6206, 0.0
  %v6463 = vmax.f32 %v6207, 0.0
  %v6464 = vmax.f32 %v6208, 0.0
  %v6465 = vmax.f32 %v6209, 0.0
  %v6466 = vmax.f32 %v6210, 0.0
  %v6467 = vmax.f32 %v6211, 0.0
  %v6468 = vmax.f32 %v6212, 0.0
  %v6469 = vmax.f32 %v6213, 0.0
  %v6470 = vmax.f32 %v6214, 0.0
  %v6471 = vmax.f32 %v6215, 0.0
  %v6472 = vmax.f32 %v6216, 0.0
  %v6473 = vmax.f32 %v6217, 0.0
  %v6474 = vmax.f32 %v6218, 0.0
  %v6475 = vmax.f32 %v6219, 0.0
  %v6476 = vmax.f32 %v6220, 0.0
  %v6477 = vmax.f32 %v6221, 0.0
  %v6478 = vmax.f32 %v6222, 0.0
  %v6479 = vmax.f32 %v6223, 0.0
  %v6480 = vmax.f32 %v6224, 0.0
  %v6481 = vmax.f32 %v6225, 0.0
  %v6482 = vmax.f32 %v6226, 0.0
  %v6483 = vmax.f32 %v6227, 0.0
  %v6484 = vmax.f32 %v6228, 0.0
  %v6485 = vmax.f32 %v6229, 0.0
  %v6486 = vmax.f32 %v6230, 0.0
  %v6487 = vmax.f32 %v6231, 0.0
  %v6488 = vmax.f32 %v6232, 0.0
  %v6489 = vmax.f32 %v6233, 0.0
  %v6490 = vmax.f32 %v6234, 0.0
  %v6491 = vmax.f32 %v6235, 0.0
  %v6492 = vmax.f32 %v6236, 0.0
  %v6493 = vmax.f32 %v6237, 0.0
  %v6494 = vmax.f32 %v6238, 0.0
  %v6495 = vmax.f32 %v6239, 0.0
  %v6496 = vmax.f32 %v6240, 0.0
  %v6497 = vmax.f32 %v6241, 0.0
  %v6498 = vmax.f32 %v6242, 0.0
  %v6499 = vmax.f32 %v6243, 0.0
  %v6500 = vmax.f32 %v6244, 0.0
  %v6501 = vmax.f32 %v6245, 0.0
  %v6502 = vmax.f32 %v6246, 0.0
  %v6503 = vmax.f32 %v6247, 0.0
  %v6504 = vmax.f32 %v6248, 0.0
  %v6505 = vmax.f32 %v6249, 0.0
  %v6506 = vmax.f32 %v6250, 0.0
  %v6507 = vmax.f32 %v6251, 0.0
  %v6508 = vmax.f32 %v6252, 0.0
  %v6509 = vmax.f32 %v6253, 0.0
  %v6510 = vmax.f32 %v6254, 0.0
  %v6511 = vmax.f32 %v6255, 0.0
  %v6512 = vmax.f32 %v6256, 0.0
  %v6513 = vmax.f32 %v6257, 0.0
  %v6514 = vmax.f32 %v6258, 0.0
  %v6515 = vmax.f32 %v6259, 0.0
  %v6516 = vmax.f32 %v6260, 0.0
  %v6517 = vmax.f32 %v6261, 0.0
  %v6518 = vmax.f32 %v6262, 0.0
  %v6519 = vmax.f32 %v6263, 0.0
  %v6520 = vmax.f32 %v6264, 0.0
  %v6521 = vmax.f32 %v6265, 0.0
  %v6522 = vmax.f32 %v6266, 0.0
  %v6523 = vmax.f32 %v6267, 0.0
  %v6524 = vmax.f32 %v6268, 0.0
  %v6525 = vmax.f32 %v6269, 0.0
  %v6526 = vmax.f32 %v6270, 0.0
  %v6527 = vmax.f32 %v6271, 0.0
  %v6528 = vmax.f32 %v6272, 0.0
  %v6529 = vmax.f32 %v6273, 0.0
  %v6530 = vmax.f32 %v6274, 0.0
  %v6531 = vmax.f32 %v6275, 0.0
  %v6532 = vmax.f32 %v6276, 0.0
  %v6533 = vmax.f32 %v6277, 0.0
  %v6534 = vmax.f32 %v6278, 0.0
  %v6535 = vmax.f32 %v6279, 0.0
  %v6536 = vmax.f32 %v6280, 0.0
  %v6537 = vmax.f32 %v6281, 0.0
  %v6538 = vmax.f32 %v6282, 0.0
  %v6539 = vmax.f32 %v6283, 0.0
  %v6540 = vmax.f32 %v6284, 0.0
  %v6541 = vmax.f32 %v6285, 0.0
  %v6542 = vmax.f32 %v6286, 0.0
  %v6543 = vmax.f32 %v6287, 0.0
  %v6544 = vmax.f32 %v6288, 0.0
  %v6545 = vmax.f32 %v6289, 0.0
  %v6546 = vmax.f32 %v6290, 0.0
  %v6547 = vmax.f32 %v6291, 0.0
  %v6548 = vmax.f32 %v6292, 0.0
  %v6549 = vmax.f32 %v6293, 0.0
  %v6550 = vmax.f32 %v6294, 0.0
  %v6551 = vmax.f32 %v6295, 0.0
  %v6552 = vmax.f32 %v6296, 0.0
  %v6553 = vmax.f32 %v6297, 0.0
  %v6554 = vmax.f32 %v6298, 0.0
  %v6555 = vmax.f32 %v6299, 0.0
  %v6556 = vmax.f32 %v6300, 0.0
  %v6557 = vmax.f32 %v6301, 0.0
  %v6558 = vmax.f32 %v6302, 0.0
  %v6559 = vmax.f32 %v6303, 0.0
  %v6560 = vmax.f32 %v6304, 0.0
  %v6561 = vmax.f32 %v6305, 0.0
  %v6562 = vmax.f32 %v6306, 0.0
  %v6563 = vmax.f32 %v6307, 0.0
  %v6564 = vmax.f32 %v6308, 0.0
  %v6565 = vmax.f32 %v6309, 0.0
  %v6566 = vmax.f32 %v6310, 0.0
  %v6567 = vmax.f32 %v6311, 0.0
  %v6568 = vmax.f32 %v6312, 0.0
  %v6569 = vmax.f32 %v6313, 0.0
  %v6570 = vmax.f32 %v6314, 0.0
  %v6571 = vmax.f32 %v6315, 0.0
  %v6572 = vmax.f32 %v6316, 0.0
  %v6573 = vmax.f32 %v6317, 0.0
  %v6574 = vmax.f32 %v6318, 0.0
  %v6575 = vmax.f32 %v6319, 0.0
  %v6576 = vmax.f32 %v6320, 0.0
  %v6577 = vmax.f32 %v6321, 0.0
  %v6578 = vmax.f32 %v6322, 0.0
  %v6579 = vmax.f32 %v6323, 0.0
  %v6580 = vmax.f32 %v6324, 0.0
  %v6581 = vmax.f32 %v6325, 0.0
  %v6582 = vmax.f32 %v6326, 0.0
  %v6583 = vmax.f32 %v6327, 0.0
  %v6584 = vmax.f32 %v6328, 0.0
  %v6585 = vmax.f32 %v6329, 0.0
  %v6586 = vmax.f32 %v6330, 0.0
  %v6587 = vmax.f32 %v6331, 0.0
  %v6588 = vmax.f32 %v6332, 0.0
  %v6589 = vmax.f32 %v6333, 0.0
  %v6590 = vmax.f32 %v6334, 0.0
  %v6591 = vmax.f32 %v6335, 0.0
  %v6592 = vmax.f32 %v6336, 0.0
  %v6593 = vmax.f32 %v6337, 0.0
  %v6594 = vmax.f32 %v6338, 0.0
  %v6595 = vmax.f32 %v6339, 0.0
  %v6596 = vmax.f32 %v6340, 0.0
  %v6597 = vmax.f32 %v6341, 0.0
  %v6598 = vmax.f32 %v6342, 0.0
  %v6599 = vmax.f32 %v6343, 0.0
  %v6600 = vmax.f32 %v6344, 0.0
  %v6601 = vmax.f32 %v6345, 0.0
  %v6602 = vmax.f32 %v6346, 0.0
  %v6603 = vmax.f32 %v6347, 0.0
  %v6604 = vmax.f32 %v6348, 0.0
  %v6605 = vmax.f32 %v6349, 0.0
  %v6606 = vmax.f32 %v6350, 0.0
  %v6607 = vmax.f32 %v6351, 0.0
  %v6608 = vmax.f32 %v6352, 0.0
  %v6609 = vmax.f32 %v6353, 0.0
  %v6610 = vmax.f32 %v6354, 0.0
  %v6611 = vmax.f32 %v6355, 0.0
  %v6612 = vmax.f32 %v6356, 0.0
  %v6613 = vmax.f32 %v6357, 0.0
  %v6614 = vmax.f32 %v6358, 0.0
  %v6615 = vmax.f32 %v6359, 0.0
  %v6616 = vmax.f32 %v6360, 0.0
  %v6617 = vmax.f32 %v6361, 0.0
  %v6618 = vmax.f32 %v6362, 0.0
  %v6619 = vmax.f32 %v6363, 0.0
  %v6620 = vmax.f32 %v6364, 0.0
  %v6621 = vmax.f32 %v6365, 0.0
  %v6622 = vmax.f32 %v6366, 0.0
  %v6623 = vmax.f32 %v6367, 0.0
  %v6624 = vmax.f32 %v6368, 0.0
  %v6625 = vmax.f32 %v6369, 0.0
  %v6626 = vmax.f32 %v6370, 0.0
  %v6627 = vmax.f32 %v6371, 0.0
  %v6628 = vmax.f32 %v6372, 0.0
  %v6629 = vmax.f32 %v6373, 0.0
  %v6630 = vmax.f32 %v6374, 0.0
  %v6631 = vmax.f32 %v6375, 0.0
  %v6632 = vmax.f32 %v6376, 0.0
  %v6633 = vmax.f32 %v6377, 0.0
  %v6634 = vmax.f32 %v6378, 0.0
  %v6635 = vmax.f32 %v6379, 0.0
  %v6636 = vmax.f32 %v6380, 0.0
  %v6637 = vmax.f32 %v6381, 0.0
  %v6638 = vmax.f32 %v6382, 0.0
  %v6639 = vmax.f32 %v6383, 0.0
  %v6640 = vmax.f32 %v6384, 0.0
  %v6641 = vmax.f32 %v6385, 0.0
  %v6642 = vmax.f32 %v6386, 0.0
  %v6643 = vmax.f32 %v6387, 0.0
  %v6644 = vmax.f32 %v6388, 0.0
  %v6645 = vmax.f32 %v6389, 0.0
  %v6646 = vmax.f32 %v6390, 0.0
  %v6647 = vmax.f32 %v6391, 0.0
  %v6648 = vmax.f32 %v6392, 0.0
  %v6649 = vmax.f32 %v6393, 0.0
  %v6650 = vmax.f32 %v6394, 0.0
  %v6651 = vmax.f32 %v6395, 0.0
  %v6652 = vmax.f32 %v6396, 0.0
  %v6653 = vmax.f32 %v6397, 0.0
  %v6654 = vmax.f32 %v6398, 0.0
  %v6655 = vmax.f32 %v6399, 0.0
  %v6656 = vmax.f32 %v6400, 0.0
  %v6657 = vmax.f32 %v6401, 0.0
  %v6658 = vmax.f32 %v6402, 0.0
  %v6659 = vmax.f32 %v6403, 0.0
  %v6660 = vmax.f32 %v6404, 0.0
  %v6661 = vmax.f32 %v6405, 0.0
  %v6662 = vmax.f32 %v6406, 0.0
  %v6663 = vmax.f32 %v6407, 0.0
  %v6664 = vmax.f32 %v6408, 0.0
  %v6665 = vmax.f32 %v6409, 0.0
  %v6666 = vmax.f32 %v6410, 0.0
  %v6667 = vmax.f32 %v6411, 0.0
  %v6668 = vmax.f32 %v6412, 0.0
  %v6669 = vmax.f32 %v6413, 0.0
  %v6670 = vmax.f32 %v6414, 0.0
  %v6671 = vmax.f32 %v6415, 0.0
  %v6672 = vmax.f32 %v6416, 0.0
  %v6673 = vmax.f32 %v6417, 0.0
  %v6674 = vmax.f32 %v6418, 0.0
  %v6675 = vmax.f32 %v6419, 0.0
  %v6676 = vmax.f32 %v6420, 0.0
  %v6677 = vld [vmem:[%s4] sm:$0xff]
  %v6678 = vld [vmem:[%s4 + $0x8] sm:$0xff]
  %v6679 = vld [vmem:[%s4 + $0x10] sm:$0xff]
  %v6680 = vld [vmem:[%s4 + $0x18] sm:$0xff]
  %v6681 = vld [vmem:[%s4 + $0x20] sm:$0xff]
  %v6682 = vld [vmem:[%s4 + $0x28] sm:$0xff]
  %v6683 = vld [vmem:[%s4 + $0x30] sm:$0xff]
  %v6684 = vld [vmem:[%s4 + $0x38] sm:$0xff]
  %v6685 = vld [vmem:[%s4 + $0x40] sm:$0xff]
  %v6686 = vld [vmem:[%s4 + $0x48] sm:$0xff]
  %v6687 = vld [vmem:[%s4 + $0x50] sm:$0xff]
  %v6688 = vld [vmem:[%s4 + $0x58] sm:$0xff]
  %v6689 = vld [vmem:[%s4 + $0x60] sm:$0xff]
  %v6690 = vld [vmem:[%s4 + $0x68] sm:$0xff]
  %v6691 = vld [vmem:[%s4 + $0x70] sm:$0xff]
  %v6692 = vld [vmem:[%s4 + $0x78] sm:$0xff]
  %v6693 = vld [vmem:[%s4 + $0x80] sm:$0xff]
  %v6694 = vld [vmem:[%s4 + $0x88] sm:$0xff]
  %v6695 = vld [vmem:[%s4 + $0x90] sm:$0xff]
  %v6696 = vld [vmem:[%s4 + $0x98] sm:$0xff]
  %v6697 = vld [vmem:[%s4 + $0xa0] sm:$0xff]
  %v6698 = vld [vmem:[%s4 + $0xa8] sm:$0xff]
  %v6699 = vld [vmem:[%s4 + $0xb0] sm:$0xff]
  %v6700 = vld [vmem:[%s4 + $0xb8] sm:$0xff]
  %v6701 = vld [vmem:[%s4 + $0xc0] sm:$0xff]
  %v6702 = vld [vmem:[%s4 + $0xc8] sm:$0xff]
  %v6703 = vld [vmem:[%s4 + $0xd0] sm:$0xff]
  %v6704 = vld [vmem:[%s4 + $0xd8] sm:$0xff]
  %v6705 = vld [vmem:[%s4 + $0xe0] sm:$0xff]
  %v6706 = vld [vmem:[%s4 + $0xe8] sm:$0xff]
  %v6707 = vld [vmem:[%s4 + $0xf0] sm:$0xff]
  %v6708 = vld [vmem:[%s4 + $0xf8] sm:$0xff]
  %v6709 = vld [vmem:[%s4 + $0x100] sm:$0xff]
  %v6710 = vld [vmem:[%s4 + $0x108] sm:$0xff]
  %v6711 = vld [vmem:[%s4 + $0x110] sm:$0xff]
  %v6712 = vld [vmem:[%s4 + $0x118] sm:$0xff]
  %v6713 = vld [vmem:[%s4 + $0x120] sm:$0xff]
  %v6714 = vld [vmem:[%s4 + $0x128] sm:$0xff]
  %v6715 = vld [vmem:[%s4 + $0x130] sm:$0xff]
  %v6716 = vld [vmem:[%s4 + $0x138] sm:$0xff]
  %v6717 = vld [vmem:[%s4 + $0x140] sm:$0xff]
  %v6718 = vld [vmem:[%s4 + $0x148] sm:$0xff]
  %v6719 = vld [vmem:[%s4 + $0x150] sm:$0xff]
  %v6720 = vld [vmem:[%s4 + $0x158] sm:$0xff]
  %v6721 = vld [vmem:[%s4 + $0x160] sm:$0xff]
  %v6722 = vld [vmem:[%s4 + $0x168] sm:$0xff]
  %v6723 = vld [vmem:[%s4 + $0x170] sm:$0xff]
  %v6724 = vld [vmem:[%s4 + $0x178] sm:$0xff]
  %v6725 = vld [vmem:[%s4 + $0x180] sm:$0xff]
  %v6726 = vld [vmem:[%s4 + $0x188] sm:$0xff]
  %v6727 = vld [vmem:[%s4 + $0x190] sm:$0xff]
  %v6728 = vld [vmem:[%s4 + $0x198] sm:$0xff]
  %v6729 = vld [vmem:[%s4 + $0x1a0] sm:$0xff]
  %v6730 = vld [vmem:[%s4 + $0x1a8] sm:$0xff]
  %v6731 = vld [vmem:[%s4 + $0x1b0] sm:$0xff]
  %v6732 = vld [vmem:[%s4 + $0x1b8] sm:$0xff]
  %v6733 = vld [vmem:[%s4 + $0x1c0] sm:$0xff]
  %v6734 = vld [vmem:[%s4 + $0x1c8] sm:$0xff]
  %v6735 = vld [vmem:[%s4 + $0x1d0] sm:$0xff]
  %v6736 = vld [vmem:[%s4 + $0x1d8] sm:$0xff]
  %v6737 = vld [vmem:[%s4 + $0x1e0] sm:$0xff]
  %v6738 = vld [vmem:[%s4 + $0x1e8] sm:$0xff]
  %v6739 = vld [vmem:[%s4 + $0x1f0] sm:$0xff]
  %v6740 = vld [vmem:[%s4 + $0x1f8] sm:$0xff]
  %v6741 = vld [vmem:[%s4 + $0x200] sm:$0xff]
  %v6742 = vld [vmem:[%s4 + $0x208] sm:$0xff]
  %v6743 = vld [vmem:[%s4 + $0x210] sm:$0xff]
  %v6744 = vld [vmem:[%s4 + $0x218] sm:$0xff]
  %v6745 = vld [vmem:[%s4 + $0x220] sm:$0xff]
  %v6746 = vld [vmem:[%s4 + $0x228] sm:$0xff]
  %v6747 = vld [vmem:[%s4 + $0x230] sm:$0xff]
  %v6748 = vld [vmem:[%s4 + $0x238] sm:$0xff]
  %v6749 = vld [vmem:[%s4 + $0x240] sm:$0xff]
  %v6750 = vld [vmem:[%s4 + $0x248] sm:$0xff]
  %v6751 = vld [vmem:[%s4 + $0x250] sm:$0xff]
  %v6752 = vld [vmem:[%s4 + $0x258] sm:$0xff]
  %v6753 = vld [vmem:[%s4 + $0x260] sm:$0xff]
  %v6754 = vld [vmem:[%s4 + $0x268] sm:$0xff]
  %v6755 = vld [vmem:[%s4 + $0x270] sm:$0xff]
  %v6756 = vld [vmem:[%s4 + $0x278] sm:$0xff]
  %v6757 = vld [vmem:[%s4 + $0x280] sm:$0xff]
  %v6758 = vld [vmem:[%s4 + $0x288] sm:$0xff]
  %v6759 = vld [vmem:[%s4 + $0x290] sm:$0xff]
  %v6760 = vld [vmem:[%s4 + $0x298] sm:$0xff]
  %v6761 = vld [vmem:[%s4 + $0x2a0] sm:$0xff]
  %v6762 = vld [vmem:[%s4 + $0x2a8] sm:$0xff]
  %v6763 = vld [vmem:[%s4 + $0x2b0] sm:$0xff]
  %v6764 = vld [vmem:[%s4 + $0x2b8] sm:$0xff]
  %v6765 = vld [vmem:[%s4 + $0x2c0] sm:$0xff]
  %v6766 = vld [vmem:[%s4 + $0x2c8] sm:$0xff]
  %v6767 = vld [vmem:[%s4 + $0x2d0] sm:$0xff]
  %v6768 = vld [vmem:[%s4 + $0x2d8] sm:$0xff]
  %v6769 = vld [vmem:[%s4 + $0x2e0] sm:$0xff]
  %v6770 = vld [vmem:[%s4 + $0x2e8] sm:$0xff]
  %v6771 = vld [vmem:[%s4 + $0x2f0] sm:$0xff]
  %v6772 = vld [vmem:[%s4 + $0x2f8] sm:$0xff]
  %v6773 = vld [vmem:[%s4 + $0x300] sm:$0xff]
  %v6774 = vld [vmem:[%s4 + $0x308] sm:$0xff]
  %v6775 = vld [vmem:[%s4 + $0x310] sm:$0xff]
  %v6776 = vld [vmem:[%s4 + $0x318] sm:$0xff]
  %v6777 = vld [vmem:[%s4 + $0x320] sm:$0xff]
  %v6778 = vld [vmem:[%s4 + $0x328] sm:$0xff]
  %v6779 = vld [vmem:[%s4 + $0x330] sm:$0xff]
  %v6780 = vld [vmem:[%s4 + $0x338] sm:$0xff]
  %v6781 = vld [vmem:[%s4 + $0x340] sm:$0xff]
  %v6782 = vld [vmem:[%s4 + $0x348] sm:$0xff]
  %v6783 = vld [vmem:[%s4 + $0x350] sm:$0xff]
  %v6784 = vld [vmem:[%s4 + $0x358] sm:$0xff]
  %v6785 = vld [vmem:[%s4 + $0x360] sm:$0xff]
  %v6786 = vld [vmem:[%s4 + $0x368] sm:$0xff]
  %v6787 = vld [vmem:[%s4 + $0x370] sm:$0xff]
  %v6788 = vld [vmem:[%s4 + $0x378] sm:$0xff]
  %v6789 = vld [vmem:[%s4 + $0x380] sm:$0xff]
  %v6790 = vld [vmem:[%s4 + $0x388] sm:$0xff]
  %v6791 = vld [vmem:[%s4 + $0x390] sm:$0xff]
  %v6792 = vld [vmem:[%s4 + $0x398] sm:$0xff]
  %v6793 = vld [vmem:[%s4 + $0x3a0] sm:$0xff]
  %v6794 = vld [vmem:[%s4 + $0x3a8] sm:$0xff]
  %v6795 = vld [vmem:[%s4 + $0x3b0] sm:$0xff]
  %v6796 = vld [vmem:[%s4 + $0x3b8] sm:$0xff]
  %v6797 = vld [vmem:[%s4 + $0x3c0] sm:$0xff]
  %v6798 = vld [vmem:[%s4 + $0x3c8] sm:$0xff]
  %v6799 = vld [vmem:[%s4 + $0x3d0] sm:$0xff]
  %v6800 = vld [vmem:[%s4 + $0x3d8] sm:$0xff]
  %v6801 = vld [vmem:[%s4 + $0x3e0] sm:$0xff]
  %v6802 = vld [vmem:[%s4 + $0x3e8] sm:$0xff]
  %v6803 = vld [vmem:[%s4 + $0x3f0] sm:$0xff]
  %v6804 = vld [vmem:[%s4 + $0x3f8] sm:$0xff]
  %v6805 = vpack.c.bf16 %v6423, %v6421
  %v6806 = vpack.c.bf16 %v6424, %v6422
  %v6807 = vpack.c.bf16 %v6427, %v6425
  %v6808 = vpack.c.bf16 %v6428, %v6426
  %v6809 = vpack.c.bf16 %v6431, %v6429
  %v6810 = vpack.c.bf16 %v6432, %v6430
  %v6811 = vpack.c.bf16 %v6435, %v6433
  %v6812 = vpack.c.bf16 %v6436, %v6434
  %v6813 = vpack.c.bf16 %v6439, %v6437
  %v6814 = vpack.c.bf16 %v6440, %v6438
  %v6815 = vpack.c.bf16 %v6443, %v6441
  %v6816 = vpack.c.bf16 %v6444, %v6442
  %v6817 = vpack.c.bf16 %v6447, %v6445
  %v6818 = vpack.c.bf16 %v6448, %v6446
  %v6819 = vpack.c.bf16 %v6451, %v6449
  %v6820 = vpack.c.bf16 %v6452, %v6450
  %v6821 = vpack.c.bf16 %v6455, %v6453
  %v6822 = vpack.c.bf16 %v6456, %v6454
  %v6823 = vpack.c.bf16 %v6459, %v6457
  %v6824 = vpack.c.bf16 %v6460, %v6458
  %v6825 = vpack.c.bf16 %v6463, %v6461
  %v6826 = vpack.c.bf16 %v6464, %v6462
  %v6827 = vpack.c.bf16 %v6467, %v6465
  %v6828 = vpack.c.bf16 %v6468, %v6466
  %v6829 = vpack.c.bf16 %v6471, %v6469
  %v6830 = vpack.c.bf16 %v6472, %v6470
  %v6831 = vpack.c.bf16 %v6475, %v6473
  %v6832 = vpack.c.bf16 %v6476, %v6474
  %v6833 = vpack.c.bf16 %v6479, %v6477
  %v6834 = vpack.c.bf16 %v6480, %v6478
  %v6835 = vpack.c.bf16 %v6483, %v6481
  %v6836 = vpack.c.bf16 %v6484, %v6482
  %v6837 = vpack.c.bf16 %v6487, %v6485
  %v6838 = vpack.c.bf16 %v6488, %v6486
  %v6839 = vpack.c.bf16 %v6491, %v6489
  %v6840 = vpack.c.bf16 %v6492, %v6490
  %v6841 = vpack.c.bf16 %v6495, %v6493
  %v6842 = vpack.c.bf16 %v6496, %v6494
  %v6843 = vpack.c.bf16 %v6499, %v6497
  %v6844 = vpack.c.bf16 %v6500, %v6498
  %v6845 = vpack.c.bf16 %v6503, %v6501
  %v6846 = vpack.c.bf16 %v6504, %v6502
  %v6847 = vpack.c.bf16 %v6507, %v6505
  %v6848 = vpack.c.bf16 %v6508, %v6506
  %v6849 = vpack.c.bf16 %v6511, %v6509
  %v6850 = vpack.c.bf16 %v6512, %v6510
  %v6851 = vpack.c.bf16 %v6515, %v6513
  %v6852 = vpack.c.bf16 %v6516, %v6514
  %v6853 = vpack.c.bf16 %v6519, %v6517
  %v6854 = vpack.c.bf16 %v6520, %v6518
  %v6855 = vpack.c.bf16 %v6523, %v6521
  %v6856 = vpack.c.bf16 %v6524, %v6522
  %v6857 = vpack.c.bf16 %v6527, %v6525
  %v6858 = vpack.c.bf16 %v6528, %v6526
  %v6859 = vpack.c.bf16 %v6531, %v6529
  %v6860 = vpack.c.bf16 %v6532, %v6530
  %v6861 = vpack.c.bf16 %v6535, %v6533
  %v6862 = vpack.c.bf16 %v6536, %v6534
  %v6863 = vpack.c.bf16 %v6539, %v6537
  %v6864 = vpack.c.bf16 %v6540, %v6538
  %v6865 = vpack.c.bf16 %v6543, %v6541
  %v6866 = vpack.c.bf16 %v6544, %v6542
  %v6867 = vpack.c.bf16 %v6547, %v6545
  %v6868 = vpack.c.bf16 %v6548, %v6546
  %v6869 = vpack.c.bf16 %v6551, %v6549
  %v6870 = vpack.c.bf16 %v6552, %v6550
  %v6871 = vpack.c.bf16 %v6555, %v6553
  %v6872 = vpack.c.bf16 %v6556, %v6554
  %v6873 = vpack.c.bf16 %v6559, %v6557
  %v6874 = vpack.c.bf16 %v6560, %v6558
  %v6875 = vpack.c.bf16 %v6563, %v6561
  %v6876 = vpack.c.bf16 %v6564, %v6562
  %v6877 = vpack.c.bf16 %v6567, %v6565
  %v6878 = vpack.c.bf16 %v6568, %v6566
  %v6879 = vpack.c.bf16 %v6571, %v6569
  %v6880 = vpack.c.bf16 %v6572, %v6570
  %v6881 = vpack.c.bf16 %v6575, %v6573
  %v6882 = vpack.c.bf16 %v6576, %v6574
  %v6883 = vpack.c.bf16 %v6579, %v6577
  %v6884 = vpack.c.bf16 %v6580, %v6578
  %v6885 = vpack.c.bf16 %v6583, %v6581
  %v6886 = vpack.c.bf16 %v6584, %v6582
  %v6887 = vpack.c.bf16 %v6587, %v6585
  %v6888 = vpack.c.bf16 %v6588, %v6586
  %v6889 = vpack.c.bf16 %v6591, %v6589
  %v6890 = vpack.c.bf16 %v6592, %v6590
  %v6891 = vpack.c.bf16 %v6595, %v6593
  %v6892 = vpack.c.bf16 %v6596, %v6594
  %v6893 = vpack.c.bf16 %v6599, %v6597
  %v6894 = vpack.c.bf16 %v6600, %v6598
  %v6895 = vpack.c.bf16 %v6603, %v6601
  %v6896 = vpack.c.bf16 %v6604, %v6602
  %v6897 = vpack.c.bf16 %v6607, %v6605
  %v6898 = vpack.c.bf16 %v6608, %v6606
  %v6899 = vpack.c.bf16 %v6611, %v6609
  %v6900 = vpack.c.bf16 %v6612, %v6610
  %v6901 = vpack.c.bf16 %v6615, %v6613
  %v6902 = vpack.c.bf16 %v6616, %v6614
  %v6903 = vpack.c.bf16 %v6619, %v6617
  %v6904 = vpack.c.bf16 %v6620, %v6618
  %v6905 = vpack.c.bf16 %v6623, %v6621
  %v6906 = vpack.c.bf16 %v6624, %v6622
  %v6907 = vpack.c.bf16 %v6627, %v6625
  %v6908 = vpack.c.bf16 %v6628, %v6626
  %v6909 = vpack.c.bf16 %v6631, %v6629
  %v6910 = vpack.c.bf16 %v6632, %v6630
  %v6911 = vpack.c.bf16 %v6635, %v6633
  %v6912 = vpack.c.bf16 %v6636, %v6634
  %v6913 = vpack.c.bf16 %v6639, %v6637
  %v6914 = vpack.c.bf16 %v6640, %v6638
  %v6915 = vpack.c.bf16 %v6643, %v6641
  %v6916 = vpack.c.bf16 %v6644, %v6642
  %v6917 = vpack.c.bf16 %v6647, %v6645
  %v6918 = vpack.c.bf16 %v6648, %v6646
  %v6919 = vpack.c.bf16 %v6651, %v6649
  %v6920 = vpack.c.bf16 %v6652, %v6650
  %v6921 = vpack.c.bf16 %v6655, %v6653
  %v6922 = vpack.c.bf16 %v6656, %v6654
  %v6923 = vpack.c.bf16 %v6659, %v6657
  %v6924 = vpack.c.bf16 %v6660, %v6658
  %v6925 = vpack.c.bf16 %v6663, %v6661
  %v6926 = vpack.c.bf16 %v6664, %v6662
  %v6927 = vpack.c.bf16 %v6667, %v6665
  %v6928 = vpack.c.bf16 %v6668, %v6666
  %v6929 = vpack.c.bf16 %v6671, %v6669
  %v6930 = vpack.c.bf16 %v6672, %v6670
  %v6931 = vpack.c.bf16 %v6675, %v6673
  %v6932 = vpack.c.bf16 %v6676, %v6674
  %v7061 = vunpack.c.l.b16 %v6677
  %v7062 = vunpack.c.h.b16 %v6677
  %v7063 = vunpack.c.l.b16 %v6678
  %v7064 = vunpack.c.h.b16 %v6678
  %v7065 = vunpack.c.l.b16 %v6679
  %v7066 = vunpack.c.h.b16 %v6679
  %v7067 = vunpack.c.l.b16 %v6680
  %v7068 = vunpack.c.h.b16 %v6680
  %v7069 = vunpack.c.l.b16 %v6681
  %v7070 = vunpack.c.h.b16 %v6681
  %v7071 = vunpack.c.l.b16 %v6682
  %v7072 = vunpack.c.h.b16 %v6682
  %v7073 = vunpack.c.l.b16 %v6683
  %v7074 = vunpack.c.h.b16 %v6683
  %v7075 = vunpack.c.l.b16 %v6684
  %v7076 = vunpack.c.h.b16 %v6684
  %v7077 = vunpack.c.l.b16 %v6685
  %v7078 = vunpack.c.h.b16 %v6685
  %v7079 = vunpack.c.l.b16 %v6686
  %v7080 = vunpack.c.h.b16 %v6686
  %v7081 = vunpack.c.l.b16 %v6687
  %v7082 = vunpack.c.h.b16 %v6687
  %v7083 = vunpack.c.l.b16 %v6688
  %v7084 = vunpack.c.h.b16 %v6688
  %v7085 = vunpack.c.l.b16 %v6689
  %v7086 = vunpack.c.h.b16 %v6689
  %v7087 = vunpack.c.l.b16 %v6690
  %v7088 = vunpack.c.h.b16 %v6690
  %v7089 = vunpack.c.l.b16 %v6691
  %v7090 = vunpack.c.h.b16 %v6691
  %v7091 = vunpack.c.l.b16 %v6692
  %v7092 = vunpack.c.h.b16 %v6692
  %v7093 = vunpack.c.l.b16 %v6693
  %v7094 = vunpack.c.h.b16 %v6693
  %v7095 = vunpack.c.l.b16 %v6694
  %v7096 = vunpack.c.h.b16 %v6694
  %v7097 = vunpack.c.l.b16 %v6695
  %v7098 = vunpack.c.h.b16 %v6695
  %v7099 = vunpack.c.l.b16 %v6696
  %v7100 = vunpack.c.h.b16 %v6696
  %v7101 = vunpack.c.l.b16 %v6697
  %v7102 = vunpack.c.h.b16 %v6697
  %v7103 = vunpack.c.l.b16 %v6698
  %v7104 = vunpack.c.h.b16 %v6698
  %v7105 = vunpack.c.l.b16 %v6699
  %v7106 = vunpack.c.h.b16 %v6699
  %v7107 = vunpack.c.l.b16 %v6700
  %v7108 = vunpack.c.h.b16 %v6700
  %v7109 = vunpack.c.l.b16 %v6701
  %v7110 = vunpack.c.h.b16 %v6701
  %v7111 = vunpack.c.l.b16 %v6702
  %v7112 = vunpack.c.h.b16 %v6702
  %v7113 = vunpack.c.l.b16 %v6703
  %v7114 = vunpack.c.h.b16 %v6703
  %v7115 = vunpack.c.l.b16 %v6704
  %v7116 = vunpack.c.h.b16 %v6704
  %v7117 = vunpack.c.l.b16 %v6705
  %v7118 = vunpack.c.h.b16 %v6705
  %v7119 = vunpack.c.l.b16 %v6706
  %v7120 = vunpack.c.h.b16 %v6706
  %v7121 = vunpack.c.l.b16 %v6707
  %v7122 = vunpack.c.h.b16 %v6707
  %v7123 = vunpack.c.l.b16 %v6708
  %v7124 = vunpack.c.h.b16 %v6708
  %v7125 = vunpack.c.l.b16 %v6709
  %v7126 = vunpack.c.h.b16 %v6709
  %v7127 = vunpack.c.l.b16 %v6710
  %v7128 = vunpack.c.h.b16 %v6710
  %v7129 = vunpack.c.l.b16 %v6711
  %v7130 = vunpack.c.h.b16 %v6711
  %v7131 = vunpack.c.l.b16 %v6712
  %v7132 = vunpack.c.h.b16 %v6712
  %v7133 = vunpack.c.l.b16 %v6713
  %v7134 = vunpack.c.h.b16 %v6713
  %v7135 = vunpack.c.l.b16 %v6714
  %v7136 = vunpack.c.h.b16 %v6714
  %v7137 = vunpack.c.l.b16 %v6715
  %v7138 = vunpack.c.h.b16 %v6715
  %v7139 = vunpack.c.l.b16 %v6716
  %v7140 = vunpack.c.h.b16 %v6716
  %v7141 = vunpack.c.l.b16 %v6717
  %v7142 = vunpack.c.h.b16 %v6717
  %v7143 = vunpack.c.l.b16 %v6718
  %v7144 = vunpack.c.h.b16 %v6718
  %v7145 = vunpack.c.l.b16 %v6719
  %v7146 = vunpack.c.h.b16 %v6719
  %v7147 = vunpack.c.l.b16 %v6720
  %v7148 = vunpack.c.h.b16 %v6720
  %v7149 = vunpack.c.l.b16 %v6721
  %v7150 = vunpack.c.h.b16 %v6721
  %v7151 = vunpack.c.l.b16 %v6722
  %v7152 = vunpack.c.h.b16 %v6722
  %v7153 = vunpack.c.l.b16 %v6723
  %v7154 = vunpack.c.h.b16 %v6723
  %v7155 = vunpack.c.l.b16 %v6724
  %v7156 = vunpack.c.h.b16 %v6724
  %v7157 = vunpack.c.l.b16 %v6725
  %v7158 = vunpack.c.h.b16 %v6725
  %v7159 = vunpack.c.l.b16 %v6726
  %v7160 = vunpack.c.h.b16 %v6726
  %v7161 = vunpack.c.l.b16 %v6727
  %v7162 = vunpack.c.h.b16 %v6727
  %v7163 = vunpack.c.l.b16 %v6728
  %v7164 = vunpack.c.h.b16 %v6728
  %v7165 = vunpack.c.l.b16 %v6729
  %v7166 = vunpack.c.h.b16 %v6729
  %v7167 = vunpack.c.l.b16 %v6730
  %v7168 = vunpack.c.h.b16 %v6730
  %v7169 = vunpack.c.l.b16 %v6731
  %v7170 = vunpack.c.h.b16 %v6731
  %v7171 = vunpack.c.l.b16 %v6732
  %v7172 = vunpack.c.h.b16 %v6732
  %v7173 = vunpack.c.l.b16 %v6733
  %v7174 = vunpack.c.h.b16 %v6733
  %v7175 = vunpack.c.l.b16 %v6734
  %v7176 = vunpack.c.h.b16 %v6734
  %v7177 = vunpack.c.l.b16 %v6735
  %v7178 = vunpack.c.h.b16 %v6735
  %v7179 = vunpack.c.l.b16 %v6736
  %v7180 = vunpack.c.h.b16 %v6736
  %v7181 = vunpack.c.l.b16 %v6737
  %v7182 = vunpack.c.h.b16 %v6737
  %v7183 = vunpack.c.l.b16 %v6738
  %v7184 = vunpack.c.h.b16 %v6738
  %v7185 = vunpack.c.l.b16 %v6739
  %v7186 = vunpack.c.h.b16 %v6739
  %v7187 = vunpack.c.l.b16 %v6740
  %v7188 = vunpack.c.h.b16 %v6740
  %v7189 = vunpack.c.l.b16 %v6741
  %v7190 = vunpack.c.h.b16 %v6741
  %v7191 = vunpack.c.l.b16 %v6742
  %v7192 = vunpack.c.h.b16 %v6742
  %v7193 = vunpack.c.l.b16 %v6743
  %v7194 = vunpack.c.h.b16 %v6743
  %v7195 = vunpack.c.l.b16 %v6744
  %v7196 = vunpack.c.h.b16 %v6744
  %v7197 = vunpack.c.l.b16 %v6745
  %v7198 = vunpack.c.h.b16 %v6745
  %v7199 = vunpack.c.l.b16 %v6746
  %v7200 = vunpack.c.h.b16 %v6746
  %v7201 = vunpack.c.l.b16 %v6747
  %v7202 = vunpack.c.h.b16 %v6747
  %v7203 = vunpack.c.l.b16 %v6748
  %v7204 = vunpack.c.h.b16 %v6748
  %v7205 = vunpack.c.l.b16 %v6749
  %v7206 = vunpack.c.h.b16 %v6749
  %v7207 = vunpack.c.l.b16 %v6750
  %v7208 = vunpack.c.h.b16 %v6750
  %v7209 = vunpack.c.l.b16 %v6751
  %v7210 = vunpack.c.h.b16 %v6751
  %v7211 = vunpack.c.l.b16 %v6752
  %v7212 = vunpack.c.h.b16 %v6752
  %v7213 = vunpack.c.l.b16 %v6753
  %v7214 = vunpack.c.h.b16 %v6753
  %v7215 = vunpack.c.l.b16 %v6754
  %v7216 = vunpack.c.h.b16 %v6754
  %v7217 = vunpack.c.l.b16 %v6755
  %v7218 = vunpack.c.h.b16 %v6755
  %v7219 = vunpack.c.l.b16 %v6756
  %v7220 = vunpack.c.h.b16 %v6756
  %v7221 = vunpack.c.l.b16 %v6757
  %v7222 = vunpack.c.h.b16 %v6757
  %v7223 = vunpack.c.l.b16 %v6758
  %v7224 = vunpack.c.h.b16 %v6758
  %v7225 = vunpack.c.l.b16 %v6759
  %v7226 = vunpack.c.h.b16 %v6759
  %v7227 = vunpack.c.l.b16 %v6760
  %v7228 = vunpack.c.h.b16 %v6760
  %v7229 = vunpack.c.l.b16 %v6761
  %v7230 = vunpack.c.h.b16 %v6761
  %v7231 = vunpack.c.l.b16 %v6762
  %v7232 = vunpack.c.h.b16 %v6762
  %v7233 = vunpack.c.l.b16 %v6763
  %v7234 = vunpack.c.h.b16 %v6763
  %v7235 = vunpack.c.l.b16 %v6764
  %v7236 = vunpack.c.h.b16 %v6764
  %v7237 = vunpack.c.l.b16 %v6765
  %v7238 = vunpack.c.h.b16 %v6765
  %v7239 = vunpack.c.l.b16 %v6766
  %v7240 = vunpack.c.h.b16 %v6766
  %v7241 = vunpack.c.l.b16 %v6767
  %v7242 = vunpack.c.h.b16 %v6767
  %v7243 = vunpack.c.l.b16 %v6768
  %v7244 = vunpack.c.h.b16 %v6768
  %v7245 = vunpack.c.l.b16 %v6769
  %v7246 = vunpack.c.h.b16 %v6769
  %v7247 = vunpack.c.l.b16 %v6770
  %v7248 = vunpack.c.h.b16 %v6770
  %v7249 = vunpack.c.l.b16 %v6771
  %v7250 = vunpack.c.h.b16 %v6771
  %v7251 = vunpack.c.l.b16 %v6772
  %v7252 = vunpack.c.h.b16 %v6772
  %v7253 = vunpack.c.l.b16 %v6773
  %v7254 = vunpack.c.h.b16 %v6773
  %v7255 = vunpack.c.l.b16 %v6774
  %v7256 = vunpack.c.h.b16 %v6774
  %v7257 = vunpack.c.l.b16 %v6775
  %v7258 = vunpack.c.h.b16 %v6775
  %v7259 = vunpack.c.l.b16 %v6776
  %v7260 = vunpack.c.h.b16 %v6776
  %v7261 = vunpack.c.l.b16 %v6777
  %v7262 = vunpack.c.h.b16 %v6777
  %v7263 = vunpack.c.l.b16 %v6778
  %v7264 = vunpack.c.h.b16 %v6778
  %v7265 = vunpack.c.l.b16 %v6779
  %v7266 = vunpack.c.h.b16 %v6779
  %v7267 = vunpack.c.l.b16 %v6780
  %v7268 = vunpack.c.h.b16 %v6780
  %v7269 = vunpack.c.l.b16 %v6781
  %v7270 = vunpack.c.h.b16 %v6781
  %v7271 = vunpack.c.l.b16 %v6782
  %v7272 = vunpack.c.h.b16 %v6782
  %v7273 = vunpack.c.l.b16 %v6783
  %v7274 = vunpack.c.h.b16 %v6783
  %v7275 = vunpack.c.l.b16 %v6784
  %v7276 = vunpack.c.h.b16 %v6784
  %v7277 = vunpack.c.l.b16 %v6785
  %v7278 = vunpack.c.h.b16 %v6785
  %v7279 = vunpack.c.l.b16 %v6786
  %v7280 = vunpack.c.h.b16 %v6786
  %v7281 = vunpack.c.l.b16 %v6787
  %v7282 = vunpack.c.h.b16 %v6787
  %v7283 = vunpack.c.l.b16 %v6788
  %v7284 = vunpack.c.h.b16 %v6788
  %v7285 = vunpack.c.l.b16 %v6789
  %v7286 = vunpack.c.h.b16 %v6789
  %v7287 = vunpack.c.l.b16 %v6790
  %v7288 = vunpack.c.h.b16 %v6790
  %v7289 = vunpack.c.l.b16 %v6791
  %v7290 = vunpack.c.h.b16 %v6791
  %v7291 = vunpack.c.l.b16 %v6792
  %v7292 = vunpack.c.h.b16 %v6792
  %v7293 = vunpack.c.l.b16 %v6793
  %v7294 = vunpack.c.h.b16 %v6793
  %v7295 = vunpack.c.l.b16 %v6794
  %v7296 = vunpack.c.h.b16 %v6794
  %v7297 = vunpack.c.l.b16 %v6795
  %v7298 = vunpack.c.h.b16 %v6795
  %v7299 = vunpack.c.l.b16 %v6796
  %v7300 = vunpack.c.h.b16 %v6796
  %v7301 = vunpack.c.l.b16 %v6797
  %v7302 = vunpack.c.h.b16 %v6797
  %v7303 = vunpack.c.l.b16 %v6798
  %v7304 = vunpack.c.h.b16 %v6798
  %v7305 = vunpack.c.l.b16 %v6799
  %v7306 = vunpack.c.h.b16 %v6799
  %v7307 = vunpack.c.l.b16 %v6800
  %v7308 = vunpack.c.h.b16 %v6800
  %v7309 = vunpack.c.l.b16 %v6801
  %v7310 = vunpack.c.h.b16 %v6801
  %v7311 = vunpack.c.l.b16 %v6802
  %v7312 = vunpack.c.h.b16 %v6802
  %v7313 = vunpack.c.l.b16 %v6803
  %v7314 = vunpack.c.h.b16 %v6803
  %v7315 = vunpack.c.l.b16 %v6804
  %v7316 = vunpack.c.h.b16 %v6804
  %v7317 = vpack.c.b16 %v7069, %v7061
  %v7318 = vpack.c.b16 %v7070, %v7062
  %v7319 = vpack.c.b16 %v7071, %v7063
  %v7320 = vpack.c.b16 %v7072, %v7064
  %v7321 = vpack.c.b16 %v7073, %v7065
  %v7322 = vpack.c.b16 %v7074, %v7066
  %v7323 = vpack.c.b16 %v7075, %v7067
  %v7324 = vpack.c.b16 %v7076, %v7068
  %v7325 = vpack.c.b16 %v7085, %v7077
  %v7326 = vpack.c.b16 %v7086, %v7078
  %v7327 = vpack.c.b16 %v7087, %v7079
  %v7328 = vpack.c.b16 %v7088, %v7080
  %v7329 = vpack.c.b16 %v7089, %v7081
  %v7330 = vpack.c.b16 %v7090, %v7082
  %v7331 = vpack.c.b16 %v7091, %v7083
  %v7332 = vpack.c.b16 %v7092, %v7084
  %v7333 = vpack.c.b16 %v7101, %v7093
  %v7334 = vpack.c.b16 %v7102, %v7094
  %v7335 = vpack.c.b16 %v7103, %v7095
  %v7336 = vpack.c.b16 %v7104, %v7096
  %v7337 = vpack.c.b16 %v7105, %v7097
  %v7338 = vpack.c.b16 %v7106, %v7098
  %v7339 = vpack.c.b16 %v7107, %v7099
  %v7340 = vpack.c.b16 %v7108, %v7100
  %v7341 = vpack.c.b16 %v7117, %v7109
  %v7342 = vpack.c.b16 %v7118, %v7110
  %v7343 = vpack.c.b16 %v7119, %v7111
  %v7344 = vpack.c.b16 %v7120, %v7112
  %v7345 = vpack.c.b16 %v7121, %v7113
  %v7346 = vpack.c.b16 %v7122, %v7114
  %v7347 = vpack.c.b16 %v7123, %v7115
  %v7348 = vpack.c.b16 %v7124, %v7116
  %v7349 = vpack.c.b16 %v7133, %v7125
  %v7350 = vpack.c.b16 %v7134, %v7126
  %v7351 = vpack.c.b16 %v7135, %v7127
  %v7352 = vpack.c.b16 %v7136, %v7128
  %v7353 = vpack.c.b16 %v7137, %v7129
  %v7354 = vpack.c.b16 %v7138, %v7130
  %v7355 = vpack.c.b16 %v7139, %v7131
  %v7356 = vpack.c.b16 %v7140, %v7132
  %v7357 = vpack.c.b16 %v7149, %v7141
  %v7358 = vpack.c.b16 %v7150, %v7142
  %v7359 = vpack.c.b16 %v7151, %v7143
  %v7360 = vpack.c.b16 %v7152, %v7144
  %v7361 = vpack.c.b16 %v7153, %v7145
  %v7362 = vpack.c.b16 %v7154, %v7146
  %v7363 = vpack.c.b16 %v7155, %v7147
  %v7364 = vpack.c.b16 %v7156, %v7148
  %v7365 = vpack.c.b16 %v7165, %v7157
  %v7366 = vpack.c.b16 %v7166, %v7158
  %v7367 = vpack.c.b16 %v7167, %v7159
  %v7368 = vpack.c.b16 %v7168, %v7160
  %v7369 = vpack.c.b16 %v7169, %v7161
  %v7370 = vpack.c.b16 %v7170, %v7162
  %v7371 = vpack.c.b16 %v7171, %v7163
  %v7372 = vpack.c.b16 %v7172, %v7164
  %v7373 = vpack.c.b16 %v7181, %v7173
  %v7374 = vpack.c.b16 %v7182, %v7174
  %v7375 = vpack.c.b16 %v7183, %v7175
  %v7376 = vpack.c.b16 %v7184, %v7176
  %v7377 = vpack.c.b16 %v7185, %v7177
  %v7378 = vpack.c.b16 %v7186, %v7178
  %v7379 = vpack.c.b16 %v7187, %v7179
  %v7380 = vpack.c.b16 %v7188, %v7180
  %v7381 = vpack.c.b16 %v7197, %v7189
  %v7382 = vpack.c.b16 %v7198, %v7190
  %v7383 = vpack.c.b16 %v7199, %v7191
  %v7384 = vpack.c.b16 %v7200, %v7192
  %v7385 = vpack.c.b16 %v7201, %v7193
  %v7386 = vpack.c.b16 %v7202, %v7194
  %v7387 = vpack.c.b16 %v7203, %v7195
  %v7388 = vpack.c.b16 %v7204, %v7196
  %v7389 = vpack.c.b16 %v7213, %v7205
  %v7390 = vpack.c.b16 %v7214, %v7206
  %v7391 = vpack.c.b16 %v7215, %v7207
  %v7392 = vpack.c.b16 %v7216, %v7208
  %v7393 = vpack.c.b16 %v7217, %v7209
  %v7394 = vpack.c.b16 %v7218, %v7210
  %v7395 = vpack.c.b16 %v7219, %v7211
  %v7396 = vpack.c.b16 %v7220, %v7212
  %v7397 = vpack.c.b16 %v7229, %v7221
  %v7398 = vpack.c.b16 %v7230, %v7222
  %v7399 = vpack.c.b16 %v7231, %v7223
  %v7400 = vpack.c.b16 %v7232, %v7224
  %v7401 = vpack.c.b16 %v7233, %v7225
  %v7402 = vpack.c.b16 %v7234, %v7226
  %v7403 = vpack.c.b16 %v7235, %v7227
  %v7404 = vpack.c.b16 %v7236, %v7228
  %v7405 = vpack.c.b16 %v7245, %v7237
  %v7406 = vpack.c.b16 %v7246, %v7238
  %v7407 = vpack.c.b16 %v7247, %v7239
  %v7408 = vpack.c.b16 %v7248, %v7240
  %v7409 = vpack.c.b16 %v7249, %v7241
  %v7410 = vpack.c.b16 %v7250, %v7242
  %v7411 = vpack.c.b16 %v7251, %v7243
  %v7412 = vpack.c.b16 %v7252, %v7244
  %v7413 = vpack.c.b16 %v7261, %v7253
  %v7414 = vpack.c.b16 %v7262, %v7254
  %v7415 = vpack.c.b16 %v7263, %v7255
  %v7416 = vpack.c.b16 %v7264, %v7256
  %v7417 = vpack.c.b16 %v7265, %v7257
  %v7418 = vpack.c.b16 %v7266, %v7258
  %v7419 = vpack.c.b16 %v7267, %v7259
  %v7420 = vpack.c.b16 %v7268, %v7260
  %v7421 = vpack.c.b16 %v7277, %v7269
  %v7422 = vpack.c.b16 %v7278, %v7270
  %v7423 = vpack.c.b16 %v7279, %v7271
  %v7424 = vpack.c.b16 %v7280, %v7272
  %v7425 = vpack.c.b16 %v7281, %v7273
  %v7426 = vpack.c.b16 %v7282, %v7274
  %v7427 = vpack.c.b16 %v7283, %v7275
  %v7428 = vpack.c.b16 %v7284, %v7276
  %v7429 = vpack.c.b16 %v7293, %v7285
  %v7430 = vpack.c.b16 %v7294, %v7286
  %v7431 = vpack.c.b16 %v7295, %v7287
  %v7432 = vpack.c.b16 %v7296, %v7288
  %v7433 = vpack.c.b16 %v7297, %v7289
  %v7434 = vpack.c.b16 %v7298, %v7290
  %v7435 = vpack.c.b16 %v7299, %v7291
  %v7436 = vpack.c.b16 %v7300, %v7292
  %v7437 = vpack.c.b16 %v7309, %v7301
  %v7438 = vpack.c.b16 %v7310, %v7302
  %v7439 = vpack.c.b16 %v7311, %v7303
  %v7440 = vpack.c.b16 %v7312, %v7304
  %v7441 = vpack.c.b16 %v7313, %v7305
  %v7442 = vpack.c.b16 %v7314, %v7306
  %v7443 = vpack.c.b16 %v7315, %v7307
  %v7444 = vpack.c.b16 %v7316, %v7308
  %7573 = vmatpush.bf16.msra.mxu0 %v6819
  %7574 = vmatpush.bf16.msra.mxu0 %v6817
  %7575 = vmatpush.bf16.msra.mxu0 %v6815
  %7576 = vmatpush.bf16.msra.mxu0 %v6813
  %7577 = vmatpush.bf16.msra.mxu0 %v6811
  %7578 = vmatpush.bf16.msra.mxu0 %v6809
  %7579 = vmatpush.bf16.msra.mxu0 %v6807
  %7580 = vmatpush.bf16.msra.mxu0 %v6805
  %7581 = vmatmul.bf16.gmra.mxu0 %v7317
  %v7582 = vpop.f32.mrf.mxu0
  %v7583 = vadd.f32 0.0, %v7582
  %v7584 = vpop.f32.mrf.mxu0
  %v7585 = vadd.f32 0.0, %v7584
  %7586 = vmatmul.bf16.gmra.mxu0 %v7325
  %v7587 = vpop.f32.mrf.mxu0
  %v7588 = vadd.f32 0.0, %v7587
  %v7589 = vpop.f32.mrf.mxu0
  %v7590 = vadd.f32 0.0, %v7589
  %7591 = vmatmul.bf16.gmra.mxu0 %v7333
  %v7592 = vpop.f32.mrf.mxu0
  %v7593 = vadd.f32 0.0, %v7592
  %v7594 = vpop.f32.mrf.mxu0
  %v7595 = vadd.f32 0.0, %v7594
  %7596 = vmatmul.bf16.gmra.mxu0 %v7341
  %v7597 = vpop.f32.mrf.mxu0
  %v7598 = vadd.f32 0.0, %v7597
  %v7599 = vpop.f32.mrf.mxu0
  %v7600 = vadd.f32 0.0, %v7599
  %7601 = vmatmul.bf16.gmra.mxu0 %v7349
  %v7602 = vpop.f32.mrf.mxu0
  %v7603 = vadd.f32 0.0, %v7602
  %v7604 = vpop.f32.mrf.mxu0
  %v7605 = vadd.f32 0.0, %v7604
  %7606 = vmatmul.bf16.gmra.mxu0 %v7357
  %v7607 = vpop.f32.mrf.mxu0
  %v7608 = vadd.f32 0.0, %v7607
  %v7609 = vpop.f32.mrf.mxu0
  %v7610 = vadd.f32 0.0, %v7609
  %7611 = vmatmul.bf16.gmra.mxu0 %v7365
  %v7612 = vpop.f32.mrf.mxu0
  %v7613 = vadd.f32 0.0, %v7612
  %v7614 = vpop.f32.mrf.mxu0
  %v7615 = vadd.f32 0.0, %v7614
  %7616 = vmatmul.bf16.gmra.mxu0 %v7373
  %v7617 = vpop.f32.mrf.mxu0
  %v7618 = vadd.f32 0.0, %v7617
  %v7619 = vpop.f32.mrf.mxu0
  %v7620 = vadd.f32 0.0, %v7619
  %7621 = vmatmul.bf16.gmra.mxu0 %v7381
  %v7622 = vpop.f32.mrf.mxu0
  %v7623 = vadd.f32 0.0, %v7622
  %v7624 = vpop.f32.mrf.mxu0
  %v7625 = vadd.f32 0.0, %v7624
  %7626 = vmatmul.bf16.gmra.mxu0 %v7389
  %v7627 = vpop.f32.mrf.mxu0
  %v7628 = vadd.f32 0.0, %v7627
  %v7629 = vpop.f32.mrf.mxu0
  %v7630 = vadd.f32 0.0, %v7629
  %7631 = vmatmul.bf16.gmra.mxu0 %v7397
  %v7632 = vpop.f32.mrf.mxu0
  %v7633 = vadd.f32 0.0, %v7632
  %v7634 = vpop.f32.mrf.mxu0
  %v7635 = vadd.f32 0.0, %v7634
  %7636 = vmatmul.bf16.gmra.mxu0 %v7405
  %v7637 = vpop.f32.mrf.mxu0
  %v7638 = vadd.f32 0.0, %v7637
  %v7639 = vpop.f32.mrf.mxu0
  %v7640 = vadd.f32 0.0, %v7639
  %7641 = vmatmul.bf16.gmra.mxu0 %v7413
  %v7642 = vpop.f32.mrf.mxu0
  %v7643 = vadd.f32 0.0, %v7642
  %v7644 = vpop.f32.mrf.mxu0
  %v7645 = vadd.f32 0.0, %v7644
  %7646 = vmatmul.bf16.gmra.mxu0 %v7421
  %v7647 = vpop.f32.mrf.mxu0
  %v7648 = vadd.f32 0.0, %v7647
  %v7649 = vpop.f32.mrf.mxu0
  %v7650 = vadd.f32 0.0, %v7649
  %7651 = vmatmul.bf16.gmra.mxu0 %v7429
  %v7652 = vpop.f32.mrf.mxu0
  %v7653 = vadd.f32 0.0, %v7652
  %v7654 = vpop.f32.mrf.mxu0
  %v7655 = vadd.f32 0.0, %v7654
  %7656 = vmatmul.bf16.gmra.mxu0 %v7437
  %v7657 = vpop.f32.mrf.mxu0
  %v7658 = vadd.f32 0.0, %v7657
  %v7659 = vpop.f32.mrf.mxu0
  %v7660 = vadd.f32 0.0, %v7659
  %7661 = vdwg.mxu0
  %7662 = vmatpush.bf16.msra.mxu0 %v6835
  %7663 = vmatpush.bf16.msra.mxu0 %v6833
  %7664 = vmatpush.bf16.msra.mxu0 %v6831
  %7665 = vmatpush.bf16.msra.mxu0 %v6829
  %7666 = vmatpush.bf16.msra.mxu0 %v6827
  %7667 = vmatpush.bf16.msra.mxu0 %v6825
  %7668 = vmatpush.bf16.msra.mxu0 %v6823
  %7669 = vmatpush.bf16.msra.mxu0 %v6821
  %7670 = vmatmul.bf16.gmra.mxu0 %v7318
  %v7671 = vpop.f32.mrf.mxu0
  %v7672 = vadd.f32 %v7583, %v7671
  %v7673 = vpop.f32.mrf.mxu0
  %v7674 = vadd.f32 %v7585, %v7673
  %7675 = vmatmul.bf16.gmra.mxu0 %v7326
  %v7676 = vpop.f32.mrf.mxu0
  %v7677 = vadd.f32 %v7588, %v7676
  %v7678 = vpop.f32.mrf.mxu0
  %v7679 = vadd.f32 %v7590, %v7678
  %7680 = vmatmul.bf16.gmra.mxu0 %v7334
  %v7681 = vpop.f32.mrf.mxu0
  %v7682 = vadd.f32 %v7593, %v7681
  %v7683 = vpop.f32.mrf.mxu0
  %v7684 = vadd.f32 %v7595, %v7683
  %7685 = vmatmul.bf16.gmra.mxu0 %v7342
  %v7686 = vpop.f32.mrf.mxu0
  %v7687 = vadd.f32 %v7598, %v7686
  %v7688 = vpop.f32.mrf.mxu0
  %v7689 = vadd.f32 %v7600, %v7688
  %7690 = vmatmul.bf16.gmra.mxu0 %v7350
  %v7691 = vpop.f32.mrf.mxu0
  %v7692 = vadd.f32 %v7603, %v7691
  %v7693 = vpop.f32.mrf.mxu0
  %v7694 = vadd.f32 %v7605, %v7693
  %7695 = vmatmul.bf16.gmra.mxu0 %v7358
  %v7696 = vpop.f32.mrf.mxu0
  %v7697 = vadd.f32 %v7608, %v7696
  %v7698 = vpop.f32.mrf.mxu0
  %v7699 = vadd.f32 %v7610, %v7698
  %7700 = vmatmul.bf16.gmra.mxu0 %v7366
  %v7701 = vpop.f32.mrf.mxu0
  %v7702 = vadd.f32 %v7613, %v7701
  %v7703 = vpop.f32.mrf.mxu0
  %v7704 = vadd.f32 %v7615, %v7703
  %7705 = vmatmul.bf16.gmra.mxu0 %v7374
  %v7706 = vpop.f32.mrf.mxu0
  %v7707 = vadd.f32 %v7618, %v7706
  %v7708 = vpop.f32.mrf.mxu0
  %v7709 = vadd.f32 %v7620, %v7708
  %7710 = vmatmul.bf16.gmra.mxu0 %v7382
  %v7711 = vpop.f32.mrf.mxu0
  %v7712 = vadd.f32 %v7623, %v7711
  %v7713 = vpop.f32.mrf.mxu0
  %v7714 = vadd.f32 %v7625, %v7713
  %7715 = vmatmul.bf16.gmra.mxu0 %v7390
  %v7716 = vpop.f32.mrf.mxu0
  %v7717 = vadd.f32 %v7628, %v7716
  %v7718 = vpop.f32.mrf.mxu0
  %v7719 = vadd.f32 %v7630, %v7718
  %7720 = vmatmul.bf16.gmra.mxu0 %v7398
  %v7721 = vpop.f32.mrf.mxu0
  %v7722 = vadd.f32 %v7633, %v7721
  %v7723 = vpop.f32.mrf.mxu0
  %v7724 = vadd.f32 %v7635, %v7723
  %7725 = vmatmul.bf16.gmra.mxu0 %v7406
  %v7726 = vpop.f32.mrf.mxu0
  %v7727 = vadd.f32 %v7638, %v7726
  %v7728 = vpop.f32.mrf.mxu0
  %v7729 = vadd.f32 %v7640, %v7728
  %7730 = vmatmul.bf16.gmra.mxu0 %v7414
  %v7731 = vpop.f32.mrf.mxu0
  %v7732 = vadd.f32 %v7643, %v7731
  %v7733 = vpop.f32.mrf.mxu0
  %v7734 = vadd.f32 %v7645, %v7733
  %7735 = vmatmul.bf16.gmra.mxu0 %v7422
  %v7736 = vpop.f32.mrf.mxu0
  %v7737 = vadd.f32 %v7648, %v7736
  %v7738 = vpop.f32.mrf.mxu0
  %v7739 = vadd.f32 %v7650, %v7738
  %7740 = vmatmul.bf16.gmra.mxu0 %v7430
  %v7741 = vpop.f32.mrf.mxu0
  %v7742 = vadd.f32 %v7653, %v7741
  %v7743 = vpop.f32.mrf.mxu0
  %v7744 = vadd.f32 %v7655, %v7743
  %7745 = vmatmul.bf16.gmra.mxu0 %v7438
  %v7746 = vpop.f32.mrf.mxu0
  %v7747 = vadd.f32 %v7658, %v7746
  %v7748 = vpop.f32.mrf.mxu0
  %v7749 = vadd.f32 %v7660, %v7748
  %7750 = vdwg.mxu0
  %7751 = vmatpush.bf16.msra.mxu0 %v6851
  %7752 = vmatpush.bf16.msra.mxu0 %v6849
  %7753 = vmatpush.bf16.msra.mxu0 %v6847
  %7754 = vmatpush.bf16.msra.mxu0 %v6845
  %7755 = vmatpush.bf16.msra.mxu0 %v6843
  %7756 = vmatpush.bf16.msra.mxu0 %v6841
  %7757 = vmatpush.bf16.msra.mxu0 %v6839
  %7758 = vmatpush.bf16.msra.mxu0 %v6837
  %7759 = vmatmul.bf16.gmra.mxu0 %v7319
  %v7760 = vpop.f32.mrf.mxu0
  %v7761 = vadd.f32 %v7672, %v7760
  %v7762 = vpop.f32.mrf.mxu0
  %v7763 = vadd.f32 %v7674, %v7762
  %7764 = vmatmul.bf16.gmra.mxu0 %v7327
  %v7765 = vpop.f32.mrf.mxu0
  %v7766 = vadd.f32 %v7677, %v7765
  %v7767 = vpop.f32.mrf.mxu0
  %v7768 = vadd.f32 %v7679, %v7767
  %7769 = vmatmul.bf16.gmra.mxu0 %v7335
  %v7770 = vpop.f32.mrf.mxu0
  %v7771 = vadd.f32 %v7682, %v7770
  %v7772 = vpop.f32.mrf.mxu0
  %v7773 = vadd.f32 %v7684, %v7772
  %7774 = vmatmul.bf16.gmra.mxu0 %v7343
  %v7775 = vpop.f32.mrf.mxu0
  %v7776 = vadd.f32 %v7687, %v7775
  %v7777 = vpop.f32.mrf.mxu0
  %v7778 = vadd.f32 %v7689, %v7777
  %7779 = vmatmul.bf16.gmra.mxu0 %v7351
  %v7780 = vpop.f32.mrf.mxu0
  %v7781 = vadd.f32 %v7692, %v7780
  %v7782 = vpop.f32.mrf.mxu0
  %v7783 = vadd.f32 %v7694, %v7782
  %7784 = vmatmul.bf16.gmra.mxu0 %v7359
  %v7785 = vpop.f32.mrf.mxu0
  %v7786 = vadd.f32 %v7697, %v7785
  %v7787 = vpop.f32.mrf.mxu0
  %v7788 = vadd.f32 %v7699, %v7787
  %7789 = vmatmul.bf16.gmra.mxu0 %v7367
  %v7790 = vpop.f32.mrf.mxu0
  %v7791 = vadd.f32 %v7702, %v7790
  %v7792 = vpop.f32.mrf.mxu0
  %v7793 = vadd.f32 %v7704, %v7792
  %7794 = vmatmul.bf16.gmra.mxu0 %v7375
  %v7795 = vpop.f32.mrf.mxu0
  %v7796 = vadd.f32 %v7707, %v7795
  %v7797 = vpop.f32.mrf.mxu0
  %v7798 = vadd.f32 %v7709, %v7797
  %7799 = vmatmul.bf16.gmra.mxu0 %v7383
  %v7800 = vpop.f32.mrf.mxu0
  %v7801 = vadd.f32 %v7712, %v7800
  %v7802 = vpop.f32.mrf.mxu0
  %v7803 = vadd.f32 %v7714, %v7802
  %7804 = vmatmul.bf16.gmra.mxu0 %v7391
  %v7805 = vpop.f32.mrf.mxu0
  %v7806 = vadd.f32 %v7717, %v7805
  %v7807 = vpop.f32.mrf.mxu0
  %v7808 = vadd.f32 %v7719, %v7807
  %7809 = vmatmul.bf16.gmra.mxu0 %v7399
  %v7810 = vpop.f32.mrf.mxu0
  %v7811 = vadd.f32 %v7722, %v7810
  %v7812 = vpop.f32.mrf.mxu0
  %v7813 = vadd.f32 %v7724, %v7812
  %7814 = vmatmul.bf16.gmra.mxu0 %v7407
  %v7815 = vpop.f32.mrf.mxu0
  %v7816 = vadd.f32 %v7727, %v7815
  %v7817 = vpop.f32.mrf.mxu0
  %v7818 = vadd.f32 %v7729, %v7817
  %7819 = vmatmul.bf16.gmra.mxu0 %v7415
  %v7820 = vpop.f32.mrf.mxu0
  %v7821 = vadd.f32 %v7732, %v7820
  %v7822 = vpop.f32.mrf.mxu0
  %v7823 = vadd.f32 %v7734, %v7822
  %7824 = vmatmul.bf16.gmra.mxu0 %v7423
  %v7825 = vpop.f32.mrf.mxu0
  %v7826 = vadd.f32 %v7737, %v7825
  %v7827 = vpop.f32.mrf.mxu0
  %v7828 = vadd.f32 %v7739, %v7827
  %7829 = vmatmul.bf16.gmra.mxu0 %v7431
  %v7830 = vpop.f32.mrf.mxu0
  %v7831 = vadd.f32 %v7742, %v7830
  %v7832 = vpop.f32.mrf.mxu0
  %v7833 = vadd.f32 %v7744, %v7832
  %7834 = vmatmul.bf16.gmra.mxu0 %v7439
  %v7835 = vpop.f32.mrf.mxu0
  %v7836 = vadd.f32 %v7747, %v7835
  %v7837 = vpop.f32.mrf.mxu0
  %v7838 = vadd.f32 %v7749, %v7837
  %7839 = vdwg.mxu0
  %7840 = vmatpush.bf16.msra.mxu0 %v6867
  %7841 = vmatpush.bf16.msra.mxu0 %v6865
  %7842 = vmatpush.bf16.msra.mxu0 %v6863
  %7843 = vmatpush.bf16.msra.mxu0 %v6861
  %7844 = vmatpush.bf16.msra.mxu0 %v6859
  %7845 = vmatpush.bf16.msra.mxu0 %v6857
  %7846 = vmatpush.bf16.msra.mxu0 %v6855
  %7847 = vmatpush.bf16.msra.mxu0 %v6853
  %7848 = vmatmul.bf16.gmra.mxu0 %v7320
  %v7849 = vpop.f32.mrf.mxu0
  %v7850 = vadd.f32 %v7761, %v7849
  %v7851 = vpop.f32.mrf.mxu0
  %v7852 = vadd.f32 %v7763, %v7851
  %7853 = vmatmul.bf16.gmra.mxu0 %v7328
  %v7854 = vpop.f32.mrf.mxu0
  %v7855 = vadd.f32 %v7766, %v7854
  %v7856 = vpop.f32.mrf.mxu0
  %v7857 = vadd.f32 %v7768, %v7856
  %7858 = vmatmul.bf16.gmra.mxu0 %v7336
  %v7859 = vpop.f32.mrf.mxu0
  %v7860 = vadd.f32 %v7771, %v7859
  %v7861 = vpop.f32.mrf.mxu0
  %v7862 = vadd.f32 %v7773, %v7861
  %7863 = vmatmul.bf16.gmra.mxu0 %v7344
  %v7864 = vpop.f32.mrf.mxu0
  %v7865 = vadd.f32 %v7776, %v7864
  %v7866 = vpop.f32.mrf.mxu0
  %v7867 = vadd.f32 %v7778, %v7866
  %7868 = vmatmul.bf16.gmra.mxu0 %v7352
  %v7869 = vpop.f32.mrf.mxu0
  %v7870 = vadd.f32 %v7781, %v7869
  %v7871 = vpop.f32.mrf.mxu0
  %v7872 = vadd.f32 %v7783, %v7871
  %7873 = vmatmul.bf16.gmra.mxu0 %v7360
  %v7874 = vpop.f32.mrf.mxu0
  %v7875 = vadd.f32 %v7786, %v7874
  %v7876 = vpop.f32.mrf.mxu0
  %v7877 = vadd.f32 %v7788, %v7876
  %7878 = vmatmul.bf16.gmra.mxu0 %v7368
  %v7879 = vpop.f32.mrf.mxu0
  %v7880 = vadd.f32 %v7791, %v7879
  %v7881 = vpop.f32.mrf.mxu0
  %v7882 = vadd.f32 %v7793, %v7881
  %7883 = vmatmul.bf16.gmra.mxu0 %v7376
  %v7884 = vpop.f32.mrf.mxu0
  %v7885 = vadd.f32 %v7796, %v7884
  %v7886 = vpop.f32.mrf.mxu0
  %v7887 = vadd.f32 %v7798, %v7886
  %7888 = vmatmul.bf16.gmra.mxu0 %v7384
  %v7889 = vpop.f32.mrf.mxu0
  %v7890 = vadd.f32 %v7801, %v7889
  %v7891 = vpop.f32.mrf.mxu0
  %v7892 = vadd.f32 %v7803, %v7891
  %7893 = vmatmul.bf16.gmra.mxu0 %v7392
  %v7894 = vpop.f32.mrf.mxu0
  %v7895 = vadd.f32 %v7806, %v7894
  %v7896 = vpop.f32.mrf.mxu0
  %v7897 = vadd.f32 %v7808, %v7896
  %7898 = vmatmul.bf16.gmra.mxu0 %v7400
  %v7899 = vpop.f32.mrf.mxu0
  %v7900 = vadd.f32 %v7811, %v7899
  %v7901 = vpop.f32.mrf.mxu0
  %v7902 = vadd.f32 %v7813, %v7901
  %7903 = vmatmul.bf16.gmra.mxu0 %v7408
  %v7904 = vpop.f32.mrf.mxu0
  %v7905 = vadd.f32 %v7816, %v7904
  %v7906 = vpop.f32.mrf.mxu0
  %v7907 = vadd.f32 %v7818, %v7906
  %7908 = vmatmul.bf16.gmra.mxu0 %v7416
  %v7909 = vpop.f32.mrf.mxu0
  %v7910 = vadd.f32 %v7821, %v7909
  %v7911 = vpop.f32.mrf.mxu0
  %v7912 = vadd.f32 %v7823, %v7911
  %7913 = vmatmul.bf16.gmra.mxu0 %v7424
  %v7914 = vpop.f32.mrf.mxu0
  %v7915 = vadd.f32 %v7826, %v7914
  %v7916 = vpop.f32.mrf.mxu0
  %v7917 = vadd.f32 %v7828, %v7916
  %7918 = vmatmul.bf16.gmra.mxu0 %v7432
  %v7919 = vpop.f32.mrf.mxu0
  %v7920 = vadd.f32 %v7831, %v7919
  %v7921 = vpop.f32.mrf.mxu0
  %v7922 = vadd.f32 %v7833, %v7921
  %7923 = vmatmul.bf16.gmra.mxu0 %v7440
  %v7924 = vpop.f32.mrf.mxu0
  %v7925 = vadd.f32 %v7836, %v7924
  %v7926 = vpop.f32.mrf.mxu0
  %v7927 = vadd.f32 %v7838, %v7926
  %7928 = vdwg.mxu0
  %7929 = vmatpush.bf16.msra.mxu0 %v6883
  %7930 = vmatpush.bf16.msra.mxu0 %v6881
  %7931 = vmatpush.bf16.msra.mxu0 %v6879
  %7932 = vmatpush.bf16.msra.mxu0 %v6877
  %7933 = vmatpush.bf16.msra.mxu0 %v6875
  %7934 = vmatpush.bf16.msra.mxu0 %v6873
  %7935 = vmatpush.bf16.msra.mxu0 %v6871
  %7936 = vmatpush.bf16.msra.mxu0 %v6869
  %7937 = vmatmul.bf16.gmra.mxu0 %v7321
  %v7938 = vpop.f32.mrf.mxu0
  %v7939 = vadd.f32 %v7850, %v7938
  %v7940 = vpop.f32.mrf.mxu0
  %v7941 = vadd.f32 %v7852, %v7940
  %7942 = vmatmul.bf16.gmra.mxu0 %v7329
  %v7943 = vpop.f32.mrf.mxu0
  %v7944 = vadd.f32 %v7855, %v7943
  %v7945 = vpop.f32.mrf.mxu0
  %v7946 = vadd.f32 %v7857, %v7945
  %7947 = vmatmul.bf16.gmra.mxu0 %v7337
  %v7948 = vpop.f32.mrf.mxu0
  %v7949 = vadd.f32 %v7860, %v7948
  %v7950 = vpop.f32.mrf.mxu0
  %v7951 = vadd.f32 %v7862, %v7950
  %7952 = vmatmul.bf16.gmra.mxu0 %v7345
  %v7953 = vpop.f32.mrf.mxu0
  %v7954 = vadd.f32 %v7865, %v7953
  %v7955 = vpop.f32.mrf.mxu0
  %v7956 = vadd.f32 %v7867, %v7955
  %7957 = vmatmul.bf16.gmra.mxu0 %v7353
  %v7958 = vpop.f32.mrf.mxu0
  %v7959 = vadd.f32 %v7870, %v7958
  %v7960 = vpop.f32.mrf.mxu0
  %v7961 = vadd.f32 %v7872, %v7960
  %7962 = vmatmul.bf16.gmra.mxu0 %v7361
  %v7963 = vpop.f32.mrf.mxu0
  %v7964 = vadd.f32 %v7875, %v7963
  %v7965 = vpop.f32.mrf.mxu0
  %v7966 = vadd.f32 %v7877, %v7965
  %7967 = vmatmul.bf16.gmra.mxu0 %v7369
  %v7968 = vpop.f32.mrf.mxu0
  %v7969 = vadd.f32 %v7880, %v7968
  %v7970 = vpop.f32.mrf.mxu0
  %v7971 = vadd.f32 %v7882, %v7970
  %7972 = vmatmul.bf16.gmra.mxu0 %v7377
  %v7973 = vpop.f32.mrf.mxu0
  %v7974 = vadd.f32 %v7885, %v7973
  %v7975 = vpop.f32.mrf.mxu0
  %v7976 = vadd.f32 %v7887, %v7975
  %7977 = vmatmul.bf16.gmra.mxu0 %v7385
  %v7978 = vpop.f32.mrf.mxu0
  %v7979 = vadd.f32 %v7890, %v7978
  %v7980 = vpop.f32.mrf.mxu0
  %v7981 = vadd.f32 %v7892, %v7980
  %7982 = vmatmul.bf16.gmra.mxu0 %v7393
  %v7983 = vpop.f32.mrf.mxu0
  %v7984 = vadd.f32 %v7895, %v7983
  %v7985 = vpop.f32.mrf.mxu0
  %v7986 = vadd.f32 %v7897, %v7985
  %7987 = vmatmul.bf16.gmra.mxu0 %v7401
  %v7988 = vpop.f32.mrf.mxu0
  %v7989 = vadd.f32 %v7900, %v7988
  %v7990 = vpop.f32.mrf.mxu0
  %v7991 = vadd.f32 %v7902, %v7990
  %7992 = vmatmul.bf16.gmra.mxu0 %v7409
  %v7993 = vpop.f32.mrf.mxu0
  %v7994 = vadd.f32 %v7905, %v7993
  %v7995 = vpop.f32.mrf.mxu0
  %v7996 = vadd.f32 %v7907, %v7995
  %7997 = vmatmul.bf16.gmra.mxu0 %v7417
  %v7998 = vpop.f32.mrf.mxu0
  %v7999 = vadd.f32 %v7910, %v7998
  %v8000 = vpop.f32.mrf.mxu0
  %v8001 = vadd.f32 %v7912, %v8000
  %8002 = vmatmul.bf16.gmra.mxu0 %v7425
  %v8003 = vpop.f32.mrf.mxu0
  %v8004 = vadd.f32 %v7915, %v8003
  %v8005 = vpop.f32.mrf.mxu0
  %v8006 = vadd.f32 %v7917, %v8005
  %8007 = vmatmul.bf16.gmra.mxu0 %v7433
  %v8008 = vpop.f32.mrf.mxu0
  %v8009 = vadd.f32 %v7920, %v8008
  %v8010 = vpop.f32.mrf.mxu0
  %v8011 = vadd.f32 %v7922, %v8010
  %8012 = vmatmul.bf16.gmra.mxu0 %v7441
  %v8013 = vpop.f32.mrf.mxu0
  %v8014 = vadd.f32 %v7925, %v8013
  %v8015 = vpop.f32.mrf.mxu0
  %v8016 = vadd.f32 %v7927, %v8015
  %8017 = vdwg.mxu0
  %8018 = vmatpush.bf16.msra.mxu0 %v6899
  %8019 = vmatpush.bf16.msra.mxu0 %v6897
  %8020 = vmatpush.bf16.msra.mxu0 %v6895
  %8021 = vmatpush.bf16.msra.mxu0 %v6893
  %8022 = vmatpush.bf16.msra.mxu0 %v6891
  %8023 = vmatpush.bf16.msra.mxu0 %v6889
  %8024 = vmatpush.bf16.msra.mxu0 %v6887
  %8025 = vmatpush.bf16.msra.mxu0 %v6885
  %8026 = vmatmul.bf16.gmra.mxu0 %v7322
  %v8027 = vpop.f32.mrf.mxu0
  %v8028 = vadd.f32 %v7939, %v8027
  %v8029 = vpop.f32.mrf.mxu0
  %v8030 = vadd.f32 %v7941, %v8029
  %8031 = vmatmul.bf16.gmra.mxu0 %v7330
  %v8032 = vpop.f32.mrf.mxu0
  %v8033 = vadd.f32 %v7944, %v8032
  %v8034 = vpop.f32.mrf.mxu0
  %v8035 = vadd.f32 %v7946, %v8034
  %8036 = vmatmul.bf16.gmra.mxu0 %v7338
  %v8037 = vpop.f32.mrf.mxu0
  %v8038 = vadd.f32 %v7949, %v8037
  %v8039 = vpop.f32.mrf.mxu0
  %v8040 = vadd.f32 %v7951, %v8039
  %8041 = vmatmul.bf16.gmra.mxu0 %v7346
  %v8042 = vpop.f32.mrf.mxu0
  %v8043 = vadd.f32 %v7954, %v8042
  %v8044 = vpop.f32.mrf.mxu0
  %v8045 = vadd.f32 %v7956, %v8044
  %8046 = vmatmul.bf16.gmra.mxu0 %v7354
  %v8047 = vpop.f32.mrf.mxu0
  %v8048 = vadd.f32 %v7959, %v8047
  %v8049 = vpop.f32.mrf.mxu0
  %v8050 = vadd.f32 %v7961, %v8049
  %8051 = vmatmul.bf16.gmra.mxu0 %v7362
  %v8052 = vpop.f32.mrf.mxu0
  %v8053 = vadd.f32 %v7964, %v8052
  %v8054 = vpop.f32.mrf.mxu0
  %v8055 = vadd.f32 %v7966, %v8054
  %8056 = vmatmul.bf16.gmra.mxu0 %v7370
  %v8057 = vpop.f32.mrf.mxu0
  %v8058 = vadd.f32 %v7969, %v8057
  %v8059 = vpop.f32.mrf.mxu0
  %v8060 = vadd.f32 %v7971, %v8059
  %8061 = vmatmul.bf16.gmra.mxu0 %v7378
  %v8062 = vpop.f32.mrf.mxu0
  %v8063 = vadd.f32 %v7974, %v8062
  %v8064 = vpop.f32.mrf.mxu0
  %v8065 = vadd.f32 %v7976, %v8064
  %8066 = vmatmul.bf16.gmra.mxu0 %v7386
  %v8067 = vpop.f32.mrf.mxu0
  %v8068 = vadd.f32 %v7979, %v8067
  %v8069 = vpop.f32.mrf.mxu0
  %v8070 = vadd.f32 %v7981, %v8069
  %8071 = vmatmul.bf16.gmra.mxu0 %v7394
  %v8072 = vpop.f32.mrf.mxu0
  %v8073 = vadd.f32 %v7984, %v8072
  %v8074 = vpop.f32.mrf.mxu0
  %v8075 = vadd.f32 %v7986, %v8074
  %8076 = vmatmul.bf16.gmra.mxu0 %v7402
  %v8077 = vpop.f32.mrf.mxu0
  %v8078 = vadd.f32 %v7989, %v8077
  %v8079 = vpop.f32.mrf.mxu0
  %v8080 = vadd.f32 %v7991, %v8079
  %8081 = vmatmul.bf16.gmra.mxu0 %v7410
  %v8082 = vpop.f32.mrf.mxu0
  %v8083 = vadd.f32 %v7994, %v8082
  %v8084 = vpop.f32.mrf.mxu0
  %v8085 = vadd.f32 %v7996, %v8084
  %8086 = vmatmul.bf16.gmra.mxu0 %v7418
  %v8087 = vpop.f32.mrf.mxu0
  %v8088 = vadd.f32 %v7999, %v8087
  %v8089 = vpop.f32.mrf.mxu0
  %v8090 = vadd.f32 %v8001, %v8089
  %8091 = vmatmul.bf16.gmra.mxu0 %v7426
  %v8092 = vpop.f32.mrf.mxu0
  %v8093 = vadd.f32 %v8004, %v8092
  %v8094 = vpop.f32.mrf.mxu0
  %v8095 = vadd.f32 %v8006, %v8094
  %8096 = vmatmul.bf16.gmra.mxu0 %v7434
  %v8097 = vpop.f32.mrf.mxu0
  %v8098 = vadd.f32 %v8009, %v8097
  %v8099 = vpop.f32.mrf.mxu0
  %v8100 = vadd.f32 %v8011, %v8099
  %8101 = vmatmul.bf16.gmra.mxu0 %v7442
  %v8102 = vpop.f32.mrf.mxu0
  %v8103 = vadd.f32 %v8014, %v8102
  %v8104 = vpop.f32.mrf.mxu0
  %v8105 = vadd.f32 %v8016, %v8104
  %8106 = vdwg.mxu0
  %8107 = vmatpush.bf16.msra.mxu0 %v6915
  %8108 = vmatpush.bf16.msra.mxu0 %v6913
  %8109 = vmatpush.bf16.msra.mxu0 %v6911
  %8110 = vmatpush.bf16.msra.mxu0 %v6909
  %8111 = vmatpush.bf16.msra.mxu0 %v6907
  %8112 = vmatpush.bf16.msra.mxu0 %v6905
  %8113 = vmatpush.bf16.msra.mxu0 %v6903
  %8114 = vmatpush.bf16.msra.mxu0 %v6901
  %8115 = vmatmul.bf16.gmra.mxu0 %v7323
  %v8116 = vpop.f32.mrf.mxu0
  %v8117 = vadd.f32 %v8028, %v8116
  %v8118 = vpop.f32.mrf.mxu0
  %v8119 = vadd.f32 %v8030, %v8118
  %8120 = vmatmul.bf16.gmra.mxu0 %v7331
  %v8121 = vpop.f32.mrf.mxu0
  %v8122 = vadd.f32 %v8033, %v8121
  %v8123 = vpop.f32.mrf.mxu0
  %v8124 = vadd.f32 %v8035, %v8123
  %8125 = vmatmul.bf16.gmra.mxu0 %v7339
  %v8126 = vpop.f32.mrf.mxu0
  %v8127 = vadd.f32 %v8038, %v8126
  %v8128 = vpop.f32.mrf.mxu0
  %v8129 = vadd.f32 %v8040, %v8128
  %8130 = vmatmul.bf16.gmra.mxu0 %v7347
  %v8131 = vpop.f32.mrf.mxu0
  %v8132 = vadd.f32 %v8043, %v8131
  %v8133 = vpop.f32.mrf.mxu0
  %v8134 = vadd.f32 %v8045, %v8133
  %8135 = vmatmul.bf16.gmra.mxu0 %v7355
  %v8136 = vpop.f32.mrf.mxu0
  %v8137 = vadd.f32 %v8048, %v8136
  %v8138 = vpop.f32.mrf.mxu0
  %v8139 = vadd.f32 %v8050, %v8138
  %8140 = vmatmul.bf16.gmra.mxu0 %v7363
  %v8141 = vpop.f32.mrf.mxu0
  %v8142 = vadd.f32 %v8053, %v8141
  %v8143 = vpop.f32.mrf.mxu0
  %v8144 = vadd.f32 %v8055, %v8143
  %8145 = vmatmul.bf16.gmra.mxu0 %v7371
  %v8146 = vpop.f32.mrf.mxu0
  %v8147 = vadd.f32 %v8058, %v8146
  %v8148 = vpop.f32.mrf.mxu0
  %v8149 = vadd.f32 %v8060, %v8148
  %8150 = vmatmul.bf16.gmra.mxu0 %v7379
  %v8151 = vpop.f32.mrf.mxu0
  %v8152 = vadd.f32 %v8063, %v8151
  %v8153 = vpop.f32.mrf.mxu0
  %v8154 = vadd.f32 %v8065, %v8153
  %8155 = vmatmul.bf16.gmra.mxu0 %v7387
  %v8156 = vpop.f32.mrf.mxu0
  %v8157 = vadd.f32 %v8068, %v8156
  %v8158 = vpop.f32.mrf.mxu0
  %v8159 = vadd.f32 %v8070, %v8158
  %8160 = vmatmul.bf16.gmra.mxu0 %v7395
  %v8161 = vpop.f32.mrf.mxu0
  %v8162 = vadd.f32 %v8073, %v8161
  %v8163 = vpop.f32.mrf.mxu0
  %v8164 = vadd.f32 %v8075, %v8163
  %8165 = vmatmul.bf16.gmra.mxu0 %v7403
  %v8166 = vpop.f32.mrf.mxu0
  %v8167 = vadd.f32 %v8078, %v8166
  %v8168 = vpop.f32.mrf.mxu0
  %v8169 = vadd.f32 %v8080, %v8168
  %8170 = vmatmul.bf16.gmra.mxu0 %v7411
  %v8171 = vpop.f32.mrf.mxu0
  %v8172 = vadd.f32 %v8083, %v8171
  %v8173 = vpop.f32.mrf.mxu0
  %v8174 = vadd.f32 %v8085, %v8173
  %8175 = vmatmul.bf16.gmra.mxu0 %v7419
  %v8176 = vpop.f32.mrf.mxu0
  %v8177 = vadd.f32 %v8088, %v8176
  %v8178 = vpop.f32.mrf.mxu0
  %v8179 = vadd.f32 %v8090, %v8178
  %8180 = vmatmul.bf16.gmra.mxu0 %v7427
  %v8181 = vpop.f32.mrf.mxu0
  %v8182 = vadd.f32 %v8093, %v8181
  %v8183 = vpop.f32.mrf.mxu0
  %v8184 = vadd.f32 %v8095, %v8183
  %8185 = vmatmul.bf16.gmra.mxu0 %v7435
  %v8186 = vpop.f32.mrf.mxu0
  %v8187 = vadd.f32 %v8098, %v8186
  %v8188 = vpop.f32.mrf.mxu0
  %v8189 = vadd.f32 %v8100, %v8188
  %8190 = vmatmul.bf16.gmra.mxu0 %v7443
  %v8191 = vpop.f32.mrf.mxu0
  %v8192 = vadd.f32 %v8103, %v8191
  %v8193 = vpop.f32.mrf.mxu0
  %v8194 = vadd.f32 %v8105, %v8193
  %8195 = vdwg.mxu0
  %8196 = vmatpush.bf16.msra.mxu0 %v6931
  %8197 = vmatpush.bf16.msra.mxu0 %v6929
  %8198 = vmatpush.bf16.msra.mxu0 %v6927
  %8199 = vmatpush.bf16.msra.mxu0 %v6925
  %8200 = vmatpush.bf16.msra.mxu0 %v6923
  %8201 = vmatpush.bf16.msra.mxu0 %v6921
  %8202 = vmatpush.bf16.msra.mxu0 %v6919
  %8203 = vmatpush.bf16.msra.mxu0 %v6917
  %8204 = vmatmul.bf16.gmra.mxu0 %v7324
  %v8205 = vpop.f32.mrf.mxu0
  %v8206 = vadd.f32 %v8117, %v8205
  %v8207 = vpop.f32.mrf.mxu0
  %v8208 = vadd.f32 %v8119, %v8207
  %8209 = vmatmul.bf16.gmra.mxu0 %v7332
  %v8210 = vpop.f32.mrf.mxu0
  %v8211 = vadd.f32 %v8122, %v8210
  %v8212 = vpop.f32.mrf.mxu0
  %v8213 = vadd.f32 %v8124, %v8212
  %8214 = vmatmul.bf16.gmra.mxu0 %v7340
  %v8215 = vpop.f32.mrf.mxu0
  %v8216 = vadd.f32 %v8127, %v8215
  %v8217 = vpop.f32.mrf.mxu0
  %v8218 = vadd.f32 %v8129, %v8217
  %8219 = vmatmul.bf16.gmra.mxu0 %v7348
  %v8220 = vpop.f32.mrf.mxu0
  %v8221 = vadd.f32 %v8132, %v8220
  %v8222 = vpop.f32.mrf.mxu0
  %v8223 = vadd.f32 %v8134, %v8222
  %8224 = vmatmul.bf16.gmra.mxu0 %v7356
  %v8225 = vpop.f32.mrf.mxu0
  %v8226 = vadd.f32 %v8137, %v8225
  %v8227 = vpop.f32.mrf.mxu0
  %v8228 = vadd.f32 %v8139, %v8227
  %8229 = vmatmul.bf16.gmra.mxu0 %v7364
  %v8230 = vpop.f32.mrf.mxu0
  %v8231 = vadd.f32 %v8142, %v8230
  %v8232 = vpop.f32.mrf.mxu0
  %v8233 = vadd.f32 %v8144, %v8232
  %8234 = vmatmul.bf16.gmra.mxu0 %v7372
  %v8235 = vpop.f32.mrf.mxu0
  %v8236 = vadd.f32 %v8147, %v8235
  %v8237 = vpop.f32.mrf.mxu0
  %v8238 = vadd.f32 %v8149, %v8237
  %8239 = vmatmul.bf16.gmra.mxu0 %v7380
  %v8240 = vpop.f32.mrf.mxu0
  %v8241 = vadd.f32 %v8152, %v8240
  %v8242 = vpop.f32.mrf.mxu0
  %v8243 = vadd.f32 %v8154, %v8242
  %8244 = vmatmul.bf16.gmra.mxu0 %v7388
  %v8245 = vpop.f32.mrf.mxu0
  %v8246 = vadd.f32 %v8157, %v8245
  %v8247 = vpop.f32.mrf.mxu0
  %v8248 = vadd.f32 %v8159, %v8247
  %8249 = vmatmul.bf16.gmra.mxu0 %v7396
  %v8250 = vpop.f32.mrf.mxu0
  %v8251 = vadd.f32 %v8162, %v8250
  %v8252 = vpop.f32.mrf.mxu0
  %v8253 = vadd.f32 %v8164, %v8252
  %8254 = vmatmul.bf16.gmra.mxu0 %v7404
  %v8255 = vpop.f32.mrf.mxu0
  %v8256 = vadd.f32 %v8167, %v8255
  %v8257 = vpop.f32.mrf.mxu0
  %v8258 = vadd.f32 %v8169, %v8257
  %8259 = vmatmul.bf16.gmra.mxu0 %v7412
  %v8260 = vpop.f32.mrf.mxu0
  %v8261 = vadd.f32 %v8172, %v8260
  %v8262 = vpop.f32.mrf.mxu0
  %v8263 = vadd.f32 %v8174, %v8262
  %8264 = vmatmul.bf16.gmra.mxu0 %v7420
  %v8265 = vpop.f32.mrf.mxu0
  %v8266 = vadd.f32 %v8177, %v8265
  %v8267 = vpop.f32.mrf.mxu0
  %v8268 = vadd.f32 %v8179, %v8267
  %8269 = vmatmul.bf16.gmra.mxu0 %v7428
  %v8270 = vpop.f32.mrf.mxu0
  %v8271 = vadd.f32 %v8182, %v8270
  %v8272 = vpop.f32.mrf.mxu0
  %v8273 = vadd.f32 %v8184, %v8272
  %8274 = vmatmul.bf16.gmra.mxu0 %v7436
  %v8275 = vpop.f32.mrf.mxu0
  %v8276 = vadd.f32 %v8187, %v8275
  %v8277 = vpop.f32.mrf.mxu0
  %v8278 = vadd.f32 %v8189, %v8277
  %8279 = vmatmul.bf16.gmra.mxu0 %v7444
  %v8280 = vpop.f32.mrf.mxu0
  %v8281 = vadd.f32 %v8192, %v8280
  %v8282 = vpop.f32.mrf.mxu0
  %v8283 = vadd.f32 %v8194, %v8282
  %8284 = vdwg.mxu0
  %8285 = vmatpush.bf16.msra.mxu0 %v6820
  %8286 = vmatpush.bf16.msra.mxu0 %v6818
  %8287 = vmatpush.bf16.msra.mxu0 %v6816
  %8288 = vmatpush.bf16.msra.mxu0 %v6814
  %8289 = vmatpush.bf16.msra.mxu0 %v6812
  %8290 = vmatpush.bf16.msra.mxu0 %v6810
  %8291 = vmatpush.bf16.msra.mxu0 %v6808
  %8292 = vmatpush.bf16.msra.mxu0 %v6806
  %8293 = vmatmul.bf16.gmra.mxu0 %v7317
  %v8294 = vpop.f32.mrf.mxu0
  %v8295 = vadd.f32 0.0, %v8294
  %v8296 = vpop.f32.mrf.mxu0
  %v8297 = vadd.f32 0.0, %v8296
  %8298 = vmatmul.bf16.gmra.mxu0 %v7325
  %v8299 = vpop.f32.mrf.mxu0
  %v8300 = vadd.f32 0.0, %v8299
  %v8301 = vpop.f32.mrf.mxu0
  %v8302 = vadd.f32 0.0, %v8301
  %8303 = vmatmul.bf16.gmra.mxu0 %v7333
  %v8304 = vpop.f32.mrf.mxu0
  %v8305 = vadd.f32 0.0, %v8304
  %v8306 = vpop.f32.mrf.mxu0
  %v8307 = vadd.f32 0.0, %v8306
  %8308 = vmatmul.bf16.gmra.mxu0 %v7341
  %v8309 = vpop.f32.mrf.mxu0
  %v8310 = vadd.f32 0.0, %v8309
  %v8311 = vpop.f32.mrf.mxu0
  %v8312 = vadd.f32 0.0, %v8311
  %8313 = vmatmul.bf16.gmra.mxu0 %v7349
  %v8314 = vpop.f32.mrf.mxu0
  %v8315 = vadd.f32 0.0, %v8314
  %v8316 = vpop.f32.mrf.mxu0
  %v8317 = vadd.f32 0.0, %v8316
  %8318 = vmatmul.bf16.gmra.mxu0 %v7357
  %v8319 = vpop.f32.mrf.mxu0
  %v8320 = vadd.f32 0.0, %v8319
  %v8321 = vpop.f32.mrf.mxu0
  %v8322 = vadd.f32 0.0, %v8321
  %8323 = vmatmul.bf16.gmra.mxu0 %v7365
  %v8324 = vpop.f32.mrf.mxu0
  %v8325 = vadd.f32 0.0, %v8324
  %v8326 = vpop.f32.mrf.mxu0
  %v8327 = vadd.f32 0.0, %v8326
  %8328 = vmatmul.bf16.gmra.mxu0 %v7373
  %v8329 = vpop.f32.mrf.mxu0
  %v8330 = vadd.f32 0.0, %v8329
  %v8331 = vpop.f32.mrf.mxu0
  %v8332 = vadd.f32 0.0, %v8331
  %8333 = vmatmul.bf16.gmra.mxu0 %v7381
  %v8334 = vpop.f32.mrf.mxu0
  %v8335 = vadd.f32 0.0, %v8334
  %v8336 = vpop.f32.mrf.mxu0
  %v8337 = vadd.f32 0.0, %v8336
  %8338 = vmatmul.bf16.gmra.mxu0 %v7389
  %v8339 = vpop.f32.mrf.mxu0
  %v8340 = vadd.f32 0.0, %v8339
  %v8341 = vpop.f32.mrf.mxu0
  %v8342 = vadd.f32 0.0, %v8341
  %8343 = vmatmul.bf16.gmra.mxu0 %v7397
  %v8344 = vpop.f32.mrf.mxu0
  %v8345 = vadd.f32 0.0, %v8344
  %v8346 = vpop.f32.mrf.mxu0
  %v8347 = vadd.f32 0.0, %v8346
  %8348 = vmatmul.bf16.gmra.mxu0 %v7405
  %v8349 = vpop.f32.mrf.mxu0
  %v8350 = vadd.f32 0.0, %v8349
  %v8351 = vpop.f32.mrf.mxu0
  %v8352 = vadd.f32 0.0, %v8351
  %8353 = vmatmul.bf16.gmra.mxu0 %v7413
  %v8354 = vpop.f32.mrf.mxu0
  %v8355 = vadd.f32 0.0, %v8354
  %v8356 = vpop.f32.mrf.mxu0
  %v8357 = vadd.f32 0.0, %v8356
  %8358 = vmatmul.bf16.gmra.mxu0 %v7421
  %v8359 = vpop.f32.mrf.mxu0
  %v8360 = vadd.f32 0.0, %v8359
  %v8361 = vpop.f32.mrf.mxu0
  %v8362 = vadd.f32 0.0, %v8361
  %8363 = vmatmul.bf16.gmra.mxu0 %v7429
  %v8364 = vpop.f32.mrf.mxu0
  %v8365 = vadd.f32 0.0, %v8364
  %v8366 = vpop.f32.mrf.mxu0
  %v8367 = vadd.f32 0.0, %v8366
  %8368 = vmatmul.bf16.gmra.mxu0 %v7437
  %v8369 = vpop.f32.mrf.mxu0
  %v8370 = vadd.f32 0.0, %v8369
  %v8371 = vpop.f32.mrf.mxu0
  %v8372 = vadd.f32 0.0, %v8371
  %8373 = vdwg.mxu0
  %8374 = vmatpush.bf16.msra.mxu0 %v6836
  %8375 = vmatpush.bf16.msra.mxu0 %v6834
  %8376 = vmatpush.bf16.msra.mxu0 %v6832
  %8377 = vmatpush.bf16.msra.mxu0 %v6830
  %8378 = vmatpush.bf16.msra.mxu0 %v6828
  %8379 = vmatpush.bf16.msra.mxu0 %v6826
  %8380 = vmatpush.bf16.msra.mxu0 %v6824
  %8381 = vmatpush.bf16.msra.mxu0 %v6822
  %8382 = vmatmul.bf16.gmra.mxu0 %v7318
  %v8383 = vpop.f32.mrf.mxu0
  %v8384 = vadd.f32 %v8295, %v8383
  %v8385 = vpop.f32.mrf.mxu0
  %v8386 = vadd.f32 %v8297, %v8385
  %8387 = vmatmul.bf16.gmra.mxu0 %v7326
  %v8388 = vpop.f32.mrf.mxu0
  %v8389 = vadd.f32 %v8300, %v8388
  %v8390 = vpop.f32.mrf.mxu0
  %v8391 = vadd.f32 %v8302, %v8390
  %8392 = vmatmul.bf16.gmra.mxu0 %v7334
  %v8393 = vpop.f32.mrf.mxu0
  %v8394 = vadd.f32 %v8305, %v8393
  %v8395 = vpop.f32.mrf.mxu0
  %v8396 = vadd.f32 %v8307, %v8395
  %8397 = vmatmul.bf16.gmra.mxu0 %v7342
  %v8398 = vpop.f32.mrf.mxu0
  %v8399 = vadd.f32 %v8310, %v8398
  %v8400 = vpop.f32.mrf.mxu0
  %v8401 = vadd.f32 %v8312, %v8400
  %8402 = vmatmul.bf16.gmra.mxu0 %v7350
  %v8403 = vpop.f32.mrf.mxu0
  %v8404 = vadd.f32 %v8315, %v8403
  %v8405 = vpop.f32.mrf.mxu0
  %v8406 = vadd.f32 %v8317, %v8405
  %8407 = vmatmul.bf16.gmra.mxu0 %v7358
  %v8408 = vpop.f32.mrf.mxu0
  %v8409 = vadd.f32 %v8320, %v8408
  %v8410 = vpop.f32.mrf.mxu0
  %v8411 = vadd.f32 %v8322, %v8410
  %8412 = vmatmul.bf16.gmra.mxu0 %v7366
  %v8413 = vpop.f32.mrf.mxu0
  %v8414 = vadd.f32 %v8325, %v8413
  %v8415 = vpop.f32.mrf.mxu0
  %v8416 = vadd.f32 %v8327, %v8415
  %8417 = vmatmul.bf16.gmra.mxu0 %v7374
  %v8418 = vpop.f32.mrf.mxu0
  %v8419 = vadd.f32 %v8330, %v8418
  %v8420 = vpop.f32.mrf.mxu0
  %v8421 = vadd.f32 %v8332, %v8420
  %8422 = vmatmul.bf16.gmra.mxu0 %v7382
  %v8423 = vpop.f32.mrf.mxu0
  %v8424 = vadd.f32 %v8335, %v8423
  %v8425 = vpop.f32.mrf.mxu0
  %v8426 = vadd.f32 %v8337, %v8425
  %8427 = vmatmul.bf16.gmra.mxu0 %v7390
  %v8428 = vpop.f32.mrf.mxu0
  %v8429 = vadd.f32 %v8340, %v8428
  %v8430 = vpop.f32.mrf.mxu0
  %v8431 = vadd.f32 %v8342, %v8430
  %8432 = vmatmul.bf16.gmra.mxu0 %v7398
  %v8433 = vpop.f32.mrf.mxu0
  %v8434 = vadd.f32 %v8345, %v8433
  %v8435 = vpop.f32.mrf.mxu0
  %v8436 = vadd.f32 %v8347, %v8435
  %8437 = vmatmul.bf16.gmra.mxu0 %v7406
  %v8438 = vpop.f32.mrf.mxu0
  %v8439 = vadd.f32 %v8350, %v8438
  %v8440 = vpop.f32.mrf.mxu0
  %v8441 = vadd.f32 %v8352, %v8440
  %8442 = vmatmul.bf16.gmra.mxu0 %v7414
  %v8443 = vpop.f32.mrf.mxu0
  %v8444 = vadd.f32 %v8355, %v8443
  %v8445 = vpop.f32.mrf.mxu0
  %v8446 = vadd.f32 %v8357, %v8445
  %8447 = vmatmul.bf16.gmra.mxu0 %v7422
  %v8448 = vpop.f32.mrf.mxu0
  %v8449 = vadd.f32 %v8360, %v8448
  %v8450 = vpop.f32.mrf.mxu0
  %v8451 = vadd.f32 %v8362, %v8450
  %8452 = vmatmul.bf16.gmra.mxu0 %v7430
  %v8453 = vpop.f32.mrf.mxu0
  %v8454 = vadd.f32 %v8365, %v8453
  %v8455 = vpop.f32.mrf.mxu0
  %v8456 = vadd.f32 %v8367, %v8455
  %8457 = vmatmul.bf16.gmra.mxu0 %v7438
  %v8458 = vpop.f32.mrf.mxu0
  %v8459 = vadd.f32 %v8370, %v8458
  %v8460 = vpop.f32.mrf.mxu0
  %v8461 = vadd.f32 %v8372, %v8460
  %8462 = vdwg.mxu0
  %8463 = vmatpush.bf16.msra.mxu0 %v6852
  %8464 = vmatpush.bf16.msra.mxu0 %v6850
  %8465 = vmatpush.bf16.msra.mxu0 %v6848
  %8466 = vmatpush.bf16.msra.mxu0 %v6846
  %8467 = vmatpush.bf16.msra.mxu0 %v6844
  %8468 = vmatpush.bf16.msra.mxu0 %v6842
  %8469 = vmatpush.bf16.msra.mxu0 %v6840
  %8470 = vmatpush.bf16.msra.mxu0 %v6838
  %8471 = vmatmul.bf16.gmra.mxu0 %v7319
  %v8472 = vpop.f32.mrf.mxu0
  %v8473 = vadd.f32 %v8384, %v8472
  %v8474 = vpop.f32.mrf.mxu0
  %v8475 = vadd.f32 %v8386, %v8474
  %8476 = vmatmul.bf16.gmra.mxu0 %v7327
  %v8477 = vpop.f32.mrf.mxu0
  %v8478 = vadd.f32 %v8389, %v8477
  %v8479 = vpop.f32.mrf.mxu0
  %v8480 = vadd.f32 %v8391, %v8479
  %8481 = vmatmul.bf16.gmra.mxu0 %v7335
  %v8482 = vpop.f32.mrf.mxu0
  %v8483 = vadd.f32 %v8394, %v8482
  %v8484 = vpop.f32.mrf.mxu0
  %v8485 = vadd.f32 %v8396, %v8484
  %8486 = vmatmul.bf16.gmra.mxu0 %v7343
  %v8487 = vpop.f32.mrf.mxu0
  %v8488 = vadd.f32 %v8399, %v8487
  %v8489 = vpop.f32.mrf.mxu0
  %v8490 = vadd.f32 %v8401, %v8489
  %8491 = vmatmul.bf16.gmra.mxu0 %v7351
  %v8492 = vpop.f32.mrf.mxu0
  %v8493 = vadd.f32 %v8404, %v8492
  %v8494 = vpop.f32.mrf.mxu0
  %v8495 = vadd.f32 %v8406, %v8494
  %8496 = vmatmul.bf16.gmra.mxu0 %v7359
  %v8497 = vpop.f32.mrf.mxu0
  %v8498 = vadd.f32 %v8409, %v8497
  %v8499 = vpop.f32.mrf.mxu0
  %v8500 = vadd.f32 %v8411, %v8499
  %8501 = vmatmul.bf16.gmra.mxu0 %v7367
  %v8502 = vpop.f32.mrf.mxu0
  %v8503 = vadd.f32 %v8414, %v8502
  %v8504 = vpop.f32.mrf.mxu0
  %v8505 = vadd.f32 %v8416, %v8504
  %8506 = vmatmul.bf16.gmra.mxu0 %v7375
  %v8507 = vpop.f32.mrf.mxu0
  %v8508 = vadd.f32 %v8419, %v8507
  %v8509 = vpop.f32.mrf.mxu0
  %v8510 = vadd.f32 %v8421, %v8509
  %8511 = vmatmul.bf16.gmra.mxu0 %v7383
  %v8512 = vpop.f32.mrf.mxu0
  %v8513 = vadd.f32 %v8424, %v8512
  %v8514 = vpop.f32.mrf.mxu0
  %v8515 = vadd.f32 %v8426, %v8514
  %8516 = vmatmul.bf16.gmra.mxu0 %v7391
  %v8517 = vpop.f32.mrf.mxu0
  %v8518 = vadd.f32 %v8429, %v8517
  %v8519 = vpop.f32.mrf.mxu0
  %v8520 = vadd.f32 %v8431, %v8519
  %8521 = vmatmul.bf16.gmra.mxu0 %v7399
  %v8522 = vpop.f32.mrf.mxu0
  %v8523 = vadd.f32 %v8434, %v8522
  %v8524 = vpop.f32.mrf.mxu0
  %v8525 = vadd.f32 %v8436, %v8524
  %8526 = vmatmul.bf16.gmra.mxu0 %v7407
  %v8527 = vpop.f32.mrf.mxu0
  %v8528 = vadd.f32 %v8439, %v8527
  %v8529 = vpop.f32.mrf.mxu0
  %v8530 = vadd.f32 %v8441, %v8529
  %8531 = vmatmul.bf16.gmra.mxu0 %v7415
  %v8532 = vpop.f32.mrf.mxu0
  %v8533 = vadd.f32 %v8444, %v8532
  %v8534 = vpop.f32.mrf.mxu0
  %v8535 = vadd.f32 %v8446, %v8534
  %8536 = vmatmul.bf16.gmra.mxu0 %v7423
  %v8537 = vpop.f32.mrf.mxu0
  %v8538 = vadd.f32 %v8449, %v8537
  %v8539 = vpop.f32.mrf.mxu0
  %v8540 = vadd.f32 %v8451, %v8539
  %8541 = vmatmul.bf16.gmra.mxu0 %v7431
  %v8542 = vpop.f32.mrf.mxu0
  %v8543 = vadd.f32 %v8454, %v8542
  %v8544 = vpop.f32.mrf.mxu0
  %v8545 = vadd.f32 %v8456, %v8544
  %8546 = vmatmul.bf16.gmra.mxu0 %v7439
  %v8547 = vpop.f32.mrf.mxu0
  %v8548 = vadd.f32 %v8459, %v8547
  %v8549 = vpop.f32.mrf.mxu0
  %v8550 = vadd.f32 %v8461, %v8549
  %8551 = vdwg.mxu0
  %8552 = vmatpush.bf16.msra.mxu0 %v6868
  %8553 = vmatpush.bf16.msra.mxu0 %v6866
  %8554 = vmatpush.bf16.msra.mxu0 %v6864
  %8555 = vmatpush.bf16.msra.mxu0 %v6862
  %8556 = vmatpush.bf16.msra.mxu0 %v6860
  %8557 = vmatpush.bf16.msra.mxu0 %v6858
  %8558 = vmatpush.bf16.msra.mxu0 %v6856
  %8559 = vmatpush.bf16.msra.mxu0 %v6854
  %8560 = vmatmul.bf16.gmra.mxu0 %v7320
  %v8561 = vpop.f32.mrf.mxu0
  %v8562 = vadd.f32 %v8473, %v8561
  %v8563 = vpop.f32.mrf.mxu0
  %v8564 = vadd.f32 %v8475, %v8563
  %8565 = vmatmul.bf16.gmra.mxu0 %v7328
  %v8566 = vpop.f32.mrf.mxu0
  %v8567 = vadd.f32 %v8478, %v8566
  %v8568 = vpop.f32.mrf.mxu0
  %v8569 = vadd.f32 %v8480, %v8568
  %8570 = vmatmul.bf16.gmra.mxu0 %v7336
  %v8571 = vpop.f32.mrf.mxu0
  %v8572 = vadd.f32 %v8483, %v8571
  %v8573 = vpop.f32.mrf.mxu0
  %v8574 = vadd.f32 %v8485, %v8573
  %8575 = vmatmul.bf16.gmra.mxu0 %v7344
  %v8576 = vpop.f32.mrf.mxu0
  %v8577 = vadd.f32 %v8488, %v8576
  %v8578 = vpop.f32.mrf.mxu0
  %v8579 = vadd.f32 %v8490, %v8578
  %8580 = vmatmul.bf16.gmra.mxu0 %v7352
  %v8581 = vpop.f32.mrf.mxu0
  %v8582 = vadd.f32 %v8493, %v8581
  %v8583 = vpop.f32.mrf.mxu0
  %v8584 = vadd.f32 %v8495, %v8583
  %8585 = vmatmul.bf16.gmra.mxu0 %v7360
  %v8586 = vpop.f32.mrf.mxu0
  %v8587 = vadd.f32 %v8498, %v8586
  %v8588 = vpop.f32.mrf.mxu0
  %v8589 = vadd.f32 %v8500, %v8588
  %8590 = vmatmul.bf16.gmra.mxu0 %v7368
  %v8591 = vpop.f32.mrf.mxu0
  %v8592 = vadd.f32 %v8503, %v8591
  %v8593 = vpop.f32.mrf.mxu0
  %v8594 = vadd.f32 %v8505, %v8593
  %8595 = vmatmul.bf16.gmra.mxu0 %v7376
  %v8596 = vpop.f32.mrf.mxu0
  %v8597 = vadd.f32 %v8508, %v8596
  %v8598 = vpop.f32.mrf.mxu0
  %v8599 = vadd.f32 %v8510, %v8598
  %8600 = vmatmul.bf16.gmra.mxu0 %v7384
  %v8601 = vpop.f32.mrf.mxu0
  %v8602 = vadd.f32 %v8513, %v8601
  %v8603 = vpop.f32.mrf.mxu0
  %v8604 = vadd.f32 %v8515, %v8603
  %8605 = vmatmul.bf16.gmra.mxu0 %v7392
  %v8606 = vpop.f32.mrf.mxu0
  %v8607 = vadd.f32 %v8518, %v8606
  %v8608 = vpop.f32.mrf.mxu0
  %v8609 = vadd.f32 %v8520, %v8608
  %8610 = vmatmul.bf16.gmra.mxu0 %v7400
  %v8611 = vpop.f32.mrf.mxu0
  %v8612 = vadd.f32 %v8523, %v8611
  %v8613 = vpop.f32.mrf.mxu0
  %v8614 = vadd.f32 %v8525, %v8613
  %8615 = vmatmul.bf16.gmra.mxu0 %v7408
  %v8616 = vpop.f32.mrf.mxu0
  %v8617 = vadd.f32 %v8528, %v8616
  %v8618 = vpop.f32.mrf.mxu0
  %v8619 = vadd.f32 %v8530, %v8618
  %8620 = vmatmul.bf16.gmra.mxu0 %v7416
  %v8621 = vpop.f32.mrf.mxu0
  %v8622 = vadd.f32 %v8533, %v8621
  %v8623 = vpop.f32.mrf.mxu0
  %v8624 = vadd.f32 %v8535, %v8623
  %8625 = vmatmul.bf16.gmra.mxu0 %v7424
  %v8626 = vpop.f32.mrf.mxu0
  %v8627 = vadd.f32 %v8538, %v8626
  %v8628 = vpop.f32.mrf.mxu0
  %v8629 = vadd.f32 %v8540, %v8628
  %8630 = vmatmul.bf16.gmra.mxu0 %v7432
  %v8631 = vpop.f32.mrf.mxu0
  %v8632 = vadd.f32 %v8543, %v8631
  %v8633 = vpop.f32.mrf.mxu0
  %v8634 = vadd.f32 %v8545, %v8633
  %8635 = vmatmul.bf16.gmra.mxu0 %v7440
  %v8636 = vpop.f32.mrf.mxu0
  %v8637 = vadd.f32 %v8548, %v8636
  %v8638 = vpop.f32.mrf.mxu0
  %v8639 = vadd.f32 %v8550, %v8638
  %8640 = vdwg.mxu0
  %8641 = vmatpush.bf16.msra.mxu0 %v6884
  %8642 = vmatpush.bf16.msra.mxu0 %v6882
  %8643 = vmatpush.bf16.msra.mxu0 %v6880
  %8644 = vmatpush.bf16.msra.mxu0 %v6878
  %8645 = vmatpush.bf16.msra.mxu0 %v6876
  %8646 = vmatpush.bf16.msra.mxu0 %v6874
  %8647 = vmatpush.bf16.msra.mxu0 %v6872
  %8648 = vmatpush.bf16.msra.mxu0 %v6870
  %8649 = vmatmul.bf16.gmra.mxu0 %v7321
  %v8650 = vpop.f32.mrf.mxu0
  %v8651 = vadd.f32 %v8562, %v8650
  %v8652 = vpop.f32.mrf.mxu0
  %v8653 = vadd.f32 %v8564, %v8652
  %8654 = vmatmul.bf16.gmra.mxu0 %v7329
  %v8655 = vpop.f32.mrf.mxu0
  %v8656 = vadd.f32 %v8567, %v8655
  %v8657 = vpop.f32.mrf.mxu0
  %v8658 = vadd.f32 %v8569, %v8657
  %8659 = vmatmul.bf16.gmra.mxu0 %v7337
  %v8660 = vpop.f32.mrf.mxu0
  %v8661 = vadd.f32 %v8572, %v8660
  %v8662 = vpop.f32.mrf.mxu0
  %v8663 = vadd.f32 %v8574, %v8662
  %8664 = vmatmul.bf16.gmra.mxu0 %v7345
  %v8665 = vpop.f32.mrf.mxu0
  %v8666 = vadd.f32 %v8577, %v8665
  %v8667 = vpop.f32.mrf.mxu0
  %v8668 = vadd.f32 %v8579, %v8667
  %8669 = vmatmul.bf16.gmra.mxu0 %v7353
  %v8670 = vpop.f32.mrf.mxu0
  %v8671 = vadd.f32 %v8582, %v8670
  %v8672 = vpop.f32.mrf.mxu0
  %v8673 = vadd.f32 %v8584, %v8672
  %8674 = vmatmul.bf16.gmra.mxu0 %v7361
  %v8675 = vpop.f32.mrf.mxu0
  %v8676 = vadd.f32 %v8587, %v8675
  %v8677 = vpop.f32.mrf.mxu0
  %v8678 = vadd.f32 %v8589, %v8677
  %8679 = vmatmul.bf16.gmra.mxu0 %v7369
  %v8680 = vpop.f32.mrf.mxu0
  %v8681 = vadd.f32 %v8592, %v8680
  %v8682 = vpop.f32.mrf.mxu0
  %v8683 = vadd.f32 %v8594, %v8682
  %8684 = vmatmul.bf16.gmra.mxu0 %v7377
  %v8685 = vpop.f32.mrf.mxu0
  %v8686 = vadd.f32 %v8597, %v8685
  %v8687 = vpop.f32.mrf.mxu0
  %v8688 = vadd.f32 %v8599, %v8687
  %8689 = vmatmul.bf16.gmra.mxu0 %v7385
  %v8690 = vpop.f32.mrf.mxu0
  %v8691 = vadd.f32 %v8602, %v8690
  %v8692 = vpop.f32.mrf.mxu0
  %v8693 = vadd.f32 %v8604, %v8692
  %8694 = vmatmul.bf16.gmra.mxu0 %v7393
  %v8695 = vpop.f32.mrf.mxu0
  %v8696 = vadd.f32 %v8607, %v8695
  %v8697 = vpop.f32.mrf.mxu0
  %v8698 = vadd.f32 %v8609, %v8697
  %8699 = vmatmul.bf16.gmra.mxu0 %v7401
  %v8700 = vpop.f32.mrf.mxu0
  %v8701 = vadd.f32 %v8612, %v8700
  %v8702 = vpop.f32.mrf.mxu0
  %v8703 = vadd.f32 %v8614, %v8702
  %8704 = vmatmul.bf16.gmra.mxu0 %v7409
  %v8705 = vpop.f32.mrf.mxu0
  %v8706 = vadd.f32 %v8617, %v8705
  %v8707 = vpop.f32.mrf.mxu0
  %v8708 = vadd.f32 %v8619, %v8707
  %8709 = vmatmul.bf16.gmra.mxu0 %v7417
  %v8710 = vpop.f32.mrf.mxu0
  %v8711 = vadd.f32 %v8622, %v8710
  %v8712 = vpop.f32.mrf.mxu0
  %v8713 = vadd.f32 %v8624, %v8712
  %8714 = vmatmul.bf16.gmra.mxu0 %v7425
  %v8715 = vpop.f32.mrf.mxu0
  %v8716 = vadd.f32 %v8627, %v8715
  %v8717 = vpop.f32.mrf.mxu0
  %v8718 = vadd.f32 %v8629, %v8717
  %8719 = vmatmul.bf16.gmra.mxu0 %v7433
  %v8720 = vpop.f32.mrf.mxu0
  %v8721 = vadd.f32 %v8632, %v8720
  %v8722 = vpop.f32.mrf.mxu0
  %v8723 = vadd.f32 %v8634, %v8722
  %8724 = vmatmul.bf16.gmra.mxu0 %v7441
  %v8725 = vpop.f32.mrf.mxu0
  %v8726 = vadd.f32 %v8637, %v8725
  %v8727 = vpop.f32.mrf.mxu0
  %v8728 = vadd.f32 %v8639, %v8727
  %8729 = vdwg.mxu0
  %8730 = vmatpush.bf16.msra.mxu0 %v6900
  %8731 = vmatpush.bf16.msra.mxu0 %v6898
  %8732 = vmatpush.bf16.msra.mxu0 %v6896
  %8733 = vmatpush.bf16.msra.mxu0 %v6894
  %8734 = vmatpush.bf16.msra.mxu0 %v6892
  %8735 = vmatpush.bf16.msra.mxu0 %v6890
  %8736 = vmatpush.bf16.msra.mxu0 %v6888
  %8737 = vmatpush.bf16.msra.mxu0 %v6886
  %8738 = vmatmul.bf16.gmra.mxu0 %v7322
  %v8739 = vpop.f32.mrf.mxu0
  %v8740 = vadd.f32 %v8651, %v8739
  %v8741 = vpop.f32.mrf.mxu0
  %v8742 = vadd.f32 %v8653, %v8741
  %8743 = vmatmul.bf16.gmra.mxu0 %v7330
  %v8744 = vpop.f32.mrf.mxu0
  %v8745 = vadd.f32 %v8656, %v8744
  %v8746 = vpop.f32.mrf.mxu0
  %v8747 = vadd.f32 %v8658, %v8746
  %8748 = vmatmul.bf16.gmra.mxu0 %v7338
  %v8749 = vpop.f32.mrf.mxu0
  %v8750 = vadd.f32 %v8661, %v8749
  %v8751 = vpop.f32.mrf.mxu0
  %v8752 = vadd.f32 %v8663, %v8751
  %8753 = vmatmul.bf16.gmra.mxu0 %v7346
  %v8754 = vpop.f32.mrf.mxu0
  %v8755 = vadd.f32 %v8666, %v8754
  %v8756 = vpop.f32.mrf.mxu0
  %v8757 = vadd.f32 %v8668, %v8756
  %8758 = vmatmul.bf16.gmra.mxu0 %v7354
  %v8759 = vpop.f32.mrf.mxu0
  %v8760 = vadd.f32 %v8671, %v8759
  %v8761 = vpop.f32.mrf.mxu0
  %v8762 = vadd.f32 %v8673, %v8761
  %8763 = vmatmul.bf16.gmra.mxu0 %v7362
  %v8764 = vpop.f32.mrf.mxu0
  %v8765 = vadd.f32 %v8676, %v8764
  %v8766 = vpop.f32.mrf.mxu0
  %v8767 = vadd.f32 %v8678, %v8766
  %8768 = vmatmul.bf16.gmra.mxu0 %v7370
  %v8769 = vpop.f32.mrf.mxu0
  %v8770 = vadd.f32 %v8681, %v8769
  %v8771 = vpop.f32.mrf.mxu0
  %v8772 = vadd.f32 %v8683, %v8771
  %8773 = vmatmul.bf16.gmra.mxu0 %v7378
  %v8774 = vpop.f32.mrf.mxu0
  %v8775 = vadd.f32 %v8686, %v8774
  %v8776 = vpop.f32.mrf.mxu0
  %v8777 = vadd.f32 %v8688, %v8776
  %8778 = vmatmul.bf16.gmra.mxu0 %v7386
  %v8779 = vpop.f32.mrf.mxu0
  %v8780 = vadd.f32 %v8691, %v8779
  %v8781 = vpop.f32.mrf.mxu0
  %v8782 = vadd.f32 %v8693, %v8781
  %8783 = vmatmul.bf16.gmra.mxu0 %v7394
  %v8784 = vpop.f32.mrf.mxu0
  %v8785 = vadd.f32 %v8696, %v8784
  %v8786 = vpop.f32.mrf.mxu0
  %v8787 = vadd.f32 %v8698, %v8786
  %8788 = vmatmul.bf16.gmra.mxu0 %v7402
  %v8789 = vpop.f32.mrf.mxu0
  %v8790 = vadd.f32 %v8701, %v8789
  %v8791 = vpop.f32.mrf.mxu0
  %v8792 = vadd.f32 %v8703, %v8791
  %8793 = vmatmul.bf16.gmra.mxu0 %v7410
  %v8794 = vpop.f32.mrf.mxu0
  %v8795 = vadd.f32 %v8706, %v8794
  %v8796 = vpop.f32.mrf.mxu0
  %v8797 = vadd.f32 %v8708, %v8796
  %8798 = vmatmul.bf16.gmra.mxu0 %v7418
  %v8799 = vpop.f32.mrf.mxu0
  %v8800 = vadd.f32 %v8711, %v8799
  %v8801 = vpop.f32.mrf.mxu0
  %v8802 = vadd.f32 %v8713, %v8801
  %8803 = vmatmul.bf16.gmra.mxu0 %v7426
  %v8804 = vpop.f32.mrf.mxu0
  %v8805 = vadd.f32 %v8716, %v8804
  %v8806 = vpop.f32.mrf.mxu0
  %v8807 = vadd.f32 %v8718, %v8806
  %8808 = vmatmul.bf16.gmra.mxu0 %v7434
  %v8809 = vpop.f32.mrf.mxu0
  %v8810 = vadd.f32 %v8721, %v8809
  %v8811 = vpop.f32.mrf.mxu0
  %v8812 = vadd.f32 %v8723, %v8811
  %8813 = vmatmul.bf16.gmra.mxu0 %v7442
  %v8814 = vpop.f32.mrf.mxu0
  %v8815 = vadd.f32 %v8726, %v8814
  %v8816 = vpop.f32.mrf.mxu0
  %v8817 = vadd.f32 %v8728, %v8816
  %8818 = vdwg.mxu0
  %8819 = vmatpush.bf16.msra.mxu0 %v6916
  %8820 = vmatpush.bf16.msra.mxu0 %v6914
  %8821 = vmatpush.bf16.msra.mxu0 %v6912
  %8822 = vmatpush.bf16.msra.mxu0 %v6910
  %8823 = vmatpush.bf16.msra.mxu0 %v6908
  %8824 = vmatpush.bf16.msra.mxu0 %v6906
  %8825 = vmatpush.bf16.msra.mxu0 %v6904
  %8826 = vmatpush.bf16.msra.mxu0 %v6902
  %8827 = vmatmul.bf16.gmra.mxu0 %v7323
  %v8828 = vpop.f32.mrf.mxu0
  %v8829 = vadd.f32 %v8740, %v8828
  %v8830 = vpop.f32.mrf.mxu0
  %v8831 = vadd.f32 %v8742, %v8830
  %8832 = vmatmul.bf16.gmra.mxu0 %v7331
  %v8833 = vpop.f32.mrf.mxu0
  %v8834 = vadd.f32 %v8745, %v8833
  %v8835 = vpop.f32.mrf.mxu0
  %v8836 = vadd.f32 %v8747, %v8835
  %8837 = vmatmul.bf16.gmra.mxu0 %v7339
  %v8838 = vpop.f32.mrf.mxu0
  %v8839 = vadd.f32 %v8750, %v8838
  %v8840 = vpop.f32.mrf.mxu0
  %v8841 = vadd.f32 %v8752, %v8840
  %8842 = vmatmul.bf16.gmra.mxu0 %v7347
  %v8843 = vpop.f32.mrf.mxu0
  %v8844 = vadd.f32 %v8755, %v8843
  %v8845 = vpop.f32.mrf.mxu0
  %v8846 = vadd.f32 %v8757, %v8845
  %8847 = vmatmul.bf16.gmra.mxu0 %v7355
  %v8848 = vpop.f32.mrf.mxu0
  %v8849 = vadd.f32 %v8760, %v8848
  %v8850 = vpop.f32.mrf.mxu0
  %v8851 = vadd.f32 %v8762, %v8850
  %8852 = vmatmul.bf16.gmra.mxu0 %v7363
  %v8853 = vpop.f32.mrf.mxu0
  %v8854 = vadd.f32 %v8765, %v8853
  %v8855 = vpop.f32.mrf.mxu0
  %v8856 = vadd.f32 %v8767, %v8855
  %8857 = vmatmul.bf16.gmra.mxu0 %v7371
  %v8858 = vpop.f32.mrf.mxu0
  %v8859 = vadd.f32 %v8770, %v8858
  %v8860 = vpop.f32.mrf.mxu0
  %v8861 = vadd.f32 %v8772, %v8860
  %8862 = vmatmul.bf16.gmra.mxu0 %v7379
  %v8863 = vpop.f32.mrf.mxu0
  %v8864 = vadd.f32 %v8775, %v8863
  %v8865 = vpop.f32.mrf.mxu0
  %v8866 = vadd.f32 %v8777, %v8865
  %8867 = vmatmul.bf16.gmra.mxu0 %v7387
  %v8868 = vpop.f32.mrf.mxu0
  %v8869 = vadd.f32 %v8780, %v8868
  %v8870 = vpop.f32.mrf.mxu0
  %v8871 = vadd.f32 %v8782, %v8870
  %8872 = vmatmul.bf16.gmra.mxu0 %v7395
  %v8873 = vpop.f32.mrf.mxu0
  %v8874 = vadd.f32 %v8785, %v8873
  %v8875 = vpop.f32.mrf.mxu0
  %v8876 = vadd.f32 %v8787, %v8875
  %8877 = vmatmul.bf16.gmra.mxu0 %v7403
  %v8878 = vpop.f32.mrf.mxu0
  %v8879 = vadd.f32 %v8790, %v8878
  %v8880 = vpop.f32.mrf.mxu0
  %v8881 = vadd.f32 %v8792, %v8880
  %8882 = vmatmul.bf16.gmra.mxu0 %v7411
  %v8883 = vpop.f32.mrf.mxu0
  %v8884 = vadd.f32 %v8795, %v8883
  %v8885 = vpop.f32.mrf.mxu0
  %v8886 = vadd.f32 %v8797, %v8885
  %8887 = vmatmul.bf16.gmra.mxu0 %v7419
  %v8888 = vpop.f32.mrf.mxu0
  %v8889 = vadd.f32 %v8800, %v8888
  %v8890 = vpop.f32.mrf.mxu0
  %v8891 = vadd.f32 %v8802, %v8890
  %8892 = vmatmul.bf16.gmra.mxu0 %v7427
  %v8893 = vpop.f32.mrf.mxu0
  %v8894 = vadd.f32 %v8805, %v8893
  %v8895 = vpop.f32.mrf.mxu0
  %v8896 = vadd.f32 %v8807, %v8895
  %8897 = vmatmul.bf16.gmra.mxu0 %v7435
  %v8898 = vpop.f32.mrf.mxu0
  %v8899 = vadd.f32 %v8810, %v8898
  %v8900 = vpop.f32.mrf.mxu0
  %v8901 = vadd.f32 %v8812, %v8900
  %8902 = vmatmul.bf16.gmra.mxu0 %v7443
  %v8903 = vpop.f32.mrf.mxu0
  %v8904 = vadd.f32 %v8815, %v8903
  %v8905 = vpop.f32.mrf.mxu0
  %v8906 = vadd.f32 %v8817, %v8905
  %8907 = vdwg.mxu0
  %8908 = vmatpush.bf16.msra.mxu0 %v6932
  %8909 = vmatpush.bf16.msra.mxu0 %v6930
  %8910 = vmatpush.bf16.msra.mxu0 %v6928
  %8911 = vmatpush.bf16.msra.mxu0 %v6926
  %8912 = vmatpush.bf16.msra.mxu0 %v6924
  %8913 = vmatpush.bf16.msra.mxu0 %v6922
  %8914 = vmatpush.bf16.msra.mxu0 %v6920
  %8915 = vmatpush.bf16.msra.mxu0 %v6918
  %8916 = vmatmul.bf16.gmra.mxu0 %v7324
  %v8917 = vpop.f32.mrf.mxu0
  %v8918 = vadd.f32 %v8829, %v8917
  %v8919 = vpop.f32.mrf.mxu0
  %v8920 = vadd.f32 %v8831, %v8919
  %8921 = vmatmul.bf16.gmra.mxu0 %v7332
  %v8922 = vpop.f32.mrf.mxu0
  %v8923 = vadd.f32 %v8834, %v8922
  %v8924 = vpop.f32.mrf.mxu0
  %v8925 = vadd.f32 %v8836, %v8924
  %8926 = vmatmul.bf16.gmra.mxu0 %v7340
  %v8927 = vpop.f32.mrf.mxu0
  %v8928 = vadd.f32 %v8839, %v8927
  %v8929 = vpop.f32.mrf.mxu0
  %v8930 = vadd.f32 %v8841, %v8929
  %8931 = vmatmul.bf16.gmra.mxu0 %v7348
  %v8932 = vpop.f32.mrf.mxu0
  %v8933 = vadd.f32 %v8844, %v8932
  %v8934 = vpop.f32.mrf.mxu0
  %v8935 = vadd.f32 %v8846, %v8934
  %8936 = vmatmul.bf16.gmra.mxu0 %v7356
  %v8937 = vpop.f32.mrf.mxu0
  %v8938 = vadd.f32 %v8849, %v8937
  %v8939 = vpop.f32.mrf.mxu0
  %v8940 = vadd.f32 %v8851, %v8939
  %8941 = vmatmul.bf16.gmra.mxu0 %v7364
  %v8942 = vpop.f32.mrf.mxu0
  %v8943 = vadd.f32 %v8854, %v8942
  %v8944 = vpop.f32.mrf.mxu0
  %v8945 = vadd.f32 %v8856, %v8944
  %8946 = vmatmul.bf16.gmra.mxu0 %v7372
  %v8947 = vpop.f32.mrf.mxu0
  %v8948 = vadd.f32 %v8859, %v8947
  %v8949 = vpop.f32.mrf.mxu0
  %v8950 = vadd.f32 %v8861, %v8949
  %8951 = vmatmul.bf16.gmra.mxu0 %v7380
  %v8952 = vpop.f32.mrf.mxu0
  %v8953 = vadd.f32 %v8864, %v8952
  %v8954 = vpop.f32.mrf.mxu0
  %v8955 = vadd.f32 %v8866, %v8954
  %8956 = vmatmul.bf16.gmra.mxu0 %v7388
  %v8957 = vpop.f32.mrf.mxu0
  %v8958 = vadd.f32 %v8869, %v8957
  %v8959 = vpop.f32.mrf.mxu0
  %v8960 = vadd.f32 %v8871, %v8959
  %8961 = vmatmul.bf16.gmra.mxu0 %v7396
  %v8962 = vpop.f32.mrf.mxu0
  %v8963 = vadd.f32 %v8874, %v8962
  %v8964 = vpop.f32.mrf.mxu0
  %v8965 = vadd.f32 %v8876, %v8964
  %8966 = vmatmul.bf16.gmra.mxu0 %v7404
  %v8967 = vpop.f32.mrf.mxu0
  %v8968 = vadd.f32 %v8879, %v8967
  %v8969 = vpop.f32.mrf.mxu0
  %v8970 = vadd.f32 %v8881, %v8969
  %8971 = vmatmul.bf16.gmra.mxu0 %v7412
  %v8972 = vpop.f32.mrf.mxu0
  %v8973 = vadd.f32 %v8884, %v8972
  %v8974 = vpop.f32.mrf.mxu0
  %v8975 = vadd.f32 %v8886, %v8974
  %8976 = vmatmul.bf16.gmra.mxu0 %v7420
  %v8977 = vpop.f32.mrf.mxu0
  %v8978 = vadd.f32 %v8889, %v8977
  %v8979 = vpop.f32.mrf.mxu0
  %v8980 = vadd.f32 %v8891, %v8979
  %8981 = vmatmul.bf16.gmra.mxu0 %v7428
  %v8982 = vpop.f32.mrf.mxu0
  %v8983 = vadd.f32 %v8894, %v8982
  %v8984 = vpop.f32.mrf.mxu0
  %v8985 = vadd.f32 %v8896, %v8984
  %8986 = vmatmul.bf16.gmra.mxu0 %v7436
  %v8987 = vpop.f32.mrf.mxu0
  %v8988 = vadd.f32 %v8899, %v8987
  %v8989 = vpop.f32.mrf.mxu0
  %v8990 = vadd.f32 %v8901, %v8989
  %8991 = vmatmul.bf16.gmra.mxu0 %v7444
  %v8992 = vpop.f32.mrf.mxu0
  %v8993 = vadd.f32 %v8904, %v8992
  %v8994 = vpop.f32.mrf.mxu0
  %v8995 = vadd.f32 %v8906, %v8994
  %8996 = vdwg.mxu0
  %8997 = vst [vmem:[%s5] sm:$0xff] %v8206
  %8998 = vst.msk [vmem:[%s5 + $0x8] sm:$0xff] %vm276, %v8918
  %8999 = vst [vmem:[%s5 + $0x10] sm:$0xff] %v8208
  %9000 = vst.msk [vmem:[%s5 + $0x18] sm:$0xff] %vm276, %v8920
  %9001 = vst [vmem:[%s5 + $0x20] sm:$0xff] %v8211
  %9002 = vst.msk [vmem:[%s5 + $0x28] sm:$0xff] %vm276, %v8923
  %9003 = vst [vmem:[%s5 + $0x30] sm:$0xff] %v8213
  %9004 = vst.msk [vmem:[%s5 + $0x38] sm:$0xff] %vm276, %v8925
  %9005 = vst [vmem:[%s5 + $0x40] sm:$0xff] %v8216
  %9006 = vst.msk [vmem:[%s5 + $0x48] sm:$0xff] %vm276, %v8928
  %9007 = vst [vmem:[%s5 + $0x50] sm:$0xff] %v8218
  %9008 = vst.msk [vmem:[%s5 + $0x58] sm:$0xff] %vm276, %v8930
  %9009 = vst [vmem:[%s5 + $0x60] sm:$0xff] %v8221
  %9010 = vst.msk [vmem:[%s5 + $0x68] sm:$0xff] %vm276, %v8933
  %9011 = vst [vmem:[%s5 + $0x70] sm:$0xff] %v8223
  %9012 = vst.msk [vmem:[%s5 + $0x78] sm:$0xff] %vm276, %v8935
  %9013 = vst [vmem:[%s5 + $0x80] sm:$0xff] %v8226
  %9014 = vst.msk [vmem:[%s5 + $0x88] sm:$0xff] %vm276, %v8938
  %9015 = vst [vmem:[%s5 + $0x90] sm:$0xff] %v8228
  %9016 = vst.msk [vmem:[%s5 + $0x98] sm:$0xff] %vm276, %v8940
  %9017 = vst [vmem:[%s5 + $0xa0] sm:$0xff] %v8231
  %9018 = vst.msk [vmem:[%s5 + $0xa8] sm:$0xff] %vm276, %v8943
  %9019 = vst [vmem:[%s5 + $0xb0] sm:$0xff] %v8233
  %9020 = vst.msk [vmem:[%s5 + $0xb8] sm:$0xff] %vm276, %v8945
  %9021 = vst [vmem:[%s5 + $0xc0] sm:$0xff] %v8236
  %9022 = vst.msk [vmem:[%s5 + $0xc8] sm:$0xff] %vm276, %v8948
  %9023 = vst [vmem:[%s5 + $0xd0] sm:$0xff] %v8238
  %9024 = vst.msk [vmem:[%s5 + $0xd8] sm:$0xff] %vm276, %v8950
  %9025 = vst [vmem:[%s5 + $0xe0] sm:$0xff] %v8241
  %9026 = vst.msk [vmem:[%s5 + $0xe8] sm:$0xff] %vm276, %v8953
  %9027 = vst [vmem:[%s5 + $0xf0] sm:$0xff] %v8243
  %9028 = vst.msk [vmem:[%s5 + $0xf8] sm:$0xff] %vm276, %v8955
  %9029 = vst [vmem:[%s5 + $0x100] sm:$0xff] %v8246
  %9030 = vst.msk [vmem:[%s5 + $0x108] sm:$0xff] %vm276, %v8958
  %9031 = vst [vmem:[%s5 + $0x110] sm:$0xff] %v8248
  %9032 = vst.msk [vmem:[%s5 + $0x118] sm:$0xff] %vm276, %v8960
  %9033 = vst [vmem:[%s5 + $0x120] sm:$0xff] %v8251
  %9034 = vst.msk [vmem:[%s5 + $0x128] sm:$0xff] %vm276, %v8963
  %9035 = vst [vmem:[%s5 + $0x130] sm:$0xff] %v8253
  %9036 = vst.msk [vmem:[%s5 + $0x138] sm:$0xff] %vm276, %v8965
  %9037 = vst [vmem:[%s5 + $0x140] sm:$0xff] %v8256
  %9038 = vst.msk [vmem:[%s5 + $0x148] sm:$0xff] %vm276, %v8968
  %9039 = vst [vmem:[%s5 + $0x150] sm:$0xff] %v8258
  %9040 = vst.msk [vmem:[%s5 + $0x158] sm:$0xff] %vm276, %v8970
  %9041 = vst [vmem:[%s5 + $0x160] sm:$0xff] %v8261
  %9042 = vst.msk [vmem:[%s5 + $0x168] sm:$0xff] %vm276, %v8973
  %9043 = vst [vmem:[%s5 + $0x170] sm:$0xff] %v8263
  %9044 = vst.msk [vmem:[%s5 + $0x178] sm:$0xff] %vm276, %v8975
  %9045 = vst [vmem:[%s5 + $0x180] sm:$0xff] %v8266
  %9046 = vst.msk [vmem:[%s5 + $0x188] sm:$0xff] %vm276, %v8978
  %9047 = vst [vmem:[%s5 + $0x190] sm:$0xff] %v8268
  %9048 = vst.msk [vmem:[%s5 + $0x198] sm:$0xff] %vm276, %v8980
  %9049 = vst [vmem:[%s5 + $0x1a0] sm:$0xff] %v8271
  %9050 = vst.msk [vmem:[%s5 + $0x1a8] sm:$0xff] %vm276, %v8983
  %9051 = vst [vmem:[%s5 + $0x1b0] sm:$0xff] %v8273
  %9052 = vst.msk [vmem:[%s5 + $0x1b8] sm:$0xff] %vm276, %v8985
  %9053 = vst [vmem:[%s5 + $0x1c0] sm:$0xff] %v8276
  %9054 = vst.msk [vmem:[%s5 + $0x1c8] sm:$0xff] %vm276, %v8988
  %9055 = vst [vmem:[%s5 + $0x1d0] sm:$0xff] %v8278
  %9056 = vst.msk [vmem:[%s5 + $0x1d8] sm:$0xff] %vm276, %v8990
  %9057 = vst [vmem:[%s5 + $0x1e0] sm:$0xff] %v8281
  %9058 = vst.msk [vmem:[%s5 + $0x1e8] sm:$0xff] %vm276, %v8993
  %9059 = vst [vmem:[%s5 + $0x1f0] sm:$0xff] %v8283
  %9060 = vst.msk [vmem:[%s5 + $0x1f8] sm:$0xff] %vm276, %v8995
  // Predicated region
  $region22: #{fused_bn_add_relu_conv1x1.1} parent=0 // pred_check
    _
  $region23: #{fused_bn_add_relu_conv1x1.1} parent=0 // pred_check_branch
    %9062 = sbr.rel (0) target = $region25
  $region24: #{fused_bn_add_relu_conv1x1.1} parent=0 // pred_region
    _
  $region25: #{fused_bn_add_relu_conv1x1.1} parent=0 // pred_fallthru
    _
  // Predicated region
  $region26: #{fused_bn_add_relu_conv1x1.1} parent=0 // pred_check
    _
  $region27: #{fused_bn_add_relu_conv1x1.1} parent=0 // pred_check_branch
    %9064 = sbr.rel (0) target = $region29
  $region28: #{fused_bn_add_relu_conv1x1.1} parent=0 // pred_region
    _
  $region29: #{fused_bn_add_relu_conv1x1.1} parent=0 // pred_fallthru
    _

</llo_original>
